<compile_context>
chip_gen: v6e
topology: v6e:2x2x1
jax: 0.10.0
libtpu: 0.0.40
codegen_flags: <defaults>
</compile_context>

<pallas_src>
import math

import jax
import jax.numpy as jnp
from jax.experimental import pallas as pl
from jax.experimental.pallas import tpu as pltpu

HP = WP = 16          # spatial size after the 2x2 max-pool
CIN, COUT = 4, 8      # in_channels / out_channels of HugeDown
KH, KS = 31, 5        # huge kernel extent / small_ks
EPS = 1e-5            # BatchNorm2d eps
TB = 8                # images per grid step -> matmul M = TB*HP = 128


# --------------------------------------------------------------------------- #
# Pallas kernel
# --------------------------------------------------------------------------- #
def hugedown_kernel(xp_ref, w_ref, mask_ref, scale_ref, bias_ref, o_ref):
    tbh = o_ref.shape[1]

    # ---- MaxPool2d(2): elementwise max over the 4 pre-arranged positions ----
    xq = jnp.maximum(jnp.maximum(xp_ref[0, 0], xp_ref[0, 1]),
                     jnp.maximum(xp_ref[0, 2], xp_ref[0, 3]))   # (tbh, CIN*WP) f32

    # ---- 31 vertical taps: sublane roll (XLU) + validity mask (VPU) + MXU ----
    # result row r must read source row r + sy  ==>  jnp.roll shift = -sy;
    # mask[ky] zeroes the rows whose source falls outside the same image.
    def tap(ky):
        sy = ky - KH // 2
        if sy == 0:
            xs = xq
        else:
            xs = pltpu.roll(xq, shift=(-sy) % tbh, axis=0) * mask_ref[ky]
        return jnp.dot(xs.astype(jnp.bfloat16), w_ref[ky],
                       preferred_element_type=jnp.float32)

    # accumulate in the output VMEM block (bounds vreg pressure across the
    # 31-deep unrolled loop); epilogue applied in place at the end.
    o_ref[0] = tap(0)
    for ky in range(1, KH):
        o_ref[0] += tap(ky)

    # ---- folded biases + eval-mode BatchNorm + ReLU, lane-dense store --------
    o_ref[0] = jnp.maximum(o_ref[0] * scale_ref[...] + bias_ref[...], 0.0)


# --------------------------------------------------------------------------- #
# Wrapper: layout plumbing + pallas_call
# --------------------------------------------------------------------------- #
def hugedown(x, kparams, tb=TB):
    wtot, mask, scale_lane, bias_lane = kparams
    B, cin, H2, W2 = x.shape
    hp, wp = H2 // 2, W2 // 2
    assert B % tb == 0, "batch must be divisible by TB"
    nblk = B // tb
    tbh, cinw, coutw = tb * hp, cin * wp, wtot.shape[-1]

    # (B, C, 2hp, 2wp) -> (nblk, 4, TB*hp, C*wp): axis 1 enumerates the 2x2
    # pooling-window positions; rows stack TB images along sublanes.
    xr = x.reshape(B, cin, hp, 2, wp, 2).transpose(0, 3, 5, 2, 1, 4)
    xr = xr.reshape(nblk, tb, 4, hp, cin * wp).transpose(0, 2, 1, 3, 4)
    xr = xr.reshape(nblk, 4, tbh, cinw)

    out_lay = pl.pallas_call(
        hugedown_kernel,
        out_shape=jax.ShapeDtypeStruct((nblk, tbh, coutw), jnp.float32),
        grid=(nblk,),
        in_specs=[
            pl.BlockSpec((1, 4, tbh, cinw), lambda i: (i, 0, 0, 0)),
            pl.BlockSpec((KH, cinw, coutw), lambda i: (0, 0, 0)),   # grid-invariant
            pl.BlockSpec((KH, tbh, 1), lambda i: (0, 0, 0)),        # grid-invariant
            pl.BlockSpec((1, coutw), lambda i: (0, 0)),             # grid-invariant
            pl.BlockSpec((1, coutw), lambda i: (0, 0)),             # grid-invariant
        ],
        out_specs=pl.BlockSpec((1, tbh, coutw), lambda i: (i, 0, 0)),
        compiler_params=pltpu.CompilerParams(
            dimension_semantics=("parallel",)),
    )(xr, wtot, mask, scale_lane, bias_lane)

    cout = coutw // wp
    out = out_lay.reshape(nblk, tb, hp, cout, wp).transpose(0, 1, 3, 2, 4)
    return out.reshape(B, cout, hp, wp)


# --------------------------------------------------------------------------- #
# Host-side weight folding (pure algebra on the module parameters, done once)
# --------------------------------------------------------------------------- #
def fold_params(params, tb=TB):
    (wd0, bd0, w10, b10, wd1, bd1, w11, b11, ws, bs,
     gamma, beta, mean, var) = params

    # banded column-mixing matrices: encode the W-direction taps + zero padding
    d = jnp.arange(WP)[:, None] - jnp.arange(WP)[None, :]       # d[t, x] = t - x
    kx_small = d + KS // 2
    m_small = ((kx_small >= 0) & (kx_small < KS)).astype(jnp.float32)
    kx_small = jnp.clip(kx_small, 0, KS - 1)

    # conv0 = depthwise (KH x KS) -> 1x1(w10):     31 matrices
    band0 = wd0[:, :, kx_small] * m_small                       # (CIN, KH, WP, WP)
    g0 = jnp.einsum('oc,cktx->kctox', w10, band0)
    g0 = g0.reshape(KH, CIN * WP, COUT * WP)

    # conv1 = depthwise (KS x KH) -> 1x1(w11):      5 matrices (dense along W)
    band1 = wd1[:, :, d + KH // 2]                              # (CIN, KS, WP, WP)
    g1 = jnp.einsum('oc,cktx->kctox', w11, band1)
    g1 = g1.reshape(KS, CIN * WP, COUT * WP)

    # sconv = full (KS x KS) conv:                  5 matrices
    band_s = ws[:, :, :, kx_small] * m_small                    # (COUT, CIN, KS, WP, WP)
    gs = jnp.transpose(band_s, (2, 1, 3, 0, 4)).reshape(KS, CIN * WP, COUT * WP)

    lo = KH // 2 - KS // 2
    wtot = g0.at[lo:lo + KS].add(g1 + gs)                       # (KH, CIN*WP, COUT*WP)
    wtot = wtot.astype(jnp.bfloat16)                            # bf16-native MXU

    # per-ky row-validity mask (replaces the v1 row-shift matrices):
    # destination row r (local y = r % HP) is valid iff y + sy lies in [0, HP).
    tbh = tb * HP
    ylocal = jnp.arange(tbh) % HP                               # (tbh,)
    sy = jnp.arange(KH) - KH // 2                               # (KH,)
    src = ylocal[None, :] + sy[:, None]
    mask = ((src >= 0) & (src < HP)).astype(jnp.float32)[:, :, None]   # (KH, tbh, 1)

    # biases (depthwise biases folded through the 1x1 convs) + eval-mode BN
    bias_tot = (b10 + w10 @ bd0) + (b11 + w11 @ bd1) + bs       # (COUT,)
    bn_s = gamma * jax.lax.rsqrt(var + EPS)
    bn_b = beta - mean * bn_s
    scale_lane = jnp.repeat(bn_s, WP).reshape(1, COUT * WP)
    bias_lane = jnp.repeat(bn_s * bias_tot + bn_b, WP).reshape(1, COUT * WP)
    return wtot, mask, scale_lane, bias_lane


# --------------------------------------------------------------------------- #
# Parameters + pure-JAX reference of the PyTorch forward (eval-mode BN)
# --------------------------------------------------------------------------- #
def make_params(key):
    ks = jax.random.split(key, 12)

    def u(k, shape, fan_in):
        bnd = 1.0 / math.sqrt(fan_in)
        return jax.random.uniform(k, shape, jnp.float32, -bnd, bnd)

    wd0 = u(ks[0], (CIN, KH, KS), KH * KS)      # conv0 depthwise weight
    bd0 = u(ks[1], (CIN,), KH * KS)             # conv0 depthwise bias
    w10 = u(ks[2], (COUT, CIN), CIN)            # conv0 1x1 weight
    b10 = u(ks[3], (COUT,), CIN)                # conv0 1x1 bias
    wd1 = u(ks[4], (CIN, KS, KH), KS * KH)      # conv1 depthwise weight
    bd1 = u(ks[5], (CIN,), KS * KH)             # conv1 depthwise bias
    w11 = u(ks[6], (COUT, CIN), CIN)            # conv1 1x1 weight
    b11 = u(ks[7], (COUT,), CIN)                # conv1 1x1 bias
    ws = u(ks[8], (COUT, CIN, KS, KS), CIN * KS * KS)   # sconv weight
    bs = u(ks[9], (COUT,), CIN * KS * KS)               # sconv bias
    gamma = 1.0 + 0.1 * jax.random.normal(ks[10], (COUT,), jnp.float32)
    beta = 0.1 * jax.random.normal(ks[11], (COUT,), jnp.float32)
    mean = 0.05 * jnp.arange(COUT, dtype=jnp.float32) - 0.2
    var = 1.0 + 0.1 * jnp.arange(COUT, dtype=jnp.float32)
    return (wd0, bd0, w10, b10, wd1, bd1, w11, b11, ws, bs,
            gamma, beta, mean, var)


def ref_forward(x, params):
    (wd0, bd0, w10, b10, wd1, bd1, w11, b11, ws, bs,
     gamma, beta, mean, var) = params
    hi = jax.lax.Precision.HIGHEST

    xp = jax.lax.reduce_window(x, -jnp.inf, jax.lax.max,
                               (1, 1, 2, 2), (1, 1, 2, 2), 'VALID')

    def dwconv(v, w, b, pad):
        out = jax.lax.conv_general_dilated(
            v, w[:, None, :, :], (1, 1), pad,
            dimension_numbers=('NCHW', 'OIHW', 'NCHW'),
            feature_group_count=v.shape[1], precision=hi)
        return out + b[None, :, None, None]

    def conv1x1(v, w, b):
        return (jnp.einsum('oc,bchw->bohw', w, v, precision=hi)
                + b[None, :, None, None])

    p_a = ((KH // 2, KH // 2), (KS // 2, KS // 2))
    p_b = ((KS // 2, KS // 2), (KH // 2, KH // 2))
    p_s = ((KS // 2, KS // 2), (KS // 2, KS // 2))

    main = conv1x1(dwconv(xp, wd0, bd0, p_a), w10, b10)
    main = main + conv1x1(dwconv(xp, wd1, bd1, p_b), w11, b11)
    path = jax.lax.conv_general_dilated(
        xp, ws, (1, 1), p_s,
        dimension_numbers=('NCHW', 'OIHW', 'NCHW'),
        precision=hi) + bs[None, :, None, None]

    s = gamma * jax.lax.rsqrt(var + EPS)
    return jnp.maximum((path + main) * s[None, :, None, None]
                       + (beta - mean * s)[None, :, None, None], 0.0)


# --------------------------------------------------------------------------- #
if __name__ == "__main__":
    root = jax.random.PRNGKey(0)
    kx, kp = jax.random.split(root)

    B = 2 * TB                                 # 2 grid steps x TB=8 images each
    x = jax.random.normal(kx, (B, CIN, 2 * HP, 2 * WP), jnp.float32)
    params = make_params(kp)

    kparams = fold_params(params, TB)
    out = hugedown(x, kparams, TB)
    out = jax.block_until_ready(out)

    ref = ref_forward(x, params)
    assert out.shape == (B, COUT, HP, WP), out.shape
    err = float(jnp.max(jnp.abs(out - ref)))
    assert err < 3e-2, f"max abs err {err}"    # bf16 matmul operands, f32 accumulation
    print("KERNEL_OK")
</pallas_src>

<mosaic_0001>
module attributes {stable_mosaic.version = 11 : i64} {
  func.func @hugedown_kernel(%arg0: i32, %arg1: memref<1x4x128x64xf32, #tpu.memory_space<vmem>>, %arg2: memref<31x64x128xbf16, #tpu.memory_space<vmem>>, %arg3: memref<31x128x1xf32, #tpu.memory_space<vmem>>, %arg4: memref<1x128xf32, #tpu.memory_space<vmem>>, %arg5: memref<1x128xf32, #tpu.memory_space<vmem>>, %arg6: memref<1x128x128xf32, #tpu.memory_space<vmem>>) attributes {dimension_semantics = [#tpu.dimension_semantics<parallel>], iteration_bounds = array<i64: 2>, scalar_prefetch = 0 : i64, scratch_operands = 0 : i64, tpu.core_type = #tpu.core_type<tc>, window_params = [{transform_indices = @transform_0, window_bounds = array<i64: 1, 4, 128, 64>}, {pipeline_mode = #tpu.pipeline_mode<synchronous>, transform_indices = @transform_1, window_bounds = array<i64: 31, 64, 128>}, {pipeline_mode = #tpu.pipeline_mode<synchronous>, transform_indices = @transform_2, window_bounds = array<i64: 31, 128, 1>}, {pipeline_mode = #tpu.pipeline_mode<synchronous>, transform_indices = @transform_3, window_bounds = array<i64: 1, 128>}, {pipeline_mode = #tpu.pipeline_mode<synchronous>, transform_indices = @transform_4, window_bounds = array<i64: 1, 128>}, {transform_indices = @transform_5, window_bounds = array<i64: 1, 128, 128>}]} {
    %c0 = arith.constant 0 : index
    %c0_0 = arith.constant 0 : index
    %c0_1 = arith.constant 0 : index
    %c0_2 = arith.constant 0 : index
    %0 = vector.load %arg1[%c0, %c0_0, %c0_1, %c0_2] : memref<1x4x128x64xf32, #tpu.memory_space<vmem>>, vector<1x1x128x64xf32>
    %1 = vector.shape_cast %0 : vector<1x1x128x64xf32> to vector<128x64xf32>
    %c0_3 = arith.constant 0 : index
    %c1 = arith.constant 1 : index
    %c0_4 = arith.constant 0 : index
    %c0_5 = arith.constant 0 : index
    %2 = vector.load %arg1[%c0_3, %c1, %c0_4, %c0_5] : memref<1x4x128x64xf32, #tpu.memory_space<vmem>>, vector<1x1x128x64xf32>
    %3 = vector.shape_cast %2 : vector<1x1x128x64xf32> to vector<128x64xf32>
    %4 = arith.maximumf %1, %3 : vector<128x64xf32>
    %c0_6 = arith.constant 0 : index
    %c2 = arith.constant 2 : index
    %c0_7 = arith.constant 0 : index
    %c0_8 = arith.constant 0 : index
    %5 = vector.load %arg1[%c0_6, %c2, %c0_7, %c0_8] : memref<1x4x128x64xf32, #tpu.memory_space<vmem>>, vector<1x1x128x64xf32>
    %6 = vector.shape_cast %5 : vector<1x1x128x64xf32> to vector<128x64xf32>
    %c0_9 = arith.constant 0 : index
    %c3 = arith.constant 3 : index
    %c0_10 = arith.constant 0 : index
    %c0_11 = arith.constant 0 : index
    %7 = vector.load %arg1[%c0_9, %c3, %c0_10, %c0_11] : memref<1x4x128x64xf32, #tpu.memory_space<vmem>>, vector<1x1x128x64xf32>
    %8 = vector.shape_cast %7 : vector<1x1x128x64xf32> to vector<128x64xf32>
    %9 = arith.maximumf %6, %8 : vector<128x64xf32>
    %10 = arith.maximumf %4, %9 : vector<128x64xf32>
    %c15_i32 = arith.constant 15 : i32
    %11 = tpu.dynamic_rotate %10 by %c15_i32 dim 0 : vector<128x64xf32>, i32 -> vector<128x64xf32>
    %c0_12 = arith.constant 0 : index
    %c0_13 = arith.constant 0 : index
    %c0_14 = arith.constant 0 : index
    %12 = vector.load %arg3[%c0_12, %c0_13, %c0_14] : memref<31x128x1xf32, #tpu.memory_space<vmem>>, vector<1x128x1xf32>
    %13 = vector.shape_cast %12 : vector<1x128x1xf32> to vector<128x1xf32>
    %14 = vector.broadcast %13 : vector<128x1xf32> to vector<128x64xf32>
    %15 = arith.mulf %11, %14 : vector<128x64xf32>
    %16 = arith.truncf %15 : vector<128x64xf32> to vector<128x64xbf16>
    %c0_15 = arith.constant 0 : index
    %c0_16 = arith.constant 0 : index
    %c0_17 = arith.constant 0 : index
    %17 = vector.load %arg2[%c0_15, %c0_16, %c0_17] : memref<31x64x128xbf16, #tpu.memory_space<vmem>>, vector<1x64x128xbf16>
    %18 = vector.shape_cast %17 : vector<1x64x128xbf16> to vector<64x128xbf16>
    %cst = arith.constant dense<0.000000e+00> : vector<128x128xf32>
    %19 = tpu.matmul %16, %18, %cst {dimension_numbers = #tpu.dot_dimension_numbers<[1], [0], [0], [1], [0, 0, 1, 1], [], []>} : vector<128x64xbf16>, vector<64x128xbf16>, vector<128x128xf32> -> vector<128x128xf32>
    %c0_18 = arith.constant 0 : index
    %c0_19 = arith.constant 0 : index
    %c0_20 = arith.constant 0 : index
    %20 = vector.load %arg6[%c0_18, %c0_19, %c0_20] : memref<1x128x128xf32, #tpu.memory_space<vmem>>, vector<1x128x128xf32>
    %21 = vector.shape_cast %20 : vector<1x128x128xf32> to vector<128x128xf32>
    %22 = vector.shape_cast %19 : vector<128x128xf32> to vector<1x128x128xf32>
    tpu.vector_store %arg6[%c0_18, %c0_19, %c0_20], %22 {strides = array<i32>} : memref<1x128x128xf32, #tpu.memory_space<vmem>>, vector<1x128x128xf32>,
    %c0_21 = arith.constant 0 : index
    %c0_22 = arith.constant 0 : index
    %c0_23 = arith.constant 0 : index
    %23 = vector.load %arg6[%c0_21, %c0_22, %c0_23] : memref<1x128x128xf32, #tpu.memory_space<vmem>>, vector<1x128x128xf32>
    %24 = vector.shape_cast %23 : vector<1x128x128xf32> to vector<128x128xf32>
    %c14_i32 = arith.constant 14 : i32
    %25 = tpu.dynamic_rotate %10 by %c14_i32 dim 0 : vector<128x64xf32>, i32 -> vector<128x64xf32>
    %c1_24 = arith.constant 1 : index
    %c0_25 = arith.constant 0 : index
    %c0_26 = arith.constant 0 : index
    %26 = vector.load %arg3[%c1_24, %c0_25, %c0_26] : memref<31x128x1xf32, #tpu.memory_space<vmem>>, vector<1x128x1xf32>
    %27 = vector.shape_cast %26 : vector<1x128x1xf32> to vector<128x1xf32>
    %28 = vector.broadcast %27 : vector<128x1xf32> to vector<128x64xf32>
    %29 = arith.mulf %25, %28 : vector<128x64xf32>
    %30 = arith.truncf %29 : vector<128x64xf32> to vector<128x64xbf16>
    %c1_27 = arith.constant 1 : index
    %c0_28 = arith.constant 0 : index
    %c0_29 = arith.constant 0 : index
    %31 = vector.load %arg2[%c1_27, %c0_28, %c0_29] : memref<31x64x128xbf16, #tpu.memory_space<vmem>>, vector<1x64x128xbf16>
    %32 = vector.shape_cast %31 : vector<1x64x128xbf16> to vector<64x128xbf16>
    %cst_30 = arith.constant dense<0.000000e+00> : vector<128x128xf32>
    %33 = tpu.matmul %30, %32, %cst_30 {dimension_numbers = #tpu.dot_dimension_numbers<[1], [0], [0], [1], [0, 0, 1, 1], [], []>} : vector<128x64xbf16>, vector<64x128xbf16>, vector<128x128xf32> -> vector<128x128xf32>
    %34 = arith.addf %24, %33 : vector<128x128xf32>
    %c0_31 = arith.constant 0 : index
    %c0_32 = arith.constant 0 : index
    %c0_33 = arith.constant 0 : index
    %35 = vector.load %arg6[%c0_31, %c0_32, %c0_33] : memref<1x128x128xf32, #tpu.memory_space<vmem>>, vector<1x128x128xf32>
    %36 = vector.shape_cast %35 : vector<1x128x128xf32> to vector<128x128xf32>
    %37 = vector.shape_cast %34 : vector<128x128xf32> to vector<1x128x128xf32>
    tpu.vector_store %arg6[%c0_31, %c0_32, %c0_33], %37 {strides = array<i32>} : memref<1x128x128xf32, #tpu.memory_space<vmem>>, vector<1x128x128xf32>,
    %c0_34 = arith.constant 0 : index
    %c0_35 = arith.constant 0 : index
    %c0_36 = arith.constant 0 : index
    %38 = vector.load %arg6[%c0_34, %c0_35, %c0_36] : memref<1x128x128xf32, #tpu.memory_space<vmem>>, vector<1x128x128xf32>
    %39 = vector.shape_cast %38 : vector<1x128x128xf32> to vector<128x128xf32>
    %c13_i32 = arith.constant 13 : i32
    %40 = tpu.dynamic_rotate %10 by %c13_i32 dim 0 : vector<128x64xf32>, i32 -> vector<128x64xf32>
    %c2_37 = arith.constant 2 : index
    %c0_38 = arith.constant 0 : index
    %c0_39 = arith.constant 0 : index
    %41 = vector.load %arg3[%c2_37, %c0_38, %c0_39] : memref<31x128x1xf32, #tpu.memory_space<vmem>>, vector<1x128x1xf32>
    %42 = vector.shape_cast %41 : vector<1x128x1xf32> to vector<128x1xf32>
    %43 = vector.broadcast %42 : vector<128x1xf32> to vector<128x64xf32>
    %44 = arith.mulf %40, %43 : vector<128x64xf32>
    %45 = arith.truncf %44 : vector<128x64xf32> to vector<128x64xbf16>
    %c2_40 = arith.constant 2 : index
    %c0_41 = arith.constant 0 : index
    %c0_42 = arith.constant 0 : index
    %46 = vector.load %arg2[%c2_40, %c0_41, %c0_42] : memref<31x64x128xbf16, #tpu.memory_space<vmem>>, vector<1x64x128xbf16>
    %47 = vector.shape_cast %46 : vector<1x64x128xbf16> to vector<64x128xbf16>
    %cst_43 = arith.constant dense<0.000000e+00> : vector<128x128xf32>
    %48 = tpu.matmul %45, %47, %cst_43 {dimension_numbers = #tpu.dot_dimension_numbers<[1], [0], [0], [1], [0, 0, 1, 1], [], []>} : vector<128x64xbf16>, vector<64x128xbf16>, vector<128x128xf32> -> vector<128x128xf32>
    %49 = arith.addf %39, %48 : vector<128x128xf32>
    %c0_44 = arith.constant 0 : index
    %c0_45 = arith.constant 0 : index
    %c0_46 = arith.constant 0 : index
    %50 = vector.load %arg6[%c0_44, %c0_45, %c0_46] : memref<1x128x128xf32, #tpu.memory_space<vmem>>, vector<1x128x128xf32>
    %51 = vector.shape_cast %50 : vector<1x128x128xf32> to vector<128x128xf32>
    %52 = vector.shape_cast %49 : vector<128x128xf32> to vector<1x128x128xf32>
    tpu.vector_store %arg6[%c0_44, %c0_45, %c0_46], %52 {strides = array<i32>} : memref<1x128x128xf32, #tpu.memory_space<vmem>>, vector<1x128x128xf32>,
    %c0_47 = arith.constant 0 : index
    %c0_48 = arith.constant 0 : index
    %c0_49 = arith.constant 0 : index
    %53 = vector.load %arg6[%c0_47, %c0_48, %c0_49] : memref<1x128x128xf32, #tpu.memory_space<vmem>>, vector<1x128x128xf32>
    %54 = vector.shape_cast %53 : vector<1x128x128xf32> to vector<128x128xf32>
    %c12_i32 = arith.constant 12 : i32
    %55 = tpu.dynamic_rotate %10 by %c12_i32 dim 0 : vector<128x64xf32>, i32 -> vector<128x64xf32>
    %c3_50 = arith.constant 3 : index
    %c0_51 = arith.constant 0 : index
    %c0_52 = arith.constant 0 : index
    %56 = vector.load %arg3[%c3_50, %c0_51, %c0_52] : memref<31x128x1xf32, #tpu.memory_space<vmem>>, vector<1x128x1xf32>
    %57 = vector.shape_cast %56 : vector<1x128x1xf32> to vector<128x1xf32>
    %58 = vector.broadcast %57 : vector<128x1xf32> to vector<128x64xf32>
    %59 = arith.mulf %55, %58 : vector<128x64xf32>
    %60 = arith.truncf %59 : vector<128x64xf32> to vector<128x64xbf16>
    %c3_53 = arith.constant 3 : index
    %c0_54 = arith.constant 0 : index
    %c0_55 = arith.constant 0 : index
    %61 = vector.load %arg2[%c3_53, %c0_54, %c0_55] : memref<31x64x128xbf16, #tpu.memory_space<vmem>>, vector<1x64x128xbf16>
    %62 = vector.shape_cast %61 : vector<1x64x128xbf16> to vector<64x128xbf16>
    %cst_56 = arith.constant dense<0.000000e+00> : vector<128x128xf32>
    %63 = tpu.matmul %60, %62, %cst_56 {dimension_numbers = #tpu.dot_dimension_numbers<[1], [0], [0], [1], [0, 0, 1, 1], [], []>} : vector<128x64xbf16>, vector<64x128xbf16>, vector<128x128xf32> -> vector<128x128xf32>
    %64 = arith.addf %54, %63 : vector<128x128xf32>
    %c0_57 = arith.constant 0 : index
    %c0_58 = arith.constant 0 : index
    %c0_59 = arith.constant 0 : index
    %65 = vector.load %arg6[%c0_57, %c0_58, %c0_59] : memref<1x128x128xf32, #tpu.memory_space<vmem>>, vector<1x128x128xf32>
    %66 = vector.shape_cast %65 : vector<1x128x128xf32> to vector<128x128xf32>
    %67 = vector.shape_cast %64 : vector<128x128xf32> to vector<1x128x128xf32>
    tpu.vector_store %arg6[%c0_57, %c0_58, %c0_59], %67 {strides = array<i32>} : memref<1x128x128xf32, #tpu.memory_space<vmem>>, vector<1x128x128xf32>,
    %c0_60 = arith.constant 0 : index
    %c0_61 = arith.constant 0 : index
    %c0_62 = arith.constant 0 : index
    %68 = vector.load %arg6[%c0_60, %c0_61, %c0_62] : memref<1x128x128xf32, #tpu.memory_space<vmem>>, vector<1x128x128xf32>
    %69 = vector.shape_cast %68 : vector<1x128x128xf32> to vector<128x128xf32>
    %c11_i32 = arith.constant 11 : i32
    %70 = tpu.dynamic_rotate %10 by %c11_i32 dim 0 : vector<128x64xf32>, i32 -> vector<128x64xf32>
    %c4 = arith.constant 4 : index
    %c0_63 = arith.constant 0 : index
    %c0_64 = arith.constant 0 : index
    %71 = vector.load %arg3[%c4, %c0_63, %c0_64] : memref<31x128x1xf32, #tpu.memory_space<vmem>>, vector<1x128x1xf32>
    %72 = vector.shape_cast %71 : vector<1x128x1xf32> to vector<128x1xf32>
    %73 = vector.broadcast %72 : vector<128x1xf32> to vector<128x64xf32>
    %74 = arith.mulf %70, %73 : vector<128x64xf32>
    %75 = arith.truncf %74 : vector<128x64xf32> to vector<128x64xbf16>
    %c4_65 = arith.constant 4 : index
    %c0_66 = arith.constant 0 : index
    %c0_67 = arith.constant 0 : index
    %76 = vector.load %arg2[%c4_65, %c0_66, %c0_67] : memref<31x64x128xbf16, #tpu.memory_space<vmem>>, vector<1x64x128xbf16>
    %77 = vector.shape_cast %76 : vector<1x64x128xbf16> to vector<64x128xbf16>
    %cst_68 = arith.constant dense<0.000000e+00> : vector<128x128xf32>
    %78 = tpu.matmul %75, %77, %cst_68 {dimension_numbers = #tpu.dot_dimension_numbers<[1], [0], [0], [1], [0, 0, 1, 1], [], []>} : vector<128x64xbf16>, vector<64x128xbf16>, vector<128x128xf32> -> vector<128x128xf32>
    %79 = arith.addf %69, %78 : vector<128x128xf32>
    %c0_69 = arith.constant 0 : index
    %c0_70 = arith.constant 0 : index
    %c0_71 = arith.constant 0 : index
    %80 = vector.load %arg6[%c0_69, %c0_70, %c0_71] : memref<1x128x128xf32, #tpu.memory_space<vmem>>, vector<1x128x128xf32>
    %81 = vector.shape_cast %80 : vector<1x128x128xf32> to vector<128x128xf32>
    %82 = vector.shape_cast %79 : vector<128x128xf32> to vector<1x128x128xf32>
    tpu.vector_store %arg6[%c0_69, %c0_70, %c0_71], %82 {strides = array<i32>} : memref<1x128x128xf32, #tpu.memory_space<vmem>>, vector<1x128x128xf32>,
    %c0_72 = arith.constant 0 : index
    %c0_73 = arith.constant 0 : index
    %c0_74 = arith.constant 0 : index
    %83 = vector.load %arg6[%c0_72, %c0_73, %c0_74] : memref<1x128x128xf32, #tpu.memory_space<vmem>>, vector<1x128x128xf32>
    %84 = vector.shape_cast %83 : vector<1x128x128xf32> to vector<128x128xf32>
    %c10_i32 = arith.constant 10 : i32
    %85 = tpu.dynamic_rotate %10 by %c10_i32 dim 0 : vector<128x64xf32>, i32 -> vector<128x64xf32>
    %c5 = arith.constant 5 : index
    %c0_75 = arith.constant 0 : index
    %c0_76 = arith.constant 0 : index
    %86 = vector.load %arg3[%c5, %c0_75, %c0_76] : memref<31x128x1xf32, #tpu.memory_space<vmem>>, vector<1x128x1xf32>
    %87 = vector.shape_cast %86 : vector<1x128x1xf32> to vector<128x1xf32>
    %88 = vector.broadcast %87 : vector<128x1xf32> to vector<128x64xf32>
    %89 = arith.mulf %85, %88 : vector<128x64xf32>
    %90 = arith.truncf %89 : vector<128x64xf32> to vector<128x64xbf16>
    %c5_77 = arith.constant 5 : index
    %c0_78 = arith.constant 0 : index
    %c0_79 = arith.constant 0 : index
    %91 = vector.load %arg2[%c5_77, %c0_78, %c0_79] : memref<31x64x128xbf16, #tpu.memory_space<vmem>>, vector<1x64x128xbf16>
    %92 = vector.shape_cast %91 : vector<1x64x128xbf16> to vector<64x128xbf16>
    %cst_80 = arith.constant dense<0.000000e+00> : vector<128x128xf32>
    %93 = tpu.matmul %90, %92, %cst_80 {dimension_numbers = #tpu.dot_dimension_numbers<[1], [0], [0], [1], [0, 0, 1, 1], [], []>} : vector<128x64xbf16>, vector<64x128xbf16>, vector<128x128xf32> -> vector<128x128xf32>
    %94 = arith.addf %84, %93 : vector<128x128xf32>
    %c0_81 = arith.constant 0 : index
    %c0_82 = arith.constant 0 : index
    %c0_83 = arith.constant 0 : index
    %95 = vector.load %arg6[%c0_81, %c0_82, %c0_83] : memref<1x128x128xf32, #tpu.memory_space<vmem>>, vector<1x128x128xf32>
    %96 = vector.shape_cast %95 : vector<1x128x128xf32> to vector<128x128xf32>
    %97 = vector.shape_cast %94 : vector<128x128xf32> to vector<1x128x128xf32>
    tpu.vector_store %arg6[%c0_81, %c0_82, %c0_83], %97 {strides = array<i32>} : memref<1x128x128xf32, #tpu.memory_space<vmem>>, vector<1x128x128xf32>,
    %c0_84 = arith.constant 0 : index
    %c0_85 = arith.constant 0 : index
    %c0_86 = arith.constant 0 : index
    %98 = vector.load %arg6[%c0_84, %c0_85, %c0_86] : memref<1x128x128xf32, #tpu.memory_space<vmem>>, vector<1x128x128xf32>
    %99 = vector.shape_cast %98 : vector<1x128x128xf32> to vector<128x128xf32>
    %c9_i32 = arith.constant 9 : i32
    %100 = tpu.dynamic_rotate %10 by %c9_i32 dim 0 : vector<128x64xf32>, i32 -> vector<128x64xf32>
    %c6 = arith.constant 6 : index
    %c0_87 = arith.constant 0 : index
    %c0_88 = arith.constant 0 : index
    %101 = vector.load %arg3[%c6, %c0_87, %c0_88] : memref<31x128x1xf32, #tpu.memory_space<vmem>>, vector<1x128x1xf32>
    %102 = vector.shape_cast %101 : vector<1x128x1xf32> to vector<128x1xf32>
    %103 = vector.broadcast %102 : vector<128x1xf32> to vector<128x64xf32>
    %104 = arith.mulf %100, %103 : vector<128x64xf32>
    %105 = arith.truncf %104 : vector<128x64xf32> to vector<128x64xbf16>
    %c6_89 = arith.constant 6 : index
    %c0_90 = arith.constant 0 : index
    %c0_91 = arith.constant 0 : index
    %106 = vector.load %arg2[%c6_89, %c0_90, %c0_91] : memref<31x64x128xbf16, #tpu.memory_space<vmem>>, vector<1x64x128xbf16>
    %107 = vector.shape_cast %106 : vector<1x64x128xbf16> to vector<64x128xbf16>
    %cst_92 = arith.constant dense<0.000000e+00> : vector<128x128xf32>
    %108 = tpu.matmul %105, %107, %cst_92 {dimension_numbers = #tpu.dot_dimension_numbers<[1], [0], [0], [1], [0, 0, 1, 1], [], []>} : vector<128x64xbf16>, vector<64x128xbf16>, vector<128x128xf32> -> vector<128x128xf32>
    %109 = arith.addf %99, %108 : vector<128x128xf32>
    %c0_93 = arith.constant 0 : index
    %c0_94 = arith.constant 0 : index
    %c0_95 = arith.constant 0 : index
    %110 = vector.load %arg6[%c0_93, %c0_94, %c0_95] : memref<1x128x128xf32, #tpu.memory_space<vmem>>, vector<1x128x128xf32>
    %111 = vector.shape_cast %110 : vector<1x128x128xf32> to vector<128x128xf32>
    %112 = vector.shape_cast %109 : vector<128x128xf32> to vector<1x128x128xf32>
    tpu.vector_store %arg6[%c0_93, %c0_94, %c0_95], %112 {strides = array<i32>} : memref<1x128x128xf32, #tpu.memory_space<vmem>>, vector<1x128x128xf32>,
    %c0_96 = arith.constant 0 : index
    %c0_97 = arith.constant 0 : index
    %c0_98 = arith.constant 0 : index
    %113 = vector.load %arg6[%c0_96, %c0_97, %c0_98] : memref<1x128x128xf32, #tpu.memory_space<vmem>>, vector<1x128x128xf32>
    %114 = vector.shape_cast %113 : vector<1x128x128xf32> to vector<128x128xf32>
    %c8_i32 = arith.constant 8 : i32
    %115 = tpu.dynamic_rotate %10 by %c8_i32 dim 0 : vector<128x64xf32>, i32 -> vector<128x64xf32>
    %c7 = arith.constant 7 : index
    %c0_99 = arith.constant 0 : index
    %c0_100 = arith.constant 0 : index
    %116 = vector.load %arg3[%c7, %c0_99, %c0_100] : memref<31x128x1xf32, #tpu.memory_space<vmem>>, vector<1x128x1xf32>
    %117 = vector.shape_cast %116 : vector<1x128x1xf32> to vector<128x1xf32>
    %118 = vector.broadcast %117 : vector<128x1xf32> to vector<128x64xf32>
    %119 = arith.mulf %115, %118 : vector<128x64xf32>
    %120 = arith.truncf %119 : vector<128x64xf32> to vector<128x64xbf16>
    %c7_101 = arith.constant 7 : index
    %c0_102 = arith.constant 0 : index
    %c0_103 = arith.constant 0 : index
    %121 = vector.load %arg2[%c7_101, %c0_102, %c0_103] : memref<31x64x128xbf16, #tpu.memory_space<vmem>>, vector<1x64x128xbf16>
    %122 = vector.shape_cast %121 : vector<1x64x128xbf16> to vector<64x128xbf16>
    %cst_104 = arith.constant dense<0.000000e+00> : vector<128x128xf32>
    %123 = tpu.matmul %120, %122, %cst_104 {dimension_numbers = #tpu.dot_dimension_numbers<[1], [0], [0], [1], [0, 0, 1, 1], [], []>} : vector<128x64xbf16>, vector<64x128xbf16>, vector<128x128xf32> -> vector<128x128xf32>
    %124 = arith.addf %114, %123 : vector<128x128xf32>
    %c0_105 = arith.constant 0 : index
    %c0_106 = arith.constant 0 : index
    %c0_107 = arith.constant 0 : index
    %125 = vector.load %arg6[%c0_105, %c0_106, %c0_107] : memref<1x128x128xf32, #tpu.memory_space<vmem>>, vector<1x128x128xf32>
    %126 = vector.shape_cast %125 : vector<1x128x128xf32> to vector<128x128xf32>
    %127 = vector.shape_cast %124 : vector<128x128xf32> to vector<1x128x128xf32>
    tpu.vector_store %arg6[%c0_105, %c0_106, %c0_107], %127 {strides = array<i32>} : memref<1x128x128xf32, #tpu.memory_space<vmem>>, vector<1x128x128xf32>,
    %c0_108 = arith.constant 0 : index
    %c0_109 = arith.constant 0 : index
    %c0_110 = arith.constant 0 : index
    %128 = vector.load %arg6[%c0_108, %c0_109, %c0_110] : memref<1x128x128xf32, #tpu.memory_space<vmem>>, vector<1x128x128xf32>
    %129 = vector.shape_cast %128 : vector<1x128x128xf32> to vector<128x128xf32>
    %c7_i32 = arith.constant 7 : i32
    %130 = tpu.dynamic_rotate %10 by %c7_i32 dim 0 : vector<128x64xf32>, i32 -> vector<128x64xf32>
    %c8 = arith.constant 8 : index
    %c0_111 = arith.constant 0 : index
    %c0_112 = arith.constant 0 : index
    %131 = vector.load %arg3[%c8, %c0_111, %c0_112] : memref<31x128x1xf32, #tpu.memory_space<vmem>>, vector<1x128x1xf32>
    %132 = vector.shape_cast %131 : vector<1x128x1xf32> to vector<128x1xf32>
    %133 = vector.broadcast %132 : vector<128x1xf32> to vector<128x64xf32>
    %134 = arith.mulf %130, %133 : vector<128x64xf32>
    %135 = arith.truncf %134 : vector<128x64xf32> to vector<128x64xbf16>
    %c8_113 = arith.constant 8 : index
    %c0_114 = arith.constant 0 : index
    %c0_115 = arith.constant 0 : index
    %136 = vector.load %arg2[%c8_113, %c0_114, %c0_115] : memref<31x64x128xbf16, #tpu.memory_space<vmem>>, vector<1x64x128xbf16>
    %137 = vector.shape_cast %136 : vector<1x64x128xbf16> to vector<64x128xbf16>
    %cst_116 = arith.constant dense<0.000000e+00> : vector<128x128xf32>
    %138 = tpu.matmul %135, %137, %cst_116 {dimension_numbers = #tpu.dot_dimension_numbers<[1], [0], [0], [1], [0, 0, 1, 1], [], []>} : vector<128x64xbf16>, vector<64x128xbf16>, vector<128x128xf32> -> vector<128x128xf32>
    %139 = arith.addf %129, %138 : vector<128x128xf32>
    %c0_117 = arith.constant 0 : index
    %c0_118 = arith.constant 0 : index
    %c0_119 = arith.constant 0 : index
    %140 = vector.load %arg6[%c0_117, %c0_118, %c0_119] : memref<1x128x128xf32, #tpu.memory_space<vmem>>, vector<1x128x128xf32>
    %141 = vector.shape_cast %140 : vector<1x128x128xf32> to vector<128x128xf32>
    %142 = vector.shape_cast %139 : vector<128x128xf32> to vector<1x128x128xf32>
    tpu.vector_store %arg6[%c0_117, %c0_118, %c0_119], %142 {strides = array<i32>} : memref<1x128x128xf32, #tpu.memory_space<vmem>>, vector<1x128x128xf32>,
    %c0_120 = arith.constant 0 : index
    %c0_121 = arith.constant 0 : index
    %c0_122 = arith.constant 0 : index
    %143 = vector.load %arg6[%c0_120, %c0_121, %c0_122] : memref<1x128x128xf32, #tpu.memory_space<vmem>>, vector<1x128x128xf32>
    %144 = vector.shape_cast %143 : vector<1x128x128xf32> to vector<128x128xf32>
    %c6_i32 = arith.constant 6 : i32
    %145 = tpu.dynamic_rotate %10 by %c6_i32 dim 0 : vector<128x64xf32>, i32 -> vector<128x64xf32>
    %c9 = arith.constant 9 : index
    %c0_123 = arith.constant 0 : index
    %c0_124 = arith.constant 0 : index
    %146 = vector.load %arg3[%c9, %c0_123, %c0_124] : memref<31x128x1xf32, #tpu.memory_space<vmem>>, vector<1x128x1xf32>
    %147 = vector.shape_cast %146 : vector<1x128x1xf32> to vector<128x1xf32>
    %148 = vector.broadcast %147 : vector<128x1xf32> to vector<128x64xf32>
    %149 = arith.mulf %145, %148 : vector<128x64xf32>
    %150 = arith.truncf %149 : vector<128x64xf32> to vector<128x64xbf16>
    %c9_125 = arith.constant 9 : index
    %c0_126 = arith.constant 0 : index
    %c0_127 = arith.constant 0 : index
    %151 = vector.load %arg2[%c9_125, %c0_126, %c0_127] : memref<31x64x128xbf16, #tpu.memory_space<vmem>>, vector<1x64x128xbf16>
    %152 = vector.shape_cast %151 : vector<1x64x128xbf16> to vector<64x128xbf16>
    %cst_128 = arith.constant dense<0.000000e+00> : vector<128x128xf32>
    %153 = tpu.matmul %150, %152, %cst_128 {dimension_numbers = #tpu.dot_dimension_numbers<[1], [0], [0], [1], [0, 0, 1, 1], [], []>} : vector<128x64xbf16>, vector<64x128xbf16>, vector<128x128xf32> -> vector<128x128xf32>
    %154 = arith.addf %144, %153 : vector<128x128xf32>
    %c0_129 = arith.constant 0 : index
    %c0_130 = arith.constant 0 : index
    %c0_131 = arith.constant 0 : index
    %155 = vector.load %arg6[%c0_129, %c0_130, %c0_131] : memref<1x128x128xf32, #tpu.memory_space<vmem>>, vector<1x128x128xf32>
    %156 = vector.shape_cast %155 : vector<1x128x128xf32> to vector<128x128xf32>
    %157 = vector.shape_cast %154 : vector<128x128xf32> to vector<1x128x128xf32>
    tpu.vector_store %arg6[%c0_129, %c0_130, %c0_131], %157 {strides = array<i32>} : memref<1x128x128xf32, #tpu.memory_space<vmem>>, vector<1x128x128xf32>,
    %c0_132 = arith.constant 0 : index
    %c0_133 = arith.constant 0 : index
    %c0_134 = arith.constant 0 : index
    %158 = vector.load %arg6[%c0_132, %c0_133, %c0_134] : memref<1x128x128xf32, #tpu.memory_space<vmem>>, vector<1x128x128xf32>
    %159 = vector.shape_cast %158 : vector<1x128x128xf32> to vector<128x128xf32>
    %c5_i32 = arith.constant 5 : i32
    %160 = tpu.dynamic_rotate %10 by %c5_i32 dim 0 : vector<128x64xf32>, i32 -> vector<128x64xf32>
    %c10 = arith.constant 10 : index
    %c0_135 = arith.constant 0 : index
    %c0_136 = arith.constant 0 : index
    %161 = vector.load %arg3[%c10, %c0_135, %c0_136] : memref<31x128x1xf32, #tpu.memory_space<vmem>>, vector<1x128x1xf32>
    %162 = vector.shape_cast %161 : vector<1x128x1xf32> to vector<128x1xf32>
    %163 = vector.broadcast %162 : vector<128x1xf32> to vector<128x64xf32>
    %164 = arith.mulf %160, %163 : vector<128x64xf32>
    %165 = arith.truncf %164 : vector<128x64xf32> to vector<128x64xbf16>
    %c10_137 = arith.constant 10 : index
    %c0_138 = arith.constant 0 : index
    %c0_139 = arith.constant 0 : index
    %166 = vector.load %arg2[%c10_137, %c0_138, %c0_139] : memref<31x64x128xbf16, #tpu.memory_space<vmem>>, vector<1x64x128xbf16>
    %167 = vector.shape_cast %166 : vector<1x64x128xbf16> to vector<64x128xbf16>
    %cst_140 = arith.constant dense<0.000000e+00> : vector<128x128xf32>
    %168 = tpu.matmul %165, %167, %cst_140 {dimension_numbers = #tpu.dot_dimension_numbers<[1], [0], [0], [1], [0, 0, 1, 1], [], []>} : vector<128x64xbf16>, vector<64x128xbf16>, vector<128x128xf32> -> vector<128x128xf32>
    %169 = arith.addf %159, %168 : vector<128x128xf32>
    %c0_141 = arith.constant 0 : index
    %c0_142 = arith.constant 0 : index
    %c0_143 = arith.constant 0 : index
    %170 = vector.load %arg6[%c0_141, %c0_142, %c0_143] : memref<1x128x128xf32, #tpu.memory_space<vmem>>, vector<1x128x128xf32>
    %171 = vector.shape_cast %170 : vector<1x128x128xf32> to vector<128x128xf32>
    %172 = vector.shape_cast %169 : vector<128x128xf32> to vector<1x128x128xf32>
    tpu.vector_store %arg6[%c0_141, %c0_142, %c0_143], %172 {strides = array<i32>} : memref<1x128x128xf32, #tpu.memory_space<vmem>>, vector<1x128x128xf32>,
    %c0_144 = arith.constant 0 : index
    %c0_145 = arith.constant 0 : index
    %c0_146 = arith.constant 0 : index
    %173 = vector.load %arg6[%c0_144, %c0_145, %c0_146] : memref<1x128x128xf32, #tpu.memory_space<vmem>>, vector<1x128x128xf32>
    %174 = vector.shape_cast %173 : vector<1x128x128xf32> to vector<128x128xf32>
    %c4_i32 = arith.constant 4 : i32
    %175 = tpu.dynamic_rotate %10 by %c4_i32 dim 0 : vector<128x64xf32>, i32 -> vector<128x64xf32>
    %c11 = arith.constant 11 : index
    %c0_147 = arith.constant 0 : index
    %c0_148 = arith.constant 0 : index
    %176 = vector.load %arg3[%c11, %c0_147, %c0_148] : memref<31x128x1xf32, #tpu.memory_space<vmem>>, vector<1x128x1xf32>
    %177 = vector.shape_cast %176 : vector<1x128x1xf32> to vector<128x1xf32>
    %178 = vector.broadcast %177 : vector<128x1xf32> to vector<128x64xf32>
    %179 = arith.mulf %175, %178 : vector<128x64xf32>
    %180 = arith.truncf %179 : vector<128x64xf32> to vector<128x64xbf16>
    %c11_149 = arith.constant 11 : index
    %c0_150 = arith.constant 0 : index
    %c0_151 = arith.constant 0 : index
    %181 = vector.load %arg2[%c11_149, %c0_150, %c0_151] : memref<31x64x128xbf16, #tpu.memory_space<vmem>>, vector<1x64x128xbf16>
    %182 = vector.shape_cast %181 : vector<1x64x128xbf16> to vector<64x128xbf16>
    %cst_152 = arith.constant dense<0.000000e+00> : vector<128x128xf32>
    %183 = tpu.matmul %180, %182, %cst_152 {dimension_numbers = #tpu.dot_dimension_numbers<[1], [0], [0], [1], [0, 0, 1, 1], [], []>} : vector<128x64xbf16>, vector<64x128xbf16>, vector<128x128xf32> -> vector<128x128xf32>
    %184 = arith.addf %174, %183 : vector<128x128xf32>
    %c0_153 = arith.constant 0 : index
    %c0_154 = arith.constant 0 : index
    %c0_155 = arith.constant 0 : index
    %185 = vector.load %arg6[%c0_153, %c0_154, %c0_155] : memref<1x128x128xf32, #tpu.memory_space<vmem>>, vector<1x128x128xf32>
    %186 = vector.shape_cast %185 : vector<1x128x128xf32> to vector<128x128xf32>
    %187 = vector.shape_cast %184 : vector<128x128xf32> to vector<1x128x128xf32>
    tpu.vector_store %arg6[%c0_153, %c0_154, %c0_155], %187 {strides = array<i32>} : memref<1x128x128xf32, #tpu.memory_space<vmem>>, vector<1x128x128xf32>,
    %c0_156 = arith.constant 0 : index
    %c0_157 = arith.constant 0 : index
    %c0_158 = arith.constant 0 : index
    %188 = vector.load %arg6[%c0_156, %c0_157, %c0_158] : memref<1x128x128xf32, #tpu.memory_space<vmem>>, vector<1x128x128xf32>
    %189 = vector.shape_cast %188 : vector<1x128x128xf32> to vector<128x128xf32>
    %c3_i32 = arith.constant 3 : i32
    %190 = tpu.dynamic_rotate %10 by %c3_i32 dim 0 : vector<128x64xf32>, i32 -> vector<128x64xf32>
    %c12 = arith.constant 12 : index
    %c0_159 = arith.constant 0 : index
    %c0_160 = arith.constant 0 : index
    %191 = vector.load %arg3[%c12, %c0_159, %c0_160] : memref<31x128x1xf32, #tpu.memory_space<vmem>>, vector<1x128x1xf32>
    %192 = vector.shape_cast %191 : vector<1x128x1xf32> to vector<128x1xf32>
    %193 = vector.broadcast %192 : vector<128x1xf32> to vector<128x64xf32>
    %194 = arith.mulf %190, %193 : vector<128x64xf32>
    %195 = arith.truncf %194 : vector<128x64xf32> to vector<128x64xbf16>
    %c12_161 = arith.constant 12 : index
    %c0_162 = arith.constant 0 : index
    %c0_163 = arith.constant 0 : index
    %196 = vector.load %arg2[%c12_161, %c0_162, %c0_163] : memref<31x64x128xbf16, #tpu.memory_space<vmem>>, vector<1x64x128xbf16>
    %197 = vector.shape_cast %196 : vector<1x64x128xbf16> to vector<64x128xbf16>
    %cst_164 = arith.constant dense<0.000000e+00> : vector<128x128xf32>
    %198 = tpu.matmul %195, %197, %cst_164 {dimension_numbers = #tpu.dot_dimension_numbers<[1], [0], [0], [1], [0, 0, 1, 1], [], []>} : vector<128x64xbf16>, vector<64x128xbf16>, vector<128x128xf32> -> vector<128x128xf32>
    %199 = arith.addf %189, %198 : vector<128x128xf32>
    %c0_165 = arith.constant 0 : index
    %c0_166 = arith.constant 0 : index
    %c0_167 = arith.constant 0 : index
    %200 = vector.load %arg6[%c0_165, %c0_166, %c0_167] : memref<1x128x128xf32, #tpu.memory_space<vmem>>, vector<1x128x128xf32>
    %201 = vector.shape_cast %200 : vector<1x128x128xf32> to vector<128x128xf32>
    %202 = vector.shape_cast %199 : vector<128x128xf32> to vector<1x128x128xf32>
    tpu.vector_store %arg6[%c0_165, %c0_166, %c0_167], %202 {strides = array<i32>} : memref<1x128x128xf32, #tpu.memory_space<vmem>>, vector<1x128x128xf32>,
    %c0_168 = arith.constant 0 : index
    %c0_169 = arith.constant 0 : index
    %c0_170 = arith.constant 0 : index
    %203 = vector.load %arg6[%c0_168, %c0_169, %c0_170] : memref<1x128x128xf32, #tpu.memory_space<vmem>>, vector<1x128x128xf32>
    %204 = vector.shape_cast %203 : vector<1x128x128xf32> to vector<128x128xf32>
    %c2_i32 = arith.constant 2 : i32
    %205 = tpu.dynamic_rotate %10 by %c2_i32 dim 0 : vector<128x64xf32>, i32 -> vector<128x64xf32>
    %c13 = arith.constant 13 : index
    %c0_171 = arith.constant 0 : index
    %c0_172 = arith.constant 0 : index
    %206 = vector.load %arg3[%c13, %c0_171, %c0_172] : memref<31x128x1xf32, #tpu.memory_space<vmem>>, vector<1x128x1xf32>
    %207 = vector.shape_cast %206 : vector<1x128x1xf32> to vector<128x1xf32>
    %208 = vector.broadcast %207 : vector<128x1xf32> to vector<128x64xf32>
    %209 = arith.mulf %205, %208 : vector<128x64xf32>
    %210 = arith.truncf %209 : vector<128x64xf32> to vector<128x64xbf16>
    %c13_173 = arith.constant 13 : index
    %c0_174 = arith.constant 0 : index
    %c0_175 = arith.constant 0 : index
    %211 = vector.load %arg2[%c13_173, %c0_174, %c0_175] : memref<31x64x128xbf16, #tpu.memory_space<vmem>>, vector<1x64x128xbf16>
    %212 = vector.shape_cast %211 : vector<1x64x128xbf16> to vector<64x128xbf16>
    %cst_176 = arith.constant dense<0.000000e+00> : vector<128x128xf32>
    %213 = tpu.matmul %210, %212, %cst_176 {dimension_numbers = #tpu.dot_dimension_numbers<[1], [0], [0], [1], [0, 0, 1, 1], [], []>} : vector<128x64xbf16>, vector<64x128xbf16>, vector<128x128xf32> -> vector<128x128xf32>
    %214 = arith.addf %204, %213 : vector<128x128xf32>
    %c0_177 = arith.constant 0 : index
    %c0_178 = arith.constant 0 : index
    %c0_179 = arith.constant 0 : index
    %215 = vector.load %arg6[%c0_177, %c0_178, %c0_179] : memref<1x128x128xf32, #tpu.memory_space<vmem>>, vector<1x128x128xf32>
    %216 = vector.shape_cast %215 : vector<1x128x128xf32> to vector<128x128xf32>
    %217 = vector.shape_cast %214 : vector<128x128xf32> to vector<1x128x128xf32>
    tpu.vector_store %arg6[%c0_177, %c0_178, %c0_179], %217 {strides = array<i32>} : memref<1x128x128xf32, #tpu.memory_space<vmem>>, vector<1x128x128xf32>,
    %c0_180 = arith.constant 0 : index
    %c0_181 = arith.constant 0 : index
    %c0_182 = arith.constant 0 : index
    %218 = vector.load %arg6[%c0_180, %c0_181, %c0_182] : memref<1x128x128xf32, #tpu.memory_space<vmem>>, vector<1x128x128xf32>
    %219 = vector.shape_cast %218 : vector<1x128x128xf32> to vector<128x128xf32>
    %c1_i32 = arith.constant 1 : i32
    %220 = tpu.dynamic_rotate %10 by %c1_i32 dim 0 : vector<128x64xf32>, i32 -> vector<128x64xf32>
    %c14 = arith.constant 14 : index
    %c0_183 = arith.constant 0 : index
    %c0_184 = arith.constant 0 : index
    %221 = vector.load %arg3[%c14, %c0_183, %c0_184] : memref<31x128x1xf32, #tpu.memory_space<vmem>>, vector<1x128x1xf32>
    %222 = vector.shape_cast %221 : vector<1x128x1xf32> to vector<128x1xf32>
    %223 = vector.broadcast %222 : vector<128x1xf32> to vector<128x64xf32>
    %224 = arith.mulf %220, %223 : vector<128x64xf32>
    %225 = arith.truncf %224 : vector<128x64xf32> to vector<128x64xbf16>
    %c14_185 = arith.constant 14 : index
    %c0_186 = arith.constant 0 : index
    %c0_187 = arith.constant 0 : index
    %226 = vector.load %arg2[%c14_185, %c0_186, %c0_187] : memref<31x64x128xbf16, #tpu.memory_space<vmem>>, vector<1x64x128xbf16>
    %227 = vector.shape_cast %226 : vector<1x64x128xbf16> to vector<64x128xbf16>
    %cst_188 = arith.constant dense<0.000000e+00> : vector<128x128xf32>
    %228 = tpu.matmul %225, %227, %cst_188 {dimension_numbers = #tpu.dot_dimension_numbers<[1], [0], [0], [1], [0, 0, 1, 1], [], []>} : vector<128x64xbf16>, vector<64x128xbf16>, vector<128x128xf32> -> vector<128x128xf32>
    %229 = arith.addf %219, %228 : vector<128x128xf32>
    %c0_189 = arith.constant 0 : index
    %c0_190 = arith.constant 0 : index
    %c0_191 = arith.constant 0 : index
    %230 = vector.load %arg6[%c0_189, %c0_190, %c0_191] : memref<1x128x128xf32, #tpu.memory_space<vmem>>, vector<1x128x128xf32>
    %231 = vector.shape_cast %230 : vector<1x128x128xf32> to vector<128x128xf32>
    %232 = vector.shape_cast %229 : vector<128x128xf32> to vector<1x128x128xf32>
    tpu.vector_store %arg6[%c0_189, %c0_190, %c0_191], %232 {strides = array<i32>} : memref<1x128x128xf32, #tpu.memory_space<vmem>>, vector<1x128x128xf32>,
    %c0_192 = arith.constant 0 : index
    %c0_193 = arith.constant 0 : index
    %c0_194 = arith.constant 0 : index
    %233 = vector.load %arg6[%c0_192, %c0_193, %c0_194] : memref<1x128x128xf32, #tpu.memory_space<vmem>>, vector<1x128x128xf32>
    %234 = vector.shape_cast %233 : vector<1x128x128xf32> to vector<128x128xf32>
    %235 = arith.truncf %10 : vector<128x64xf32> to vector<128x64xbf16>
    %c15 = arith.constant 15 : index
    %c0_195 = arith.constant 0 : index
    %c0_196 = arith.constant 0 : index
    %236 = vector.load %arg2[%c15, %c0_195, %c0_196] : memref<31x64x128xbf16, #tpu.memory_space<vmem>>, vector<1x64x128xbf16>
    %237 = vector.shape_cast %236 : vector<1x64x128xbf16> to vector<64x128xbf16>
    %cst_197 = arith.constant dense<0.000000e+00> : vector<128x128xf32>
    %238 = tpu.matmul %235, %237, %cst_197 {dimension_numbers = #tpu.dot_dimension_numbers<[1], [0], [0], [1], [0, 0, 1, 1], [], []>} : vector<128x64xbf16>, vector<64x128xbf16>, vector<128x128xf32> -> vector<128x128xf32>
    %239 = arith.addf %234, %238 : vector<128x128xf32>
    %c0_198 = arith.constant 0 : index
    %c0_199 = arith.constant 0 : index
    %c0_200 = arith.constant 0 : index
    %240 = vector.load %arg6[%c0_198, %c0_199, %c0_200] : memref<1x128x128xf32, #tpu.memory_space<vmem>>, vector<1x128x128xf32>
    %241 = vector.shape_cast %240 : vector<1x128x128xf32> to vector<128x128xf32>
    %242 = vector.shape_cast %239 : vector<128x128xf32> to vector<1x128x128xf32>
    tpu.vector_store %arg6[%c0_198, %c0_199, %c0_200], %242 {strides = array<i32>} : memref<1x128x128xf32, #tpu.memory_space<vmem>>, vector<1x128x128xf32>,
    %c0_201 = arith.constant 0 : index
    %c0_202 = arith.constant 0 : index
    %c0_203 = arith.constant 0 : index
    %243 = vector.load %arg6[%c0_201, %c0_202, %c0_203] : memref<1x128x128xf32, #tpu.memory_space<vmem>>, vector<1x128x128xf32>
    %244 = vector.shape_cast %243 : vector<1x128x128xf32> to vector<128x128xf32>
    %c127_i32 = arith.constant 127 : i32
    %245 = tpu.dynamic_rotate %10 by %c127_i32 dim 0 : vector<128x64xf32>, i32 -> vector<128x64xf32>
    %c16 = arith.constant 16 : index
    %c0_204 = arith.constant 0 : index
    %c0_205 = arith.constant 0 : index
    %246 = vector.load %arg3[%c16, %c0_204, %c0_205] : memref<31x128x1xf32, #tpu.memory_space<vmem>>, vector<1x128x1xf32>
    %247 = vector.shape_cast %246 : vector<1x128x1xf32> to vector<128x1xf32>
    %248 = vector.broadcast %247 : vector<128x1xf32> to vector<128x64xf32>
    %249 = arith.mulf %245, %248 : vector<128x64xf32>
    %250 = arith.truncf %249 : vector<128x64xf32> to vector<128x64xbf16>
    %c16_206 = arith.constant 16 : index
    %c0_207 = arith.constant 0 : index
    %c0_208 = arith.constant 0 : index
    %251 = vector.load %arg2[%c16_206, %c0_207, %c0_208] : memref<31x64x128xbf16, #tpu.memory_space<vmem>>, vector<1x64x128xbf16>
    %252 = vector.shape_cast %251 : vector<1x64x128xbf16> to vector<64x128xbf16>
    %cst_209 = arith.constant dense<0.000000e+00> : vector<128x128xf32>
    %253 = tpu.matmul %250, %252, %cst_209 {dimension_numbers = #tpu.dot_dimension_numbers<[1], [0], [0], [1], [0, 0, 1, 1], [], []>} : vector<128x64xbf16>, vector<64x128xbf16>, vector<128x128xf32> -> vector<128x128xf32>
    %254 = arith.addf %244, %253 : vector<128x128xf32>
    %c0_210 = arith.constant 0 : index
    %c0_211 = arith.constant 0 : index
    %c0_212 = arith.constant 0 : index
    %255 = vector.load %arg6[%c0_210, %c0_211, %c0_212] : memref<1x128x128xf32, #tpu.memory_space<vmem>>, vector<1x128x128xf32>
    %256 = vector.shape_cast %255 : vector<1x128x128xf32> to vector<128x128xf32>
    %257 = vector.shape_cast %254 : vector<128x128xf32> to vector<1x128x128xf32>
    tpu.vector_store %arg6[%c0_210, %c0_211, %c0_212], %257 {strides = array<i32>} : memref<1x128x128xf32, #tpu.memory_space<vmem>>, vector<1x128x128xf32>,
    %c0_213 = arith.constant 0 : index
    %c0_214 = arith.constant 0 : index
    %c0_215 = arith.constant 0 : index
    %258 = vector.load %arg6[%c0_213, %c0_214, %c0_215] : memref<1x128x128xf32, #tpu.memory_space<vmem>>, vector<1x128x128xf32>
    %259 = vector.shape_cast %258 : vector<1x128x128xf32> to vector<128x128xf32>
    %c126_i32 = arith.constant 126 : i32
    %260 = tpu.dynamic_rotate %10 by %c126_i32 dim 0 : vector<128x64xf32>, i32 -> vector<128x64xf32>
    %c17 = arith.constant 17 : index
    %c0_216 = arith.constant 0 : index
    %c0_217 = arith.constant 0 : index
    %261 = vector.load %arg3[%c17, %c0_216, %c0_217] : memref<31x128x1xf32, #tpu.memory_space<vmem>>, vector<1x128x1xf32>
    %262 = vector.shape_cast %261 : vector<1x128x1xf32> to vector<128x1xf32>
    %263 = vector.broadcast %262 : vector<128x1xf32> to vector<128x64xf32>
    %264 = arith.mulf %260, %263 : vector<128x64xf32>
    %265 = arith.truncf %264 : vector<128x64xf32> to vector<128x64xbf16>
    %c17_218 = arith.constant 17 : index
    %c0_219 = arith.constant 0 : index
    %c0_220 = arith.constant 0 : index
    %266 = vector.load %arg2[%c17_218, %c0_219, %c0_220] : memref<31x64x128xbf16, #tpu.memory_space<vmem>>, vector<1x64x128xbf16>
    %267 = vector.shape_cast %266 : vector<1x64x128xbf16> to vector<64x128xbf16>
    %cst_221 = arith.constant dense<0.000000e+00> : vector<128x128xf32>
    %268 = tpu.matmul %265, %267, %cst_221 {dimension_numbers = #tpu.dot_dimension_numbers<[1], [0], [0], [1], [0, 0, 1, 1], [], []>} : vector<128x64xbf16>, vector<64x128xbf16>, vector<128x128xf32> -> vector<128x128xf32>
    %269 = arith.addf %259, %268 : vector<128x128xf32>
    %c0_222 = arith.constant 0 : index
    %c0_223 = arith.constant 0 : index
    %c0_224 = arith.constant 0 : index
    %270 = vector.load %arg6[%c0_222, %c0_223, %c0_224] : memref<1x128x128xf32, #tpu.memory_space<vmem>>, vector<1x128x128xf32>
    %271 = vector.shape_cast %270 : vector<1x128x128xf32> to vector<128x128xf32>
    %272 = vector.shape_cast %269 : vector<128x128xf32> to vector<1x128x128xf32>
    tpu.vector_store %arg6[%c0_222, %c0_223, %c0_224], %272 {strides = array<i32>} : memref<1x128x128xf32, #tpu.memory_space<vmem>>, vector<1x128x128xf32>,
    %c0_225 = arith.constant 0 : index
    %c0_226 = arith.constant 0 : index
    %c0_227 = arith.constant 0 : index
    %273 = vector.load %arg6[%c0_225, %c0_226, %c0_227] : memref<1x128x128xf32, #tpu.memory_space<vmem>>, vector<1x128x128xf32>
    %274 = vector.shape_cast %273 : vector<1x128x128xf32> to vector<128x128xf32>
    %c125_i32 = arith.constant 125 : i32
    %275 = tpu.dynamic_rotate %10 by %c125_i32 dim 0 : vector<128x64xf32>, i32 -> vector<128x64xf32>
    %c18 = arith.constant 18 : index
    %c0_228 = arith.constant 0 : index
    %c0_229 = arith.constant 0 : index
    %276 = vector.load %arg3[%c18, %c0_228, %c0_229] : memref<31x128x1xf32, #tpu.memory_space<vmem>>, vector<1x128x1xf32>
    %277 = vector.shape_cast %276 : vector<1x128x1xf32> to vector<128x1xf32>
    %278 = vector.broadcast %277 : vector<128x1xf32> to vector<128x64xf32>
    %279 = arith.mulf %275, %278 : vector<128x64xf32>
    %280 = arith.truncf %279 : vector<128x64xf32> to vector<128x64xbf16>
    %c18_230 = arith.constant 18 : index
    %c0_231 = arith.constant 0 : index
    %c0_232 = arith.constant 0 : index
    %281 = vector.load %arg2[%c18_230, %c0_231, %c0_232] : memref<31x64x128xbf16, #tpu.memory_space<vmem>>, vector<1x64x128xbf16>
    %282 = vector.shape_cast %281 : vector<1x64x128xbf16> to vector<64x128xbf16>
    %cst_233 = arith.constant dense<0.000000e+00> : vector<128x128xf32>
    %283 = tpu.matmul %280, %282, %cst_233 {dimension_numbers = #tpu.dot_dimension_numbers<[1], [0], [0], [1], [0, 0, 1, 1], [], []>} : vector<128x64xbf16>, vector<64x128xbf16>, vector<128x128xf32> -> vector<128x128xf32>
    %284 = arith.addf %274, %283 : vector<128x128xf32>
    %c0_234 = arith.constant 0 : index
    %c0_235 = arith.constant 0 : index
    %c0_236 = arith.constant 0 : index
    %285 = vector.load %arg6[%c0_234, %c0_235, %c0_236] : memref<1x128x128xf32, #tpu.memory_space<vmem>>, vector<1x128x128xf32>
    %286 = vector.shape_cast %285 : vector<1x128x128xf32> to vector<128x128xf32>
    %287 = vector.shape_cast %284 : vector<128x128xf32> to vector<1x128x128xf32>
    tpu.vector_store %arg6[%c0_234, %c0_235, %c0_236], %287 {strides = array<i32>} : memref<1x128x128xf32, #tpu.memory_space<vmem>>, vector<1x128x128xf32>,
    %c0_237 = arith.constant 0 : index
    %c0_238 = arith.constant 0 : index
    %c0_239 = arith.constant 0 : index
    %288 = vector.load %arg6[%c0_237, %c0_238, %c0_239] : memref<1x128x128xf32, #tpu.memory_space<vmem>>, vector<1x128x128xf32>
    %289 = vector.shape_cast %288 : vector<1x128x128xf32> to vector<128x128xf32>
    %c124_i32 = arith.constant 124 : i32
    %290 = tpu.dynamic_rotate %10 by %c124_i32 dim 0 : vector<128x64xf32>, i32 -> vector<128x64xf32>
    %c19 = arith.constant 19 : index
    %c0_240 = arith.constant 0 : index
    %c0_241 = arith.constant 0 : index
    %291 = vector.load %arg3[%c19, %c0_240, %c0_241] : memref<31x128x1xf32, #tpu.memory_space<vmem>>, vector<1x128x1xf32>
    %292 = vector.shape_cast %291 : vector<1x128x1xf32> to vector<128x1xf32>
    %293 = vector.broadcast %292 : vector<128x1xf32> to vector<128x64xf32>
    %294 = arith.mulf %290, %293 : vector<128x64xf32>
    %295 = arith.truncf %294 : vector<128x64xf32> to vector<128x64xbf16>
    %c19_242 = arith.constant 19 : index
    %c0_243 = arith.constant 0 : index
    %c0_244 = arith.constant 0 : index
    %296 = vector.load %arg2[%c19_242, %c0_243, %c0_244] : memref<31x64x128xbf16, #tpu.memory_space<vmem>>, vector<1x64x128xbf16>
    %297 = vector.shape_cast %296 : vector<1x64x128xbf16> to vector<64x128xbf16>
    %cst_245 = arith.constant dense<0.000000e+00> : vector<128x128xf32>
    %298 = tpu.matmul %295, %297, %cst_245 {dimension_numbers = #tpu.dot_dimension_numbers<[1], [0], [0], [1], [0, 0, 1, 1], [], []>} : vector<128x64xbf16>, vector<64x128xbf16>, vector<128x128xf32> -> vector<128x128xf32>
    %299 = arith.addf %289, %298 : vector<128x128xf32>
    %c0_246 = arith.constant 0 : index
    %c0_247 = arith.constant 0 : index
    %c0_248 = arith.constant 0 : index
    %300 = vector.load %arg6[%c0_246, %c0_247, %c0_248] : memref<1x128x128xf32, #tpu.memory_space<vmem>>, vector<1x128x128xf32>
    %301 = vector.shape_cast %300 : vector<1x128x128xf32> to vector<128x128xf32>
    %302 = vector.shape_cast %299 : vector<128x128xf32> to vector<1x128x128xf32>
    tpu.vector_store %arg6[%c0_246, %c0_247, %c0_248], %302 {strides = array<i32>} : memref<1x128x128xf32, #tpu.memory_space<vmem>>, vector<1x128x128xf32>,
    %c0_249 = arith.constant 0 : index
    %c0_250 = arith.constant 0 : index
    %c0_251 = arith.constant 0 : index
    %303 = vector.load %arg6[%c0_249, %c0_250, %c0_251] : memref<1x128x128xf32, #tpu.memory_space<vmem>>, vector<1x128x128xf32>
    %304 = vector.shape_cast %303 : vector<1x128x128xf32> to vector<128x128xf32>
    %c123_i32 = arith.constant 123 : i32
    %305 = tpu.dynamic_rotate %10 by %c123_i32 dim 0 : vector<128x64xf32>, i32 -> vector<128x64xf32>
    %c20 = arith.constant 20 : index
    %c0_252 = arith.constant 0 : index
    %c0_253 = arith.constant 0 : index
    %306 = vector.load %arg3[%c20, %c0_252, %c0_253] : memref<31x128x1xf32, #tpu.memory_space<vmem>>, vector<1x128x1xf32>
    %307 = vector.shape_cast %306 : vector<1x128x1xf32> to vector<128x1xf32>
    %308 = vector.broadcast %307 : vector<128x1xf32> to vector<128x64xf32>
    %309 = arith.mulf %305, %308 : vector<128x64xf32>
    %310 = arith.truncf %309 : vector<128x64xf32> to vector<128x64xbf16>
    %c20_254 = arith.constant 20 : index
    %c0_255 = arith.constant 0 : index
    %c0_256 = arith.constant 0 : index
    %311 = vector.load %arg2[%c20_254, %c0_255, %c0_256] : memref<31x64x128xbf16, #tpu.memory_space<vmem>>, vector<1x64x128xbf16>
    %312 = vector.shape_cast %311 : vector<1x64x128xbf16> to vector<64x128xbf16>
    %cst_257 = arith.constant dense<0.000000e+00> : vector<128x128xf32>
    %313 = tpu.matmul %310, %312, %cst_257 {dimension_numbers = #tpu.dot_dimension_numbers<[1], [0], [0], [1], [0, 0, 1, 1], [], []>} : vector<128x64xbf16>, vector<64x128xbf16>, vector<128x128xf32> -> vector<128x128xf32>
    %314 = arith.addf %304, %313 : vector<128x128xf32>
    %c0_258 = arith.constant 0 : index
    %c0_259 = arith.constant 0 : index
    %c0_260 = arith.constant 0 : index
    %315 = vector.load %arg6[%c0_258, %c0_259, %c0_260] : memref<1x128x128xf32, #tpu.memory_space<vmem>>, vector<1x128x128xf32>
    %316 = vector.shape_cast %315 : vector<1x128x128xf32> to vector<128x128xf32>
    %317 = vector.shape_cast %314 : vector<128x128xf32> to vector<1x128x128xf32>
    tpu.vector_store %arg6[%c0_258, %c0_259, %c0_260], %317 {strides = array<i32>} : memref<1x128x128xf32, #tpu.memory_space<vmem>>, vector<1x128x128xf32>,
    %c0_261 = arith.constant 0 : index
    %c0_262 = arith.constant 0 : index
    %c0_263 = arith.constant 0 : index
    %318 = vector.load %arg6[%c0_261, %c0_262, %c0_263] : memref<1x128x128xf32, #tpu.memory_space<vmem>>, vector<1x128x128xf32>
    %319 = vector.shape_cast %318 : vector<1x128x128xf32> to vector<128x128xf32>
    %c122_i32 = arith.constant 122 : i32
    %320 = tpu.dynamic_rotate %10 by %c122_i32 dim 0 : vector<128x64xf32>, i32 -> vector<128x64xf32>
    %c21 = arith.constant 21 : index
    %c0_264 = arith.constant 0 : index
    %c0_265 = arith.constant 0 : index
    %321 = vector.load %arg3[%c21, %c0_264, %c0_265] : memref<31x128x1xf32, #tpu.memory_space<vmem>>, vector<1x128x1xf32>
    %322 = vector.shape_cast %321 : vector<1x128x1xf32> to vector<128x1xf32>
    %323 = vector.broadcast %322 : vector<128x1xf32> to vector<128x64xf32>
    %324 = arith.mulf %320, %323 : vector<128x64xf32>
    %325 = arith.truncf %324 : vector<128x64xf32> to vector<128x64xbf16>
    %c21_266 = arith.constant 21 : index
    %c0_267 = arith.constant 0 : index
    %c0_268 = arith.constant 0 : index
    %326 = vector.load %arg2[%c21_266, %c0_267, %c0_268] : memref<31x64x128xbf16, #tpu.memory_space<vmem>>, vector<1x64x128xbf16>
    %327 = vector.shape_cast %326 : vector<1x64x128xbf16> to vector<64x128xbf16>
    %cst_269 = arith.constant dense<0.000000e+00> : vector<128x128xf32>
    %328 = tpu.matmul %325, %327, %cst_269 {dimension_numbers = #tpu.dot_dimension_numbers<[1], [0], [0], [1], [0, 0, 1, 1], [], []>} : vector<128x64xbf16>, vector<64x128xbf16>, vector<128x128xf32> -> vector<128x128xf32>
    %329 = arith.addf %319, %328 : vector<128x128xf32>
    %c0_270 = arith.constant 0 : index
    %c0_271 = arith.constant 0 : index
    %c0_272 = arith.constant 0 : index
    %330 = vector.load %arg6[%c0_270, %c0_271, %c0_272] : memref<1x128x128xf32, #tpu.memory_space<vmem>>, vector<1x128x128xf32>
    %331 = vector.shape_cast %330 : vector<1x128x128xf32> to vector<128x128xf32>
    %332 = vector.shape_cast %329 : vector<128x128xf32> to vector<1x128x128xf32>
    tpu.vector_store %arg6[%c0_270, %c0_271, %c0_272], %332 {strides = array<i32>} : memref<1x128x128xf32, #tpu.memory_space<vmem>>, vector<1x128x128xf32>,
    %c0_273 = arith.constant 0 : index
    %c0_274 = arith.constant 0 : index
    %c0_275 = arith.constant 0 : index
    %333 = vector.load %arg6[%c0_273, %c0_274, %c0_275] : memref<1x128x128xf32, #tpu.memory_space<vmem>>, vector<1x128x128xf32>
    %334 = vector.shape_cast %333 : vector<1x128x128xf32> to vector<128x128xf32>
    %c121_i32 = arith.constant 121 : i32
    %335 = tpu.dynamic_rotate %10 by %c121_i32 dim 0 : vector<128x64xf32>, i32 -> vector<128x64xf32>
    %c22 = arith.constant 22 : index
    %c0_276 = arith.constant 0 : index
    %c0_277 = arith.constant 0 : index
    %336 = vector.load %arg3[%c22, %c0_276, %c0_277] : memref<31x128x1xf32, #tpu.memory_space<vmem>>, vector<1x128x1xf32>
    %337 = vector.shape_cast %336 : vector<1x128x1xf32> to vector<128x1xf32>
    %338 = vector.broadcast %337 : vector<128x1xf32> to vector<128x64xf32>
    %339 = arith.mulf %335, %338 : vector<128x64xf32>
    %340 = arith.truncf %339 : vector<128x64xf32> to vector<128x64xbf16>
    %c22_278 = arith.constant 22 : index
    %c0_279 = arith.constant 0 : index
    %c0_280 = arith.constant 0 : index
    %341 = vector.load %arg2[%c22_278, %c0_279, %c0_280] : memref<31x64x128xbf16, #tpu.memory_space<vmem>>, vector<1x64x128xbf16>
    %342 = vector.shape_cast %341 : vector<1x64x128xbf16> to vector<64x128xbf16>
    %cst_281 = arith.constant dense<0.000000e+00> : vector<128x128xf32>
    %343 = tpu.matmul %340, %342, %cst_281 {dimension_numbers = #tpu.dot_dimension_numbers<[1], [0], [0], [1], [0, 0, 1, 1], [], []>} : vector<128x64xbf16>, vector<64x128xbf16>, vector<128x128xf32> -> vector<128x128xf32>
    %344 = arith.addf %334, %343 : vector<128x128xf32>
    %c0_282 = arith.constant 0 : index
    %c0_283 = arith.constant 0 : index
    %c0_284 = arith.constant 0 : index
    %345 = vector.load %arg6[%c0_282, %c0_283, %c0_284] : memref<1x128x128xf32, #tpu.memory_space<vmem>>, vector<1x128x128xf32>
    %346 = vector.shape_cast %345 : vector<1x128x128xf32> to vector<128x128xf32>
    %347 = vector.shape_cast %344 : vector<128x128xf32> to vector<1x128x128xf32>
    tpu.vector_store %arg6[%c0_282, %c0_283, %c0_284], %347 {strides = array<i32>} : memref<1x128x128xf32, #tpu.memory_space<vmem>>, vector<1x128x128xf32>,
    %c0_285 = arith.constant 0 : index
    %c0_286 = arith.constant 0 : index
    %c0_287 = arith.constant 0 : index
    %348 = vector.load %arg6[%c0_285, %c0_286, %c0_287] : memref<1x128x128xf32, #tpu.memory_space<vmem>>, vector<1x128x128xf32>
    %349 = vector.shape_cast %348 : vector<1x128x128xf32> to vector<128x128xf32>
    %c120_i32 = arith.constant 120 : i32
    %350 = tpu.dynamic_rotate %10 by %c120_i32 dim 0 : vector<128x64xf32>, i32 -> vector<128x64xf32>
    %c23 = arith.constant 23 : index
    %c0_288 = arith.constant 0 : index
    %c0_289 = arith.constant 0 : index
    %351 = vector.load %arg3[%c23, %c0_288, %c0_289] : memref<31x128x1xf32, #tpu.memory_space<vmem>>, vector<1x128x1xf32>
    %352 = vector.shape_cast %351 : vector<1x128x1xf32> to vector<128x1xf32>
    %353 = vector.broadcast %352 : vector<128x1xf32> to vector<128x64xf32>
    %354 = arith.mulf %350, %353 : vector<128x64xf32>
    %355 = arith.truncf %354 : vector<128x64xf32> to vector<128x64xbf16>
    %c23_290 = arith.constant 23 : index
    %c0_291 = arith.constant 0 : index
    %c0_292 = arith.constant 0 : index
    %356 = vector.load %arg2[%c23_290, %c0_291, %c0_292] : memref<31x64x128xbf16, #tpu.memory_space<vmem>>, vector<1x64x128xbf16>
    %357 = vector.shape_cast %356 : vector<1x64x128xbf16> to vector<64x128xbf16>
    %cst_293 = arith.constant dense<0.000000e+00> : vector<128x128xf32>
    %358 = tpu.matmul %355, %357, %cst_293 {dimension_numbers = #tpu.dot_dimension_numbers<[1], [0], [0], [1], [0, 0, 1, 1], [], []>} : vector<128x64xbf16>, vector<64x128xbf16>, vector<128x128xf32> -> vector<128x128xf32>
    %359 = arith.addf %349, %358 : vector<128x128xf32>
    %c0_294 = arith.constant 0 : index
    %c0_295 = arith.constant 0 : index
    %c0_296 = arith.constant 0 : index
    %360 = vector.load %arg6[%c0_294, %c0_295, %c0_296] : memref<1x128x128xf32, #tpu.memory_space<vmem>>, vector<1x128x128xf32>
    %361 = vector.shape_cast %360 : vector<1x128x128xf32> to vector<128x128xf32>
    %362 = vector.shape_cast %359 : vector<128x128xf32> to vector<1x128x128xf32>
    tpu.vector_store %arg6[%c0_294, %c0_295, %c0_296], %362 {strides = array<i32>} : memref<1x128x128xf32, #tpu.memory_space<vmem>>, vector<1x128x128xf32>,
    %c0_297 = arith.constant 0 : index
    %c0_298 = arith.constant 0 : index
    %c0_299 = arith.constant 0 : index
    %363 = vector.load %arg6[%c0_297, %c0_298, %c0_299] : memref<1x128x128xf32, #tpu.memory_space<vmem>>, vector<1x128x128xf32>
    %364 = vector.shape_cast %363 : vector<1x128x128xf32> to vector<128x128xf32>
    %c119_i32 = arith.constant 119 : i32
    %365 = tpu.dynamic_rotate %10 by %c119_i32 dim 0 : vector<128x64xf32>, i32 -> vector<128x64xf32>
    %c24 = arith.constant 24 : index
    %c0_300 = arith.constant 0 : index
    %c0_301 = arith.constant 0 : index
    %366 = vector.load %arg3[%c24, %c0_300, %c0_301] : memref<31x128x1xf32, #tpu.memory_space<vmem>>, vector<1x128x1xf32>
    %367 = vector.shape_cast %366 : vector<1x128x1xf32> to vector<128x1xf32>
    %368 = vector.broadcast %367 : vector<128x1xf32> to vector<128x64xf32>
    %369 = arith.mulf %365, %368 : vector<128x64xf32>
    %370 = arith.truncf %369 : vector<128x64xf32> to vector<128x64xbf16>
    %c24_302 = arith.constant 24 : index
    %c0_303 = arith.constant 0 : index
    %c0_304 = arith.constant 0 : index
    %371 = vector.load %arg2[%c24_302, %c0_303, %c0_304] : memref<31x64x128xbf16, #tpu.memory_space<vmem>>, vector<1x64x128xbf16>
    %372 = vector.shape_cast %371 : vector<1x64x128xbf16> to vector<64x128xbf16>
    %cst_305 = arith.constant dense<0.000000e+00> : vector<128x128xf32>
    %373 = tpu.matmul %370, %372, %cst_305 {dimension_numbers = #tpu.dot_dimension_numbers<[1], [0], [0], [1], [0, 0, 1, 1], [], []>} : vector<128x64xbf16>, vector<64x128xbf16>, vector<128x128xf32> -> vector<128x128xf32>
    %374 = arith.addf %364, %373 : vector<128x128xf32>
    %c0_306 = arith.constant 0 : index
    %c0_307 = arith.constant 0 : index
    %c0_308 = arith.constant 0 : index
    %375 = vector.load %arg6[%c0_306, %c0_307, %c0_308] : memref<1x128x128xf32, #tpu.memory_space<vmem>>, vector<1x128x128xf32>
    %376 = vector.shape_cast %375 : vector<1x128x128xf32> to vector<128x128xf32>
    %377 = vector.shape_cast %374 : vector<128x128xf32> to vector<1x128x128xf32>
    tpu.vector_store %arg6[%c0_306, %c0_307, %c0_308], %377 {strides = array<i32>} : memref<1x128x128xf32, #tpu.memory_space<vmem>>, vector<1x128x128xf32>,
    %c0_309 = arith.constant 0 : index
    %c0_310 = arith.constant 0 : index
    %c0_311 = arith.constant 0 : index
    %378 = vector.load %arg6[%c0_309, %c0_310, %c0_311] : memref<1x128x128xf32, #tpu.memory_space<vmem>>, vector<1x128x128xf32>
    %379 = vector.shape_cast %378 : vector<1x128x128xf32> to vector<128x128xf32>
    %c118_i32 = arith.constant 118 : i32
    %380 = tpu.dynamic_rotate %10 by %c118_i32 dim 0 : vector<128x64xf32>, i32 -> vector<128x64xf32>
    %c25 = arith.constant 25 : index
    %c0_312 = arith.constant 0 : index
    %c0_313 = arith.constant 0 : index
    %381 = vector.load %arg3[%c25, %c0_312, %c0_313] : memref<31x128x1xf32, #tpu.memory_space<vmem>>, vector<1x128x1xf32>
    %382 = vector.shape_cast %381 : vector<1x128x1xf32> to vector<128x1xf32>
    %383 = vector.broadcast %382 : vector<128x1xf32> to vector<128x64xf32>
    %384 = arith.mulf %380, %383 : vector<128x64xf32>
    %385 = arith.truncf %384 : vector<128x64xf32> to vector<128x64xbf16>
    %c25_314 = arith.constant 25 : index
    %c0_315 = arith.constant 0 : index
    %c0_316 = arith.constant 0 : index
    %386 = vector.load %arg2[%c25_314, %c0_315, %c0_316] : memref<31x64x128xbf16, #tpu.memory_space<vmem>>, vector<1x64x128xbf16>
    %387 = vector.shape_cast %386 : vector<1x64x128xbf16> to vector<64x128xbf16>
    %cst_317 = arith.constant dense<0.000000e+00> : vector<128x128xf32>
    %388 = tpu.matmul %385, %387, %cst_317 {dimension_numbers = #tpu.dot_dimension_numbers<[1], [0], [0], [1], [0, 0, 1, 1], [], []>} : vector<128x64xbf16>, vector<64x128xbf16>, vector<128x128xf32> -> vector<128x128xf32>
    %389 = arith.addf %379, %388 : vector<128x128xf32>
    %c0_318 = arith.constant 0 : index
    %c0_319 = arith.constant 0 : index
    %c0_320 = arith.constant 0 : index
    %390 = vector.load %arg6[%c0_318, %c0_319, %c0_320] : memref<1x128x128xf32, #tpu.memory_space<vmem>>, vector<1x128x128xf32>
    %391 = vector.shape_cast %390 : vector<1x128x128xf32> to vector<128x128xf32>
    %392 = vector.shape_cast %389 : vector<128x128xf32> to vector<1x128x128xf32>
    tpu.vector_store %arg6[%c0_318, %c0_319, %c0_320], %392 {strides = array<i32>} : memref<1x128x128xf32, #tpu.memory_space<vmem>>, vector<1x128x128xf32>,
    %c0_321 = arith.constant 0 : index
    %c0_322 = arith.constant 0 : index
    %c0_323 = arith.constant 0 : index
    %393 = vector.load %arg6[%c0_321, %c0_322, %c0_323] : memref<1x128x128xf32, #tpu.memory_space<vmem>>, vector<1x128x128xf32>
    %394 = vector.shape_cast %393 : vector<1x128x128xf32> to vector<128x128xf32>
    %c117_i32 = arith.constant 117 : i32
    %395 = tpu.dynamic_rotate %10 by %c117_i32 dim 0 : vector<128x64xf32>, i32 -> vector<128x64xf32>
    %c26 = arith.constant 26 : index
    %c0_324 = arith.constant 0 : index
    %c0_325 = arith.constant 0 : index
    %396 = vector.load %arg3[%c26, %c0_324, %c0_325] : memref<31x128x1xf32, #tpu.memory_space<vmem>>, vector<1x128x1xf32>
    %397 = vector.shape_cast %396 : vector<1x128x1xf32> to vector<128x1xf32>
    %398 = vector.broadcast %397 : vector<128x1xf32> to vector<128x64xf32>
    %399 = arith.mulf %395, %398 : vector<128x64xf32>
    %400 = arith.truncf %399 : vector<128x64xf32> to vector<128x64xbf16>
    %c26_326 = arith.constant 26 : index
    %c0_327 = arith.constant 0 : index
    %c0_328 = arith.constant 0 : index
    %401 = vector.load %arg2[%c26_326, %c0_327, %c0_328] : memref<31x64x128xbf16, #tpu.memory_space<vmem>>, vector<1x64x128xbf16>
    %402 = vector.shape_cast %401 : vector<1x64x128xbf16> to vector<64x128xbf16>
    %cst_329 = arith.constant dense<0.000000e+00> : vector<128x128xf32>
    %403 = tpu.matmul %400, %402, %cst_329 {dimension_numbers = #tpu.dot_dimension_numbers<[1], [0], [0], [1], [0, 0, 1, 1], [], []>} : vector<128x64xbf16>, vector<64x128xbf16>, vector<128x128xf32> -> vector<128x128xf32>
    %404 = arith.addf %394, %403 : vector<128x128xf32>
    %c0_330 = arith.constant 0 : index
    %c0_331 = arith.constant 0 : index
    %c0_332 = arith.constant 0 : index
    %405 = vector.load %arg6[%c0_330, %c0_331, %c0_332] : memref<1x128x128xf32, #tpu.memory_space<vmem>>, vector<1x128x128xf32>
    %406 = vector.shape_cast %405 : vector<1x128x128xf32> to vector<128x128xf32>
    %407 = vector.shape_cast %404 : vector<128x128xf32> to vector<1x128x128xf32>
    tpu.vector_store %arg6[%c0_330, %c0_331, %c0_332], %407 {strides = array<i32>} : memref<1x128x128xf32, #tpu.memory_space<vmem>>, vector<1x128x128xf32>,
    %c0_333 = arith.constant 0 : index
    %c0_334 = arith.constant 0 : index
    %c0_335 = arith.constant 0 : index
    %408 = vector.load %arg6[%c0_333, %c0_334, %c0_335] : memref<1x128x128xf32, #tpu.memory_space<vmem>>, vector<1x128x128xf32>
    %409 = vector.shape_cast %408 : vector<1x128x128xf32> to vector<128x128xf32>
    %c116_i32 = arith.constant 116 : i32
    %410 = tpu.dynamic_rotate %10 by %c116_i32 dim 0 : vector<128x64xf32>, i32 -> vector<128x64xf32>
    %c27 = arith.constant 27 : index
    %c0_336 = arith.constant 0 : index
    %c0_337 = arith.constant 0 : index
    %411 = vector.load %arg3[%c27, %c0_336, %c0_337] : memref<31x128x1xf32, #tpu.memory_space<vmem>>, vector<1x128x1xf32>
    %412 = vector.shape_cast %411 : vector<1x128x1xf32> to vector<128x1xf32>
    %413 = vector.broadcast %412 : vector<128x1xf32> to vector<128x64xf32>
    %414 = arith.mulf %410, %413 : vector<128x64xf32>
    %415 = arith.truncf %414 : vector<128x64xf32> to vector<128x64xbf16>
    %c27_338 = arith.constant 27 : index
    %c0_339 = arith.constant 0 : index
    %c0_340 = arith.constant 0 : index
    %416 = vector.load %arg2[%c27_338, %c0_339, %c0_340] : memref<31x64x128xbf16, #tpu.memory_space<vmem>>, vector<1x64x128xbf16>
    %417 = vector.shape_cast %416 : vector<1x64x128xbf16> to vector<64x128xbf16>
    %cst_341 = arith.constant dense<0.000000e+00> : vector<128x128xf32>
    %418 = tpu.matmul %415, %417, %cst_341 {dimension_numbers = #tpu.dot_dimension_numbers<[1], [0], [0], [1], [0, 0, 1, 1], [], []>} : vector<128x64xbf16>, vector<64x128xbf16>, vector<128x128xf32> -> vector<128x128xf32>
    %419 = arith.addf %409, %418 : vector<128x128xf32>
    %c0_342 = arith.constant 0 : index
    %c0_343 = arith.constant 0 : index
    %c0_344 = arith.constant 0 : index
    %420 = vector.load %arg6[%c0_342, %c0_343, %c0_344] : memref<1x128x128xf32, #tpu.memory_space<vmem>>, vector<1x128x128xf32>
    %421 = vector.shape_cast %420 : vector<1x128x128xf32> to vector<128x128xf32>
    %422 = vector.shape_cast %419 : vector<128x128xf32> to vector<1x128x128xf32>
    tpu.vector_store %arg6[%c0_342, %c0_343, %c0_344], %422 {strides = array<i32>} : memref<1x128x128xf32, #tpu.memory_space<vmem>>, vector<1x128x128xf32>,
    %c0_345 = arith.constant 0 : index
    %c0_346 = arith.constant 0 : index
    %c0_347 = arith.constant 0 : index
    %423 = vector.load %arg6[%c0_345, %c0_346, %c0_347] : memref<1x128x128xf32, #tpu.memory_space<vmem>>, vector<1x128x128xf32>
    %424 = vector.shape_cast %423 : vector<1x128x128xf32> to vector<128x128xf32>
    %c115_i32 = arith.constant 115 : i32
    %425 = tpu.dynamic_rotate %10 by %c115_i32 dim 0 : vector<128x64xf32>, i32 -> vector<128x64xf32>
    %c28 = arith.constant 28 : index
    %c0_348 = arith.constant 0 : index
    %c0_349 = arith.constant 0 : index
    %426 = vector.load %arg3[%c28, %c0_348, %c0_349] : memref<31x128x1xf32, #tpu.memory_space<vmem>>, vector<1x128x1xf32>
    %427 = vector.shape_cast %426 : vector<1x128x1xf32> to vector<128x1xf32>
    %428 = vector.broadcast %427 : vector<128x1xf32> to vector<128x64xf32>
    %429 = arith.mulf %425, %428 : vector<128x64xf32>
    %430 = arith.truncf %429 : vector<128x64xf32> to vector<128x64xbf16>
    %c28_350 = arith.constant 28 : index
    %c0_351 = arith.constant 0 : index
    %c0_352 = arith.constant 0 : index
    %431 = vector.load %arg2[%c28_350, %c0_351, %c0_352] : memref<31x64x128xbf16, #tpu.memory_space<vmem>>, vector<1x64x128xbf16>
    %432 = vector.shape_cast %431 : vector<1x64x128xbf16> to vector<64x128xbf16>
    %cst_353 = arith.constant dense<0.000000e+00> : vector<128x128xf32>
    %433 = tpu.matmul %430, %432, %cst_353 {dimension_numbers = #tpu.dot_dimension_numbers<[1], [0], [0], [1], [0, 0, 1, 1], [], []>} : vector<128x64xbf16>, vector<64x128xbf16>, vector<128x128xf32> -> vector<128x128xf32>
    %434 = arith.addf %424, %433 : vector<128x128xf32>
    %c0_354 = arith.constant 0 : index
    %c0_355 = arith.constant 0 : index
    %c0_356 = arith.constant 0 : index
    %435 = vector.load %arg6[%c0_354, %c0_355, %c0_356] : memref<1x128x128xf32, #tpu.memory_space<vmem>>, vector<1x128x128xf32>
    %436 = vector.shape_cast %435 : vector<1x128x128xf32> to vector<128x128xf32>
    %437 = vector.shape_cast %434 : vector<128x128xf32> to vector<1x128x128xf32>
    tpu.vector_store %arg6[%c0_354, %c0_355, %c0_356], %437 {strides = array<i32>} : memref<1x128x128xf32, #tpu.memory_space<vmem>>, vector<1x128x128xf32>,
    %c0_357 = arith.constant 0 : index
    %c0_358 = arith.constant 0 : index
    %c0_359 = arith.constant 0 : index
    %438 = vector.load %arg6[%c0_357, %c0_358, %c0_359] : memref<1x128x128xf32, #tpu.memory_space<vmem>>, vector<1x128x128xf32>
    %439 = vector.shape_cast %438 : vector<1x128x128xf32> to vector<128x128xf32>
    %c114_i32 = arith.constant 114 : i32
    %440 = tpu.dynamic_rotate %10 by %c114_i32 dim 0 : vector<128x64xf32>, i32 -> vector<128x64xf32>
    %c29 = arith.constant 29 : index
    %c0_360 = arith.constant 0 : index
    %c0_361 = arith.constant 0 : index
    %441 = vector.load %arg3[%c29, %c0_360, %c0_361] : memref<31x128x1xf32, #tpu.memory_space<vmem>>, vector<1x128x1xf32>
    %442 = vector.shape_cast %441 : vector<1x128x1xf32> to vector<128x1xf32>
    %443 = vector.broadcast %442 : vector<128x1xf32> to vector<128x64xf32>
    %444 = arith.mulf %440, %443 : vector<128x64xf32>
    %445 = arith.truncf %444 : vector<128x64xf32> to vector<128x64xbf16>
    %c29_362 = arith.constant 29 : index
    %c0_363 = arith.constant 0 : index
    %c0_364 = arith.constant 0 : index
    %446 = vector.load %arg2[%c29_362, %c0_363, %c0_364] : memref<31x64x128xbf16, #tpu.memory_space<vmem>>, vector<1x64x128xbf16>
    %447 = vector.shape_cast %446 : vector<1x64x128xbf16> to vector<64x128xbf16>
    %cst_365 = arith.constant dense<0.000000e+00> : vector<128x128xf32>
    %448 = tpu.matmul %445, %447, %cst_365 {dimension_numbers = #tpu.dot_dimension_numbers<[1], [0], [0], [1], [0, 0, 1, 1], [], []>} : vector<128x64xbf16>, vector<64x128xbf16>, vector<128x128xf32> -> vector<128x128xf32>
    %449 = arith.addf %439, %448 : vector<128x128xf32>
    %c0_366 = arith.constant 0 : index
    %c0_367 = arith.constant 0 : index
    %c0_368 = arith.constant 0 : index
    %450 = vector.load %arg6[%c0_366, %c0_367, %c0_368] : memref<1x128x128xf32, #tpu.memory_space<vmem>>, vector<1x128x128xf32>
    %451 = vector.shape_cast %450 : vector<1x128x128xf32> to vector<128x128xf32>
    %452 = vector.shape_cast %449 : vector<128x128xf32> to vector<1x128x128xf32>
    tpu.vector_store %arg6[%c0_366, %c0_367, %c0_368], %452 {strides = array<i32>} : memref<1x128x128xf32, #tpu.memory_space<vmem>>, vector<1x128x128xf32>,
    %c0_369 = arith.constant 0 : index
    %c0_370 = arith.constant 0 : index
    %c0_371 = arith.constant 0 : index
    %453 = vector.load %arg6[%c0_369, %c0_370, %c0_371] : memref<1x128x128xf32, #tpu.memory_space<vmem>>, vector<1x128x128xf32>
    %454 = vector.shape_cast %453 : vector<1x128x128xf32> to vector<128x128xf32>
    %c113_i32 = arith.constant 113 : i32
    %455 = tpu.dynamic_rotate %10 by %c113_i32 dim 0 : vector<128x64xf32>, i32 -> vector<128x64xf32>
    %c30 = arith.constant 30 : index
    %c0_372 = arith.constant 0 : index
    %c0_373 = arith.constant 0 : index
    %456 = vector.load %arg3[%c30, %c0_372, %c0_373] : memref<31x128x1xf32, #tpu.memory_space<vmem>>, vector<1x128x1xf32>
    %457 = vector.shape_cast %456 : vector<1x128x1xf32> to vector<128x1xf32>
    %458 = vector.broadcast %457 : vector<128x1xf32> to vector<128x64xf32>
    %459 = arith.mulf %455, %458 : vector<128x64xf32>
    %460 = arith.truncf %459 : vector<128x64xf32> to vector<128x64xbf16>
    %c30_374 = arith.constant 30 : index
    %c0_375 = arith.constant 0 : index
    %c0_376 = arith.constant 0 : index
    %461 = vector.load %arg2[%c30_374, %c0_375, %c0_376] : memref<31x64x128xbf16, #tpu.memory_space<vmem>>, vector<1x64x128xbf16>
    %462 = vector.shape_cast %461 : vector<1x64x128xbf16> to vector<64x128xbf16>
    %cst_377 = arith.constant dense<0.000000e+00> : vector<128x128xf32>
    %463 = tpu.matmul %460, %462, %cst_377 {dimension_numbers = #tpu.dot_dimension_numbers<[1], [0], [0], [1], [0, 0, 1, 1], [], []>} : vector<128x64xbf16>, vector<64x128xbf16>, vector<128x128xf32> -> vector<128x128xf32>
    %464 = arith.addf %454, %463 : vector<128x128xf32>
    %c0_378 = arith.constant 0 : index
    %c0_379 = arith.constant 0 : index
    %c0_380 = arith.constant 0 : index
    %465 = vector.load %arg6[%c0_378, %c0_379, %c0_380] : memref<1x128x128xf32, #tpu.memory_space<vmem>>, vector<1x128x128xf32>
    %466 = vector.shape_cast %465 : vector<1x128x128xf32> to vector<128x128xf32>
    %467 = vector.shape_cast %464 : vector<128x128xf32> to vector<1x128x128xf32>
    tpu.vector_store %arg6[%c0_378, %c0_379, %c0_380], %467 {strides = array<i32>} : memref<1x128x128xf32, #tpu.memory_space<vmem>>, vector<1x128x128xf32>,
    %c0_381 = arith.constant 0 : index
    %c0_382 = arith.constant 0 : index
    %c0_383 = arith.constant 0 : index
    %468 = vector.load %arg6[%c0_381, %c0_382, %c0_383] : memref<1x128x128xf32, #tpu.memory_space<vmem>>, vector<1x128x128xf32>
    %469 = vector.shape_cast %468 : vector<1x128x128xf32> to vector<128x128xf32>
    %c0_384 = arith.constant 0 : index
    %c0_385 = arith.constant 0 : index
    %470 = vector.load %arg4[%c0_384, %c0_385] : memref<1x128xf32, #tpu.memory_space<vmem>>, vector<1x128xf32>
    %471 = vector.broadcast %470 : vector<1x128xf32> to vector<128x128xf32>
    %472 = arith.mulf %469, %471 : vector<128x128xf32>
    %c0_386 = arith.constant 0 : index
    %c0_387 = arith.constant 0 : index
    %473 = vector.load %arg5[%c0_386, %c0_387] : memref<1x128xf32, #tpu.memory_space<vmem>>, vector<1x128xf32>
    %474 = vector.broadcast %473 : vector<1x128xf32> to vector<128x128xf32>
    %475 = arith.addf %472, %474 : vector<128x128xf32>
    %cst_388 = arith.constant 0.000000e+00 : f32
    %476 = vector.broadcast %cst_388 : f32 to vector<128x128xf32>
    %477 = arith.maximumf %475, %476 : vector<128x128xf32>
    %c0_389 = arith.constant 0 : index
    %c0_390 = arith.constant 0 : index
    %c0_391 = arith.constant 0 : index
    %478 = vector.load %arg6[%c0_389, %c0_390, %c0_391] : memref<1x128x128xf32, #tpu.memory_space<vmem>>, vector<1x128x128xf32>
    %479 = vector.shape_cast %478 : vector<1x128x128xf32> to vector<128x128xf32>
    %480 = vector.shape_cast %477 : vector<128x128xf32> to vector<1x128x128xf32>
    tpu.vector_store %arg6[%c0_389, %c0_390, %c0_391], %480 {strides = array<i32>} : memref<1x128x128xf32, #tpu.memory_space<vmem>>, vector<1x128x128xf32>,
    return
  }
  func.func @transform_0(%arg0: i32) -> (i32, i32, i32, i32) {
    %c0_i32 = arith.constant 0 : i32
    %c0_i32_0 = arith.constant 0 : i32
    %c0_i32_1 = arith.constant 0 : i32
    %c0_i32_2 = arith.constant 0 : i32
    return %arg0, %c0_i32, %c0_i32_0, %c0_i32_1 : i32, i32, i32, i32
  }
  func.func @transform_1(%arg0: i32) -> (i32, i32, i32) {
    %c0_i32 = arith.constant 0 : i32
    %c0_i32_0 = arith.constant 0 : i32
    %c0_i32_1 = arith.constant 0 : i32
    %c0_i32_2 = arith.constant 0 : i32
    return %c0_i32, %c0_i32_0, %c0_i32_1 : i32, i32, i32
  }
  func.func @transform_2(%arg0: i32) -> (i32, i32, i32) {
    %c0_i32 = arith.constant 0 : i32
    %c0_i32_0 = arith.constant 0 : i32
    %c0_i32_1 = arith.constant 0 : i32
    %c0_i32_2 = arith.constant 0 : i32
    return %c0_i32, %c0_i32_0, %c0_i32_1 : i32, i32, i32
  }
  func.func @transform_3(%arg0: i32) -> (i32, i32) {
    %c0_i32 = arith.constant 0 : i32
    %c0_i32_0 = arith.constant 0 : i32
    %c0_i32_1 = arith.constant 0 : i32
    return %c0_i32, %c0_i32_0 : i32, i32
  }
  func.func @transform_4(%arg0: i32) -> (i32, i32) {
    %c0_i32 = arith.constant 0 : i32
    %c0_i32_0 = arith.constant 0 : i32
    %c0_i32_1 = arith.constant 0 : i32
    return %c0_i32, %c0_i32_0 : i32, i32
  }
  func.func @transform_5(%arg0: i32) -> (i32, i32, i32) {
    %c0_i32 = arith.constant 0 : i32
    %c0_i32_0 = arith.constant 0 : i32
    %c0_i32_1 = arith.constant 0 : i32
    return %arg0, %c0_i32, %c0_i32_0 : i32, i32, i32
  }
}

</mosaic_0001>

<llo_original>
// kernel: tpu_custom_call.1
$region0: #{tpu_custom_call.1}
  #allocation0 [shape = 'u32[]', space=smem, size = 0x4, offset = 0x4, fixed_abs, tag = 'smem constant byte address 0x4 - core index']
  #allocation1 [shape = 'u32[144,128]{1,0:T(1,128)}', space=vmem, size = 0x12000, scoped, tag = 'internal scratch']
  %s0 = inlined_call_operand.vmem [shape: f32[2,4,128,64], index: 0, kind: input, shape index: {}]
  %s1 = inlined_call_operand.vmem [shape: bf16[31,64,128], index: 1, kind: input, shape index: {}]
  %s2 = inlined_call_operand.vmem [shape: f32[31,128,1], index: 2, kind: input, shape index: {}]
  %s3 = inlined_call_operand.vmem [shape: f32[1,128], index: 3, kind: input, shape index: {}]
  %s4 = inlined_call_operand.vmem [shape: f32[1,128], index: 4, kind: input, shape index: {}]
  %s5 = inlined_call_operand.hbm [shape: f32[2,128,128], index: 5, kind: output, shape index: {}]
  %s6 = sld [smem:[#allocation0]]
  $region53: #{tpu_custom_call.1} parent=0
    _
  %s8 = ssub.s32 1, %s6
  %s9 = scalar_select 0, %s8, %s6
  $region1: #{tpu_custom_call.1} parent=0
    #allocation2 [shape = 'u8[131072]{0}', space=vmem, size = 0x20000, scoped, tag = 'output window, operand 0']
    #allocation3 [shape = 's32[2]{0}', space=sflag, size = 0x8, scoped, tag = 'scoped memory for tpu_custom_call.1']
    %10 = vsyncpa [#allocation3], 0
    %s11 = scalar_lea.sflag [#allocation3], 1
    %12 = vsyncpa %s11, 0
    loop: start=0, step=1, limit=4
    $region2: #{tpu_custom_call.1} parent=1 // loop_pre_header
      _
    $region3: #{tpu_custom_call.1} parent=1 // loop_header
      %s14 = sphi 0, %s18
      %p15 = scmp.ge.s32.totalorder %s14, 4
      %s24 = sphi 0, %s26
      %s27 = sphi 0, %s24
      %s28 = sphi 0, %s27
      %s44 = sphi 0, %s28
      %s48 = sphi 0, %s48
      %s50 = sphi 0, %s48
      %s51 = sphi 0, %s50
      %s65 = sphi 0, %s51
      %s69 = sphi 0, %s69
      %s71 = sphi 0, %s69
      %s72 = sphi 0, %s71
      %s86 = sphi 0, %s72
      %s90 = sphi 0, %s90
      %s92 = sphi 0, %s90
      %s93 = sphi 0, %s92
      %s107 = sphi 0, %s93
      %s111 = sphi 0, %s111
      %s113 = sphi 0, %s111
      %s114 = sphi 0, %s113
      %s128 = sphi 0, %s114
      %s134 = sphi 0, %s136
      %s137 = sphi 0, %s134
      %s138 = sphi 0, %s137
      %s154 = sphi 0, %s138
    $region4: #{tpu_custom_call.1} parent=1 // loop_header_branch
      %17 = sbr.rel (%p15) target = $region8
    $region5: #{tpu_custom_call.1} parent=1 // loop_body
      %s19 = ssub.s32 %s14, 1
      %s20 = ssub.s32 %s14, 2
      %s21 = sadd.s32 %s14, 1
      %s22 = ssub.s32 %s14, %s21
      %p23 = scmp.eq.s32.totalorder %s22, 0
      %s25 = sadd.s32 %s24, 1
      %s26 = scalar_select %p23, %s24, %s25
      %p29 = pneg %p23
      %p30 = scmp.eq.s32.totalorder %s14, 1
      %p31 = por %p29, %p30
      %p32 = scmp.ne.s32.totalorder %s24, %s27
      %p33 = scmp.eq.s32.totalorder %s14, 0
      %p34 = por %p32, %p33
      %p35 = scmp.ne.s32.totalorder %s24, %s27
      %p36 = scmp.eq.s32.totalorder %s19, 1
      %p37 = por %p35, %p36
      %p38 = scmp.ne.s32.totalorder %s27, %s28
      %p39 = scmp.eq.s32.totalorder %s19, 0
      %p40 = por %p38, %p39
      %p41 = scmp.ne.s32.totalorder %s27, %s28
      %p42 = scmp.eq.s32.totalorder %s20, 1
      %p43 = por %p41, %p42
      %p45 = scmp.ne.s32.totalorder %s28, %s44
      %p46 = scmp.eq.s32.totalorder %s20, 0
      %p47 = por %p45, %p46
      %s49 = sadd.s32 %s48, 1
      %p52 = scmp.eq.s32.totalorder %s14, 1
      %p53 = scmp.ne.s32.totalorder %s48, %s50
      %p54 = scmp.eq.s32.totalorder %s14, 0
      %p55 = por %p53, %p54
      %p56 = scmp.ne.s32.totalorder %s48, %s50
      %p57 = scmp.eq.s32.totalorder %s19, 1
      %p58 = por %p56, %p57
      %p59 = scmp.ne.s32.totalorder %s50, %s51
      %p60 = scmp.eq.s32.totalorder %s19, 0
      %p61 = por %p59, %p60
      %p62 = scmp.ne.s32.totalorder %s50, %s51
      %p63 = scmp.eq.s32.totalorder %s20, 1
      %p64 = por %p62, %p63
      %p66 = scmp.ne.s32.totalorder %s51, %s65
      %p67 = scmp.eq.s32.totalorder %s20, 0
      %p68 = por %p66, %p67
      %s70 = sadd.s32 %s69, 1
      %p73 = scmp.eq.s32.totalorder %s14, 1
      %p74 = scmp.ne.s32.totalorder %s69, %s71
      %p75 = scmp.eq.s32.totalorder %s14, 0
      %p76 = por %p74, %p75
      %p77 = scmp.ne.s32.totalorder %s69, %s71
      %p78 = scmp.eq.s32.totalorder %s19, 1
      %p79 = por %p77, %p78
      %p80 = scmp.ne.s32.totalorder %s71, %s72
      %p81 = scmp.eq.s32.totalorder %s19, 0
      %p82 = por %p80, %p81
      %p83 = scmp.ne.s32.totalorder %s71, %s72
      %p84 = scmp.eq.s32.totalorder %s20, 1
      %p85 = por %p83, %p84
      %p87 = scmp.ne.s32.totalorder %s72, %s86
      %p88 = scmp.eq.s32.totalorder %s20, 0
      %p89 = por %p87, %p88
      %s91 = sadd.s32 %s90, 1
      %p94 = scmp.eq.s32.totalorder %s14, 1
      %p95 = scmp.ne.s32.totalorder %s90, %s92
      %p96 = scmp.eq.s32.totalorder %s14, 0
      %p97 = por %p95, %p96
      %p98 = scmp.ne.s32.totalorder %s90, %s92
      %p99 = scmp.eq.s32.totalorder %s19, 1
      %p100 = por %p98, %p99
      %p101 = scmp.ne.s32.totalorder %s92, %s93
      %p102 = scmp.eq.s32.totalorder %s19, 0
      %p103 = por %p101, %p102
      %p104 = scmp.ne.s32.totalorder %s92, %s93
      %p105 = scmp.eq.s32.totalorder %s20, 1
      %p106 = por %p104, %p105
      %p108 = scmp.ne.s32.totalorder %s93, %s107
      %p109 = scmp.eq.s32.totalorder %s20, 0
      %p110 = por %p108, %p109
      %s112 = sadd.s32 %s111, 1
      %p115 = scmp.eq.s32.totalorder %s14, 1
      %p116 = scmp.ne.s32.totalorder %s111, %s113
      %p117 = scmp.eq.s32.totalorder %s14, 0
      %p118 = por %p116, %p117
      %p119 = scmp.ne.s32.totalorder %s111, %s113
      %p120 = scmp.eq.s32.totalorder %s19, 1
      %p121 = por %p119, %p120
      %p122 = scmp.ne.s32.totalorder %s113, %s114
      %p123 = scmp.eq.s32.totalorder %s19, 0
      %p124 = por %p122, %p123
      %p125 = scmp.ne.s32.totalorder %s113, %s114
      %p126 = scmp.eq.s32.totalorder %s20, 1
      %p127 = por %p125, %p126
      %p129 = scmp.ne.s32.totalorder %s114, %s128
      %p130 = scmp.eq.s32.totalorder %s20, 0
      %p131 = por %p129, %p130
      %s132 = ssub.s32 %s14, %s21
      %p133 = scmp.eq.s32.totalorder %s132, 0
      %s135 = sadd.s32 %s134, 1
      %s136 = scalar_select %p133, %s134, %s135
      %p139 = pneg %p133
      %p140 = scmp.eq.s32.totalorder %s14, 1
      %p141 = por %p139, %p140
      %p142 = scmp.ne.s32.totalorder %s134, %s137
      %p143 = scmp.eq.s32.totalorder %s14, 0
      %p144 = por %p142, %p143
      %p145 = scmp.ne.s32.totalorder %s134, %s137
      %p146 = scmp.eq.s32.totalorder %s19, 1
      %p147 = por %p145, %p146
      %p148 = scmp.ne.s32.totalorder %s137, %s138
      %p149 = scmp.eq.s32.totalorder %s19, 0
      %p150 = por %p148, %p149
      %p151 = scmp.ne.s32.totalorder %s137, %s138
      %p152 = scmp.eq.s32.totalorder %s20, 1
      %p153 = por %p151, %p152
      %p155 = scmp.ne.s32.totalorder %s138, %s154
      %p156 = scmp.eq.s32.totalorder %s20, 0
      %p157 = por %p155, %p156
      %p158 = scmp.le.s32.totalorder 1, %s14
      %p159 = scmp.lt.s32.totalorder %s14, 3
      %p160 = pnand %p158, %p159
      %p161 = pneg %p160
      // Predicated region
      $region9: #{tpu_custom_call.1} parent=5 // pred_check
        _
      $region10: #{tpu_custom_call.1} parent=5 // pred_check_branch
        %163 = sbr.rel (%p160) target = $region12
      $region11: #{tpu_custom_call.1} parent=5 // pred_region
        %s164 = ssub.s32 %s14, 1
        // Predicated region
        $region13: #{tpu_custom_call.1} parent=11 // pred_check
          %p165 = pneg %p61
        $region14: #{tpu_custom_call.1} parent=11 // pred_check_branch
          %167 = sbr.rel (%p165) target = $region16
        $region15: #{tpu_custom_call.1} parent=11 // pred_region
          _
        $region16: #{tpu_custom_call.1} parent=11 // pred_fallthru
          _
        // Predicated region
        $region17: #{tpu_custom_call.1} parent=11 // pred_check
          %p168 = pneg %p82
        $region18: #{tpu_custom_call.1} parent=11 // pred_check_branch
          %170 = sbr.rel (%p168) target = $region20
        $region19: #{tpu_custom_call.1} parent=11 // pred_region
          _
        $region20: #{tpu_custom_call.1} parent=11 // pred_fallthru
          _
        // Predicated region
        $region21: #{tpu_custom_call.1} parent=11 // pred_check
          %p171 = pneg %p103
        $region22: #{tpu_custom_call.1} parent=11 // pred_check_branch
          %173 = sbr.rel (%p171) target = $region24
        $region23: #{tpu_custom_call.1} parent=11 // pred_region
          _
        $region24: #{tpu_custom_call.1} parent=11 // pred_fallthru
          _
        // Predicated region
        $region25: #{tpu_custom_call.1} parent=11 // pred_check
          %p174 = pneg %p124
        $region26: #{tpu_custom_call.1} parent=11 // pred_check_branch
          %176 = sbr.rel (%p174) target = $region28
        $region27: #{tpu_custom_call.1} parent=11 // pred_region
          _
        $region28: #{tpu_custom_call.1} parent=11 // pred_fallthru
          _
      $region12: #{tpu_custom_call.1} parent=5 // pred_fallthru
        _
      %p177 = scmp.lt.s32.totalorder %s14, 2
      // Predicated region
      $region29: #{tpu_custom_call.1} parent=5 // pred_check
        %p178 = pneg %p177
      $region30: #{tpu_custom_call.1} parent=5 // pred_check_branch
        %180 = sbr.rel (%p178) target = $region32
      $region31: #{tpu_custom_call.1} parent=5 // pred_region
        // Predicated region
        $region33: #{tpu_custom_call.1} parent=31 // pred_check
          %p181 = pneg %p34
        $region34: #{tpu_custom_call.1} parent=31 // pred_check_branch
          %183 = sbr.rel (%p181) target = $region36
        $region35: #{tpu_custom_call.1} parent=31 // pred_region
          %p184 = scmp.lt.s32.totalorder %s14, 1
          %s185 = scalar_select %p184, %s14, 1
          %s186 = smul.addr %s185, 64
          %s187 = smul.addr %s186, 8
          %s188 = scalar_lea.vmem %s0, %s187
        $region36: #{tpu_custom_call.1} parent=31 // pred_fallthru
          _
      $region32: #{tpu_custom_call.1} parent=5 // pred_fallthru
        _
      %p189 = scmp.le.s32.totalorder 1, %s14
      %p190 = scmp.lt.s32.totalorder %s14, 3
      %p191 = pnand %p189, %p190
      %p192 = pneg %p191
      // Predicated region
      $region37: #{tpu_custom_call.1} parent=5 // pred_check
        _
      $region38: #{tpu_custom_call.1} parent=5 // pred_check_branch
        %194 = sbr.rel (%p191) target = $region40
      $region39: #{tpu_custom_call.1} parent=5 // pred_region
        %s195 = ssub.s32 %s14, 1
        %p196 = scmp.lt.s32.totalorder %s19, 1
        %s197 = scalar_select %p196, %s19, 1
        %s198 = smul.addr %s197, 64
        %s199 = smul.addr %s198, 8
        %s200 = scalar_lea.vmem %s0, %s199
        %p201 = pneg %p40
        %p202 = pneg %p37
        %p203 = pneg %p61
        %p204 = pneg %p58
        %p205 = pneg %p82
        %p206 = pneg %p79
        %p207 = pneg %p103
        %p208 = pneg %p100
        %p209 = pneg %p124
        %p210 = pneg %p121
        %p211 = pneg %p150
        %p212 = pneg %p147
        %s213 = sand.u32 %s137, 1
        %s214 = scalar_lea.sflag [#allocation3], %s213
        %s215 = sand.u32 %s137, 1
        %s216 = smul.addr %s215, 128
        %s217 = scalar_lea.vmem [#allocation2], %s216
        %p218 = scmp.lt.s32.totalorder %s19, 1
        %s219 = scalar_select %p218, %s19, 1
        %s220 = smul.addr %s219, 64
        %s221 = smul.addr %s220, 8
        %s222 = scalar_lea.vmem %s0, %s221
        %v224 = vld [vmem:[%s222] sm:$0xff]
        %v225 = vld [vmem:[%s222 + $0x8] sm:$0xff]
        %v226 = vld [vmem:[%s222 + $0x10] sm:$0xff]
        %v227 = vld [vmem:[%s222 + $0x18] sm:$0xff]
        %v228 = vld [vmem:[%s222 + $0x20] sm:$0xff]
        %v229 = vld [vmem:[%s222 + $0x28] sm:$0xff]
        %v230 = vld [vmem:[%s222 + $0x30] sm:$0xff]
        %v231 = vld [vmem:[%s222 + $0x38] sm:$0xff]
        %v232 = vld [vmem:[%s222 + $0x40] sm:$0xff]
        %v233 = vld [vmem:[%s222 + $0x48] sm:$0xff]
        %v234 = vld [vmem:[%s222 + $0x50] sm:$0xff]
        %v235 = vld [vmem:[%s222 + $0x58] sm:$0xff]
        %v236 = vld [vmem:[%s222 + $0x60] sm:$0xff]
        %v237 = vld [vmem:[%s222 + $0x68] sm:$0xff]
        %v238 = vld [vmem:[%s222 + $0x70] sm:$0xff]
        %v239 = vld [vmem:[%s222 + $0x78] sm:$0xff]
        %s240 = scalar_lea.vmem %s222, 128
        %v241 = vld [vmem:[%s240] sm:$0xff]
        %v242 = vld [vmem:[%s240 + $0x8] sm:$0xff]
        %v243 = vld [vmem:[%s240 + $0x10] sm:$0xff]
        %v244 = vld [vmem:[%s240 + $0x18] sm:$0xff]
        %v245 = vld [vmem:[%s240 + $0x20] sm:$0xff]
        %v246 = vld [vmem:[%s240 + $0x28] sm:$0xff]
        %v247 = vld [vmem:[%s240 + $0x30] sm:$0xff]
        %v248 = vld [vmem:[%s240 + $0x38] sm:$0xff]
        %v249 = vld [vmem:[%s240 + $0x40] sm:$0xff]
        %v250 = vld [vmem:[%s240 + $0x48] sm:$0xff]
        %v251 = vld [vmem:[%s240 + $0x50] sm:$0xff]
        %v252 = vld [vmem:[%s240 + $0x58] sm:$0xff]
        %v253 = vld [vmem:[%s240 + $0x60] sm:$0xff]
        %v254 = vld [vmem:[%s240 + $0x68] sm:$0xff]
        %v255 = vld [vmem:[%s240 + $0x70] sm:$0xff]
        %v256 = vld [vmem:[%s240 + $0x78] sm:$0xff]
        %v257 = vmax.f32 %v224, %v241
        %v258 = vmax.f32 %v225, %v242
        %v259 = vmax.f32 %v226, %v243
        %v260 = vmax.f32 %v227, %v244
        %v261 = vmax.f32 %v228, %v245
        %v262 = vmax.f32 %v229, %v246
        %v263 = vmax.f32 %v230, %v247
        %v264 = vmax.f32 %v231, %v248
        %v265 = vmax.f32 %v232, %v249
        %v266 = vmax.f32 %v233, %v250
        %v267 = vmax.f32 %v234, %v251
        %v268 = vmax.f32 %v235, %v252
        %v269 = vmax.f32 %v236, %v253
        %v270 = vmax.f32 %v237, %v254
        %v271 = vmax.f32 %v238, %v255
        %v272 = vmax.f32 %v239, %v256
        %s273 = scalar_lea.vmem %s222, 256
        %v274 = vld [vmem:[%s273] sm:$0xff]
        %v275 = vld [vmem:[%s273 + $0x8] sm:$0xff]
        %v276 = vld [vmem:[%s273 + $0x10] sm:$0xff]
        %v277 = vld [vmem:[%s273 + $0x18] sm:$0xff]
        %v278 = vld [vmem:[%s273 + $0x20] sm:$0xff]
        %v279 = vld [vmem:[%s273 + $0x28] sm:$0xff]
        %v280 = vld [vmem:[%s273 + $0x30] sm:$0xff]
        %v281 = vld [vmem:[%s273 + $0x38] sm:$0xff]
        %v282 = vld [vmem:[%s273 + $0x40] sm:$0xff]
        %v283 = vld [vmem:[%s273 + $0x48] sm:$0xff]
        %v284 = vld [vmem:[%s273 + $0x50] sm:$0xff]
        %v285 = vld [vmem:[%s273 + $0x58] sm:$0xff]
        %v286 = vld [vmem:[%s273 + $0x60] sm:$0xff]
        %v287 = vld [vmem:[%s273 + $0x68] sm:$0xff]
        %v288 = vld [vmem:[%s273 + $0x70] sm:$0xff]
        %v289 = vld [vmem:[%s273 + $0x78] sm:$0xff]
        %s290 = scalar_lea.vmem %s222, 384
        %v291 = vld [vmem:[%s290] sm:$0xff]
        %v292 = vld [vmem:[%s290 + $0x8] sm:$0xff]
        %v293 = vld [vmem:[%s290 + $0x10] sm:$0xff]
        %v294 = vld [vmem:[%s290 + $0x18] sm:$0xff]
        %v295 = vld [vmem:[%s290 + $0x20] sm:$0xff]
        %v296 = vld [vmem:[%s290 + $0x28] sm:$0xff]
        %v297 = vld [vmem:[%s290 + $0x30] sm:$0xff]
        %v298 = vld [vmem:[%s290 + $0x38] sm:$0xff]
        %v299 = vld [vmem:[%s290 + $0x40] sm:$0xff]
        %v300 = vld [vmem:[%s290 + $0x48] sm:$0xff]
        %v301 = vld [vmem:[%s290 + $0x50] sm:$0xff]
        %v302 = vld [vmem:[%s290 + $0x58] sm:$0xff]
        %v303 = vld [vmem:[%s290 + $0x60] sm:$0xff]
        %v304 = vld [vmem:[%s290 + $0x68] sm:$0xff]
        %v305 = vld [vmem:[%s290 + $0x70] sm:$0xff]
        %v306 = vld [vmem:[%s290 + $0x78] sm:$0xff]
        %v307 = vmax.f32 %v274, %v291
        %v308 = vmax.f32 %v275, %v292
        %v309 = vmax.f32 %v276, %v293
        %v310 = vmax.f32 %v277, %v294
        %v311 = vmax.f32 %v278, %v295
        %v312 = vmax.f32 %v279, %v296
        %v313 = vmax.f32 %v280, %v297
        %v314 = vmax.f32 %v281, %v298
        %v315 = vmax.f32 %v282, %v299
        %v316 = vmax.f32 %v283, %v300
        %v317 = vmax.f32 %v284, %v301
        %v318 = vmax.f32 %v285, %v302
        %v319 = vmax.f32 %v286, %v303
        %v320 = vmax.f32 %v287, %v304
        %v321 = vmax.f32 %v288, %v305
        %v322 = vmax.f32 %v289, %v306
        %v323 = vmax.f32 %v257, %v307
        %v324 = vmax.f32 %v258, %v308
        %v325 = vmax.f32 %v259, %v309
        %v326 = vmax.f32 %v260, %v310
        %v327 = vmax.f32 %v261, %v311
        %v328 = vmax.f32 %v262, %v312
        %v329 = vmax.f32 %v263, %v313
        %v330 = vmax.f32 %v264, %v314
        %v331 = vmax.f32 %v265, %v315
        %v332 = vmax.f32 %v266, %v316
        %v333 = vmax.f32 %v267, %v317
        %v334 = vmax.f32 %v268, %v318
        %v335 = vmax.f32 %v269, %v319
        %v336 = vmax.f32 %v270, %v320
        %v337 = vmax.f32 %v271, %v321
        %v338 = vmax.f32 %v272, %v322
        %v339 = vrot.slane %v323, 1
        %v340 = vrot.slane %v324, 1
        %v341 = vrot.slane %v325, 1
        %v342 = vrot.slane %v326, 1
        %v343 = vrot.slane %v327, 1
        %v344 = vrot.slane %v328, 1
        %v345 = vrot.slane %v329, 1
        %v346 = vrot.slane %v330, 1
        %v347 = vrot.slane %v331, 1
        %v348 = vrot.slane %v332, 1
        %v349 = vrot.slane %v333, 1
        %v350 = vrot.slane %v334, 1
        %v351 = vrot.slane %v335, 1
        %v352 = vrot.slane %v336, 1
        %v353 = vrot.slane %v337, 1
        %v354 = vrot.slane %v338, 1
        %v355 = vlaneseq
        %v356 = vshrl.u32 %v355, 7
        %vm357 = vcmp.lt.s32.totalorder %v356, 7
        %v358 = vsel %vm357, %v353, %v354
        %v359 = vsel %vm357, %v352, %v353
        %v360 = vsel %vm357, %v351, %v352
        %v361 = vsel %vm357, %v350, %v351
        %v362 = vsel %vm357, %v349, %v350
        %v363 = vsel %vm357, %v348, %v349
        %v364 = vsel %vm357, %v347, %v348
        %v365 = vsel %vm357, %v346, %v347
        %v366 = vsel %vm357, %v345, %v346
        %v367 = vsel %vm357, %v344, %v345
        %v368 = vsel %vm357, %v343, %v344
        %v369 = vsel %vm357, %v342, %v343
        %v370 = vsel %vm357, %v341, %v342
        %v371 = vsel %vm357, %v340, %v341
        %v372 = vsel %vm357, %v339, %v340
        %v373 = vsel %vm357, %v354, %v339
        %v374 = vld [vmem:[%s2] sm:$0xff]
        %v375 = vld [vmem:[%s2 + $0x8] sm:$0xff]
        %v376 = vld [vmem:[%s2 + $0x10] sm:$0xff]
        %v377 = vld [vmem:[%s2 + $0x18] sm:$0xff]
        %v378 = vld [vmem:[%s2 + $0x20] sm:$0xff]
        %v379 = vld [vmem:[%s2 + $0x28] sm:$0xff]
        %v380 = vld [vmem:[%s2 + $0x30] sm:$0xff]
        %v381 = vld [vmem:[%s2 + $0x38] sm:$0xff]
        %v382 = vld [vmem:[%s2 + $0x40] sm:$0xff]
        %v383 = vld [vmem:[%s2 + $0x48] sm:$0xff]
        %v384 = vld [vmem:[%s2 + $0x50] sm:$0xff]
        %v385 = vld [vmem:[%s2 + $0x58] sm:$0xff]
        %v386 = vld [vmem:[%s2 + $0x60] sm:$0xff]
        %v387 = vld [vmem:[%s2 + $0x68] sm:$0xff]
        %v388 = vld [vmem:[%s2 + $0x70] sm:$0xff]
        %v389 = vld [vmem:[%s2 + $0x78] sm:$0xff]
        %391 = vset.pattern.permute.xlu0 0
        %392 = vperm.xlu0 %391, %v374
        %v393 = vpop.permute.xlu0 %392
        %396 = vset.pattern.permute.xlu0 0
        %397 = vperm.xlu0 %396, %v375
        %v398 = vpop.permute.xlu0 %397
        %401 = vset.pattern.permute.xlu0 0
        %402 = vperm.xlu0 %401, %v376
        %v403 = vpop.permute.xlu0 %402
        %406 = vset.pattern.permute.xlu0 0
        %407 = vperm.xlu0 %406, %v377
        %v408 = vpop.permute.xlu0 %407
        %411 = vset.pattern.permute.xlu0 0
        %412 = vperm.xlu0 %411, %v378
        %v413 = vpop.permute.xlu0 %412
        %416 = vset.pattern.permute.xlu0 0
        %417 = vperm.xlu0 %416, %v379
        %v418 = vpop.permute.xlu0 %417
        %421 = vset.pattern.permute.xlu0 0
        %422 = vperm.xlu0 %421, %v380
        %v423 = vpop.permute.xlu0 %422
        %426 = vset.pattern.permute.xlu0 0
        %427 = vperm.xlu0 %426, %v381
        %v428 = vpop.permute.xlu0 %427
        %431 = vset.pattern.permute.xlu0 0
        %432 = vperm.xlu0 %431, %v382
        %v433 = vpop.permute.xlu0 %432
        %436 = vset.pattern.permute.xlu0 0
        %437 = vperm.xlu0 %436, %v383
        %v438 = vpop.permute.xlu0 %437
        %441 = vset.pattern.permute.xlu0 0
        %442 = vperm.xlu0 %441, %v384
        %v443 = vpop.permute.xlu0 %442
        %446 = vset.pattern.permute.xlu0 0
        %447 = vperm.xlu0 %446, %v385
        %v448 = vpop.permute.xlu0 %447
        %451 = vset.pattern.permute.xlu0 0
        %452 = vperm.xlu0 %451, %v386
        %v453 = vpop.permute.xlu0 %452
        %456 = vset.pattern.permute.xlu0 0
        %457 = vperm.xlu0 %456, %v387
        %v458 = vpop.permute.xlu0 %457
        %461 = vset.pattern.permute.xlu0 0
        %462 = vperm.xlu0 %461, %v388
        %v463 = vpop.permute.xlu0 %462
        %466 = vset.pattern.permute.xlu0 0
        %467 = vperm.xlu0 %466, %v389
        %v468 = vpop.permute.xlu0 %467
        %v470 = vmul.f32 %v358, %v393
        %v471 = vmul.f32 %v373, %v398
        %v472 = vmul.f32 %v372, %v403
        %v473 = vmul.f32 %v371, %v408
        %v474 = vmul.f32 %v370, %v413
        %v475 = vmul.f32 %v369, %v418
        %v476 = vmul.f32 %v368, %v423
        %v477 = vmul.f32 %v367, %v428
        %v478 = vmul.f32 %v366, %v433
        %v479 = vmul.f32 %v365, %v438
        %v480 = vmul.f32 %v364, %v443
        %v481 = vmul.f32 %v363, %v448
        %v482 = vmul.f32 %v362, %v453
        %v483 = vmul.f32 %v361, %v458
        %v484 = vmul.f32 %v360, %v463
        %v485 = vmul.f32 %v359, %v468
        %v486 = vpack.c.bf16 %v471, %v470
        %v487 = vpack.c.bf16 %v473, %v472
        %v488 = vpack.c.bf16 %v475, %v474
        %v489 = vpack.c.bf16 %v477, %v476
        %v490 = vpack.c.bf16 %v479, %v478
        %v491 = vpack.c.bf16 %v481, %v480
        %v492 = vpack.c.bf16 %v483, %v482
        %v493 = vpack.c.bf16 %v485, %v484
        %v494 = vld [vmem:[%s1] sm:$0xf]
        %v495 = vld [vmem:[%s1 + $0x4] sm:$0xf]
        %v496 = vld [vmem:[%s1 + $0x8] sm:$0xf]
        %v497 = vld [vmem:[%s1 + $0xc] sm:$0xf]
        %v498 = vld [vmem:[%s1 + $0x10] sm:$0xf]
        %v499 = vld [vmem:[%s1 + $0x14] sm:$0xf]
        %v500 = vld [vmem:[%s1 + $0x18] sm:$0xf]
        %v501 = vld [vmem:[%s1 + $0x1c] sm:$0xf]
        %v510 = vunpack.c.l.b16 %v494
        %v511 = vunpack.c.l.b16 %v495
        %v512 = vunpack.c.l.b16 %v496
        %v513 = vunpack.c.l.b16 %v497
        %v514 = vunpack.c.l.b16 %v498
        %v515 = vunpack.c.l.b16 %v499
        %v516 = vunpack.c.l.b16 %v500
        %v517 = vunpack.c.l.b16 %v501
        %v518 = vpack.c.b16 %v511, %v510
        %v519 = vpack.c.b16 %v513, %v512
        %v520 = vpack.c.b16 %v515, %v514
        %v521 = vpack.c.b16 %v517, %v516
        %vm526 = vcmask 523264
        %v528 = vsel %vm526, %v486, 0
        %v531 = vsel %vm526, %v487, 0
        %v534 = vsel %vm526, %v488, 0
        %v537 = vsel %vm526, %v489, 0
        %v540 = vsel %vm526, %v490, 0
        %v543 = vsel %vm526, %v491, 0
        %v546 = vsel %vm526, %v492, 0
        %v549 = vsel %vm526, %v493, 0
        %551 = vmatprep.subr.bf16.mxu0 0
        %552 = vmatpush1.bf16.msra.mxu0 0
        %553 = vmatprep.subr.bf16.mxu0 0
        %554 = vmatpush1.bf16.msra.mxu0 0
        %555 = vmatprep.subr.bf16.mxu0 0
        %556 = vmatpush1.bf16.msra.mxu0 0
        %557 = vmatprep.subr.bf16.mxu0 0
        %558 = vmatpush1.bf16.msra.mxu0 0
        %559 = vmatprep.subr.bf16.mxu0 0
        %560 = vmatpush1.bf16.msra.mxu0 %v521
        %561 = vmatprep.subr.bf16.mxu0 0
        %562 = vmatpush1.bf16.msra.mxu0 %v520
        %563 = vmatprep.subr.bf16.mxu0 0
        %564 = vmatpush1.bf16.msra.mxu0 %v519
        %565 = vmatprep.subr.bf16.mxu0 0
        %566 = vmatpush1.bf16.msra.mxu0 %v518
        %567 = vmatprep.subr.bf16.mxu0 0
        %568 = vmatpush2.bf16.msra.mxu0 0
        %569 = vmatprep.subr.bf16.mxu0 0
        %570 = vmatpush2.bf16.msra.mxu0 0
        %571 = vmatprep.subr.bf16.mxu0 0
        %572 = vmatpush2.bf16.msra.mxu0 0
        %573 = vmatprep.subr.bf16.mxu0 0
        %574 = vmatpush2.bf16.msra.mxu0 0
        %575 = vmatprep.subr.bf16.mxu0 0
        %576 = vmatpush2.bf16.msra.mxu0 0
        %577 = vmatprep.subr.bf16.mxu0 0
        %578 = vmatpush2.bf16.msra.mxu0 0
        %579 = vmatprep.subr.bf16.mxu0 0
        %580 = vmatpush2.bf16.msra.mxu0 0
        %581 = vmatprep.subr.bf16.mxu0 0
        %582 = vmatpush2.bf16.msra.mxu0 0
        %583 = vmatprep.mubr.bf16.mxu0 0
        %584 = vmatmul.mubr.bf16.gmra.mxu0 %v528
        %v585 = vpop.f32.mrf.mxu0
        %v586 = vadd.f32 0.0, %v585
        %v587 = vpop.f32.mrf.mxu0
        %v588 = vpop.f32.mrf.mxu0
        %v589 = vadd.f32 0.0, %v588
        %v590 = vpop.f32.mrf.mxu0
        %591 = vmatprep.mubr.bf16.mxu0 0
        %592 = vmatmul.mubr.bf16.gmra.mxu0 %v531
        %v593 = vpop.f32.mrf.mxu0
        %v594 = vadd.f32 0.0, %v593
        %v595 = vpop.f32.mrf.mxu0
        %v596 = vpop.f32.mrf.mxu0
        %v597 = vadd.f32 0.0, %v596
        %v598 = vpop.f32.mrf.mxu0
        %599 = vmatprep.mubr.bf16.mxu0 0
        %600 = vmatmul.mubr.bf16.gmra.mxu0 %v534
        %v601 = vpop.f32.mrf.mxu0
        %v602 = vadd.f32 0.0, %v601
        %v603 = vpop.f32.mrf.mxu0
        %v604 = vpop.f32.mrf.mxu0
        %v605 = vadd.f32 0.0, %v604
        %v606 = vpop.f32.mrf.mxu0
        %607 = vmatprep.mubr.bf16.mxu0 0
        %608 = vmatmul.mubr.bf16.gmra.mxu0 %v537
        %v609 = vpop.f32.mrf.mxu0
        %v610 = vadd.f32 0.0, %v609
        %v611 = vpop.f32.mrf.mxu0
        %v612 = vpop.f32.mrf.mxu0
        %v613 = vadd.f32 0.0, %v612
        %v614 = vpop.f32.mrf.mxu0
        %615 = vmatprep.mubr.bf16.mxu0 0
        %616 = vmatmul.mubr.bf16.gmra.mxu0 %v540
        %v617 = vpop.f32.mrf.mxu0
        %v618 = vadd.f32 0.0, %v617
        %v619 = vpop.f32.mrf.mxu0
        %v620 = vpop.f32.mrf.mxu0
        %v621 = vadd.f32 0.0, %v620
        %v622 = vpop.f32.mrf.mxu0
        %623 = vmatprep.mubr.bf16.mxu0 0
        %624 = vmatmul.mubr.bf16.gmra.mxu0 %v543
        %v625 = vpop.f32.mrf.mxu0
        %v626 = vadd.f32 0.0, %v625
        %v627 = vpop.f32.mrf.mxu0
        %v628 = vpop.f32.mrf.mxu0
        %v629 = vadd.f32 0.0, %v628
        %v630 = vpop.f32.mrf.mxu0
        %631 = vmatprep.mubr.bf16.mxu0 0
        %632 = vmatmul.mubr.bf16.gmra.mxu0 %v546
        %v633 = vpop.f32.mrf.mxu0
        %v634 = vadd.f32 0.0, %v633
        %v635 = vpop.f32.mrf.mxu0
        %v636 = vpop.f32.mrf.mxu0
        %v637 = vadd.f32 0.0, %v636
        %v638 = vpop.f32.mrf.mxu0
        %639 = vmatprep.mubr.bf16.mxu0 0
        %640 = vmatmul.mubr.bf16.gmra.mxu0 %v549
        %v641 = vpop.f32.mrf.mxu0
        %v642 = vadd.f32 0.0, %v641
        %v643 = vpop.f32.mrf.mxu0
        %v644 = vpop.f32.mrf.mxu0
        %v645 = vadd.f32 0.0, %v644
        %v646 = vpop.f32.mrf.mxu0
        %647 = vdwg.mxu0
        %648 = vst [vmem:[%s217] sm:$0xff] %v586
        %649 = vst [vmem:[%s217 + $0x8] sm:$0xff] %v589
        %650 = vst [vmem:[%s217 + $0x10] sm:$0xff] %v594
        %651 = vst [vmem:[%s217 + $0x18] sm:$0xff] %v597
        %652 = vst [vmem:[%s217 + $0x20] sm:$0xff] %v602
        %653 = vst [vmem:[%s217 + $0x28] sm:$0xff] %v605
        %654 = vst [vmem:[%s217 + $0x30] sm:$0xff] %v610
        %655 = vst [vmem:[%s217 + $0x38] sm:$0xff] %v613
        %656 = vst [vmem:[%s217 + $0x40] sm:$0xff] %v618
        %657 = vst [vmem:[%s217 + $0x48] sm:$0xff] %v621
        %658 = vst [vmem:[%s217 + $0x50] sm:$0xff] %v626
        %659 = vst [vmem:[%s217 + $0x58] sm:$0xff] %v629
        %660 = vst [vmem:[%s217 + $0x60] sm:$0xff] %v634
        %661 = vst [vmem:[%s217 + $0x68] sm:$0xff] %v637
        %662 = vst [vmem:[%s217 + $0x70] sm:$0xff] %v642
        %663 = vst [vmem:[%s217 + $0x78] sm:$0xff] %v645
        %v664 = vld [vmem:[%s217] sm:$0xff]
        %v665 = vld [vmem:[%s217 + $0x8] sm:$0xff]
        %v666 = vld [vmem:[%s217 + $0x10] sm:$0xff]
        %v667 = vld [vmem:[%s217 + $0x18] sm:$0xff]
        %v668 = vld [vmem:[%s217 + $0x20] sm:$0xff]
        %v669 = vld [vmem:[%s217 + $0x28] sm:$0xff]
        %v670 = vld [vmem:[%s217 + $0x30] sm:$0xff]
        %v671 = vld [vmem:[%s217 + $0x38] sm:$0xff]
        %v672 = vld [vmem:[%s217 + $0x40] sm:$0xff]
        %v673 = vld [vmem:[%s217 + $0x48] sm:$0xff]
        %v674 = vld [vmem:[%s217 + $0x50] sm:$0xff]
        %v675 = vld [vmem:[%s217 + $0x58] sm:$0xff]
        %v676 = vld [vmem:[%s217 + $0x60] sm:$0xff]
        %v677 = vld [vmem:[%s217 + $0x68] sm:$0xff]
        %v678 = vld [vmem:[%s217 + $0x70] sm:$0xff]
        %v679 = vld [vmem:[%s217 + $0x78] sm:$0xff]
        %v680 = vrot.slane %v323, 2
        %v681 = vrot.slane %v324, 2
        %v682 = vrot.slane %v325, 2
        %v683 = vrot.slane %v326, 2
        %v684 = vrot.slane %v327, 2
        %v685 = vrot.slane %v328, 2
        %v686 = vrot.slane %v329, 2
        %v687 = vrot.slane %v330, 2
        %v688 = vrot.slane %v331, 2
        %v689 = vrot.slane %v332, 2
        %v690 = vrot.slane %v333, 2
        %v691 = vrot.slane %v334, 2
        %v692 = vrot.slane %v335, 2
        %v693 = vrot.slane %v336, 2
        %v694 = vrot.slane %v337, 2
        %v695 = vrot.slane %v338, 2
        %vm696 = vcmp.lt.s32.totalorder %v356, 6
        %v697 = vsel %vm696, %v694, %v695
        %v698 = vsel %vm696, %v693, %v694
        %v699 = vsel %vm696, %v692, %v693
        %v700 = vsel %vm696, %v691, %v692
        %v701 = vsel %vm696, %v690, %v691
        %v702 = vsel %vm696, %v689, %v690
        %v703 = vsel %vm696, %v688, %v689
        %v704 = vsel %vm696, %v687, %v688
        %v705 = vsel %vm696, %v686, %v687
        %v706 = vsel %vm696, %v685, %v686
        %v707 = vsel %vm696, %v684, %v685
        %v708 = vsel %vm696, %v683, %v684
        %v709 = vsel %vm696, %v682, %v683
        %v710 = vsel %vm696, %v681, %v682
        %v711 = vsel %vm696, %v680, %v681
        %v712 = vsel %vm696, %v695, %v680
        %s713 = scalar_lea.vmem %s2, 128
        %v714 = vld [vmem:[%s713] sm:$0xff]
        %v715 = vld [vmem:[%s713 + $0x8] sm:$0xff]
        %v716 = vld [vmem:[%s713 + $0x10] sm:$0xff]
        %v717 = vld [vmem:[%s713 + $0x18] sm:$0xff]
        %v718 = vld [vmem:[%s713 + $0x20] sm:$0xff]
        %v719 = vld [vmem:[%s713 + $0x28] sm:$0xff]
        %v720 = vld [vmem:[%s713 + $0x30] sm:$0xff]
        %v721 = vld [vmem:[%s713 + $0x38] sm:$0xff]
        %v722 = vld [vmem:[%s713 + $0x40] sm:$0xff]
        %v723 = vld [vmem:[%s713 + $0x48] sm:$0xff]
        %v724 = vld [vmem:[%s713 + $0x50] sm:$0xff]
        %v725 = vld [vmem:[%s713 + $0x58] sm:$0xff]
        %v726 = vld [vmem:[%s713 + $0x60] sm:$0xff]
        %v727 = vld [vmem:[%s713 + $0x68] sm:$0xff]
        %v728 = vld [vmem:[%s713 + $0x70] sm:$0xff]
        %v729 = vld [vmem:[%s713 + $0x78] sm:$0xff]
        %731 = vset.pattern.permute.xlu0 0
        %732 = vperm.xlu0 %731, %v714
        %v733 = vpop.permute.xlu0 %732
        %736 = vset.pattern.permute.xlu0 0
        %737 = vperm.xlu0 %736, %v715
        %v738 = vpop.permute.xlu0 %737
        %741 = vset.pattern.permute.xlu0 0
        %742 = vperm.xlu0 %741, %v716
        %v743 = vpop.permute.xlu0 %742
        %746 = vset.pattern.permute.xlu0 0
        %747 = vperm.xlu0 %746, %v717
        %v748 = vpop.permute.xlu0 %747
        %751 = vset.pattern.permute.xlu0 0
        %752 = vperm.xlu0 %751, %v718
        %v753 = vpop.permute.xlu0 %752
        %756 = vset.pattern.permute.xlu0 0
        %757 = vperm.xlu0 %756, %v719
        %v758 = vpop.permute.xlu0 %757
        %761 = vset.pattern.permute.xlu0 0
        %762 = vperm.xlu0 %761, %v720
        %v763 = vpop.permute.xlu0 %762
        %766 = vset.pattern.permute.xlu0 0
        %767 = vperm.xlu0 %766, %v721
        %v768 = vpop.permute.xlu0 %767
        %771 = vset.pattern.permute.xlu0 0
        %772 = vperm.xlu0 %771, %v722
        %v773 = vpop.permute.xlu0 %772
        %776 = vset.pattern.permute.xlu0 0
        %777 = vperm.xlu0 %776, %v723
        %v778 = vpop.permute.xlu0 %777
        %781 = vset.pattern.permute.xlu0 0
        %782 = vperm.xlu0 %781, %v724
        %v783 = vpop.permute.xlu0 %782
        %786 = vset.pattern.permute.xlu0 0
        %787 = vperm.xlu0 %786, %v725
        %v788 = vpop.permute.xlu0 %787
        %791 = vset.pattern.permute.xlu0 0
        %792 = vperm.xlu0 %791, %v726
        %v793 = vpop.permute.xlu0 %792
        %796 = vset.pattern.permute.xlu0 0
        %797 = vperm.xlu0 %796, %v727
        %v798 = vpop.permute.xlu0 %797
        %801 = vset.pattern.permute.xlu0 0
        %802 = vperm.xlu0 %801, %v728
        %v803 = vpop.permute.xlu0 %802
        %806 = vset.pattern.permute.xlu0 0
        %807 = vperm.xlu0 %806, %v729
        %v808 = vpop.permute.xlu0 %807
        %v810 = vmul.f32 %v697, %v733
        %v811 = vmul.f32 %v712, %v738
        %v812 = vmul.f32 %v711, %v743
        %v813 = vmul.f32 %v710, %v748
        %v814 = vmul.f32 %v709, %v753
        %v815 = vmul.f32 %v708, %v758
        %v816 = vmul.f32 %v707, %v763
        %v817 = vmul.f32 %v706, %v768
        %v818 = vmul.f32 %v705, %v773
        %v819 = vmul.f32 %v704, %v778
        %v820 = vmul.f32 %v703, %v783
        %v821 = vmul.f32 %v702, %v788
        %v822 = vmul.f32 %v701, %v793
        %v823 = vmul.f32 %v700, %v798
        %v824 = vmul.f32 %v699, %v803
        %v825 = vmul.f32 %v698, %v808
        %v826 = vpack.c.bf16 %v811, %v810
        %v827 = vpack.c.bf16 %v813, %v812
        %v828 = vpack.c.bf16 %v815, %v814
        %v829 = vpack.c.bf16 %v817, %v816
        %v830 = vpack.c.bf16 %v819, %v818
        %v831 = vpack.c.bf16 %v821, %v820
        %v832 = vpack.c.bf16 %v823, %v822
        %v833 = vpack.c.bf16 %v825, %v824
        %s834 = scalar_lea.vmem %s1, 32
        %v835 = vld [vmem:[%s834] sm:$0xf]
        %v836 = vld [vmem:[%s834 + $0x4] sm:$0xf]
        %v837 = vld [vmem:[%s834 + $0x8] sm:$0xf]
        %v838 = vld [vmem:[%s834 + $0xc] sm:$0xf]
        %v839 = vld [vmem:[%s834 + $0x10] sm:$0xf]
        %v840 = vld [vmem:[%s834 + $0x14] sm:$0xf]
        %v841 = vld [vmem:[%s834 + $0x18] sm:$0xf]
        %v842 = vld [vmem:[%s834 + $0x1c] sm:$0xf]
        %v851 = vunpack.c.l.b16 %v835
        %v852 = vunpack.c.l.b16 %v836
        %v853 = vunpack.c.l.b16 %v837
        %v854 = vunpack.c.l.b16 %v838
        %v855 = vunpack.c.l.b16 %v839
        %v856 = vunpack.c.l.b16 %v840
        %v857 = vunpack.c.l.b16 %v841
        %v858 = vunpack.c.l.b16 %v842
        %v859 = vpack.c.b16 %v852, %v851
        %v860 = vpack.c.b16 %v854, %v853
        %v861 = vpack.c.b16 %v856, %v855
        %v862 = vpack.c.b16 %v858, %v857
        %v868 = vsel %vm526, %v826, 0
        %v871 = vsel %vm526, %v827, 0
        %v874 = vsel %vm526, %v828, 0
        %v877 = vsel %vm526, %v829, 0
        %v880 = vsel %vm526, %v830, 0
        %v883 = vsel %vm526, %v831, 0
        %v886 = vsel %vm526, %v832, 0
        %v889 = vsel %vm526, %v833, 0
        %891 = vmatprep.subr.bf16.mxu0 0
        %892 = vmatpush1.bf16.msra.mxu0 0
        %893 = vmatprep.subr.bf16.mxu0 0
        %894 = vmatpush1.bf16.msra.mxu0 0
        %895 = vmatprep.subr.bf16.mxu0 0
        %896 = vmatpush1.bf16.msra.mxu0 0
        %897 = vmatprep.subr.bf16.mxu0 0
        %898 = vmatpush1.bf16.msra.mxu0 0
        %899 = vmatprep.subr.bf16.mxu0 0
        %900 = vmatpush1.bf16.msra.mxu0 %v862
        %901 = vmatprep.subr.bf16.mxu0 0
        %902 = vmatpush1.bf16.msra.mxu0 %v861
        %903 = vmatprep.subr.bf16.mxu0 0
        %904 = vmatpush1.bf16.msra.mxu0 %v860
        %905 = vmatprep.subr.bf16.mxu0 0
        %906 = vmatpush1.bf16.msra.mxu0 %v859
        %907 = vmatprep.subr.bf16.mxu0 0
        %908 = vmatpush2.bf16.msra.mxu0 0
        %909 = vmatprep.subr.bf16.mxu0 0
        %910 = vmatpush2.bf16.msra.mxu0 0
        %911 = vmatprep.subr.bf16.mxu0 0
        %912 = vmatpush2.bf16.msra.mxu0 0
        %913 = vmatprep.subr.bf16.mxu0 0
        %914 = vmatpush2.bf16.msra.mxu0 0
        %915 = vmatprep.subr.bf16.mxu0 0
        %916 = vmatpush2.bf16.msra.mxu0 0
        %917 = vmatprep.subr.bf16.mxu0 0
        %918 = vmatpush2.bf16.msra.mxu0 0
        %919 = vmatprep.subr.bf16.mxu0 0
        %920 = vmatpush2.bf16.msra.mxu0 0
        %921 = vmatprep.subr.bf16.mxu0 0
        %922 = vmatpush2.bf16.msra.mxu0 0
        %923 = vmatprep.mubr.bf16.mxu0 0
        %924 = vmatmul.mubr.bf16.gmra.mxu0 %v868
        %v925 = vpop.f32.mrf.mxu0
        %v926 = vadd.f32 0.0, %v925
        %v927 = vpop.f32.mrf.mxu0
        %v928 = vpop.f32.mrf.mxu0
        %v929 = vadd.f32 0.0, %v928
        %v930 = vpop.f32.mrf.mxu0
        %931 = vmatprep.mubr.bf16.mxu0 0
        %932 = vmatmul.mubr.bf16.gmra.mxu0 %v871
        %v933 = vpop.f32.mrf.mxu0
        %v934 = vadd.f32 0.0, %v933
        %v935 = vpop.f32.mrf.mxu0
        %v936 = vpop.f32.mrf.mxu0
        %v937 = vadd.f32 0.0, %v936
        %v938 = vpop.f32.mrf.mxu0
        %939 = vmatprep.mubr.bf16.mxu0 0
        %940 = vmatmul.mubr.bf16.gmra.mxu0 %v874
        %v941 = vpop.f32.mrf.mxu0
        %v942 = vadd.f32 0.0, %v941
        %v943 = vpop.f32.mrf.mxu0
        %v944 = vpop.f32.mrf.mxu0
        %v945 = vadd.f32 0.0, %v944
        %v946 = vpop.f32.mrf.mxu0
        %947 = vmatprep.mubr.bf16.mxu0 0
        %948 = vmatmul.mubr.bf16.gmra.mxu0 %v877
        %v949 = vpop.f32.mrf.mxu0
        %v950 = vadd.f32 0.0, %v949
        %v951 = vpop.f32.mrf.mxu0
        %v952 = vpop.f32.mrf.mxu0
        %v953 = vadd.f32 0.0, %v952
        %v954 = vpop.f32.mrf.mxu0
        %955 = vmatprep.mubr.bf16.mxu0 0
        %956 = vmatmul.mubr.bf16.gmra.mxu0 %v880
        %v957 = vpop.f32.mrf.mxu0
        %v958 = vadd.f32 0.0, %v957
        %v959 = vpop.f32.mrf.mxu0
        %v960 = vpop.f32.mrf.mxu0
        %v961 = vadd.f32 0.0, %v960
        %v962 = vpop.f32.mrf.mxu0
        %963 = vmatprep.mubr.bf16.mxu0 0
        %964 = vmatmul.mubr.bf16.gmra.mxu0 %v883
        %v965 = vpop.f32.mrf.mxu0
        %v966 = vadd.f32 0.0, %v965
        %v967 = vpop.f32.mrf.mxu0
        %v968 = vpop.f32.mrf.mxu0
        %v969 = vadd.f32 0.0, %v968
        %v970 = vpop.f32.mrf.mxu0
        %971 = vmatprep.mubr.bf16.mxu0 0
        %972 = vmatmul.mubr.bf16.gmra.mxu0 %v886
        %v973 = vpop.f32.mrf.mxu0
        %v974 = vadd.f32 0.0, %v973
        %v975 = vpop.f32.mrf.mxu0
        %v976 = vpop.f32.mrf.mxu0
        %v977 = vadd.f32 0.0, %v976
        %v978 = vpop.f32.mrf.mxu0
        %979 = vmatprep.mubr.bf16.mxu0 0
        %980 = vmatmul.mubr.bf16.gmra.mxu0 %v889
        %v981 = vpop.f32.mrf.mxu0
        %v982 = vadd.f32 0.0, %v981
        %v983 = vpop.f32.mrf.mxu0
        %v984 = vpop.f32.mrf.mxu0
        %v985 = vadd.f32 0.0, %v984
        %v986 = vpop.f32.mrf.mxu0
        %987 = vdwg.mxu0
        %v988 = vadd.f32 %v664, %v926
        %v989 = vadd.f32 %v665, %v929
        %v990 = vadd.f32 %v666, %v934
        %v991 = vadd.f32 %v667, %v937
        %v992 = vadd.f32 %v668, %v942
        %v993 = vadd.f32 %v669, %v945
        %v994 = vadd.f32 %v670, %v950
        %v995 = vadd.f32 %v671, %v953
        %v996 = vadd.f32 %v672, %v958
        %v997 = vadd.f32 %v673, %v961
        %v998 = vadd.f32 %v674, %v966
        %v999 = vadd.f32 %v675, %v969
        %v1000 = vadd.f32 %v676, %v974
        %v1001 = vadd.f32 %v677, %v977
        %v1002 = vadd.f32 %v678, %v982
        %v1003 = vadd.f32 %v679, %v985
        %1004 = vst [vmem:[%s217] sm:$0xff] %v988
        %1005 = vst [vmem:[%s217 + $0x8] sm:$0xff] %v989
        %1006 = vst [vmem:[%s217 + $0x10] sm:$0xff] %v990
        %1007 = vst [vmem:[%s217 + $0x18] sm:$0xff] %v991
        %1008 = vst [vmem:[%s217 + $0x20] sm:$0xff] %v992
        %1009 = vst [vmem:[%s217 + $0x28] sm:$0xff] %v993
        %1010 = vst [vmem:[%s217 + $0x30] sm:$0xff] %v994
        %1011 = vst [vmem:[%s217 + $0x38] sm:$0xff] %v995
        %1012 = vst [vmem:[%s217 + $0x40] sm:$0xff] %v996
        %1013 = vst [vmem:[%s217 + $0x48] sm:$0xff] %v997
        %1014 = vst [vmem:[%s217 + $0x50] sm:$0xff] %v998
        %1015 = vst [vmem:[%s217 + $0x58] sm:$0xff] %v999
        %1016 = vst [vmem:[%s217 + $0x60] sm:$0xff] %v1000
        %1017 = vst [vmem:[%s217 + $0x68] sm:$0xff] %v1001
        %1018 = vst [vmem:[%s217 + $0x70] sm:$0xff] %v1002
        %1019 = vst [vmem:[%s217 + $0x78] sm:$0xff] %v1003
        %v1020 = vld [vmem:[%s217] sm:$0xff]
        %v1021 = vld [vmem:[%s217 + $0x8] sm:$0xff]
        %v1022 = vld [vmem:[%s217 + $0x10] sm:$0xff]
        %v1023 = vld [vmem:[%s217 + $0x18] sm:$0xff]
        %v1024 = vld [vmem:[%s217 + $0x20] sm:$0xff]
        %v1025 = vld [vmem:[%s217 + $0x28] sm:$0xff]
        %v1026 = vld [vmem:[%s217 + $0x30] sm:$0xff]
        %v1027 = vld [vmem:[%s217 + $0x38] sm:$0xff]
        %v1028 = vld [vmem:[%s217 + $0x40] sm:$0xff]
        %v1029 = vld [vmem:[%s217 + $0x48] sm:$0xff]
        %v1030 = vld [vmem:[%s217 + $0x50] sm:$0xff]
        %v1031 = vld [vmem:[%s217 + $0x58] sm:$0xff]
        %v1032 = vld [vmem:[%s217 + $0x60] sm:$0xff]
        %v1033 = vld [vmem:[%s217 + $0x68] sm:$0xff]
        %v1034 = vld [vmem:[%s217 + $0x70] sm:$0xff]
        %v1035 = vld [vmem:[%s217 + $0x78] sm:$0xff]
        %v1036 = vrot.slane %v323, 3
        %v1037 = vrot.slane %v324, 3
        %v1038 = vrot.slane %v325, 3
        %v1039 = vrot.slane %v326, 3
        %v1040 = vrot.slane %v327, 3
        %v1041 = vrot.slane %v328, 3
        %v1042 = vrot.slane %v329, 3
        %v1043 = vrot.slane %v330, 3
        %v1044 = vrot.slane %v331, 3
        %v1045 = vrot.slane %v332, 3
        %v1046 = vrot.slane %v333, 3
        %v1047 = vrot.slane %v334, 3
        %v1048 = vrot.slane %v335, 3
        %v1049 = vrot.slane %v336, 3
        %v1050 = vrot.slane %v337, 3
        %v1051 = vrot.slane %v338, 3
        %vm1052 = vcmp.lt.s32.totalorder %v356, 5
        %v1053 = vsel %vm1052, %v1050, %v1051
        %v1054 = vsel %vm1052, %v1049, %v1050
        %v1055 = vsel %vm1052, %v1048, %v1049
        %v1056 = vsel %vm1052, %v1047, %v1048
        %v1057 = vsel %vm1052, %v1046, %v1047
        %v1058 = vsel %vm1052, %v1045, %v1046
        %v1059 = vsel %vm1052, %v1044, %v1045
        %v1060 = vsel %vm1052, %v1043, %v1044
        %v1061 = vsel %vm1052, %v1042, %v1043
        %v1062 = vsel %vm1052, %v1041, %v1042
        %v1063 = vsel %vm1052, %v1040, %v1041
        %v1064 = vsel %vm1052, %v1039, %v1040
        %v1065 = vsel %vm1052, %v1038, %v1039
        %v1066 = vsel %vm1052, %v1037, %v1038
        %v1067 = vsel %vm1052, %v1036, %v1037
        %v1068 = vsel %vm1052, %v1051, %v1036
        %s1069 = scalar_lea.vmem %s2, 256
        %v1070 = vld [vmem:[%s1069] sm:$0xff]
        %v1071 = vld [vmem:[%s1069 + $0x8] sm:$0xff]
        %v1072 = vld [vmem:[%s1069 + $0x10] sm:$0xff]
        %v1073 = vld [vmem:[%s1069 + $0x18] sm:$0xff]
        %v1074 = vld [vmem:[%s1069 + $0x20] sm:$0xff]
        %v1075 = vld [vmem:[%s1069 + $0x28] sm:$0xff]
        %v1076 = vld [vmem:[%s1069 + $0x30] sm:$0xff]
        %v1077 = vld [vmem:[%s1069 + $0x38] sm:$0xff]
        %v1078 = vld [vmem:[%s1069 + $0x40] sm:$0xff]
        %v1079 = vld [vmem:[%s1069 + $0x48] sm:$0xff]
        %v1080 = vld [vmem:[%s1069 + $0x50] sm:$0xff]
        %v1081 = vld [vmem:[%s1069 + $0x58] sm:$0xff]
        %v1082 = vld [vmem:[%s1069 + $0x60] sm:$0xff]
        %v1083 = vld [vmem:[%s1069 + $0x68] sm:$0xff]
        %v1084 = vld [vmem:[%s1069 + $0x70] sm:$0xff]
        %v1085 = vld [vmem:[%s1069 + $0x78] sm:$0xff]
        %1087 = vset.pattern.permute.xlu0 0
        %1088 = vperm.xlu0 %1087, %v1070
        %v1089 = vpop.permute.xlu0 %1088
        %1092 = vset.pattern.permute.xlu0 0
        %1093 = vperm.xlu0 %1092, %v1071
        %v1094 = vpop.permute.xlu0 %1093
        %1097 = vset.pattern.permute.xlu0 0
        %1098 = vperm.xlu0 %1097, %v1072
        %v1099 = vpop.permute.xlu0 %1098
        %1102 = vset.pattern.permute.xlu0 0
        %1103 = vperm.xlu0 %1102, %v1073
        %v1104 = vpop.permute.xlu0 %1103
        %1107 = vset.pattern.permute.xlu0 0
        %1108 = vperm.xlu0 %1107, %v1074
        %v1109 = vpop.permute.xlu0 %1108
        %1112 = vset.pattern.permute.xlu0 0
        %1113 = vperm.xlu0 %1112, %v1075
        %v1114 = vpop.permute.xlu0 %1113
        %1117 = vset.pattern.permute.xlu0 0
        %1118 = vperm.xlu0 %1117, %v1076
        %v1119 = vpop.permute.xlu0 %1118
        %1122 = vset.pattern.permute.xlu0 0
        %1123 = vperm.xlu0 %1122, %v1077
        %v1124 = vpop.permute.xlu0 %1123
        %1127 = vset.pattern.permute.xlu0 0
        %1128 = vperm.xlu0 %1127, %v1078
        %v1129 = vpop.permute.xlu0 %1128
        %1132 = vset.pattern.permute.xlu0 0
        %1133 = vperm.xlu0 %1132, %v1079
        %v1134 = vpop.permute.xlu0 %1133
        %1137 = vset.pattern.permute.xlu0 0
        %1138 = vperm.xlu0 %1137, %v1080
        %v1139 = vpop.permute.xlu0 %1138
        %1142 = vset.pattern.permute.xlu0 0
        %1143 = vperm.xlu0 %1142, %v1081
        %v1144 = vpop.permute.xlu0 %1143
        %1147 = vset.pattern.permute.xlu0 0
        %1148 = vperm.xlu0 %1147, %v1082
        %v1149 = vpop.permute.xlu0 %1148
        %1152 = vset.pattern.permute.xlu0 0
        %1153 = vperm.xlu0 %1152, %v1083
        %v1154 = vpop.permute.xlu0 %1153
        %1157 = vset.pattern.permute.xlu0 0
        %1158 = vperm.xlu0 %1157, %v1084
        %v1159 = vpop.permute.xlu0 %1158
        %1162 = vset.pattern.permute.xlu0 0
        %1163 = vperm.xlu0 %1162, %v1085
        %v1164 = vpop.permute.xlu0 %1163
        %v1166 = vmul.f32 %v1053, %v1089
        %v1167 = vmul.f32 %v1068, %v1094
        %v1168 = vmul.f32 %v1067, %v1099
        %v1169 = vmul.f32 %v1066, %v1104
        %v1170 = vmul.f32 %v1065, %v1109
        %v1171 = vmul.f32 %v1064, %v1114
        %v1172 = vmul.f32 %v1063, %v1119
        %v1173 = vmul.f32 %v1062, %v1124
        %v1174 = vmul.f32 %v1061, %v1129
        %v1175 = vmul.f32 %v1060, %v1134
        %v1176 = vmul.f32 %v1059, %v1139
        %v1177 = vmul.f32 %v1058, %v1144
        %v1178 = vmul.f32 %v1057, %v1149
        %v1179 = vmul.f32 %v1056, %v1154
        %v1180 = vmul.f32 %v1055, %v1159
        %v1181 = vmul.f32 %v1054, %v1164
        %v1182 = vpack.c.bf16 %v1167, %v1166
        %v1183 = vpack.c.bf16 %v1169, %v1168
        %v1184 = vpack.c.bf16 %v1171, %v1170
        %v1185 = vpack.c.bf16 %v1173, %v1172
        %v1186 = vpack.c.bf16 %v1175, %v1174
        %v1187 = vpack.c.bf16 %v1177, %v1176
        %v1188 = vpack.c.bf16 %v1179, %v1178
        %v1189 = vpack.c.bf16 %v1181, %v1180
        %s1190 = scalar_lea.vmem %s1, 64
        %v1191 = vld [vmem:[%s1190] sm:$0xf]
        %v1192 = vld [vmem:[%s1190 + $0x4] sm:$0xf]
        %v1193 = vld [vmem:[%s1190 + $0x8] sm:$0xf]
        %v1194 = vld [vmem:[%s1190 + $0xc] sm:$0xf]
        %v1195 = vld [vmem:[%s1190 + $0x10] sm:$0xf]
        %v1196 = vld [vmem:[%s1190 + $0x14] sm:$0xf]
        %v1197 = vld [vmem:[%s1190 + $0x18] sm:$0xf]
        %v1198 = vld [vmem:[%s1190 + $0x1c] sm:$0xf]
        %v1207 = vunpack.c.l.b16 %v1191
        %v1208 = vunpack.c.l.b16 %v1192
        %v1209 = vunpack.c.l.b16 %v1193
        %v1210 = vunpack.c.l.b16 %v1194
        %v1211 = vunpack.c.l.b16 %v1195
        %v1212 = vunpack.c.l.b16 %v1196
        %v1213 = vunpack.c.l.b16 %v1197
        %v1214 = vunpack.c.l.b16 %v1198
        %v1215 = vpack.c.b16 %v1208, %v1207
        %v1216 = vpack.c.b16 %v1210, %v1209
        %v1217 = vpack.c.b16 %v1212, %v1211
        %v1218 = vpack.c.b16 %v1214, %v1213
        %v1224 = vsel %vm526, %v1182, 0
        %v1227 = vsel %vm526, %v1183, 0
        %v1230 = vsel %vm526, %v1184, 0
        %v1233 = vsel %vm526, %v1185, 0
        %v1236 = vsel %vm526, %v1186, 0
        %v1239 = vsel %vm526, %v1187, 0
        %v1242 = vsel %vm526, %v1188, 0
        %v1245 = vsel %vm526, %v1189, 0
        %1247 = vmatprep.subr.bf16.mxu0 0
        %1248 = vmatpush1.bf16.msra.mxu0 0
        %1249 = vmatprep.subr.bf16.mxu0 0
        %1250 = vmatpush1.bf16.msra.mxu0 0
        %1251 = vmatprep.subr.bf16.mxu0 0
        %1252 = vmatpush1.bf16.msra.mxu0 0
        %1253 = vmatprep.subr.bf16.mxu0 0
        %1254 = vmatpush1.bf16.msra.mxu0 0
        %1255 = vmatprep.subr.bf16.mxu0 0
        %1256 = vmatpush1.bf16.msra.mxu0 %v1218
        %1257 = vmatprep.subr.bf16.mxu0 0
        %1258 = vmatpush1.bf16.msra.mxu0 %v1217
        %1259 = vmatprep.subr.bf16.mxu0 0
        %1260 = vmatpush1.bf16.msra.mxu0 %v1216
        %1261 = vmatprep.subr.bf16.mxu0 0
        %1262 = vmatpush1.bf16.msra.mxu0 %v1215
        %1263 = vmatprep.subr.bf16.mxu0 0
        %1264 = vmatpush2.bf16.msra.mxu0 0
        %1265 = vmatprep.subr.bf16.mxu0 0
        %1266 = vmatpush2.bf16.msra.mxu0 0
        %1267 = vmatprep.subr.bf16.mxu0 0
        %1268 = vmatpush2.bf16.msra.mxu0 0
        %1269 = vmatprep.subr.bf16.mxu0 0
        %1270 = vmatpush2.bf16.msra.mxu0 0
        %1271 = vmatprep.subr.bf16.mxu0 0
        %1272 = vmatpush2.bf16.msra.mxu0 0
        %1273 = vmatprep.subr.bf16.mxu0 0
        %1274 = vmatpush2.bf16.msra.mxu0 0
        %1275 = vmatprep.subr.bf16.mxu0 0
        %1276 = vmatpush2.bf16.msra.mxu0 0
        %1277 = vmatprep.subr.bf16.mxu0 0
        %1278 = vmatpush2.bf16.msra.mxu0 0
        %1279 = vmatprep.mubr.bf16.mxu0 0
        %1280 = vmatmul.mubr.bf16.gmra.mxu0 %v1224
        %v1281 = vpop.f32.mrf.mxu0
        %v1282 = vadd.f32 0.0, %v1281
        %v1283 = vpop.f32.mrf.mxu0
        %v1284 = vpop.f32.mrf.mxu0
        %v1285 = vadd.f32 0.0, %v1284
        %v1286 = vpop.f32.mrf.mxu0
        %1287 = vmatprep.mubr.bf16.mxu0 0
        %1288 = vmatmul.mubr.bf16.gmra.mxu0 %v1227
        %v1289 = vpop.f32.mrf.mxu0
        %v1290 = vadd.f32 0.0, %v1289
        %v1291 = vpop.f32.mrf.mxu0
        %v1292 = vpop.f32.mrf.mxu0
        %v1293 = vadd.f32 0.0, %v1292
        %v1294 = vpop.f32.mrf.mxu0
        %1295 = vmatprep.mubr.bf16.mxu0 0
        %1296 = vmatmul.mubr.bf16.gmra.mxu0 %v1230
        %v1297 = vpop.f32.mrf.mxu0
        %v1298 = vadd.f32 0.0, %v1297
        %v1299 = vpop.f32.mrf.mxu0
        %v1300 = vpop.f32.mrf.mxu0
        %v1301 = vadd.f32 0.0, %v1300
        %v1302 = vpop.f32.mrf.mxu0
        %1303 = vmatprep.mubr.bf16.mxu0 0
        %1304 = vmatmul.mubr.bf16.gmra.mxu0 %v1233
        %v1305 = vpop.f32.mrf.mxu0
        %v1306 = vadd.f32 0.0, %v1305
        %v1307 = vpop.f32.mrf.mxu0
        %v1308 = vpop.f32.mrf.mxu0
        %v1309 = vadd.f32 0.0, %v1308
        %v1310 = vpop.f32.mrf.mxu0
        %1311 = vmatprep.mubr.bf16.mxu0 0
        %1312 = vmatmul.mubr.bf16.gmra.mxu0 %v1236
        %v1313 = vpop.f32.mrf.mxu0
        %v1314 = vadd.f32 0.0, %v1313
        %v1315 = vpop.f32.mrf.mxu0
        %v1316 = vpop.f32.mrf.mxu0
        %v1317 = vadd.f32 0.0, %v1316
        %v1318 = vpop.f32.mrf.mxu0
        %1319 = vmatprep.mubr.bf16.mxu0 0
        %1320 = vmatmul.mubr.bf16.gmra.mxu0 %v1239
        %v1321 = vpop.f32.mrf.mxu0
        %v1322 = vadd.f32 0.0, %v1321
        %v1323 = vpop.f32.mrf.mxu0
        %v1324 = vpop.f32.mrf.mxu0
        %v1325 = vadd.f32 0.0, %v1324
        %v1326 = vpop.f32.mrf.mxu0
        %1327 = vmatprep.mubr.bf16.mxu0 0
        %1328 = vmatmul.mubr.bf16.gmra.mxu0 %v1242
        %v1329 = vpop.f32.mrf.mxu0
        %v1330 = vadd.f32 0.0, %v1329
        %v1331 = vpop.f32.mrf.mxu0
        %v1332 = vpop.f32.mrf.mxu0
        %v1333 = vadd.f32 0.0, %v1332
        %v1334 = vpop.f32.mrf.mxu0
        %1335 = vmatprep.mubr.bf16.mxu0 0
        %1336 = vmatmul.mubr.bf16.gmra.mxu0 %v1245
        %v1337 = vpop.f32.mrf.mxu0
        %v1338 = vadd.f32 0.0, %v1337
        %v1339 = vpop.f32.mrf.mxu0
        %v1340 = vpop.f32.mrf.mxu0
        %v1341 = vadd.f32 0.0, %v1340
        %v1342 = vpop.f32.mrf.mxu0
        %1343 = vdwg.mxu0
        %v1344 = vadd.f32 %v1020, %v1282
        %v1345 = vadd.f32 %v1021, %v1285
        %v1346 = vadd.f32 %v1022, %v1290
        %v1347 = vadd.f32 %v1023, %v1293
        %v1348 = vadd.f32 %v1024, %v1298
        %v1349 = vadd.f32 %v1025, %v1301
        %v1350 = vadd.f32 %v1026, %v1306
        %v1351 = vadd.f32 %v1027, %v1309
        %v1352 = vadd.f32 %v1028, %v1314
        %v1353 = vadd.f32 %v1029, %v1317
        %v1354 = vadd.f32 %v1030, %v1322
        %v1355 = vadd.f32 %v1031, %v1325
        %v1356 = vadd.f32 %v1032, %v1330
        %v1357 = vadd.f32 %v1033, %v1333
        %v1358 = vadd.f32 %v1034, %v1338
        %v1359 = vadd.f32 %v1035, %v1341
        %1360 = vst [vmem:[%s217] sm:$0xff] %v1344
        %1361 = vst [vmem:[%s217 + $0x8] sm:$0xff] %v1345
        %1362 = vst [vmem:[%s217 + $0x10] sm:$0xff] %v1346
        %1363 = vst [vmem:[%s217 + $0x18] sm:$0xff] %v1347
        %1364 = vst [vmem:[%s217 + $0x20] sm:$0xff] %v1348
        %1365 = vst [vmem:[%s217 + $0x28] sm:$0xff] %v1349
        %1366 = vst [vmem:[%s217 + $0x30] sm:$0xff] %v1350
        %1367 = vst [vmem:[%s217 + $0x38] sm:$0xff] %v1351
        %1368 = vst [vmem:[%s217 + $0x40] sm:$0xff] %v1352
        %1369 = vst [vmem:[%s217 + $0x48] sm:$0xff] %v1353
        %1370 = vst [vmem:[%s217 + $0x50] sm:$0xff] %v1354
        %1371 = vst [vmem:[%s217 + $0x58] sm:$0xff] %v1355
        %1372 = vst [vmem:[%s217 + $0x60] sm:$0xff] %v1356
        %1373 = vst [vmem:[%s217 + $0x68] sm:$0xff] %v1357
        %1374 = vst [vmem:[%s217 + $0x70] sm:$0xff] %v1358
        %1375 = vst [vmem:[%s217 + $0x78] sm:$0xff] %v1359
        %v1376 = vld [vmem:[%s217] sm:$0xff]
        %v1377 = vld [vmem:[%s217 + $0x8] sm:$0xff]
        %v1378 = vld [vmem:[%s217 + $0x10] sm:$0xff]
        %v1379 = vld [vmem:[%s217 + $0x18] sm:$0xff]
        %v1380 = vld [vmem:[%s217 + $0x20] sm:$0xff]
        %v1381 = vld [vmem:[%s217 + $0x28] sm:$0xff]
        %v1382 = vld [vmem:[%s217 + $0x30] sm:$0xff]
        %v1383 = vld [vmem:[%s217 + $0x38] sm:$0xff]
        %v1384 = vld [vmem:[%s217 + $0x40] sm:$0xff]
        %v1385 = vld [vmem:[%s217 + $0x48] sm:$0xff]
        %v1386 = vld [vmem:[%s217 + $0x50] sm:$0xff]
        %v1387 = vld [vmem:[%s217 + $0x58] sm:$0xff]
        %v1388 = vld [vmem:[%s217 + $0x60] sm:$0xff]
        %v1389 = vld [vmem:[%s217 + $0x68] sm:$0xff]
        %v1390 = vld [vmem:[%s217 + $0x70] sm:$0xff]
        %v1391 = vld [vmem:[%s217 + $0x78] sm:$0xff]
        %v1392 = vrot.slane %v323, 4
        %v1393 = vrot.slane %v324, 4
        %v1394 = vrot.slane %v325, 4
        %v1395 = vrot.slane %v326, 4
        %v1396 = vrot.slane %v327, 4
        %v1397 = vrot.slane %v328, 4
        %v1398 = vrot.slane %v329, 4
        %v1399 = vrot.slane %v330, 4
        %v1400 = vrot.slane %v331, 4
        %v1401 = vrot.slane %v332, 4
        %v1402 = vrot.slane %v333, 4
        %v1403 = vrot.slane %v334, 4
        %v1404 = vrot.slane %v335, 4
        %v1405 = vrot.slane %v336, 4
        %v1406 = vrot.slane %v337, 4
        %v1407 = vrot.slane %v338, 4
        %vm1408 = vcmp.lt.s32.totalorder %v356, 4
        %v1409 = vsel %vm1408, %v1406, %v1407
        %v1410 = vsel %vm1408, %v1405, %v1406
        %v1411 = vsel %vm1408, %v1404, %v1405
        %v1412 = vsel %vm1408, %v1403, %v1404
        %v1413 = vsel %vm1408, %v1402, %v1403
        %v1414 = vsel %vm1408, %v1401, %v1402
        %v1415 = vsel %vm1408, %v1400, %v1401
        %v1416 = vsel %vm1408, %v1399, %v1400
        %v1417 = vsel %vm1408, %v1398, %v1399
        %v1418 = vsel %vm1408, %v1397, %v1398
        %v1419 = vsel %vm1408, %v1396, %v1397
        %v1420 = vsel %vm1408, %v1395, %v1396
        %v1421 = vsel %vm1408, %v1394, %v1395
        %v1422 = vsel %vm1408, %v1393, %v1394
        %v1423 = vsel %vm1408, %v1392, %v1393
        %v1424 = vsel %vm1408, %v1407, %v1392
        %s1425 = scalar_lea.vmem %s2, 384
        %v1426 = vld [vmem:[%s1425] sm:$0xff]
        %v1427 = vld [vmem:[%s1425 + $0x8] sm:$0xff]
        %v1428 = vld [vmem:[%s1425 + $0x10] sm:$0xff]
        %v1429 = vld [vmem:[%s1425 + $0x18] sm:$0xff]
        %v1430 = vld [vmem:[%s1425 + $0x20] sm:$0xff]
        %v1431 = vld [vmem:[%s1425 + $0x28] sm:$0xff]
        %v1432 = vld [vmem:[%s1425 + $0x30] sm:$0xff]
        %v1433 = vld [vmem:[%s1425 + $0x38] sm:$0xff]
        %v1434 = vld [vmem:[%s1425 + $0x40] sm:$0xff]
        %v1435 = vld [vmem:[%s1425 + $0x48] sm:$0xff]
        %v1436 = vld [vmem:[%s1425 + $0x50] sm:$0xff]
        %v1437 = vld [vmem:[%s1425 + $0x58] sm:$0xff]
        %v1438 = vld [vmem:[%s1425 + $0x60] sm:$0xff]
        %v1439 = vld [vmem:[%s1425 + $0x68] sm:$0xff]
        %v1440 = vld [vmem:[%s1425 + $0x70] sm:$0xff]
        %v1441 = vld [vmem:[%s1425 + $0x78] sm:$0xff]
        %1443 = vset.pattern.permute.xlu0 0
        %1444 = vperm.xlu0 %1443, %v1426
        %v1445 = vpop.permute.xlu0 %1444
        %1448 = vset.pattern.permute.xlu0 0
        %1449 = vperm.xlu0 %1448, %v1427
        %v1450 = vpop.permute.xlu0 %1449
        %1453 = vset.pattern.permute.xlu0 0
        %1454 = vperm.xlu0 %1453, %v1428
        %v1455 = vpop.permute.xlu0 %1454
        %1458 = vset.pattern.permute.xlu0 0
        %1459 = vperm.xlu0 %1458, %v1429
        %v1460 = vpop.permute.xlu0 %1459
        %1463 = vset.pattern.permute.xlu0 0
        %1464 = vperm.xlu0 %1463, %v1430
        %v1465 = vpop.permute.xlu0 %1464
        %1468 = vset.pattern.permute.xlu0 0
        %1469 = vperm.xlu0 %1468, %v1431
        %v1470 = vpop.permute.xlu0 %1469
        %1473 = vset.pattern.permute.xlu0 0
        %1474 = vperm.xlu0 %1473, %v1432
        %v1475 = vpop.permute.xlu0 %1474
        %1478 = vset.pattern.permute.xlu0 0
        %1479 = vperm.xlu0 %1478, %v1433
        %v1480 = vpop.permute.xlu0 %1479
        %1483 = vset.pattern.permute.xlu0 0
        %1484 = vperm.xlu0 %1483, %v1434
        %v1485 = vpop.permute.xlu0 %1484
        %1488 = vset.pattern.permute.xlu0 0
        %1489 = vperm.xlu0 %1488, %v1435
        %v1490 = vpop.permute.xlu0 %1489
        %1493 = vset.pattern.permute.xlu0 0
        %1494 = vperm.xlu0 %1493, %v1436
        %v1495 = vpop.permute.xlu0 %1494
        %1498 = vset.pattern.permute.xlu0 0
        %1499 = vperm.xlu0 %1498, %v1437
        %v1500 = vpop.permute.xlu0 %1499
        %1503 = vset.pattern.permute.xlu0 0
        %1504 = vperm.xlu0 %1503, %v1438
        %v1505 = vpop.permute.xlu0 %1504
        %1508 = vset.pattern.permute.xlu0 0
        %1509 = vperm.xlu0 %1508, %v1439
        %v1510 = vpop.permute.xlu0 %1509
        %1513 = vset.pattern.permute.xlu0 0
        %1514 = vperm.xlu0 %1513, %v1440
        %v1515 = vpop.permute.xlu0 %1514
        %1518 = vset.pattern.permute.xlu0 0
        %1519 = vperm.xlu0 %1518, %v1441
        %v1520 = vpop.permute.xlu0 %1519
        %v1522 = vmul.f32 %v1409, %v1445
        %v1523 = vmul.f32 %v1424, %v1450
        %v1524 = vmul.f32 %v1423, %v1455
        %v1525 = vmul.f32 %v1422, %v1460
        %v1526 = vmul.f32 %v1421, %v1465
        %v1527 = vmul.f32 %v1420, %v1470
        %v1528 = vmul.f32 %v1419, %v1475
        %v1529 = vmul.f32 %v1418, %v1480
        %v1530 = vmul.f32 %v1417, %v1485
        %v1531 = vmul.f32 %v1416, %v1490
        %v1532 = vmul.f32 %v1415, %v1495
        %v1533 = vmul.f32 %v1414, %v1500
        %v1534 = vmul.f32 %v1413, %v1505
        %v1535 = vmul.f32 %v1412, %v1510
        %v1536 = vmul.f32 %v1411, %v1515
        %v1537 = vmul.f32 %v1410, %v1520
        %v1538 = vpack.c.bf16 %v1523, %v1522
        %v1539 = vpack.c.bf16 %v1525, %v1524
        %v1540 = vpack.c.bf16 %v1527, %v1526
        %v1541 = vpack.c.bf16 %v1529, %v1528
        %v1542 = vpack.c.bf16 %v1531, %v1530
        %v1543 = vpack.c.bf16 %v1533, %v1532
        %v1544 = vpack.c.bf16 %v1535, %v1534
        %v1545 = vpack.c.bf16 %v1537, %v1536
        %s1546 = scalar_lea.vmem %s1, 96
        %v1547 = vld [vmem:[%s1546] sm:$0xf]
        %v1548 = vld [vmem:[%s1546 + $0x4] sm:$0xf]
        %v1549 = vld [vmem:[%s1546 + $0x8] sm:$0xf]
        %v1550 = vld [vmem:[%s1546 + $0xc] sm:$0xf]
        %v1551 = vld [vmem:[%s1546 + $0x10] sm:$0xf]
        %v1552 = vld [vmem:[%s1546 + $0x14] sm:$0xf]
        %v1553 = vld [vmem:[%s1546 + $0x18] sm:$0xf]
        %v1554 = vld [vmem:[%s1546 + $0x1c] sm:$0xf]
        %v1563 = vunpack.c.l.b16 %v1547
        %v1564 = vunpack.c.l.b16 %v1548
        %v1565 = vunpack.c.l.b16 %v1549
        %v1566 = vunpack.c.l.b16 %v1550
        %v1567 = vunpack.c.l.b16 %v1551
        %v1568 = vunpack.c.l.b16 %v1552
        %v1569 = vunpack.c.l.b16 %v1553
        %v1570 = vunpack.c.l.b16 %v1554
        %v1571 = vpack.c.b16 %v1564, %v1563
        %v1572 = vpack.c.b16 %v1566, %v1565
        %v1573 = vpack.c.b16 %v1568, %v1567
        %v1574 = vpack.c.b16 %v1570, %v1569
        %v1580 = vsel %vm526, %v1538, 0
        %v1583 = vsel %vm526, %v1539, 0
        %v1586 = vsel %vm526, %v1540, 0
        %v1589 = vsel %vm526, %v1541, 0
        %v1592 = vsel %vm526, %v1542, 0
        %v1595 = vsel %vm526, %v1543, 0
        %v1598 = vsel %vm526, %v1544, 0
        %v1601 = vsel %vm526, %v1545, 0
        %1603 = vmatprep.subr.bf16.mxu0 0
        %1604 = vmatpush1.bf16.msra.mxu0 0
        %1605 = vmatprep.subr.bf16.mxu0 0
        %1606 = vmatpush1.bf16.msra.mxu0 0
        %1607 = vmatprep.subr.bf16.mxu0 0
        %1608 = vmatpush1.bf16.msra.mxu0 0
        %1609 = vmatprep.subr.bf16.mxu0 0
        %1610 = vmatpush1.bf16.msra.mxu0 0
        %1611 = vmatprep.subr.bf16.mxu0 0
        %1612 = vmatpush1.bf16.msra.mxu0 %v1574
        %1613 = vmatprep.subr.bf16.mxu0 0
        %1614 = vmatpush1.bf16.msra.mxu0 %v1573
        %1615 = vmatprep.subr.bf16.mxu0 0
        %1616 = vmatpush1.bf16.msra.mxu0 %v1572
        %1617 = vmatprep.subr.bf16.mxu0 0
        %1618 = vmatpush1.bf16.msra.mxu0 %v1571
        %1619 = vmatprep.subr.bf16.mxu0 0
        %1620 = vmatpush2.bf16.msra.mxu0 0
        %1621 = vmatprep.subr.bf16.mxu0 0
        %1622 = vmatpush2.bf16.msra.mxu0 0
        %1623 = vmatprep.subr.bf16.mxu0 0
        %1624 = vmatpush2.bf16.msra.mxu0 0
        %1625 = vmatprep.subr.bf16.mxu0 0
        %1626 = vmatpush2.bf16.msra.mxu0 0
        %1627 = vmatprep.subr.bf16.mxu0 0
        %1628 = vmatpush2.bf16.msra.mxu0 0
        %1629 = vmatprep.subr.bf16.mxu0 0
        %1630 = vmatpush2.bf16.msra.mxu0 0
        %1631 = vmatprep.subr.bf16.mxu0 0
        %1632 = vmatpush2.bf16.msra.mxu0 0
        %1633 = vmatprep.subr.bf16.mxu0 0
        %1634 = vmatpush2.bf16.msra.mxu0 0
        %1635 = vmatprep.mubr.bf16.mxu0 0
        %1636 = vmatmul.mubr.bf16.gmra.mxu0 %v1580
        %v1637 = vpop.f32.mrf.mxu0
        %v1638 = vadd.f32 0.0, %v1637
        %v1639 = vpop.f32.mrf.mxu0
        %v1640 = vpop.f32.mrf.mxu0
        %v1641 = vadd.f32 0.0, %v1640
        %v1642 = vpop.f32.mrf.mxu0
        %1643 = vmatprep.mubr.bf16.mxu0 0
        %1644 = vmatmul.mubr.bf16.gmra.mxu0 %v1583
        %v1645 = vpop.f32.mrf.mxu0
        %v1646 = vadd.f32 0.0, %v1645
        %v1647 = vpop.f32.mrf.mxu0
        %v1648 = vpop.f32.mrf.mxu0
        %v1649 = vadd.f32 0.0, %v1648
        %v1650 = vpop.f32.mrf.mxu0
        %1651 = vmatprep.mubr.bf16.mxu0 0
        %1652 = vmatmul.mubr.bf16.gmra.mxu0 %v1586
        %v1653 = vpop.f32.mrf.mxu0
        %v1654 = vadd.f32 0.0, %v1653
        %v1655 = vpop.f32.mrf.mxu0
        %v1656 = vpop.f32.mrf.mxu0
        %v1657 = vadd.f32 0.0, %v1656
        %v1658 = vpop.f32.mrf.mxu0
        %1659 = vmatprep.mubr.bf16.mxu0 0
        %1660 = vmatmul.mubr.bf16.gmra.mxu0 %v1589
        %v1661 = vpop.f32.mrf.mxu0
        %v1662 = vadd.f32 0.0, %v1661
        %v1663 = vpop.f32.mrf.mxu0
        %v1664 = vpop.f32.mrf.mxu0
        %v1665 = vadd.f32 0.0, %v1664
        %v1666 = vpop.f32.mrf.mxu0
        %1667 = vmatprep.mubr.bf16.mxu0 0
        %1668 = vmatmul.mubr.bf16.gmra.mxu0 %v1592
        %v1669 = vpop.f32.mrf.mxu0
        %v1670 = vadd.f32 0.0, %v1669
        %v1671 = vpop.f32.mrf.mxu0
        %v1672 = vpop.f32.mrf.mxu0
        %v1673 = vadd.f32 0.0, %v1672
        %v1674 = vpop.f32.mrf.mxu0
        %1675 = vmatprep.mubr.bf16.mxu0 0
        %1676 = vmatmul.mubr.bf16.gmra.mxu0 %v1595
        %v1677 = vpop.f32.mrf.mxu0
        %v1678 = vadd.f32 0.0, %v1677
        %v1679 = vpop.f32.mrf.mxu0
        %v1680 = vpop.f32.mrf.mxu0
        %v1681 = vadd.f32 0.0, %v1680
        %v1682 = vpop.f32.mrf.mxu0
        %1683 = vmatprep.mubr.bf16.mxu0 0
        %1684 = vmatmul.mubr.bf16.gmra.mxu0 %v1598
        %v1685 = vpop.f32.mrf.mxu0
        %v1686 = vadd.f32 0.0, %v1685
        %v1687 = vpop.f32.mrf.mxu0
        %v1688 = vpop.f32.mrf.mxu0
        %v1689 = vadd.f32 0.0, %v1688
        %v1690 = vpop.f32.mrf.mxu0
        %1691 = vmatprep.mubr.bf16.mxu0 0
        %1692 = vmatmul.mubr.bf16.gmra.mxu0 %v1601
        %v1693 = vpop.f32.mrf.mxu0
        %v1694 = vadd.f32 0.0, %v1693
        %v1695 = vpop.f32.mrf.mxu0
        %v1696 = vpop.f32.mrf.mxu0
        %v1697 = vadd.f32 0.0, %v1696
        %v1698 = vpop.f32.mrf.mxu0
        %1699 = vdwg.mxu0
        %v1700 = vadd.f32 %v1376, %v1638
        %v1701 = vadd.f32 %v1377, %v1641
        %v1702 = vadd.f32 %v1378, %v1646
        %v1703 = vadd.f32 %v1379, %v1649
        %v1704 = vadd.f32 %v1380, %v1654
        %v1705 = vadd.f32 %v1381, %v1657
        %v1706 = vadd.f32 %v1382, %v1662
        %v1707 = vadd.f32 %v1383, %v1665
        %v1708 = vadd.f32 %v1384, %v1670
        %v1709 = vadd.f32 %v1385, %v1673
        %v1710 = vadd.f32 %v1386, %v1678
        %v1711 = vadd.f32 %v1387, %v1681
        %v1712 = vadd.f32 %v1388, %v1686
        %v1713 = vadd.f32 %v1389, %v1689
        %v1714 = vadd.f32 %v1390, %v1694
        %v1715 = vadd.f32 %v1391, %v1697
        %1716 = vst [vmem:[%s217] sm:$0xff] %v1700
        %1717 = vst [vmem:[%s217 + $0x8] sm:$0xff] %v1701
        %1718 = vst [vmem:[%s217 + $0x10] sm:$0xff] %v1702
        %1719 = vst [vmem:[%s217 + $0x18] sm:$0xff] %v1703
        %1720 = vst [vmem:[%s217 + $0x20] sm:$0xff] %v1704
        %1721 = vst [vmem:[%s217 + $0x28] sm:$0xff] %v1705
        %1722 = vst [vmem:[%s217 + $0x30] sm:$0xff] %v1706
        %1723 = vst [vmem:[%s217 + $0x38] sm:$0xff] %v1707
        %1724 = vst [vmem:[%s217 + $0x40] sm:$0xff] %v1708
        %1725 = vst [vmem:[%s217 + $0x48] sm:$0xff] %v1709
        %1726 = vst [vmem:[%s217 + $0x50] sm:$0xff] %v1710
        %1727 = vst [vmem:[%s217 + $0x58] sm:$0xff] %v1711
        %1728 = vst [vmem:[%s217 + $0x60] sm:$0xff] %v1712
        %1729 = vst [vmem:[%s217 + $0x68] sm:$0xff] %v1713
        %1730 = vst [vmem:[%s217 + $0x70] sm:$0xff] %v1714
        %1731 = vst [vmem:[%s217 + $0x78] sm:$0xff] %v1715
        %v1732 = vld [vmem:[%s217] sm:$0xff]
        %v1733 = vld [vmem:[%s217 + $0x8] sm:$0xff]
        %v1734 = vld [vmem:[%s217 + $0x10] sm:$0xff]
        %v1735 = vld [vmem:[%s217 + $0x18] sm:$0xff]
        %v1736 = vld [vmem:[%s217 + $0x20] sm:$0xff]
        %v1737 = vld [vmem:[%s217 + $0x28] sm:$0xff]
        %v1738 = vld [vmem:[%s217 + $0x30] sm:$0xff]
        %v1739 = vld [vmem:[%s217 + $0x38] sm:$0xff]
        %v1740 = vld [vmem:[%s217 + $0x40] sm:$0xff]
        %v1741 = vld [vmem:[%s217 + $0x48] sm:$0xff]
        %v1742 = vld [vmem:[%s217 + $0x50] sm:$0xff]
        %v1743 = vld [vmem:[%s217 + $0x58] sm:$0xff]
        %v1744 = vld [vmem:[%s217 + $0x60] sm:$0xff]
        %v1745 = vld [vmem:[%s217 + $0x68] sm:$0xff]
        %v1746 = vld [vmem:[%s217 + $0x70] sm:$0xff]
        %v1747 = vld [vmem:[%s217 + $0x78] sm:$0xff]
        %v1748 = vrot.slane %v323, 5
        %v1749 = vrot.slane %v324, 5
        %v1750 = vrot.slane %v325, 5
        %v1751 = vrot.slane %v326, 5
        %v1752 = vrot.slane %v327, 5
        %v1753 = vrot.slane %v328, 5
        %v1754 = vrot.slane %v329, 5
        %v1755 = vrot.slane %v330, 5
        %v1756 = vrot.slane %v331, 5
        %v1757 = vrot.slane %v332, 5
        %v1758 = vrot.slane %v333, 5
        %v1759 = vrot.slane %v334, 5
        %v1760 = vrot.slane %v335, 5
        %v1761 = vrot.slane %v336, 5
        %v1762 = vrot.slane %v337, 5
        %v1763 = vrot.slane %v338, 5
        %vm1764 = vcmp.lt.s32.totalorder %v356, 3
        %v1765 = vsel %vm1764, %v1762, %v1763
        %v1766 = vsel %vm1764, %v1761, %v1762
        %v1767 = vsel %vm1764, %v1760, %v1761
        %v1768 = vsel %vm1764, %v1759, %v1760
        %v1769 = vsel %vm1764, %v1758, %v1759
        %v1770 = vsel %vm1764, %v1757, %v1758
        %v1771 = vsel %vm1764, %v1756, %v1757
        %v1772 = vsel %vm1764, %v1755, %v1756
        %v1773 = vsel %vm1764, %v1754, %v1755
        %v1774 = vsel %vm1764, %v1753, %v1754
        %v1775 = vsel %vm1764, %v1752, %v1753
        %v1776 = vsel %vm1764, %v1751, %v1752
        %v1777 = vsel %vm1764, %v1750, %v1751
        %v1778 = vsel %vm1764, %v1749, %v1750
        %v1779 = vsel %vm1764, %v1748, %v1749
        %v1780 = vsel %vm1764, %v1763, %v1748
        %s1781 = scalar_lea.vmem %s2, 512
        %v1782 = vld [vmem:[%s1781] sm:$0xff]
        %v1783 = vld [vmem:[%s1781 + $0x8] sm:$0xff]
        %v1784 = vld [vmem:[%s1781 + $0x10] sm:$0xff]
        %v1785 = vld [vmem:[%s1781 + $0x18] sm:$0xff]
        %v1786 = vld [vmem:[%s1781 + $0x20] sm:$0xff]
        %v1787 = vld [vmem:[%s1781 + $0x28] sm:$0xff]
        %v1788 = vld [vmem:[%s1781 + $0x30] sm:$0xff]
        %v1789 = vld [vmem:[%s1781 + $0x38] sm:$0xff]
        %v1790 = vld [vmem:[%s1781 + $0x40] sm:$0xff]
        %v1791 = vld [vmem:[%s1781 + $0x48] sm:$0xff]
        %v1792 = vld [vmem:[%s1781 + $0x50] sm:$0xff]
        %v1793 = vld [vmem:[%s1781 + $0x58] sm:$0xff]
        %v1794 = vld [vmem:[%s1781 + $0x60] sm:$0xff]
        %v1795 = vld [vmem:[%s1781 + $0x68] sm:$0xff]
        %v1796 = vld [vmem:[%s1781 + $0x70] sm:$0xff]
        %v1797 = vld [vmem:[%s1781 + $0x78] sm:$0xff]
        %1799 = vset.pattern.permute.xlu0 0
        %1800 = vperm.xlu0 %1799, %v1782
        %v1801 = vpop.permute.xlu0 %1800
        %1804 = vset.pattern.permute.xlu0 0
        %1805 = vperm.xlu0 %1804, %v1783
        %v1806 = vpop.permute.xlu0 %1805
        %1809 = vset.pattern.permute.xlu0 0
        %1810 = vperm.xlu0 %1809, %v1784
        %v1811 = vpop.permute.xlu0 %1810
        %1814 = vset.pattern.permute.xlu0 0
        %1815 = vperm.xlu0 %1814, %v1785
        %v1816 = vpop.permute.xlu0 %1815
        %1819 = vset.pattern.permute.xlu0 0
        %1820 = vperm.xlu0 %1819, %v1786
        %v1821 = vpop.permute.xlu0 %1820
        %1824 = vset.pattern.permute.xlu0 0
        %1825 = vperm.xlu0 %1824, %v1787
        %v1826 = vpop.permute.xlu0 %1825
        %1829 = vset.pattern.permute.xlu0 0
        %1830 = vperm.xlu0 %1829, %v1788
        %v1831 = vpop.permute.xlu0 %1830
        %1834 = vset.pattern.permute.xlu0 0
        %1835 = vperm.xlu0 %1834, %v1789
        %v1836 = vpop.permute.xlu0 %1835
        %1839 = vset.pattern.permute.xlu0 0
        %1840 = vperm.xlu0 %1839, %v1790
        %v1841 = vpop.permute.xlu0 %1840
        %1844 = vset.pattern.permute.xlu0 0
        %1845 = vperm.xlu0 %1844, %v1791
        %v1846 = vpop.permute.xlu0 %1845
        %1849 = vset.pattern.permute.xlu0 0
        %1850 = vperm.xlu0 %1849, %v1792
        %v1851 = vpop.permute.xlu0 %1850
        %1854 = vset.pattern.permute.xlu0 0
        %1855 = vperm.xlu0 %1854, %v1793
        %v1856 = vpop.permute.xlu0 %1855
        %1859 = vset.pattern.permute.xlu0 0
        %1860 = vperm.xlu0 %1859, %v1794
        %v1861 = vpop.permute.xlu0 %1860
        %1864 = vset.pattern.permute.xlu0 0
        %1865 = vperm.xlu0 %1864, %v1795
        %v1866 = vpop.permute.xlu0 %1865
        %1869 = vset.pattern.permute.xlu0 0
        %1870 = vperm.xlu0 %1869, %v1796
        %v1871 = vpop.permute.xlu0 %1870
        %1874 = vset.pattern.permute.xlu0 0
        %1875 = vperm.xlu0 %1874, %v1797
        %v1876 = vpop.permute.xlu0 %1875
        %v1878 = vmul.f32 %v1765, %v1801
        %v1879 = vmul.f32 %v1780, %v1806
        %v1880 = vmul.f32 %v1779, %v1811
        %v1881 = vmul.f32 %v1778, %v1816
        %v1882 = vmul.f32 %v1777, %v1821
        %v1883 = vmul.f32 %v1776, %v1826
        %v1884 = vmul.f32 %v1775, %v1831
        %v1885 = vmul.f32 %v1774, %v1836
        %v1886 = vmul.f32 %v1773, %v1841
        %v1887 = vmul.f32 %v1772, %v1846
        %v1888 = vmul.f32 %v1771, %v1851
        %v1889 = vmul.f32 %v1770, %v1856
        %v1890 = vmul.f32 %v1769, %v1861
        %v1891 = vmul.f32 %v1768, %v1866
        %v1892 = vmul.f32 %v1767, %v1871
        %v1893 = vmul.f32 %v1766, %v1876
        %v1894 = vpack.c.bf16 %v1879, %v1878
        %v1895 = vpack.c.bf16 %v1881, %v1880
        %v1896 = vpack.c.bf16 %v1883, %v1882
        %v1897 = vpack.c.bf16 %v1885, %v1884
        %v1898 = vpack.c.bf16 %v1887, %v1886
        %v1899 = vpack.c.bf16 %v1889, %v1888
        %v1900 = vpack.c.bf16 %v1891, %v1890
        %v1901 = vpack.c.bf16 %v1893, %v1892
        %s1902 = scalar_lea.vmem %s1, 128
        %v1903 = vld [vmem:[%s1902] sm:$0xf]
        %v1904 = vld [vmem:[%s1902 + $0x4] sm:$0xf]
        %v1905 = vld [vmem:[%s1902 + $0x8] sm:$0xf]
        %v1906 = vld [vmem:[%s1902 + $0xc] sm:$0xf]
        %v1907 = vld [vmem:[%s1902 + $0x10] sm:$0xf]
        %v1908 = vld [vmem:[%s1902 + $0x14] sm:$0xf]
        %v1909 = vld [vmem:[%s1902 + $0x18] sm:$0xf]
        %v1910 = vld [vmem:[%s1902 + $0x1c] sm:$0xf]
        %v1919 = vunpack.c.l.b16 %v1903
        %v1920 = vunpack.c.l.b16 %v1904
        %v1921 = vunpack.c.l.b16 %v1905
        %v1922 = vunpack.c.l.b16 %v1906
        %v1923 = vunpack.c.l.b16 %v1907
        %v1924 = vunpack.c.l.b16 %v1908
        %v1925 = vunpack.c.l.b16 %v1909
        %v1926 = vunpack.c.l.b16 %v1910
        %v1927 = vpack.c.b16 %v1920, %v1919
        %v1928 = vpack.c.b16 %v1922, %v1921
        %v1929 = vpack.c.b16 %v1924, %v1923
        %v1930 = vpack.c.b16 %v1926, %v1925
        %v1936 = vsel %vm526, %v1894, 0
        %v1939 = vsel %vm526, %v1895, 0
        %v1942 = vsel %vm526, %v1896, 0
        %v1945 = vsel %vm526, %v1897, 0
        %v1948 = vsel %vm526, %v1898, 0
        %v1951 = vsel %vm526, %v1899, 0
        %v1954 = vsel %vm526, %v1900, 0
        %v1957 = vsel %vm526, %v1901, 0
        %1959 = vmatprep.subr.bf16.mxu0 0
        %1960 = vmatpush1.bf16.msra.mxu0 0
        %1961 = vmatprep.subr.bf16.mxu0 0
        %1962 = vmatpush1.bf16.msra.mxu0 0
        %1963 = vmatprep.subr.bf16.mxu0 0
        %1964 = vmatpush1.bf16.msra.mxu0 0
        %1965 = vmatprep.subr.bf16.mxu0 0
        %1966 = vmatpush1.bf16.msra.mxu0 0
        %1967 = vmatprep.subr.bf16.mxu0 0
        %1968 = vmatpush1.bf16.msra.mxu0 %v1930
        %1969 = vmatprep.subr.bf16.mxu0 0
        %1970 = vmatpush1.bf16.msra.mxu0 %v1929
        %1971 = vmatprep.subr.bf16.mxu0 0
        %1972 = vmatpush1.bf16.msra.mxu0 %v1928
        %1973 = vmatprep.subr.bf16.mxu0 0
        %1974 = vmatpush1.bf16.msra.mxu0 %v1927
        %1975 = vmatprep.subr.bf16.mxu0 0
        %1976 = vmatpush2.bf16.msra.mxu0 0
        %1977 = vmatprep.subr.bf16.mxu0 0
        %1978 = vmatpush2.bf16.msra.mxu0 0
        %1979 = vmatprep.subr.bf16.mxu0 0
        %1980 = vmatpush2.bf16.msra.mxu0 0
        %1981 = vmatprep.subr.bf16.mxu0 0
        %1982 = vmatpush2.bf16.msra.mxu0 0
        %1983 = vmatprep.subr.bf16.mxu0 0
        %1984 = vmatpush2.bf16.msra.mxu0 0
        %1985 = vmatprep.subr.bf16.mxu0 0
        %1986 = vmatpush2.bf16.msra.mxu0 0
        %1987 = vmatprep.subr.bf16.mxu0 0
        %1988 = vmatpush2.bf16.msra.mxu0 0
        %1989 = vmatprep.subr.bf16.mxu0 0
        %1990 = vmatpush2.bf16.msra.mxu0 0
        %1991 = vmatprep.mubr.bf16.mxu0 0
        %1992 = vmatmul.mubr.bf16.gmra.mxu0 %v1936
        %v1993 = vpop.f32.mrf.mxu0
        %v1994 = vadd.f32 0.0, %v1993
        %v1995 = vpop.f32.mrf.mxu0
        %v1996 = vpop.f32.mrf.mxu0
        %v1997 = vadd.f32 0.0, %v1996
        %v1998 = vpop.f32.mrf.mxu0
        %1999 = vmatprep.mubr.bf16.mxu0 0
        %2000 = vmatmul.mubr.bf16.gmra.mxu0 %v1939
        %v2001 = vpop.f32.mrf.mxu0
        %v2002 = vadd.f32 0.0, %v2001
        %v2003 = vpop.f32.mrf.mxu0
        %v2004 = vpop.f32.mrf.mxu0
        %v2005 = vadd.f32 0.0, %v2004
        %v2006 = vpop.f32.mrf.mxu0
        %2007 = vmatprep.mubr.bf16.mxu0 0
        %2008 = vmatmul.mubr.bf16.gmra.mxu0 %v1942
        %v2009 = vpop.f32.mrf.mxu0
        %v2010 = vadd.f32 0.0, %v2009
        %v2011 = vpop.f32.mrf.mxu0
        %v2012 = vpop.f32.mrf.mxu0
        %v2013 = vadd.f32 0.0, %v2012
        %v2014 = vpop.f32.mrf.mxu0
        %2015 = vmatprep.mubr.bf16.mxu0 0
        %2016 = vmatmul.mubr.bf16.gmra.mxu0 %v1945
        %v2017 = vpop.f32.mrf.mxu0
        %v2018 = vadd.f32 0.0, %v2017
        %v2019 = vpop.f32.mrf.mxu0
        %v2020 = vpop.f32.mrf.mxu0
        %v2021 = vadd.f32 0.0, %v2020
        %v2022 = vpop.f32.mrf.mxu0
        %2023 = vmatprep.mubr.bf16.mxu0 0
        %2024 = vmatmul.mubr.bf16.gmra.mxu0 %v1948
        %v2025 = vpop.f32.mrf.mxu0
        %v2026 = vadd.f32 0.0, %v2025
        %v2027 = vpop.f32.mrf.mxu0
        %v2028 = vpop.f32.mrf.mxu0
        %v2029 = vadd.f32 0.0, %v2028
        %v2030 = vpop.f32.mrf.mxu0
        %2031 = vmatprep.mubr.bf16.mxu0 0
        %2032 = vmatmul.mubr.bf16.gmra.mxu0 %v1951
        %v2033 = vpop.f32.mrf.mxu0
        %v2034 = vadd.f32 0.0, %v2033
        %v2035 = vpop.f32.mrf.mxu0
        %v2036 = vpop.f32.mrf.mxu0
        %v2037 = vadd.f32 0.0, %v2036
        %v2038 = vpop.f32.mrf.mxu0
        %2039 = vmatprep.mubr.bf16.mxu0 0
        %2040 = vmatmul.mubr.bf16.gmra.mxu0 %v1954
        %v2041 = vpop.f32.mrf.mxu0
        %v2042 = vadd.f32 0.0, %v2041
        %v2043 = vpop.f32.mrf.mxu0
        %v2044 = vpop.f32.mrf.mxu0
        %v2045 = vadd.f32 0.0, %v2044
        %v2046 = vpop.f32.mrf.mxu0
        %2047 = vmatprep.mubr.bf16.mxu0 0
        %2048 = vmatmul.mubr.bf16.gmra.mxu0 %v1957
        %v2049 = vpop.f32.mrf.mxu0
        %v2050 = vadd.f32 0.0, %v2049
        %v2051 = vpop.f32.mrf.mxu0
        %v2052 = vpop.f32.mrf.mxu0
        %v2053 = vadd.f32 0.0, %v2052
        %v2054 = vpop.f32.mrf.mxu0
        %2055 = vdwg.mxu0
        %v2056 = vadd.f32 %v1732, %v1994
        %v2057 = vadd.f32 %v1733, %v1997
        %v2058 = vadd.f32 %v1734, %v2002
        %v2059 = vadd.f32 %v1735, %v2005
        %v2060 = vadd.f32 %v1736, %v2010
        %v2061 = vadd.f32 %v1737, %v2013
        %v2062 = vadd.f32 %v1738, %v2018
        %v2063 = vadd.f32 %v1739, %v2021
        %v2064 = vadd.f32 %v1740, %v2026
        %v2065 = vadd.f32 %v1741, %v2029
        %v2066 = vadd.f32 %v1742, %v2034
        %v2067 = vadd.f32 %v1743, %v2037
        %v2068 = vadd.f32 %v1744, %v2042
        %v2069 = vadd.f32 %v1745, %v2045
        %v2070 = vadd.f32 %v1746, %v2050
        %v2071 = vadd.f32 %v1747, %v2053
        %2072 = vst [vmem:[%s217] sm:$0xff] %v2056
        %2073 = vst [vmem:[%s217 + $0x8] sm:$0xff] %v2057
        %2074 = vst [vmem:[%s217 + $0x10] sm:$0xff] %v2058
        %2075 = vst [vmem:[%s217 + $0x18] sm:$0xff] %v2059
        %2076 = vst [vmem:[%s217 + $0x20] sm:$0xff] %v2060
        %2077 = vst [vmem:[%s217 + $0x28] sm:$0xff] %v2061
        %2078 = vst [vmem:[%s217 + $0x30] sm:$0xff] %v2062
        %2079 = vst [vmem:[%s217 + $0x38] sm:$0xff] %v2063
        %2080 = vst [vmem:[%s217 + $0x40] sm:$0xff] %v2064
        %2081 = vst [vmem:[%s217 + $0x48] sm:$0xff] %v2065
        %2082 = vst [vmem:[%s217 + $0x50] sm:$0xff] %v2066
        %2083 = vst [vmem:[%s217 + $0x58] sm:$0xff] %v2067
        %2084 = vst [vmem:[%s217 + $0x60] sm:$0xff] %v2068
        %2085 = vst [vmem:[%s217 + $0x68] sm:$0xff] %v2069
        %2086 = vst [vmem:[%s217 + $0x70] sm:$0xff] %v2070
        %2087 = vst [vmem:[%s217 + $0x78] sm:$0xff] %v2071
        %v2088 = vld [vmem:[%s217] sm:$0xff]
        %v2089 = vld [vmem:[%s217 + $0x8] sm:$0xff]
        %v2090 = vld [vmem:[%s217 + $0x10] sm:$0xff]
        %v2091 = vld [vmem:[%s217 + $0x18] sm:$0xff]
        %v2092 = vld [vmem:[%s217 + $0x20] sm:$0xff]
        %v2093 = vld [vmem:[%s217 + $0x28] sm:$0xff]
        %v2094 = vld [vmem:[%s217 + $0x30] sm:$0xff]
        %v2095 = vld [vmem:[%s217 + $0x38] sm:$0xff]
        %v2096 = vld [vmem:[%s217 + $0x40] sm:$0xff]
        %v2097 = vld [vmem:[%s217 + $0x48] sm:$0xff]
        %v2098 = vld [vmem:[%s217 + $0x50] sm:$0xff]
        %v2099 = vld [vmem:[%s217 + $0x58] sm:$0xff]
        %v2100 = vld [vmem:[%s217 + $0x60] sm:$0xff]
        %v2101 = vld [vmem:[%s217 + $0x68] sm:$0xff]
        %v2102 = vld [vmem:[%s217 + $0x70] sm:$0xff]
        %v2103 = vld [vmem:[%s217 + $0x78] sm:$0xff]
        %v2104 = vrot.slane %v323, 6
        %v2105 = vrot.slane %v324, 6
        %v2106 = vrot.slane %v325, 6
        %v2107 = vrot.slane %v326, 6
        %v2108 = vrot.slane %v327, 6
        %v2109 = vrot.slane %v328, 6
        %v2110 = vrot.slane %v329, 6
        %v2111 = vrot.slane %v330, 6
        %v2112 = vrot.slane %v331, 6
        %v2113 = vrot.slane %v332, 6
        %v2114 = vrot.slane %v333, 6
        %v2115 = vrot.slane %v334, 6
        %v2116 = vrot.slane %v335, 6
        %v2117 = vrot.slane %v336, 6
        %v2118 = vrot.slane %v337, 6
        %v2119 = vrot.slane %v338, 6
        %vm2120 = vcmp.lt.s32.totalorder %v356, 2
        %v2121 = vsel %vm2120, %v2118, %v2119
        %v2122 = vsel %vm2120, %v2117, %v2118
        %v2123 = vsel %vm2120, %v2116, %v2117
        %v2124 = vsel %vm2120, %v2115, %v2116
        %v2125 = vsel %vm2120, %v2114, %v2115
        %v2126 = vsel %vm2120, %v2113, %v2114
        %v2127 = vsel %vm2120, %v2112, %v2113
        %v2128 = vsel %vm2120, %v2111, %v2112
        %v2129 = vsel %vm2120, %v2110, %v2111
        %v2130 = vsel %vm2120, %v2109, %v2110
        %v2131 = vsel %vm2120, %v2108, %v2109
        %v2132 = vsel %vm2120, %v2107, %v2108
        %v2133 = vsel %vm2120, %v2106, %v2107
        %v2134 = vsel %vm2120, %v2105, %v2106
        %v2135 = vsel %vm2120, %v2104, %v2105
        %v2136 = vsel %vm2120, %v2119, %v2104
        %s2137 = scalar_lea.vmem %s2, 640
        %v2138 = vld [vmem:[%s2137] sm:$0xff]
        %v2139 = vld [vmem:[%s2137 + $0x8] sm:$0xff]
        %v2140 = vld [vmem:[%s2137 + $0x10] sm:$0xff]
        %v2141 = vld [vmem:[%s2137 + $0x18] sm:$0xff]
        %v2142 = vld [vmem:[%s2137 + $0x20] sm:$0xff]
        %v2143 = vld [vmem:[%s2137 + $0x28] sm:$0xff]
        %v2144 = vld [vmem:[%s2137 + $0x30] sm:$0xff]
        %v2145 = vld [vmem:[%s2137 + $0x38] sm:$0xff]
        %v2146 = vld [vmem:[%s2137 + $0x40] sm:$0xff]
        %v2147 = vld [vmem:[%s2137 + $0x48] sm:$0xff]
        %v2148 = vld [vmem:[%s2137 + $0x50] sm:$0xff]
        %v2149 = vld [vmem:[%s2137 + $0x58] sm:$0xff]
        %v2150 = vld [vmem:[%s2137 + $0x60] sm:$0xff]
        %v2151 = vld [vmem:[%s2137 + $0x68] sm:$0xff]
        %v2152 = vld [vmem:[%s2137 + $0x70] sm:$0xff]
        %v2153 = vld [vmem:[%s2137 + $0x78] sm:$0xff]
        %2155 = vset.pattern.permute.xlu0 0
        %2156 = vperm.xlu0 %2155, %v2138
        %v2157 = vpop.permute.xlu0 %2156
        %2160 = vset.pattern.permute.xlu0 0
        %2161 = vperm.xlu0 %2160, %v2139
        %v2162 = vpop.permute.xlu0 %2161
        %2165 = vset.pattern.permute.xlu0 0
        %2166 = vperm.xlu0 %2165, %v2140
        %v2167 = vpop.permute.xlu0 %2166
        %2170 = vset.pattern.permute.xlu0 0
        %2171 = vperm.xlu0 %2170, %v2141
        %v2172 = vpop.permute.xlu0 %2171
        %2175 = vset.pattern.permute.xlu0 0
        %2176 = vperm.xlu0 %2175, %v2142
        %v2177 = vpop.permute.xlu0 %2176
        %2180 = vset.pattern.permute.xlu0 0
        %2181 = vperm.xlu0 %2180, %v2143
        %v2182 = vpop.permute.xlu0 %2181
        %2185 = vset.pattern.permute.xlu0 0
        %2186 = vperm.xlu0 %2185, %v2144
        %v2187 = vpop.permute.xlu0 %2186
        %2190 = vset.pattern.permute.xlu0 0
        %2191 = vperm.xlu0 %2190, %v2145
        %v2192 = vpop.permute.xlu0 %2191
        %2195 = vset.pattern.permute.xlu0 0
        %2196 = vperm.xlu0 %2195, %v2146
        %v2197 = vpop.permute.xlu0 %2196
        %2200 = vset.pattern.permute.xlu0 0
        %2201 = vperm.xlu0 %2200, %v2147
        %v2202 = vpop.permute.xlu0 %2201
        %2205 = vset.pattern.permute.xlu0 0
        %2206 = vperm.xlu0 %2205, %v2148
        %v2207 = vpop.permute.xlu0 %2206
        %2210 = vset.pattern.permute.xlu0 0
        %2211 = vperm.xlu0 %2210, %v2149
        %v2212 = vpop.permute.xlu0 %2211
        %2215 = vset.pattern.permute.xlu0 0
        %2216 = vperm.xlu0 %2215, %v2150
        %v2217 = vpop.permute.xlu0 %2216
        %2220 = vset.pattern.permute.xlu0 0
        %2221 = vperm.xlu0 %2220, %v2151
        %v2222 = vpop.permute.xlu0 %2221
        %2225 = vset.pattern.permute.xlu0 0
        %2226 = vperm.xlu0 %2225, %v2152
        %v2227 = vpop.permute.xlu0 %2226
        %2230 = vset.pattern.permute.xlu0 0
        %2231 = vperm.xlu0 %2230, %v2153
        %v2232 = vpop.permute.xlu0 %2231
        %v2234 = vmul.f32 %v2121, %v2157
        %v2235 = vmul.f32 %v2136, %v2162
        %v2236 = vmul.f32 %v2135, %v2167
        %v2237 = vmul.f32 %v2134, %v2172
        %v2238 = vmul.f32 %v2133, %v2177
        %v2239 = vmul.f32 %v2132, %v2182
        %v2240 = vmul.f32 %v2131, %v2187
        %v2241 = vmul.f32 %v2130, %v2192
        %v2242 = vmul.f32 %v2129, %v2197
        %v2243 = vmul.f32 %v2128, %v2202
        %v2244 = vmul.f32 %v2127, %v2207
        %v2245 = vmul.f32 %v2126, %v2212
        %v2246 = vmul.f32 %v2125, %v2217
        %v2247 = vmul.f32 %v2124, %v2222
        %v2248 = vmul.f32 %v2123, %v2227
        %v2249 = vmul.f32 %v2122, %v2232
        %v2250 = vpack.c.bf16 %v2235, %v2234
        %v2251 = vpack.c.bf16 %v2237, %v2236
        %v2252 = vpack.c.bf16 %v2239, %v2238
        %v2253 = vpack.c.bf16 %v2241, %v2240
        %v2254 = vpack.c.bf16 %v2243, %v2242
        %v2255 = vpack.c.bf16 %v2245, %v2244
        %v2256 = vpack.c.bf16 %v2247, %v2246
        %v2257 = vpack.c.bf16 %v2249, %v2248
        %s2258 = scalar_lea.vmem %s1, 160
        %v2259 = vld [vmem:[%s2258] sm:$0xf]
        %v2260 = vld [vmem:[%s2258 + $0x4] sm:$0xf]
        %v2261 = vld [vmem:[%s2258 + $0x8] sm:$0xf]
        %v2262 = vld [vmem:[%s2258 + $0xc] sm:$0xf]
        %v2263 = vld [vmem:[%s2258 + $0x10] sm:$0xf]
        %v2264 = vld [vmem:[%s2258 + $0x14] sm:$0xf]
        %v2265 = vld [vmem:[%s2258 + $0x18] sm:$0xf]
        %v2266 = vld [vmem:[%s2258 + $0x1c] sm:$0xf]
        %v2275 = vunpack.c.l.b16 %v2259
        %v2276 = vunpack.c.l.b16 %v2260
        %v2277 = vunpack.c.l.b16 %v2261
        %v2278 = vunpack.c.l.b16 %v2262
        %v2279 = vunpack.c.l.b16 %v2263
        %v2280 = vunpack.c.l.b16 %v2264
        %v2281 = vunpack.c.l.b16 %v2265
        %v2282 = vunpack.c.l.b16 %v2266
        %v2283 = vpack.c.b16 %v2276, %v2275
        %v2284 = vpack.c.b16 %v2278, %v2277
        %v2285 = vpack.c.b16 %v2280, %v2279
        %v2286 = vpack.c.b16 %v2282, %v2281
        %v2292 = vsel %vm526, %v2250, 0
        %v2295 = vsel %vm526, %v2251, 0
        %v2298 = vsel %vm526, %v2252, 0
        %v2301 = vsel %vm526, %v2253, 0
        %v2304 = vsel %vm526, %v2254, 0
        %v2307 = vsel %vm526, %v2255, 0
        %v2310 = vsel %vm526, %v2256, 0
        %v2313 = vsel %vm526, %v2257, 0
        %2315 = vmatprep.subr.bf16.mxu0 0
        %2316 = vmatpush1.bf16.msra.mxu0 0
        %2317 = vmatprep.subr.bf16.mxu0 0
        %2318 = vmatpush1.bf16.msra.mxu0 0
        %2319 = vmatprep.subr.bf16.mxu0 0
        %2320 = vmatpush1.bf16.msra.mxu0 0
        %2321 = vmatprep.subr.bf16.mxu0 0
        %2322 = vmatpush1.bf16.msra.mxu0 0
        %2323 = vmatprep.subr.bf16.mxu0 0
        %2324 = vmatpush1.bf16.msra.mxu0 %v2286
        %2325 = vmatprep.subr.bf16.mxu0 0
        %2326 = vmatpush1.bf16.msra.mxu0 %v2285
        %2327 = vmatprep.subr.bf16.mxu0 0
        %2328 = vmatpush1.bf16.msra.mxu0 %v2284
        %2329 = vmatprep.subr.bf16.mxu0 0
        %2330 = vmatpush1.bf16.msra.mxu0 %v2283
        %2331 = vmatprep.subr.bf16.mxu0 0
        %2332 = vmatpush2.bf16.msra.mxu0 0
        %2333 = vmatprep.subr.bf16.mxu0 0
        %2334 = vmatpush2.bf16.msra.mxu0 0
        %2335 = vmatprep.subr.bf16.mxu0 0
        %2336 = vmatpush2.bf16.msra.mxu0 0
        %2337 = vmatprep.subr.bf16.mxu0 0
        %2338 = vmatpush2.bf16.msra.mxu0 0
        %2339 = vmatprep.subr.bf16.mxu0 0
        %2340 = vmatpush2.bf16.msra.mxu0 0
        %2341 = vmatprep.subr.bf16.mxu0 0
        %2342 = vmatpush2.bf16.msra.mxu0 0
        %2343 = vmatprep.subr.bf16.mxu0 0
        %2344 = vmatpush2.bf16.msra.mxu0 0
        %2345 = vmatprep.subr.bf16.mxu0 0
        %2346 = vmatpush2.bf16.msra.mxu0 0
        %2347 = vmatprep.mubr.bf16.mxu0 0
        %2348 = vmatmul.mubr.bf16.gmra.mxu0 %v2292
        %v2349 = vpop.f32.mrf.mxu0
        %v2350 = vadd.f32 0.0, %v2349
        %v2351 = vpop.f32.mrf.mxu0
        %v2352 = vpop.f32.mrf.mxu0
        %v2353 = vadd.f32 0.0, %v2352
        %v2354 = vpop.f32.mrf.mxu0
        %2355 = vmatprep.mubr.bf16.mxu0 0
        %2356 = vmatmul.mubr.bf16.gmra.mxu0 %v2295
        %v2357 = vpop.f32.mrf.mxu0
        %v2358 = vadd.f32 0.0, %v2357
        %v2359 = vpop.f32.mrf.mxu0
        %v2360 = vpop.f32.mrf.mxu0
        %v2361 = vadd.f32 0.0, %v2360
        %v2362 = vpop.f32.mrf.mxu0
        %2363 = vmatprep.mubr.bf16.mxu0 0
        %2364 = vmatmul.mubr.bf16.gmra.mxu0 %v2298
        %v2365 = vpop.f32.mrf.mxu0
        %v2366 = vadd.f32 0.0, %v2365
        %v2367 = vpop.f32.mrf.mxu0
        %v2368 = vpop.f32.mrf.mxu0
        %v2369 = vadd.f32 0.0, %v2368
        %v2370 = vpop.f32.mrf.mxu0
        %2371 = vmatprep.mubr.bf16.mxu0 0
        %2372 = vmatmul.mubr.bf16.gmra.mxu0 %v2301
        %v2373 = vpop.f32.mrf.mxu0
        %v2374 = vadd.f32 0.0, %v2373
        %v2375 = vpop.f32.mrf.mxu0
        %v2376 = vpop.f32.mrf.mxu0
        %v2377 = vadd.f32 0.0, %v2376
        %v2378 = vpop.f32.mrf.mxu0
        %2379 = vmatprep.mubr.bf16.mxu0 0
        %2380 = vmatmul.mubr.bf16.gmra.mxu0 %v2304
        %v2381 = vpop.f32.mrf.mxu0
        %v2382 = vadd.f32 0.0, %v2381
        %v2383 = vpop.f32.mrf.mxu0
        %v2384 = vpop.f32.mrf.mxu0
        %v2385 = vadd.f32 0.0, %v2384
        %v2386 = vpop.f32.mrf.mxu0
        %2387 = vmatprep.mubr.bf16.mxu0 0
        %2388 = vmatmul.mubr.bf16.gmra.mxu0 %v2307
        %v2389 = vpop.f32.mrf.mxu0
        %v2390 = vadd.f32 0.0, %v2389
        %v2391 = vpop.f32.mrf.mxu0
        %v2392 = vpop.f32.mrf.mxu0
        %v2393 = vadd.f32 0.0, %v2392
        %v2394 = vpop.f32.mrf.mxu0
        %2395 = vmatprep.mubr.bf16.mxu0 0
        %2396 = vmatmul.mubr.bf16.gmra.mxu0 %v2310
        %v2397 = vpop.f32.mrf.mxu0
        %v2398 = vadd.f32 0.0, %v2397
        %v2399 = vpop.f32.mrf.mxu0
        %v2400 = vpop.f32.mrf.mxu0
        %v2401 = vadd.f32 0.0, %v2400
        %v2402 = vpop.f32.mrf.mxu0
        %2403 = vmatprep.mubr.bf16.mxu0 0
        %2404 = vmatmul.mubr.bf16.gmra.mxu0 %v2313
        %v2405 = vpop.f32.mrf.mxu0
        %v2406 = vadd.f32 0.0, %v2405
        %v2407 = vpop.f32.mrf.mxu0
        %v2408 = vpop.f32.mrf.mxu0
        %v2409 = vadd.f32 0.0, %v2408
        %v2410 = vpop.f32.mrf.mxu0
        %2411 = vdwg.mxu0
        %v2412 = vadd.f32 %v2088, %v2350
        %v2413 = vadd.f32 %v2089, %v2353
        %v2414 = vadd.f32 %v2090, %v2358
        %v2415 = vadd.f32 %v2091, %v2361
        %v2416 = vadd.f32 %v2092, %v2366
        %v2417 = vadd.f32 %v2093, %v2369
        %v2418 = vadd.f32 %v2094, %v2374
        %v2419 = vadd.f32 %v2095, %v2377
        %v2420 = vadd.f32 %v2096, %v2382
        %v2421 = vadd.f32 %v2097, %v2385
        %v2422 = vadd.f32 %v2098, %v2390
        %v2423 = vadd.f32 %v2099, %v2393
        %v2424 = vadd.f32 %v2100, %v2398
        %v2425 = vadd.f32 %v2101, %v2401
        %v2426 = vadd.f32 %v2102, %v2406
        %v2427 = vadd.f32 %v2103, %v2409
        %2428 = vst [vmem:[%s217] sm:$0xff] %v2412
        %2429 = vst [vmem:[%s217 + $0x8] sm:$0xff] %v2413
        %2430 = vst [vmem:[%s217 + $0x10] sm:$0xff] %v2414
        %2431 = vst [vmem:[%s217 + $0x18] sm:$0xff] %v2415
        %2432 = vst [vmem:[%s217 + $0x20] sm:$0xff] %v2416
        %2433 = vst [vmem:[%s217 + $0x28] sm:$0xff] %v2417
        %2434 = vst [vmem:[%s217 + $0x30] sm:$0xff] %v2418
        %2435 = vst [vmem:[%s217 + $0x38] sm:$0xff] %v2419
        %2436 = vst [vmem:[%s217 + $0x40] sm:$0xff] %v2420
        %2437 = vst [vmem:[%s217 + $0x48] sm:$0xff] %v2421
        %2438 = vst [vmem:[%s217 + $0x50] sm:$0xff] %v2422
        %2439 = vst [vmem:[%s217 + $0x58] sm:$0xff] %v2423
        %2440 = vst [vmem:[%s217 + $0x60] sm:$0xff] %v2424
        %2441 = vst [vmem:[%s217 + $0x68] sm:$0xff] %v2425
        %2442 = vst [vmem:[%s217 + $0x70] sm:$0xff] %v2426
        %2443 = vst [vmem:[%s217 + $0x78] sm:$0xff] %v2427
        %v2444 = vld [vmem:[%s217] sm:$0xff]
        %v2445 = vld [vmem:[%s217 + $0x8] sm:$0xff]
        %v2446 = vld [vmem:[%s217 + $0x10] sm:$0xff]
        %v2447 = vld [vmem:[%s217 + $0x18] sm:$0xff]
        %v2448 = vld [vmem:[%s217 + $0x20] sm:$0xff]
        %v2449 = vld [vmem:[%s217 + $0x28] sm:$0xff]
        %v2450 = vld [vmem:[%s217 + $0x30] sm:$0xff]
        %v2451 = vld [vmem:[%s217 + $0x38] sm:$0xff]
        %v2452 = vld [vmem:[%s217 + $0x40] sm:$0xff]
        %v2453 = vld [vmem:[%s217 + $0x48] sm:$0xff]
        %v2454 = vld [vmem:[%s217 + $0x50] sm:$0xff]
        %v2455 = vld [vmem:[%s217 + $0x58] sm:$0xff]
        %v2456 = vld [vmem:[%s217 + $0x60] sm:$0xff]
        %v2457 = vld [vmem:[%s217 + $0x68] sm:$0xff]
        %v2458 = vld [vmem:[%s217 + $0x70] sm:$0xff]
        %v2459 = vld [vmem:[%s217 + $0x78] sm:$0xff]
        %v2460 = vrot.slane %v323, 7
        %v2461 = vrot.slane %v324, 7
        %v2462 = vrot.slane %v325, 7
        %v2463 = vrot.slane %v326, 7
        %v2464 = vrot.slane %v327, 7
        %v2465 = vrot.slane %v328, 7
        %v2466 = vrot.slane %v329, 7
        %v2467 = vrot.slane %v330, 7
        %v2468 = vrot.slane %v331, 7
        %v2469 = vrot.slane %v332, 7
        %v2470 = vrot.slane %v333, 7
        %v2471 = vrot.slane %v334, 7
        %v2472 = vrot.slane %v335, 7
        %v2473 = vrot.slane %v336, 7
        %v2474 = vrot.slane %v337, 7
        %v2475 = vrot.slane %v338, 7
        %vm2476 = vcmp.lt.s32.totalorder %v356, 1
        %v2477 = vsel %vm2476, %v2474, %v2475
        %v2478 = vsel %vm2476, %v2473, %v2474
        %v2479 = vsel %vm2476, %v2472, %v2473
        %v2480 = vsel %vm2476, %v2471, %v2472
        %v2481 = vsel %vm2476, %v2470, %v2471
        %v2482 = vsel %vm2476, %v2469, %v2470
        %v2483 = vsel %vm2476, %v2468, %v2469
        %v2484 = vsel %vm2476, %v2467, %v2468
        %v2485 = vsel %vm2476, %v2466, %v2467
        %v2486 = vsel %vm2476, %v2465, %v2466
        %v2487 = vsel %vm2476, %v2464, %v2465
        %v2488 = vsel %vm2476, %v2463, %v2464
        %v2489 = vsel %vm2476, %v2462, %v2463
        %v2490 = vsel %vm2476, %v2461, %v2462
        %v2491 = vsel %vm2476, %v2460, %v2461
        %v2492 = vsel %vm2476, %v2475, %v2460
        %s2493 = scalar_lea.vmem %s2, 768
        %v2494 = vld [vmem:[%s2493] sm:$0xff]
        %v2495 = vld [vmem:[%s2493 + $0x8] sm:$0xff]
        %v2496 = vld [vmem:[%s2493 + $0x10] sm:$0xff]
        %v2497 = vld [vmem:[%s2493 + $0x18] sm:$0xff]
        %v2498 = vld [vmem:[%s2493 + $0x20] sm:$0xff]
        %v2499 = vld [vmem:[%s2493 + $0x28] sm:$0xff]
        %v2500 = vld [vmem:[%s2493 + $0x30] sm:$0xff]
        %v2501 = vld [vmem:[%s2493 + $0x38] sm:$0xff]
        %v2502 = vld [vmem:[%s2493 + $0x40] sm:$0xff]
        %v2503 = vld [vmem:[%s2493 + $0x48] sm:$0xff]
        %v2504 = vld [vmem:[%s2493 + $0x50] sm:$0xff]
        %v2505 = vld [vmem:[%s2493 + $0x58] sm:$0xff]
        %v2506 = vld [vmem:[%s2493 + $0x60] sm:$0xff]
        %v2507 = vld [vmem:[%s2493 + $0x68] sm:$0xff]
        %v2508 = vld [vmem:[%s2493 + $0x70] sm:$0xff]
        %v2509 = vld [vmem:[%s2493 + $0x78] sm:$0xff]
        %2511 = vset.pattern.permute.xlu0 0
        %2512 = vperm.xlu0 %2511, %v2494
        %v2513 = vpop.permute.xlu0 %2512
        %2516 = vset.pattern.permute.xlu0 0
        %2517 = vperm.xlu0 %2516, %v2495
        %v2518 = vpop.permute.xlu0 %2517
        %2521 = vset.pattern.permute.xlu0 0
        %2522 = vperm.xlu0 %2521, %v2496
        %v2523 = vpop.permute.xlu0 %2522
        %2526 = vset.pattern.permute.xlu0 0
        %2527 = vperm.xlu0 %2526, %v2497
        %v2528 = vpop.permute.xlu0 %2527
        %2531 = vset.pattern.permute.xlu0 0
        %2532 = vperm.xlu0 %2531, %v2498
        %v2533 = vpop.permute.xlu0 %2532
        %2536 = vset.pattern.permute.xlu0 0
        %2537 = vperm.xlu0 %2536, %v2499
        %v2538 = vpop.permute.xlu0 %2537
        %2541 = vset.pattern.permute.xlu0 0
        %2542 = vperm.xlu0 %2541, %v2500
        %v2543 = vpop.permute.xlu0 %2542
        %2546 = vset.pattern.permute.xlu0 0
        %2547 = vperm.xlu0 %2546, %v2501
        %v2548 = vpop.permute.xlu0 %2547
        %2551 = vset.pattern.permute.xlu0 0
        %2552 = vperm.xlu0 %2551, %v2502
        %v2553 = vpop.permute.xlu0 %2552
        %2556 = vset.pattern.permute.xlu0 0
        %2557 = vperm.xlu0 %2556, %v2503
        %v2558 = vpop.permute.xlu0 %2557
        %2561 = vset.pattern.permute.xlu0 0
        %2562 = vperm.xlu0 %2561, %v2504
        %v2563 = vpop.permute.xlu0 %2562
        %2566 = vset.pattern.permute.xlu0 0
        %2567 = vperm.xlu0 %2566, %v2505
        %v2568 = vpop.permute.xlu0 %2567
        %2571 = vset.pattern.permute.xlu0 0
        %2572 = vperm.xlu0 %2571, %v2506
        %v2573 = vpop.permute.xlu0 %2572
        %2576 = vset.pattern.permute.xlu0 0
        %2577 = vperm.xlu0 %2576, %v2507
        %v2578 = vpop.permute.xlu0 %2577
        %2581 = vset.pattern.permute.xlu0 0
        %2582 = vperm.xlu0 %2581, %v2508
        %v2583 = vpop.permute.xlu0 %2582
        %2586 = vset.pattern.permute.xlu0 0
        %2587 = vperm.xlu0 %2586, %v2509
        %v2588 = vpop.permute.xlu0 %2587
        %v2590 = vmul.f32 %v2477, %v2513
        %v2591 = vmul.f32 %v2492, %v2518
        %v2592 = vmul.f32 %v2491, %v2523
        %v2593 = vmul.f32 %v2490, %v2528
        %v2594 = vmul.f32 %v2489, %v2533
        %v2595 = vmul.f32 %v2488, %v2538
        %v2596 = vmul.f32 %v2487, %v2543
        %v2597 = vmul.f32 %v2486, %v2548
        %v2598 = vmul.f32 %v2485, %v2553
        %v2599 = vmul.f32 %v2484, %v2558
        %v2600 = vmul.f32 %v2483, %v2563
        %v2601 = vmul.f32 %v2482, %v2568
        %v2602 = vmul.f32 %v2481, %v2573
        %v2603 = vmul.f32 %v2480, %v2578
        %v2604 = vmul.f32 %v2479, %v2583
        %v2605 = vmul.f32 %v2478, %v2588
        %v2606 = vpack.c.bf16 %v2591, %v2590
        %v2607 = vpack.c.bf16 %v2593, %v2592
        %v2608 = vpack.c.bf16 %v2595, %v2594
        %v2609 = vpack.c.bf16 %v2597, %v2596
        %v2610 = vpack.c.bf16 %v2599, %v2598
        %v2611 = vpack.c.bf16 %v2601, %v2600
        %v2612 = vpack.c.bf16 %v2603, %v2602
        %v2613 = vpack.c.bf16 %v2605, %v2604
        %s2614 = scalar_lea.vmem %s1, 192
        %v2615 = vld [vmem:[%s2614] sm:$0xf]
        %v2616 = vld [vmem:[%s2614 + $0x4] sm:$0xf]
        %v2617 = vld [vmem:[%s2614 + $0x8] sm:$0xf]
        %v2618 = vld [vmem:[%s2614 + $0xc] sm:$0xf]
        %v2619 = vld [vmem:[%s2614 + $0x10] sm:$0xf]
        %v2620 = vld [vmem:[%s2614 + $0x14] sm:$0xf]
        %v2621 = vld [vmem:[%s2614 + $0x18] sm:$0xf]
        %v2622 = vld [vmem:[%s2614 + $0x1c] sm:$0xf]
        %v2631 = vunpack.c.l.b16 %v2615
        %v2632 = vunpack.c.l.b16 %v2616
        %v2633 = vunpack.c.l.b16 %v2617
        %v2634 = vunpack.c.l.b16 %v2618
        %v2635 = vunpack.c.l.b16 %v2619
        %v2636 = vunpack.c.l.b16 %v2620
        %v2637 = vunpack.c.l.b16 %v2621
        %v2638 = vunpack.c.l.b16 %v2622
        %v2639 = vpack.c.b16 %v2632, %v2631
        %v2640 = vpack.c.b16 %v2634, %v2633
        %v2641 = vpack.c.b16 %v2636, %v2635
        %v2642 = vpack.c.b16 %v2638, %v2637
        %v2648 = vsel %vm526, %v2606, 0
        %v2651 = vsel %vm526, %v2607, 0
        %v2654 = vsel %vm526, %v2608, 0
        %v2657 = vsel %vm526, %v2609, 0
        %v2660 = vsel %vm526, %v2610, 0
        %v2663 = vsel %vm526, %v2611, 0
        %v2666 = vsel %vm526, %v2612, 0
        %v2669 = vsel %vm526, %v2613, 0
        %2671 = vmatprep.subr.bf16.mxu0 0
        %2672 = vmatpush1.bf16.msra.mxu0 0
        %2673 = vmatprep.subr.bf16.mxu0 0
        %2674 = vmatpush1.bf16.msra.mxu0 0
        %2675 = vmatprep.subr.bf16.mxu0 0
        %2676 = vmatpush1.bf16.msra.mxu0 0
        %2677 = vmatprep.subr.bf16.mxu0 0
        %2678 = vmatpush1.bf16.msra.mxu0 0
        %2679 = vmatprep.subr.bf16.mxu0 0
        %2680 = vmatpush1.bf16.msra.mxu0 %v2642
        %2681 = vmatprep.subr.bf16.mxu0 0
        %2682 = vmatpush1.bf16.msra.mxu0 %v2641
        %2683 = vmatprep.subr.bf16.mxu0 0
        %2684 = vmatpush1.bf16.msra.mxu0 %v2640
        %2685 = vmatprep.subr.bf16.mxu0 0
        %2686 = vmatpush1.bf16.msra.mxu0 %v2639
        %2687 = vmatprep.subr.bf16.mxu0 0
        %2688 = vmatpush2.bf16.msra.mxu0 0
        %2689 = vmatprep.subr.bf16.mxu0 0
        %2690 = vmatpush2.bf16.msra.mxu0 0
        %2691 = vmatprep.subr.bf16.mxu0 0
        %2692 = vmatpush2.bf16.msra.mxu0 0
        %2693 = vmatprep.subr.bf16.mxu0 0
        %2694 = vmatpush2.bf16.msra.mxu0 0
        %2695 = vmatprep.subr.bf16.mxu0 0
        %2696 = vmatpush2.bf16.msra.mxu0 0
        %2697 = vmatprep.subr.bf16.mxu0 0
        %2698 = vmatpush2.bf16.msra.mxu0 0
        %2699 = vmatprep.subr.bf16.mxu0 0
        %2700 = vmatpush2.bf16.msra.mxu0 0
        %2701 = vmatprep.subr.bf16.mxu0 0
        %2702 = vmatpush2.bf16.msra.mxu0 0
        %2703 = vmatprep.mubr.bf16.mxu0 0
        %2704 = vmatmul.mubr.bf16.gmra.mxu0 %v2648
        %v2705 = vpop.f32.mrf.mxu0
        %v2706 = vadd.f32 0.0, %v2705
        %v2707 = vpop.f32.mrf.mxu0
        %v2708 = vpop.f32.mrf.mxu0
        %v2709 = vadd.f32 0.0, %v2708
        %v2710 = vpop.f32.mrf.mxu0
        %2711 = vmatprep.mubr.bf16.mxu0 0
        %2712 = vmatmul.mubr.bf16.gmra.mxu0 %v2651
        %v2713 = vpop.f32.mrf.mxu0
        %v2714 = vadd.f32 0.0, %v2713
        %v2715 = vpop.f32.mrf.mxu0
        %v2716 = vpop.f32.mrf.mxu0
        %v2717 = vadd.f32 0.0, %v2716
        %v2718 = vpop.f32.mrf.mxu0
        %2719 = vmatprep.mubr.bf16.mxu0 0
        %2720 = vmatmul.mubr.bf16.gmra.mxu0 %v2654
        %v2721 = vpop.f32.mrf.mxu0
        %v2722 = vadd.f32 0.0, %v2721
        %v2723 = vpop.f32.mrf.mxu0
        %v2724 = vpop.f32.mrf.mxu0
        %v2725 = vadd.f32 0.0, %v2724
        %v2726 = vpop.f32.mrf.mxu0
        %2727 = vmatprep.mubr.bf16.mxu0 0
        %2728 = vmatmul.mubr.bf16.gmra.mxu0 %v2657
        %v2729 = vpop.f32.mrf.mxu0
        %v2730 = vadd.f32 0.0, %v2729
        %v2731 = vpop.f32.mrf.mxu0
        %v2732 = vpop.f32.mrf.mxu0
        %v2733 = vadd.f32 0.0, %v2732
        %v2734 = vpop.f32.mrf.mxu0
        %2735 = vmatprep.mubr.bf16.mxu0 0
        %2736 = vmatmul.mubr.bf16.gmra.mxu0 %v2660
        %v2737 = vpop.f32.mrf.mxu0
        %v2738 = vadd.f32 0.0, %v2737
        %v2739 = vpop.f32.mrf.mxu0
        %v2740 = vpop.f32.mrf.mxu0
        %v2741 = vadd.f32 0.0, %v2740
        %v2742 = vpop.f32.mrf.mxu0
        %2743 = vmatprep.mubr.bf16.mxu0 0
        %2744 = vmatmul.mubr.bf16.gmra.mxu0 %v2663
        %v2745 = vpop.f32.mrf.mxu0
        %v2746 = vadd.f32 0.0, %v2745
        %v2747 = vpop.f32.mrf.mxu0
        %v2748 = vpop.f32.mrf.mxu0
        %v2749 = vadd.f32 0.0, %v2748
        %v2750 = vpop.f32.mrf.mxu0
        %2751 = vmatprep.mubr.bf16.mxu0 0
        %2752 = vmatmul.mubr.bf16.gmra.mxu0 %v2666
        %v2753 = vpop.f32.mrf.mxu0
        %v2754 = vadd.f32 0.0, %v2753
        %v2755 = vpop.f32.mrf.mxu0
        %v2756 = vpop.f32.mrf.mxu0
        %v2757 = vadd.f32 0.0, %v2756
        %v2758 = vpop.f32.mrf.mxu0
        %2759 = vmatprep.mubr.bf16.mxu0 0
        %2760 = vmatmul.mubr.bf16.gmra.mxu0 %v2669
        %v2761 = vpop.f32.mrf.mxu0
        %v2762 = vadd.f32 0.0, %v2761
        %v2763 = vpop.f32.mrf.mxu0
        %v2764 = vpop.f32.mrf.mxu0
        %v2765 = vadd.f32 0.0, %v2764
        %v2766 = vpop.f32.mrf.mxu0
        %2767 = vdwg.mxu0
        %v2768 = vadd.f32 %v2444, %v2706
        %v2769 = vadd.f32 %v2445, %v2709
        %v2770 = vadd.f32 %v2446, %v2714
        %v2771 = vadd.f32 %v2447, %v2717
        %v2772 = vadd.f32 %v2448, %v2722
        %v2773 = vadd.f32 %v2449, %v2725
        %v2774 = vadd.f32 %v2450, %v2730
        %v2775 = vadd.f32 %v2451, %v2733
        %v2776 = vadd.f32 %v2452, %v2738
        %v2777 = vadd.f32 %v2453, %v2741
        %v2778 = vadd.f32 %v2454, %v2746
        %v2779 = vadd.f32 %v2455, %v2749
        %v2780 = vadd.f32 %v2456, %v2754
        %v2781 = vadd.f32 %v2457, %v2757
        %v2782 = vadd.f32 %v2458, %v2762
        %v2783 = vadd.f32 %v2459, %v2765
        %2784 = vst [vmem:[%s217] sm:$0xff] %v2768
        %2785 = vst [vmem:[%s217 + $0x8] sm:$0xff] %v2769
        %2786 = vst [vmem:[%s217 + $0x10] sm:$0xff] %v2770
        %2787 = vst [vmem:[%s217 + $0x18] sm:$0xff] %v2771
        %2788 = vst [vmem:[%s217 + $0x20] sm:$0xff] %v2772
        %2789 = vst [vmem:[%s217 + $0x28] sm:$0xff] %v2773
        %2790 = vst [vmem:[%s217 + $0x30] sm:$0xff] %v2774
        %2791 = vst [vmem:[%s217 + $0x38] sm:$0xff] %v2775
        %2792 = vst [vmem:[%s217 + $0x40] sm:$0xff] %v2776
        %2793 = vst [vmem:[%s217 + $0x48] sm:$0xff] %v2777
        %2794 = vst [vmem:[%s217 + $0x50] sm:$0xff] %v2778
        %2795 = vst [vmem:[%s217 + $0x58] sm:$0xff] %v2779
        %2796 = vst [vmem:[%s217 + $0x60] sm:$0xff] %v2780
        %2797 = vst [vmem:[%s217 + $0x68] sm:$0xff] %v2781
        %2798 = vst [vmem:[%s217 + $0x70] sm:$0xff] %v2782
        %2799 = vst [vmem:[%s217 + $0x78] sm:$0xff] %v2783
        %v2800 = vld [vmem:[%s217] sm:$0xff]
        %v2801 = vld [vmem:[%s217 + $0x8] sm:$0xff]
        %v2802 = vld [vmem:[%s217 + $0x10] sm:$0xff]
        %v2803 = vld [vmem:[%s217 + $0x18] sm:$0xff]
        %v2804 = vld [vmem:[%s217 + $0x20] sm:$0xff]
        %v2805 = vld [vmem:[%s217 + $0x28] sm:$0xff]
        %v2806 = vld [vmem:[%s217 + $0x30] sm:$0xff]
        %v2807 = vld [vmem:[%s217 + $0x38] sm:$0xff]
        %v2808 = vld [vmem:[%s217 + $0x40] sm:$0xff]
        %v2809 = vld [vmem:[%s217 + $0x48] sm:$0xff]
        %v2810 = vld [vmem:[%s217 + $0x50] sm:$0xff]
        %v2811 = vld [vmem:[%s217 + $0x58] sm:$0xff]
        %v2812 = vld [vmem:[%s217 + $0x60] sm:$0xff]
        %v2813 = vld [vmem:[%s217 + $0x68] sm:$0xff]
        %v2814 = vld [vmem:[%s217 + $0x70] sm:$0xff]
        %v2815 = vld [vmem:[%s217 + $0x78] sm:$0xff]
        %s2816 = scalar_lea.vmem %s2, 896
        %v2817 = vld [vmem:[%s2816] sm:$0xff]
        %v2818 = vld [vmem:[%s2816 + $0x8] sm:$0xff]
        %v2819 = vld [vmem:[%s2816 + $0x10] sm:$0xff]
        %v2820 = vld [vmem:[%s2816 + $0x18] sm:$0xff]
        %v2821 = vld [vmem:[%s2816 + $0x20] sm:$0xff]
        %v2822 = vld [vmem:[%s2816 + $0x28] sm:$0xff]
        %v2823 = vld [vmem:[%s2816 + $0x30] sm:$0xff]
        %v2824 = vld [vmem:[%s2816 + $0x38] sm:$0xff]
        %v2825 = vld [vmem:[%s2816 + $0x40] sm:$0xff]
        %v2826 = vld [vmem:[%s2816 + $0x48] sm:$0xff]
        %v2827 = vld [vmem:[%s2816 + $0x50] sm:$0xff]
        %v2828 = vld [vmem:[%s2816 + $0x58] sm:$0xff]
        %v2829 = vld [vmem:[%s2816 + $0x60] sm:$0xff]
        %v2830 = vld [vmem:[%s2816 + $0x68] sm:$0xff]
        %v2831 = vld [vmem:[%s2816 + $0x70] sm:$0xff]
        %v2832 = vld [vmem:[%s2816 + $0x78] sm:$0xff]
        %2834 = vset.pattern.permute.xlu0 0
        %2835 = vperm.xlu0 %2834, %v2817
        %v2836 = vpop.permute.xlu0 %2835
        %2839 = vset.pattern.permute.xlu0 0
        %2840 = vperm.xlu0 %2839, %v2818
        %v2841 = vpop.permute.xlu0 %2840
        %2844 = vset.pattern.permute.xlu0 0
        %2845 = vperm.xlu0 %2844, %v2819
        %v2846 = vpop.permute.xlu0 %2845
        %2849 = vset.pattern.permute.xlu0 0
        %2850 = vperm.xlu0 %2849, %v2820
        %v2851 = vpop.permute.xlu0 %2850
        %2854 = vset.pattern.permute.xlu0 0
        %2855 = vperm.xlu0 %2854, %v2821
        %v2856 = vpop.permute.xlu0 %2855
        %2859 = vset.pattern.permute.xlu0 0
        %2860 = vperm.xlu0 %2859, %v2822
        %v2861 = vpop.permute.xlu0 %2860
        %2864 = vset.pattern.permute.xlu0 0
        %2865 = vperm.xlu0 %2864, %v2823
        %v2866 = vpop.permute.xlu0 %2865
        %2869 = vset.pattern.permute.xlu0 0
        %2870 = vperm.xlu0 %2869, %v2824
        %v2871 = vpop.permute.xlu0 %2870
        %2874 = vset.pattern.permute.xlu0 0
        %2875 = vperm.xlu0 %2874, %v2825
        %v2876 = vpop.permute.xlu0 %2875
        %2879 = vset.pattern.permute.xlu0 0
        %2880 = vperm.xlu0 %2879, %v2826
        %v2881 = vpop.permute.xlu0 %2880
        %2884 = vset.pattern.permute.xlu0 0
        %2885 = vperm.xlu0 %2884, %v2827
        %v2886 = vpop.permute.xlu0 %2885
        %2889 = vset.pattern.permute.xlu0 0
        %2890 = vperm.xlu0 %2889, %v2828
        %v2891 = vpop.permute.xlu0 %2890
        %2894 = vset.pattern.permute.xlu0 0
        %2895 = vperm.xlu0 %2894, %v2829
        %v2896 = vpop.permute.xlu0 %2895
        %2899 = vset.pattern.permute.xlu0 0
        %2900 = vperm.xlu0 %2899, %v2830
        %v2901 = vpop.permute.xlu0 %2900
        %2904 = vset.pattern.permute.xlu0 0
        %2905 = vperm.xlu0 %2904, %v2831
        %v2906 = vpop.permute.xlu0 %2905
        %2909 = vset.pattern.permute.xlu0 0
        %2910 = vperm.xlu0 %2909, %v2832
        %v2911 = vpop.permute.xlu0 %2910
        %v2913 = vmul.f32 %v338, %v2836
        %v2914 = vmul.f32 %v323, %v2841
        %v2915 = vmul.f32 %v324, %v2846
        %v2916 = vmul.f32 %v325, %v2851
        %v2917 = vmul.f32 %v326, %v2856
        %v2918 = vmul.f32 %v327, %v2861
        %v2919 = vmul.f32 %v328, %v2866
        %v2920 = vmul.f32 %v329, %v2871
        %v2921 = vmul.f32 %v330, %v2876
        %v2922 = vmul.f32 %v331, %v2881
        %v2923 = vmul.f32 %v332, %v2886
        %v2924 = vmul.f32 %v333, %v2891
        %v2925 = vmul.f32 %v334, %v2896
        %v2926 = vmul.f32 %v335, %v2901
        %v2927 = vmul.f32 %v336, %v2906
        %v2928 = vmul.f32 %v337, %v2911
        %v2929 = vpack.c.bf16 %v2914, %v2913
        %v2930 = vpack.c.bf16 %v2916, %v2915
        %v2931 = vpack.c.bf16 %v2918, %v2917
        %v2932 = vpack.c.bf16 %v2920, %v2919
        %v2933 = vpack.c.bf16 %v2922, %v2921
        %v2934 = vpack.c.bf16 %v2924, %v2923
        %v2935 = vpack.c.bf16 %v2926, %v2925
        %v2936 = vpack.c.bf16 %v2928, %v2927
        %s2937 = scalar_lea.vmem %s1, 224
        %v2938 = vld [vmem:[%s2937] sm:$0xf]
        %v2939 = vld [vmem:[%s2937 + $0x4] sm:$0xf]
        %v2940 = vld [vmem:[%s2937 + $0x8] sm:$0xf]
        %v2941 = vld [vmem:[%s2937 + $0xc] sm:$0xf]
        %v2942 = vld [vmem:[%s2937 + $0x10] sm:$0xf]
        %v2943 = vld [vmem:[%s2937 + $0x14] sm:$0xf]
        %v2944 = vld [vmem:[%s2937 + $0x18] sm:$0xf]
        %v2945 = vld [vmem:[%s2937 + $0x1c] sm:$0xf]
        %v2954 = vunpack.c.l.b16 %v2938
        %v2955 = vunpack.c.l.b16 %v2939
        %v2956 = vunpack.c.l.b16 %v2940
        %v2957 = vunpack.c.l.b16 %v2941
        %v2958 = vunpack.c.l.b16 %v2942
        %v2959 = vunpack.c.l.b16 %v2943
        %v2960 = vunpack.c.l.b16 %v2944
        %v2961 = vunpack.c.l.b16 %v2945
        %v2962 = vpack.c.b16 %v2955, %v2954
        %v2963 = vpack.c.b16 %v2957, %v2956
        %v2964 = vpack.c.b16 %v2959, %v2958
        %v2965 = vpack.c.b16 %v2961, %v2960
        %v2971 = vsel %vm526, %v2929, 0
        %v2974 = vsel %vm526, %v2930, 0
        %v2977 = vsel %vm526, %v2931, 0
        %v2980 = vsel %vm526, %v2932, 0
        %v2983 = vsel %vm526, %v2933, 0
        %v2986 = vsel %vm526, %v2934, 0
        %v2989 = vsel %vm526, %v2935, 0
        %v2992 = vsel %vm526, %v2936, 0
        %2994 = vmatprep.subr.bf16.mxu0 0
        %2995 = vmatpush1.bf16.msra.mxu0 0
        %2996 = vmatprep.subr.bf16.mxu0 0
        %2997 = vmatpush1.bf16.msra.mxu0 0
        %2998 = vmatprep.subr.bf16.mxu0 0
        %2999 = vmatpush1.bf16.msra.mxu0 0
        %3000 = vmatprep.subr.bf16.mxu0 0
        %3001 = vmatpush1.bf16.msra.mxu0 0
        %3002 = vmatprep.subr.bf16.mxu0 0
        %3003 = vmatpush1.bf16.msra.mxu0 %v2965
        %3004 = vmatprep.subr.bf16.mxu0 0
        %3005 = vmatpush1.bf16.msra.mxu0 %v2964
        %3006 = vmatprep.subr.bf16.mxu0 0
        %3007 = vmatpush1.bf16.msra.mxu0 %v2963
        %3008 = vmatprep.subr.bf16.mxu0 0
        %3009 = vmatpush1.bf16.msra.mxu0 %v2962
        %3010 = vmatprep.subr.bf16.mxu0 0
        %3011 = vmatpush2.bf16.msra.mxu0 0
        %3012 = vmatprep.subr.bf16.mxu0 0
        %3013 = vmatpush2.bf16.msra.mxu0 0
        %3014 = vmatprep.subr.bf16.mxu0 0
        %3015 = vmatpush2.bf16.msra.mxu0 0
        %3016 = vmatprep.subr.bf16.mxu0 0
        %3017 = vmatpush2.bf16.msra.mxu0 0
        %3018 = vmatprep.subr.bf16.mxu0 0
        %3019 = vmatpush2.bf16.msra.mxu0 0
        %3020 = vmatprep.subr.bf16.mxu0 0
        %3021 = vmatpush2.bf16.msra.mxu0 0
        %3022 = vmatprep.subr.bf16.mxu0 0
        %3023 = vmatpush2.bf16.msra.mxu0 0
        %3024 = vmatprep.subr.bf16.mxu0 0
        %3025 = vmatpush2.bf16.msra.mxu0 0
        %3026 = vmatprep.mubr.bf16.mxu0 0
        %3027 = vmatmul.mubr.bf16.gmra.mxu0 %v2971
        %v3028 = vpop.f32.mrf.mxu0
        %v3029 = vadd.f32 0.0, %v3028
        %v3030 = vpop.f32.mrf.mxu0
        %v3031 = vpop.f32.mrf.mxu0
        %v3032 = vadd.f32 0.0, %v3031
        %v3033 = vpop.f32.mrf.mxu0
        %3034 = vmatprep.mubr.bf16.mxu0 0
        %3035 = vmatmul.mubr.bf16.gmra.mxu0 %v2974
        %v3036 = vpop.f32.mrf.mxu0
        %v3037 = vadd.f32 0.0, %v3036
        %v3038 = vpop.f32.mrf.mxu0
        %v3039 = vpop.f32.mrf.mxu0
        %v3040 = vadd.f32 0.0, %v3039
        %v3041 = vpop.f32.mrf.mxu0
        %3042 = vmatprep.mubr.bf16.mxu0 0
        %3043 = vmatmul.mubr.bf16.gmra.mxu0 %v2977
        %v3044 = vpop.f32.mrf.mxu0
        %v3045 = vadd.f32 0.0, %v3044
        %v3046 = vpop.f32.mrf.mxu0
        %v3047 = vpop.f32.mrf.mxu0
        %v3048 = vadd.f32 0.0, %v3047
        %v3049 = vpop.f32.mrf.mxu0
        %3050 = vmatprep.mubr.bf16.mxu0 0
        %3051 = vmatmul.mubr.bf16.gmra.mxu0 %v2980
        %v3052 = vpop.f32.mrf.mxu0
        %v3053 = vadd.f32 0.0, %v3052
        %v3054 = vpop.f32.mrf.mxu0
        %v3055 = vpop.f32.mrf.mxu0
        %v3056 = vadd.f32 0.0, %v3055
        %v3057 = vpop.f32.mrf.mxu0
        %3058 = vmatprep.mubr.bf16.mxu0 0
        %3059 = vmatmul.mubr.bf16.gmra.mxu0 %v2983
        %v3060 = vpop.f32.mrf.mxu0
        %v3061 = vadd.f32 0.0, %v3060
        %v3062 = vpop.f32.mrf.mxu0
        %v3063 = vpop.f32.mrf.mxu0
        %v3064 = vadd.f32 0.0, %v3063
        %v3065 = vpop.f32.mrf.mxu0
        %3066 = vmatprep.mubr.bf16.mxu0 0
        %3067 = vmatmul.mubr.bf16.gmra.mxu0 %v2986
        %v3068 = vpop.f32.mrf.mxu0
        %v3069 = vadd.f32 0.0, %v3068
        %v3070 = vpop.f32.mrf.mxu0
        %v3071 = vpop.f32.mrf.mxu0
        %v3072 = vadd.f32 0.0, %v3071
        %v3073 = vpop.f32.mrf.mxu0
        %3074 = vmatprep.mubr.bf16.mxu0 0
        %3075 = vmatmul.mubr.bf16.gmra.mxu0 %v2989
        %v3076 = vpop.f32.mrf.mxu0
        %v3077 = vadd.f32 0.0, %v3076
        %v3078 = vpop.f32.mrf.mxu0
        %v3079 = vpop.f32.mrf.mxu0
        %v3080 = vadd.f32 0.0, %v3079
        %v3081 = vpop.f32.mrf.mxu0
        %3082 = vmatprep.mubr.bf16.mxu0 0
        %3083 = vmatmul.mubr.bf16.gmra.mxu0 %v2992
        %v3084 = vpop.f32.mrf.mxu0
        %v3085 = vadd.f32 0.0, %v3084
        %v3086 = vpop.f32.mrf.mxu0
        %v3087 = vpop.f32.mrf.mxu0
        %v3088 = vadd.f32 0.0, %v3087
        %v3089 = vpop.f32.mrf.mxu0
        %3090 = vdwg.mxu0
        %v3091 = vadd.f32 %v2800, %v3029
        %v3092 = vadd.f32 %v2801, %v3032
        %v3093 = vadd.f32 %v2802, %v3037
        %v3094 = vadd.f32 %v2803, %v3040
        %v3095 = vadd.f32 %v2804, %v3045
        %v3096 = vadd.f32 %v2805, %v3048
        %v3097 = vadd.f32 %v2806, %v3053
        %v3098 = vadd.f32 %v2807, %v3056
        %v3099 = vadd.f32 %v2808, %v3061
        %v3100 = vadd.f32 %v2809, %v3064
        %v3101 = vadd.f32 %v2810, %v3069
        %v3102 = vadd.f32 %v2811, %v3072
        %v3103 = vadd.f32 %v2812, %v3077
        %v3104 = vadd.f32 %v2813, %v3080
        %v3105 = vadd.f32 %v2814, %v3085
        %v3106 = vadd.f32 %v2815, %v3088
        %3107 = vst [vmem:[%s217] sm:$0xff] %v3091
        %3108 = vst [vmem:[%s217 + $0x8] sm:$0xff] %v3092
        %3109 = vst [vmem:[%s217 + $0x10] sm:$0xff] %v3093
        %3110 = vst [vmem:[%s217 + $0x18] sm:$0xff] %v3094
        %3111 = vst [vmem:[%s217 + $0x20] sm:$0xff] %v3095
        %3112 = vst [vmem:[%s217 + $0x28] sm:$0xff] %v3096
        %3113 = vst [vmem:[%s217 + $0x30] sm:$0xff] %v3097
        %3114 = vst [vmem:[%s217 + $0x38] sm:$0xff] %v3098
        %3115 = vst [vmem:[%s217 + $0x40] sm:$0xff] %v3099
        %3116 = vst [vmem:[%s217 + $0x48] sm:$0xff] %v3100
        %3117 = vst [vmem:[%s217 + $0x50] sm:$0xff] %v3101
        %3118 = vst [vmem:[%s217 + $0x58] sm:$0xff] %v3102
        %3119 = vst [vmem:[%s217 + $0x60] sm:$0xff] %v3103
        %3120 = vst [vmem:[%s217 + $0x68] sm:$0xff] %v3104
        %3121 = vst [vmem:[%s217 + $0x70] sm:$0xff] %v3105
        %3122 = vst [vmem:[%s217 + $0x78] sm:$0xff] %v3106
        %v3123 = vld [vmem:[%s217] sm:$0xff]
        %v3124 = vld [vmem:[%s217 + $0x8] sm:$0xff]
        %v3125 = vld [vmem:[%s217 + $0x10] sm:$0xff]
        %v3126 = vld [vmem:[%s217 + $0x18] sm:$0xff]
        %v3127 = vld [vmem:[%s217 + $0x20] sm:$0xff]
        %v3128 = vld [vmem:[%s217 + $0x28] sm:$0xff]
        %v3129 = vld [vmem:[%s217 + $0x30] sm:$0xff]
        %v3130 = vld [vmem:[%s217 + $0x38] sm:$0xff]
        %v3131 = vld [vmem:[%s217 + $0x40] sm:$0xff]
        %v3132 = vld [vmem:[%s217 + $0x48] sm:$0xff]
        %v3133 = vld [vmem:[%s217 + $0x50] sm:$0xff]
        %v3134 = vld [vmem:[%s217 + $0x58] sm:$0xff]
        %v3135 = vld [vmem:[%s217 + $0x60] sm:$0xff]
        %v3136 = vld [vmem:[%s217 + $0x68] sm:$0xff]
        %v3137 = vld [vmem:[%s217 + $0x70] sm:$0xff]
        %v3138 = vld [vmem:[%s217 + $0x78] sm:$0xff]
        %s3139 = scalar_lea.vmem %s2, 1024
        %v3140 = vld [vmem:[%s3139] sm:$0xff]
        %v3141 = vld [vmem:[%s3139 + $0x8] sm:$0xff]
        %v3142 = vld [vmem:[%s3139 + $0x10] sm:$0xff]
        %v3143 = vld [vmem:[%s3139 + $0x18] sm:$0xff]
        %v3144 = vld [vmem:[%s3139 + $0x20] sm:$0xff]
        %v3145 = vld [vmem:[%s3139 + $0x28] sm:$0xff]
        %v3146 = vld [vmem:[%s3139 + $0x30] sm:$0xff]
        %v3147 = vld [vmem:[%s3139 + $0x38] sm:$0xff]
        %v3148 = vld [vmem:[%s3139 + $0x40] sm:$0xff]
        %v3149 = vld [vmem:[%s3139 + $0x48] sm:$0xff]
        %v3150 = vld [vmem:[%s3139 + $0x50] sm:$0xff]
        %v3151 = vld [vmem:[%s3139 + $0x58] sm:$0xff]
        %v3152 = vld [vmem:[%s3139 + $0x60] sm:$0xff]
        %v3153 = vld [vmem:[%s3139 + $0x68] sm:$0xff]
        %v3154 = vld [vmem:[%s3139 + $0x70] sm:$0xff]
        %v3155 = vld [vmem:[%s3139 + $0x78] sm:$0xff]
        %3157 = vset.pattern.permute.xlu0 0
        %3158 = vperm.xlu0 %3157, %v3140
        %v3159 = vpop.permute.xlu0 %3158
        %3162 = vset.pattern.permute.xlu0 0
        %3163 = vperm.xlu0 %3162, %v3141
        %v3164 = vpop.permute.xlu0 %3163
        %3167 = vset.pattern.permute.xlu0 0
        %3168 = vperm.xlu0 %3167, %v3142
        %v3169 = vpop.permute.xlu0 %3168
        %3172 = vset.pattern.permute.xlu0 0
        %3173 = vperm.xlu0 %3172, %v3143
        %v3174 = vpop.permute.xlu0 %3173
        %3177 = vset.pattern.permute.xlu0 0
        %3178 = vperm.xlu0 %3177, %v3144
        %v3179 = vpop.permute.xlu0 %3178
        %3182 = vset.pattern.permute.xlu0 0
        %3183 = vperm.xlu0 %3182, %v3145
        %v3184 = vpop.permute.xlu0 %3183
        %3187 = vset.pattern.permute.xlu0 0
        %3188 = vperm.xlu0 %3187, %v3146
        %v3189 = vpop.permute.xlu0 %3188
        %3192 = vset.pattern.permute.xlu0 0
        %3193 = vperm.xlu0 %3192, %v3147
        %v3194 = vpop.permute.xlu0 %3193
        %3197 = vset.pattern.permute.xlu0 0
        %3198 = vperm.xlu0 %3197, %v3148
        %v3199 = vpop.permute.xlu0 %3198
        %3202 = vset.pattern.permute.xlu0 0
        %3203 = vperm.xlu0 %3202, %v3149
        %v3204 = vpop.permute.xlu0 %3203
        %3207 = vset.pattern.permute.xlu0 0
        %3208 = vperm.xlu0 %3207, %v3150
        %v3209 = vpop.permute.xlu0 %3208
        %3212 = vset.pattern.permute.xlu0 0
        %3213 = vperm.xlu0 %3212, %v3151
        %v3214 = vpop.permute.xlu0 %3213
        %3217 = vset.pattern.permute.xlu0 0
        %3218 = vperm.xlu0 %3217, %v3152
        %v3219 = vpop.permute.xlu0 %3218
        %3222 = vset.pattern.permute.xlu0 0
        %3223 = vperm.xlu0 %3222, %v3153
        %v3224 = vpop.permute.xlu0 %3223
        %3227 = vset.pattern.permute.xlu0 0
        %3228 = vperm.xlu0 %3227, %v3154
        %v3229 = vpop.permute.xlu0 %3228
        %3232 = vset.pattern.permute.xlu0 0
        %3233 = vperm.xlu0 %3232, %v3155
        %v3234 = vpop.permute.xlu0 %3233
        %v3236 = vmul.f32 %v373, %v3159
        %v3237 = vmul.f32 %v372, %v3164
        %v3238 = vmul.f32 %v371, %v3169
        %v3239 = vmul.f32 %v370, %v3174
        %v3240 = vmul.f32 %v369, %v3179
        %v3241 = vmul.f32 %v368, %v3184
        %v3242 = vmul.f32 %v367, %v3189
        %v3243 = vmul.f32 %v366, %v3194
        %v3244 = vmul.f32 %v365, %v3199
        %v3245 = vmul.f32 %v364, %v3204
        %v3246 = vmul.f32 %v363, %v3209
        %v3247 = vmul.f32 %v362, %v3214
        %v3248 = vmul.f32 %v361, %v3219
        %v3249 = vmul.f32 %v360, %v3224
        %v3250 = vmul.f32 %v359, %v3229
        %v3251 = vmul.f32 %v358, %v3234
        %v3252 = vpack.c.bf16 %v3237, %v3236
        %v3253 = vpack.c.bf16 %v3239, %v3238
        %v3254 = vpack.c.bf16 %v3241, %v3240
        %v3255 = vpack.c.bf16 %v3243, %v3242
        %v3256 = vpack.c.bf16 %v3245, %v3244
        %v3257 = vpack.c.bf16 %v3247, %v3246
        %v3258 = vpack.c.bf16 %v3249, %v3248
        %v3259 = vpack.c.bf16 %v3251, %v3250
        %s3260 = scalar_lea.vmem %s1, 256
        %v3261 = vld [vmem:[%s3260] sm:$0xf]
        %v3262 = vld [vmem:[%s3260 + $0x4] sm:$0xf]
        %v3263 = vld [vmem:[%s3260 + $0x8] sm:$0xf]
        %v3264 = vld [vmem:[%s3260 + $0xc] sm:$0xf]
        %v3265 = vld [vmem:[%s3260 + $0x10] sm:$0xf]
        %v3266 = vld [vmem:[%s3260 + $0x14] sm:$0xf]
        %v3267 = vld [vmem:[%s3260 + $0x18] sm:$0xf]
        %v3268 = vld [vmem:[%s3260 + $0x1c] sm:$0xf]
        %v3277 = vunpack.c.l.b16 %v3261
        %v3278 = vunpack.c.l.b16 %v3262
        %v3279 = vunpack.c.l.b16 %v3263
        %v3280 = vunpack.c.l.b16 %v3264
        %v3281 = vunpack.c.l.b16 %v3265
        %v3282 = vunpack.c.l.b16 %v3266
        %v3283 = vunpack.c.l.b16 %v3267
        %v3284 = vunpack.c.l.b16 %v3268
        %v3285 = vpack.c.b16 %v3278, %v3277
        %v3286 = vpack.c.b16 %v3280, %v3279
        %v3287 = vpack.c.b16 %v3282, %v3281
        %v3288 = vpack.c.b16 %v3284, %v3283
        %v3294 = vsel %vm526, %v3252, 0
        %v3297 = vsel %vm526, %v3253, 0
        %v3300 = vsel %vm526, %v3254, 0
        %v3303 = vsel %vm526, %v3255, 0
        %v3306 = vsel %vm526, %v3256, 0
        %v3309 = vsel %vm526, %v3257, 0
        %v3312 = vsel %vm526, %v3258, 0
        %v3315 = vsel %vm526, %v3259, 0
        %3317 = vmatprep.subr.bf16.mxu0 0
        %3318 = vmatpush1.bf16.msra.mxu0 0
        %3319 = vmatprep.subr.bf16.mxu0 0
        %3320 = vmatpush1.bf16.msra.mxu0 0
        %3321 = vmatprep.subr.bf16.mxu0 0
        %3322 = vmatpush1.bf16.msra.mxu0 0
        %3323 = vmatprep.subr.bf16.mxu0 0
        %3324 = vmatpush1.bf16.msra.mxu0 0
        %3325 = vmatprep.subr.bf16.mxu0 0
        %3326 = vmatpush1.bf16.msra.mxu0 %v3288
        %3327 = vmatprep.subr.bf16.mxu0 0
        %3328 = vmatpush1.bf16.msra.mxu0 %v3287
        %3329 = vmatprep.subr.bf16.mxu0 0
        %3330 = vmatpush1.bf16.msra.mxu0 %v3286
        %3331 = vmatprep.subr.bf16.mxu0 0
        %3332 = vmatpush1.bf16.msra.mxu0 %v3285
        %3333 = vmatprep.subr.bf16.mxu0 0
        %3334 = vmatpush2.bf16.msra.mxu0 0
        %3335 = vmatprep.subr.bf16.mxu0 0
        %3336 = vmatpush2.bf16.msra.mxu0 0
        %3337 = vmatprep.subr.bf16.mxu0 0
        %3338 = vmatpush2.bf16.msra.mxu0 0
        %3339 = vmatprep.subr.bf16.mxu0 0
        %3340 = vmatpush2.bf16.msra.mxu0 0
        %3341 = vmatprep.subr.bf16.mxu0 0
        %3342 = vmatpush2.bf16.msra.mxu0 0
        %3343 = vmatprep.subr.bf16.mxu0 0
        %3344 = vmatpush2.bf16.msra.mxu0 0
        %3345 = vmatprep.subr.bf16.mxu0 0
        %3346 = vmatpush2.bf16.msra.mxu0 0
        %3347 = vmatprep.subr.bf16.mxu0 0
        %3348 = vmatpush2.bf16.msra.mxu0 0
        %3349 = vmatprep.mubr.bf16.mxu0 0
        %3350 = vmatmul.mubr.bf16.gmra.mxu0 %v3294
        %v3351 = vpop.f32.mrf.mxu0
        %v3352 = vadd.f32 0.0, %v3351
        %v3353 = vpop.f32.mrf.mxu0
        %v3354 = vpop.f32.mrf.mxu0
        %v3355 = vadd.f32 0.0, %v3354
        %v3356 = vpop.f32.mrf.mxu0
        %3357 = vmatprep.mubr.bf16.mxu0 0
        %3358 = vmatmul.mubr.bf16.gmra.mxu0 %v3297
        %v3359 = vpop.f32.mrf.mxu0
        %v3360 = vadd.f32 0.0, %v3359
        %v3361 = vpop.f32.mrf.mxu0
        %v3362 = vpop.f32.mrf.mxu0
        %v3363 = vadd.f32 0.0, %v3362
        %v3364 = vpop.f32.mrf.mxu0
        %3365 = vmatprep.mubr.bf16.mxu0 0
        %3366 = vmatmul.mubr.bf16.gmra.mxu0 %v3300
        %v3367 = vpop.f32.mrf.mxu0
        %v3368 = vadd.f32 0.0, %v3367
        %v3369 = vpop.f32.mrf.mxu0
        %v3370 = vpop.f32.mrf.mxu0
        %v3371 = vadd.f32 0.0, %v3370
        %v3372 = vpop.f32.mrf.mxu0
        %3373 = vmatprep.mubr.bf16.mxu0 0
        %3374 = vmatmul.mubr.bf16.gmra.mxu0 %v3303
        %v3375 = vpop.f32.mrf.mxu0
        %v3376 = vadd.f32 0.0, %v3375
        %v3377 = vpop.f32.mrf.mxu0
        %v3378 = vpop.f32.mrf.mxu0
        %v3379 = vadd.f32 0.0, %v3378
        %v3380 = vpop.f32.mrf.mxu0
        %3381 = vmatprep.mubr.bf16.mxu0 0
        %3382 = vmatmul.mubr.bf16.gmra.mxu0 %v3306
        %v3383 = vpop.f32.mrf.mxu0
        %v3384 = vadd.f32 0.0, %v3383
        %v3385 = vpop.f32.mrf.mxu0
        %v3386 = vpop.f32.mrf.mxu0
        %v3387 = vadd.f32 0.0, %v3386
        %v3388 = vpop.f32.mrf.mxu0
        %3389 = vmatprep.mubr.bf16.mxu0 0
        %3390 = vmatmul.mubr.bf16.gmra.mxu0 %v3309
        %v3391 = vpop.f32.mrf.mxu0
        %v3392 = vadd.f32 0.0, %v3391
        %v3393 = vpop.f32.mrf.mxu0
        %v3394 = vpop.f32.mrf.mxu0
        %v3395 = vadd.f32 0.0, %v3394
        %v3396 = vpop.f32.mrf.mxu0
        %3397 = vmatprep.mubr.bf16.mxu0 0
        %3398 = vmatmul.mubr.bf16.gmra.mxu0 %v3312
        %v3399 = vpop.f32.mrf.mxu0
        %v3400 = vadd.f32 0.0, %v3399
        %v3401 = vpop.f32.mrf.mxu0
        %v3402 = vpop.f32.mrf.mxu0
        %v3403 = vadd.f32 0.0, %v3402
        %v3404 = vpop.f32.mrf.mxu0
        %3405 = vmatprep.mubr.bf16.mxu0 0
        %3406 = vmatmul.mubr.bf16.gmra.mxu0 %v3315
        %v3407 = vpop.f32.mrf.mxu0
        %v3408 = vadd.f32 0.0, %v3407
        %v3409 = vpop.f32.mrf.mxu0
        %v3410 = vpop.f32.mrf.mxu0
        %v3411 = vadd.f32 0.0, %v3410
        %v3412 = vpop.f32.mrf.mxu0
        %3413 = vdwg.mxu0
        %v3414 = vadd.f32 %v3123, %v3352
        %v3415 = vadd.f32 %v3124, %v3355
        %v3416 = vadd.f32 %v3125, %v3360
        %v3417 = vadd.f32 %v3126, %v3363
        %v3418 = vadd.f32 %v3127, %v3368
        %v3419 = vadd.f32 %v3128, %v3371
        %v3420 = vadd.f32 %v3129, %v3376
        %v3421 = vadd.f32 %v3130, %v3379
        %v3422 = vadd.f32 %v3131, %v3384
        %v3423 = vadd.f32 %v3132, %v3387
        %v3424 = vadd.f32 %v3133, %v3392
        %v3425 = vadd.f32 %v3134, %v3395
        %v3426 = vadd.f32 %v3135, %v3400
        %v3427 = vadd.f32 %v3136, %v3403
        %v3428 = vadd.f32 %v3137, %v3408
        %v3429 = vadd.f32 %v3138, %v3411
        %3430 = vst [vmem:[%s217] sm:$0xff] %v3414
        %3431 = vst [vmem:[%s217 + $0x8] sm:$0xff] %v3415
        %3432 = vst [vmem:[%s217 + $0x10] sm:$0xff] %v3416
        %3433 = vst [vmem:[%s217 + $0x18] sm:$0xff] %v3417
        %3434 = vst [vmem:[%s217 + $0x20] sm:$0xff] %v3418
        %3435 = vst [vmem:[%s217 + $0x28] sm:$0xff] %v3419
        %3436 = vst [vmem:[%s217 + $0x30] sm:$0xff] %v3420
        %3437 = vst [vmem:[%s217 + $0x38] sm:$0xff] %v3421
        %3438 = vst [vmem:[%s217 + $0x40] sm:$0xff] %v3422
        %3439 = vst [vmem:[%s217 + $0x48] sm:$0xff] %v3423
        %3440 = vst [vmem:[%s217 + $0x50] sm:$0xff] %v3424
        %3441 = vst [vmem:[%s217 + $0x58] sm:$0xff] %v3425
        %3442 = vst [vmem:[%s217 + $0x60] sm:$0xff] %v3426
        %3443 = vst [vmem:[%s217 + $0x68] sm:$0xff] %v3427
        %3444 = vst [vmem:[%s217 + $0x70] sm:$0xff] %v3428
        %3445 = vst [vmem:[%s217 + $0x78] sm:$0xff] %v3429
        %v3446 = vld [vmem:[%s217] sm:$0xff]
        %v3447 = vld [vmem:[%s217 + $0x8] sm:$0xff]
        %v3448 = vld [vmem:[%s217 + $0x10] sm:$0xff]
        %v3449 = vld [vmem:[%s217 + $0x18] sm:$0xff]
        %v3450 = vld [vmem:[%s217 + $0x20] sm:$0xff]
        %v3451 = vld [vmem:[%s217 + $0x28] sm:$0xff]
        %v3452 = vld [vmem:[%s217 + $0x30] sm:$0xff]
        %v3453 = vld [vmem:[%s217 + $0x38] sm:$0xff]
        %v3454 = vld [vmem:[%s217 + $0x40] sm:$0xff]
        %v3455 = vld [vmem:[%s217 + $0x48] sm:$0xff]
        %v3456 = vld [vmem:[%s217 + $0x50] sm:$0xff]
        %v3457 = vld [vmem:[%s217 + $0x58] sm:$0xff]
        %v3458 = vld [vmem:[%s217 + $0x60] sm:$0xff]
        %v3459 = vld [vmem:[%s217 + $0x68] sm:$0xff]
        %v3460 = vld [vmem:[%s217 + $0x70] sm:$0xff]
        %v3461 = vld [vmem:[%s217 + $0x78] sm:$0xff]
        %s3462 = scalar_lea.vmem %s2, 1152
        %v3463 = vld [vmem:[%s3462] sm:$0xff]
        %v3464 = vld [vmem:[%s3462 + $0x8] sm:$0xff]
        %v3465 = vld [vmem:[%s3462 + $0x10] sm:$0xff]
        %v3466 = vld [vmem:[%s3462 + $0x18] sm:$0xff]
        %v3467 = vld [vmem:[%s3462 + $0x20] sm:$0xff]
        %v3468 = vld [vmem:[%s3462 + $0x28] sm:$0xff]
        %v3469 = vld [vmem:[%s3462 + $0x30] sm:$0xff]
        %v3470 = vld [vmem:[%s3462 + $0x38] sm:$0xff]
        %v3471 = vld [vmem:[%s3462 + $0x40] sm:$0xff]
        %v3472 = vld [vmem:[%s3462 + $0x48] sm:$0xff]
        %v3473 = vld [vmem:[%s3462 + $0x50] sm:$0xff]
        %v3474 = vld [vmem:[%s3462 + $0x58] sm:$0xff]
        %v3475 = vld [vmem:[%s3462 + $0x60] sm:$0xff]
        %v3476 = vld [vmem:[%s3462 + $0x68] sm:$0xff]
        %v3477 = vld [vmem:[%s3462 + $0x70] sm:$0xff]
        %v3478 = vld [vmem:[%s3462 + $0x78] sm:$0xff]
        %3480 = vset.pattern.permute.xlu0 0
        %3481 = vperm.xlu0 %3480, %v3463
        %v3482 = vpop.permute.xlu0 %3481
        %3485 = vset.pattern.permute.xlu0 0
        %3486 = vperm.xlu0 %3485, %v3464
        %v3487 = vpop.permute.xlu0 %3486
        %3490 = vset.pattern.permute.xlu0 0
        %3491 = vperm.xlu0 %3490, %v3465
        %v3492 = vpop.permute.xlu0 %3491
        %3495 = vset.pattern.permute.xlu0 0
        %3496 = vperm.xlu0 %3495, %v3466
        %v3497 = vpop.permute.xlu0 %3496
        %3500 = vset.pattern.permute.xlu0 0
        %3501 = vperm.xlu0 %3500, %v3467
        %v3502 = vpop.permute.xlu0 %3501
        %3505 = vset.pattern.permute.xlu0 0
        %3506 = vperm.xlu0 %3505, %v3468
        %v3507 = vpop.permute.xlu0 %3506
        %3510 = vset.pattern.permute.xlu0 0
        %3511 = vperm.xlu0 %3510, %v3469
        %v3512 = vpop.permute.xlu0 %3511
        %3515 = vset.pattern.permute.xlu0 0
        %3516 = vperm.xlu0 %3515, %v3470
        %v3517 = vpop.permute.xlu0 %3516
        %3520 = vset.pattern.permute.xlu0 0
        %3521 = vperm.xlu0 %3520, %v3471
        %v3522 = vpop.permute.xlu0 %3521
        %3525 = vset.pattern.permute.xlu0 0
        %3526 = vperm.xlu0 %3525, %v3472
        %v3527 = vpop.permute.xlu0 %3526
        %3530 = vset.pattern.permute.xlu0 0
        %3531 = vperm.xlu0 %3530, %v3473
        %v3532 = vpop.permute.xlu0 %3531
        %3535 = vset.pattern.permute.xlu0 0
        %3536 = vperm.xlu0 %3535, %v3474
        %v3537 = vpop.permute.xlu0 %3536
        %3540 = vset.pattern.permute.xlu0 0
        %3541 = vperm.xlu0 %3540, %v3475
        %v3542 = vpop.permute.xlu0 %3541
        %3545 = vset.pattern.permute.xlu0 0
        %3546 = vperm.xlu0 %3545, %v3476
        %v3547 = vpop.permute.xlu0 %3546
        %3550 = vset.pattern.permute.xlu0 0
        %3551 = vperm.xlu0 %3550, %v3477
        %v3552 = vpop.permute.xlu0 %3551
        %3555 = vset.pattern.permute.xlu0 0
        %3556 = vperm.xlu0 %3555, %v3478
        %v3557 = vpop.permute.xlu0 %3556
        %v3559 = vmul.f32 %v712, %v3482
        %v3560 = vmul.f32 %v711, %v3487
        %v3561 = vmul.f32 %v710, %v3492
        %v3562 = vmul.f32 %v709, %v3497
        %v3563 = vmul.f32 %v708, %v3502
        %v3564 = vmul.f32 %v707, %v3507
        %v3565 = vmul.f32 %v706, %v3512
        %v3566 = vmul.f32 %v705, %v3517
        %v3567 = vmul.f32 %v704, %v3522
        %v3568 = vmul.f32 %v703, %v3527
        %v3569 = vmul.f32 %v702, %v3532
        %v3570 = vmul.f32 %v701, %v3537
        %v3571 = vmul.f32 %v700, %v3542
        %v3572 = vmul.f32 %v699, %v3547
        %v3573 = vmul.f32 %v698, %v3552
        %v3574 = vmul.f32 %v697, %v3557
        %v3575 = vpack.c.bf16 %v3560, %v3559
        %v3576 = vpack.c.bf16 %v3562, %v3561
        %v3577 = vpack.c.bf16 %v3564, %v3563
        %v3578 = vpack.c.bf16 %v3566, %v3565
        %v3579 = vpack.c.bf16 %v3568, %v3567
        %v3580 = vpack.c.bf16 %v3570, %v3569
        %v3581 = vpack.c.bf16 %v3572, %v3571
        %v3582 = vpack.c.bf16 %v3574, %v3573
        %s3583 = scalar_lea.vmem %s1, 288
        %v3584 = vld [vmem:[%s3583] sm:$0xf]
        %v3585 = vld [vmem:[%s3583 + $0x4] sm:$0xf]
        %v3586 = vld [vmem:[%s3583 + $0x8] sm:$0xf]
        %v3587 = vld [vmem:[%s3583 + $0xc] sm:$0xf]
        %v3588 = vld [vmem:[%s3583 + $0x10] sm:$0xf]
        %v3589 = vld [vmem:[%s3583 + $0x14] sm:$0xf]
        %v3590 = vld [vmem:[%s3583 + $0x18] sm:$0xf]
        %v3591 = vld [vmem:[%s3583 + $0x1c] sm:$0xf]
        %v3600 = vunpack.c.l.b16 %v3584
        %v3601 = vunpack.c.l.b16 %v3585
        %v3602 = vunpack.c.l.b16 %v3586
        %v3603 = vunpack.c.l.b16 %v3587
        %v3604 = vunpack.c.l.b16 %v3588
        %v3605 = vunpack.c.l.b16 %v3589
        %v3606 = vunpack.c.l.b16 %v3590
        %v3607 = vunpack.c.l.b16 %v3591
        %v3608 = vpack.c.b16 %v3601, %v3600
        %v3609 = vpack.c.b16 %v3603, %v3602
        %v3610 = vpack.c.b16 %v3605, %v3604
        %v3611 = vpack.c.b16 %v3607, %v3606
        %v3617 = vsel %vm526, %v3575, 0
        %v3620 = vsel %vm526, %v3576, 0
        %v3623 = vsel %vm526, %v3577, 0
        %v3626 = vsel %vm526, %v3578, 0
        %v3629 = vsel %vm526, %v3579, 0
        %v3632 = vsel %vm526, %v3580, 0
        %v3635 = vsel %vm526, %v3581, 0
        %v3638 = vsel %vm526, %v3582, 0
        %3640 = vmatprep.subr.bf16.mxu0 0
        %3641 = vmatpush1.bf16.msra.mxu0 0
        %3642 = vmatprep.subr.bf16.mxu0 0
        %3643 = vmatpush1.bf16.msra.mxu0 0
        %3644 = vmatprep.subr.bf16.mxu0 0
        %3645 = vmatpush1.bf16.msra.mxu0 0
        %3646 = vmatprep.subr.bf16.mxu0 0
        %3647 = vmatpush1.bf16.msra.mxu0 0
        %3648 = vmatprep.subr.bf16.mxu0 0
        %3649 = vmatpush1.bf16.msra.mxu0 %v3611
        %3650 = vmatprep.subr.bf16.mxu0 0
        %3651 = vmatpush1.bf16.msra.mxu0 %v3610
        %3652 = vmatprep.subr.bf16.mxu0 0
        %3653 = vmatpush1.bf16.msra.mxu0 %v3609
        %3654 = vmatprep.subr.bf16.mxu0 0
        %3655 = vmatpush1.bf16.msra.mxu0 %v3608
        %3656 = vmatprep.subr.bf16.mxu0 0
        %3657 = vmatpush2.bf16.msra.mxu0 0
        %3658 = vmatprep.subr.bf16.mxu0 0
        %3659 = vmatpush2.bf16.msra.mxu0 0
        %3660 = vmatprep.subr.bf16.mxu0 0
        %3661 = vmatpush2.bf16.msra.mxu0 0
        %3662 = vmatprep.subr.bf16.mxu0 0
        %3663 = vmatpush2.bf16.msra.mxu0 0
        %3664 = vmatprep.subr.bf16.mxu0 0
        %3665 = vmatpush2.bf16.msra.mxu0 0
        %3666 = vmatprep.subr.bf16.mxu0 0
        %3667 = vmatpush2.bf16.msra.mxu0 0
        %3668 = vmatprep.subr.bf16.mxu0 0
        %3669 = vmatpush2.bf16.msra.mxu0 0
        %3670 = vmatprep.subr.bf16.mxu0 0
        %3671 = vmatpush2.bf16.msra.mxu0 0
        %3672 = vmatprep.mubr.bf16.mxu0 0
        %3673 = vmatmul.mubr.bf16.gmra.mxu0 %v3617
        %v3674 = vpop.f32.mrf.mxu0
        %v3675 = vadd.f32 0.0, %v3674
        %v3676 = vpop.f32.mrf.mxu0
        %v3677 = vpop.f32.mrf.mxu0
        %v3678 = vadd.f32 0.0, %v3677
        %v3679 = vpop.f32.mrf.mxu0
        %3680 = vmatprep.mubr.bf16.mxu0 0
        %3681 = vmatmul.mubr.bf16.gmra.mxu0 %v3620
        %v3682 = vpop.f32.mrf.mxu0
        %v3683 = vadd.f32 0.0, %v3682
        %v3684 = vpop.f32.mrf.mxu0
        %v3685 = vpop.f32.mrf.mxu0
        %v3686 = vadd.f32 0.0, %v3685
        %v3687 = vpop.f32.mrf.mxu0
        %3688 = vmatprep.mubr.bf16.mxu0 0
        %3689 = vmatmul.mubr.bf16.gmra.mxu0 %v3623
        %v3690 = vpop.f32.mrf.mxu0
        %v3691 = vadd.f32 0.0, %v3690
        %v3692 = vpop.f32.mrf.mxu0
        %v3693 = vpop.f32.mrf.mxu0
        %v3694 = vadd.f32 0.0, %v3693
        %v3695 = vpop.f32.mrf.mxu0
        %3696 = vmatprep.mubr.bf16.mxu0 0
        %3697 = vmatmul.mubr.bf16.gmra.mxu0 %v3626
        %v3698 = vpop.f32.mrf.mxu0
        %v3699 = vadd.f32 0.0, %v3698
        %v3700 = vpop.f32.mrf.mxu0
        %v3701 = vpop.f32.mrf.mxu0
        %v3702 = vadd.f32 0.0, %v3701
        %v3703 = vpop.f32.mrf.mxu0
        %3704 = vmatprep.mubr.bf16.mxu0 0
        %3705 = vmatmul.mubr.bf16.gmra.mxu0 %v3629
        %v3706 = vpop.f32.mrf.mxu0
        %v3707 = vadd.f32 0.0, %v3706
        %v3708 = vpop.f32.mrf.mxu0
        %v3709 = vpop.f32.mrf.mxu0
        %v3710 = vadd.f32 0.0, %v3709
        %v3711 = vpop.f32.mrf.mxu0
        %3712 = vmatprep.mubr.bf16.mxu0 0
        %3713 = vmatmul.mubr.bf16.gmra.mxu0 %v3632
        %v3714 = vpop.f32.mrf.mxu0
        %v3715 = vadd.f32 0.0, %v3714
        %v3716 = vpop.f32.mrf.mxu0
        %v3717 = vpop.f32.mrf.mxu0
        %v3718 = vadd.f32 0.0, %v3717
        %v3719 = vpop.f32.mrf.mxu0
        %3720 = vmatprep.mubr.bf16.mxu0 0
        %3721 = vmatmul.mubr.bf16.gmra.mxu0 %v3635
        %v3722 = vpop.f32.mrf.mxu0
        %v3723 = vadd.f32 0.0, %v3722
        %v3724 = vpop.f32.mrf.mxu0
        %v3725 = vpop.f32.mrf.mxu0
        %v3726 = vadd.f32 0.0, %v3725
        %v3727 = vpop.f32.mrf.mxu0
        %3728 = vmatprep.mubr.bf16.mxu0 0
        %3729 = vmatmul.mubr.bf16.gmra.mxu0 %v3638
        %v3730 = vpop.f32.mrf.mxu0
        %v3731 = vadd.f32 0.0, %v3730
        %v3732 = vpop.f32.mrf.mxu0
        %v3733 = vpop.f32.mrf.mxu0
        %v3734 = vadd.f32 0.0, %v3733
        %v3735 = vpop.f32.mrf.mxu0
        %3736 = vdwg.mxu0
        %v3737 = vadd.f32 %v3446, %v3675
        %v3738 = vadd.f32 %v3447, %v3678
        %v3739 = vadd.f32 %v3448, %v3683
        %v3740 = vadd.f32 %v3449, %v3686
        %v3741 = vadd.f32 %v3450, %v3691
        %v3742 = vadd.f32 %v3451, %v3694
        %v3743 = vadd.f32 %v3452, %v3699
        %v3744 = vadd.f32 %v3453, %v3702
        %v3745 = vadd.f32 %v3454, %v3707
        %v3746 = vadd.f32 %v3455, %v3710
        %v3747 = vadd.f32 %v3456, %v3715
        %v3748 = vadd.f32 %v3457, %v3718
        %v3749 = vadd.f32 %v3458, %v3723
        %v3750 = vadd.f32 %v3459, %v3726
        %v3751 = vadd.f32 %v3460, %v3731
        %v3752 = vadd.f32 %v3461, %v3734
        %3753 = vst [vmem:[%s217] sm:$0xff] %v3737
        %3754 = vst [vmem:[%s217 + $0x8] sm:$0xff] %v3738
        %3755 = vst [vmem:[%s217 + $0x10] sm:$0xff] %v3739
        %3756 = vst [vmem:[%s217 + $0x18] sm:$0xff] %v3740
        %3757 = vst [vmem:[%s217 + $0x20] sm:$0xff] %v3741
        %3758 = vst [vmem:[%s217 + $0x28] sm:$0xff] %v3742
        %3759 = vst [vmem:[%s217 + $0x30] sm:$0xff] %v3743
        %3760 = vst [vmem:[%s217 + $0x38] sm:$0xff] %v3744
        %3761 = vst [vmem:[%s217 + $0x40] sm:$0xff] %v3745
        %3762 = vst [vmem:[%s217 + $0x48] sm:$0xff] %v3746
        %3763 = vst [vmem:[%s217 + $0x50] sm:$0xff] %v3747
        %3764 = vst [vmem:[%s217 + $0x58] sm:$0xff] %v3748
        %3765 = vst [vmem:[%s217 + $0x60] sm:$0xff] %v3749
        %3766 = vst [vmem:[%s217 + $0x68] sm:$0xff] %v3750
        %3767 = vst [vmem:[%s217 + $0x70] sm:$0xff] %v3751
        %3768 = vst [vmem:[%s217 + $0x78] sm:$0xff] %v3752
        %v3769 = vld [vmem:[%s217] sm:$0xff]
        %v3770 = vld [vmem:[%s217 + $0x8] sm:$0xff]
        %v3771 = vld [vmem:[%s217 + $0x10] sm:$0xff]
        %v3772 = vld [vmem:[%s217 + $0x18] sm:$0xff]
        %v3773 = vld [vmem:[%s217 + $0x20] sm:$0xff]
        %v3774 = vld [vmem:[%s217 + $0x28] sm:$0xff]
        %v3775 = vld [vmem:[%s217 + $0x30] sm:$0xff]
        %v3776 = vld [vmem:[%s217 + $0x38] sm:$0xff]
        %v3777 = vld [vmem:[%s217 + $0x40] sm:$0xff]
        %v3778 = vld [vmem:[%s217 + $0x48] sm:$0xff]
        %v3779 = vld [vmem:[%s217 + $0x50] sm:$0xff]
        %v3780 = vld [vmem:[%s217 + $0x58] sm:$0xff]
        %v3781 = vld [vmem:[%s217 + $0x60] sm:$0xff]
        %v3782 = vld [vmem:[%s217 + $0x68] sm:$0xff]
        %v3783 = vld [vmem:[%s217 + $0x70] sm:$0xff]
        %v3784 = vld [vmem:[%s217 + $0x78] sm:$0xff]
        %s3785 = scalar_lea.vmem %s2, 1280
        %v3786 = vld [vmem:[%s3785] sm:$0xff]
        %v3787 = vld [vmem:[%s3785 + $0x8] sm:$0xff]
        %v3788 = vld [vmem:[%s3785 + $0x10] sm:$0xff]
        %v3789 = vld [vmem:[%s3785 + $0x18] sm:$0xff]
        %v3790 = vld [vmem:[%s3785 + $0x20] sm:$0xff]
        %v3791 = vld [vmem:[%s3785 + $0x28] sm:$0xff]
        %v3792 = vld [vmem:[%s3785 + $0x30] sm:$0xff]
        %v3793 = vld [vmem:[%s3785 + $0x38] sm:$0xff]
        %v3794 = vld [vmem:[%s3785 + $0x40] sm:$0xff]
        %v3795 = vld [vmem:[%s3785 + $0x48] sm:$0xff]
        %v3796 = vld [vmem:[%s3785 + $0x50] sm:$0xff]
        %v3797 = vld [vmem:[%s3785 + $0x58] sm:$0xff]
        %v3798 = vld [vmem:[%s3785 + $0x60] sm:$0xff]
        %v3799 = vld [vmem:[%s3785 + $0x68] sm:$0xff]
        %v3800 = vld [vmem:[%s3785 + $0x70] sm:$0xff]
        %v3801 = vld [vmem:[%s3785 + $0x78] sm:$0xff]
        %3803 = vset.pattern.permute.xlu0 0
        %3804 = vperm.xlu0 %3803, %v3786
        %v3805 = vpop.permute.xlu0 %3804
        %3808 = vset.pattern.permute.xlu0 0
        %3809 = vperm.xlu0 %3808, %v3787
        %v3810 = vpop.permute.xlu0 %3809
        %3813 = vset.pattern.permute.xlu0 0
        %3814 = vperm.xlu0 %3813, %v3788
        %v3815 = vpop.permute.xlu0 %3814
        %3818 = vset.pattern.permute.xlu0 0
        %3819 = vperm.xlu0 %3818, %v3789
        %v3820 = vpop.permute.xlu0 %3819
        %3823 = vset.pattern.permute.xlu0 0
        %3824 = vperm.xlu0 %3823, %v3790
        %v3825 = vpop.permute.xlu0 %3824
        %3828 = vset.pattern.permute.xlu0 0
        %3829 = vperm.xlu0 %3828, %v3791
        %v3830 = vpop.permute.xlu0 %3829
        %3833 = vset.pattern.permute.xlu0 0
        %3834 = vperm.xlu0 %3833, %v3792
        %v3835 = vpop.permute.xlu0 %3834
        %3838 = vset.pattern.permute.xlu0 0
        %3839 = vperm.xlu0 %3838, %v3793
        %v3840 = vpop.permute.xlu0 %3839
        %3843 = vset.pattern.permute.xlu0 0
        %3844 = vperm.xlu0 %3843, %v3794
        %v3845 = vpop.permute.xlu0 %3844
        %3848 = vset.pattern.permute.xlu0 0
        %3849 = vperm.xlu0 %3848, %v3795
        %v3850 = vpop.permute.xlu0 %3849
        %3853 = vset.pattern.permute.xlu0 0
        %3854 = vperm.xlu0 %3853, %v3796
        %v3855 = vpop.permute.xlu0 %3854
        %3858 = vset.pattern.permute.xlu0 0
        %3859 = vperm.xlu0 %3858, %v3797
        %v3860 = vpop.permute.xlu0 %3859
        %3863 = vset.pattern.permute.xlu0 0
        %3864 = vperm.xlu0 %3863, %v3798
        %v3865 = vpop.permute.xlu0 %3864
        %3868 = vset.pattern.permute.xlu0 0
        %3869 = vperm.xlu0 %3868, %v3799
        %v3870 = vpop.permute.xlu0 %3869
        %3873 = vset.pattern.permute.xlu0 0
        %3874 = vperm.xlu0 %3873, %v3800
        %v3875 = vpop.permute.xlu0 %3874
        %3878 = vset.pattern.permute.xlu0 0
        %3879 = vperm.xlu0 %3878, %v3801
        %v3880 = vpop.permute.xlu0 %3879
        %v3882 = vmul.f32 %v1068, %v3805
        %v3883 = vmul.f32 %v1067, %v3810
        %v3884 = vmul.f32 %v1066, %v3815
        %v3885 = vmul.f32 %v1065, %v3820
        %v3886 = vmul.f32 %v1064, %v3825
        %v3887 = vmul.f32 %v1063, %v3830
        %v3888 = vmul.f32 %v1062, %v3835
        %v3889 = vmul.f32 %v1061, %v3840
        %v3890 = vmul.f32 %v1060, %v3845
        %v3891 = vmul.f32 %v1059, %v3850
        %v3892 = vmul.f32 %v1058, %v3855
        %v3893 = vmul.f32 %v1057, %v3860
        %v3894 = vmul.f32 %v1056, %v3865
        %v3895 = vmul.f32 %v1055, %v3870
        %v3896 = vmul.f32 %v1054, %v3875
        %v3897 = vmul.f32 %v1053, %v3880
        %v3898 = vpack.c.bf16 %v3883, %v3882
        %v3899 = vpack.c.bf16 %v3885, %v3884
        %v3900 = vpack.c.bf16 %v3887, %v3886
        %v3901 = vpack.c.bf16 %v3889, %v3888
        %v3902 = vpack.c.bf16 %v3891, %v3890
        %v3903 = vpack.c.bf16 %v3893, %v3892
        %v3904 = vpack.c.bf16 %v3895, %v3894
        %v3905 = vpack.c.bf16 %v3897, %v3896
        %s3906 = scalar_lea.vmem %s1, 320
        %v3907 = vld [vmem:[%s3906] sm:$0xf]
        %v3908 = vld [vmem:[%s3906 + $0x4] sm:$0xf]
        %v3909 = vld [vmem:[%s3906 + $0x8] sm:$0xf]
        %v3910 = vld [vmem:[%s3906 + $0xc] sm:$0xf]
        %v3911 = vld [vmem:[%s3906 + $0x10] sm:$0xf]
        %v3912 = vld [vmem:[%s3906 + $0x14] sm:$0xf]
        %v3913 = vld [vmem:[%s3906 + $0x18] sm:$0xf]
        %v3914 = vld [vmem:[%s3906 + $0x1c] sm:$0xf]
        %v3923 = vunpack.c.l.b16 %v3907
        %v3924 = vunpack.c.l.b16 %v3908
        %v3925 = vunpack.c.l.b16 %v3909
        %v3926 = vunpack.c.l.b16 %v3910
        %v3927 = vunpack.c.l.b16 %v3911
        %v3928 = vunpack.c.l.b16 %v3912
        %v3929 = vunpack.c.l.b16 %v3913
        %v3930 = vunpack.c.l.b16 %v3914
        %v3931 = vpack.c.b16 %v3924, %v3923
        %v3932 = vpack.c.b16 %v3926, %v3925
        %v3933 = vpack.c.b16 %v3928, %v3927
        %v3934 = vpack.c.b16 %v3930, %v3929
        %v3940 = vsel %vm526, %v3898, 0
        %v3943 = vsel %vm526, %v3899, 0
        %v3946 = vsel %vm526, %v3900, 0
        %v3949 = vsel %vm526, %v3901, 0
        %v3952 = vsel %vm526, %v3902, 0
        %v3955 = vsel %vm526, %v3903, 0
        %v3958 = vsel %vm526, %v3904, 0
        %v3961 = vsel %vm526, %v3905, 0
        %3963 = vmatprep.subr.bf16.mxu0 0
        %3964 = vmatpush1.bf16.msra.mxu0 0
        %3965 = vmatprep.subr.bf16.mxu0 0
        %3966 = vmatpush1.bf16.msra.mxu0 0
        %3967 = vmatprep.subr.bf16.mxu0 0
        %3968 = vmatpush1.bf16.msra.mxu0 0
        %3969 = vmatprep.subr.bf16.mxu0 0
        %3970 = vmatpush1.bf16.msra.mxu0 0
        %3971 = vmatprep.subr.bf16.mxu0 0
        %3972 = vmatpush1.bf16.msra.mxu0 %v3934
        %3973 = vmatprep.subr.bf16.mxu0 0
        %3974 = vmatpush1.bf16.msra.mxu0 %v3933
        %3975 = vmatprep.subr.bf16.mxu0 0
        %3976 = vmatpush1.bf16.msra.mxu0 %v3932
        %3977 = vmatprep.subr.bf16.mxu0 0
        %3978 = vmatpush1.bf16.msra.mxu0 %v3931
        %3979 = vmatprep.subr.bf16.mxu0 0
        %3980 = vmatpush2.bf16.msra.mxu0 0
        %3981 = vmatprep.subr.bf16.mxu0 0
        %3982 = vmatpush2.bf16.msra.mxu0 0
        %3983 = vmatprep.subr.bf16.mxu0 0
        %3984 = vmatpush2.bf16.msra.mxu0 0
        %3985 = vmatprep.subr.bf16.mxu0 0
        %3986 = vmatpush2.bf16.msra.mxu0 0
        %3987 = vmatprep.subr.bf16.mxu0 0
        %3988 = vmatpush2.bf16.msra.mxu0 0
        %3989 = vmatprep.subr.bf16.mxu0 0
        %3990 = vmatpush2.bf16.msra.mxu0 0
        %3991 = vmatprep.subr.bf16.mxu0 0
        %3992 = vmatpush2.bf16.msra.mxu0 0
        %3993 = vmatprep.subr.bf16.mxu0 0
        %3994 = vmatpush2.bf16.msra.mxu0 0
        %3995 = vmatprep.mubr.bf16.mxu0 0
        %3996 = vmatmul.mubr.bf16.gmra.mxu0 %v3940
        %v3997 = vpop.f32.mrf.mxu0
        %v3998 = vadd.f32 0.0, %v3997
        %v3999 = vpop.f32.mrf.mxu0
        %v4000 = vpop.f32.mrf.mxu0
        %v4001 = vadd.f32 0.0, %v4000
        %v4002 = vpop.f32.mrf.mxu0
        %4003 = vmatprep.mubr.bf16.mxu0 0
        %4004 = vmatmul.mubr.bf16.gmra.mxu0 %v3943
        %v4005 = vpop.f32.mrf.mxu0
        %v4006 = vadd.f32 0.0, %v4005
        %v4007 = vpop.f32.mrf.mxu0
        %v4008 = vpop.f32.mrf.mxu0
        %v4009 = vadd.f32 0.0, %v4008
        %v4010 = vpop.f32.mrf.mxu0
        %4011 = vmatprep.mubr.bf16.mxu0 0
        %4012 = vmatmul.mubr.bf16.gmra.mxu0 %v3946
        %v4013 = vpop.f32.mrf.mxu0
        %v4014 = vadd.f32 0.0, %v4013
        %v4015 = vpop.f32.mrf.mxu0
        %v4016 = vpop.f32.mrf.mxu0
        %v4017 = vadd.f32 0.0, %v4016
        %v4018 = vpop.f32.mrf.mxu0
        %4019 = vmatprep.mubr.bf16.mxu0 0
        %4020 = vmatmul.mubr.bf16.gmra.mxu0 %v3949
        %v4021 = vpop.f32.mrf.mxu0
        %v4022 = vadd.f32 0.0, %v4021
        %v4023 = vpop.f32.mrf.mxu0
        %v4024 = vpop.f32.mrf.mxu0
        %v4025 = vadd.f32 0.0, %v4024
        %v4026 = vpop.f32.mrf.mxu0
        %4027 = vmatprep.mubr.bf16.mxu0 0
        %4028 = vmatmul.mubr.bf16.gmra.mxu0 %v3952
        %v4029 = vpop.f32.mrf.mxu0
        %v4030 = vadd.f32 0.0, %v4029
        %v4031 = vpop.f32.mrf.mxu0
        %v4032 = vpop.f32.mrf.mxu0
        %v4033 = vadd.f32 0.0, %v4032
        %v4034 = vpop.f32.mrf.mxu0
        %4035 = vmatprep.mubr.bf16.mxu0 0
        %4036 = vmatmul.mubr.bf16.gmra.mxu0 %v3955
        %v4037 = vpop.f32.mrf.mxu0
        %v4038 = vadd.f32 0.0, %v4037
        %v4039 = vpop.f32.mrf.mxu0
        %v4040 = vpop.f32.mrf.mxu0
        %v4041 = vadd.f32 0.0, %v4040
        %v4042 = vpop.f32.mrf.mxu0
        %4043 = vmatprep.mubr.bf16.mxu0 0
        %4044 = vmatmul.mubr.bf16.gmra.mxu0 %v3958
        %v4045 = vpop.f32.mrf.mxu0
        %v4046 = vadd.f32 0.0, %v4045
        %v4047 = vpop.f32.mrf.mxu0
        %v4048 = vpop.f32.mrf.mxu0
        %v4049 = vadd.f32 0.0, %v4048
        %v4050 = vpop.f32.mrf.mxu0
        %4051 = vmatprep.mubr.bf16.mxu0 0
        %4052 = vmatmul.mubr.bf16.gmra.mxu0 %v3961
        %v4053 = vpop.f32.mrf.mxu0
        %v4054 = vadd.f32 0.0, %v4053
        %v4055 = vpop.f32.mrf.mxu0
        %v4056 = vpop.f32.mrf.mxu0
        %v4057 = vadd.f32 0.0, %v4056
        %v4058 = vpop.f32.mrf.mxu0
        %4059 = vdwg.mxu0
        %v4060 = vadd.f32 %v3769, %v3998
        %v4061 = vadd.f32 %v3770, %v4001
        %v4062 = vadd.f32 %v3771, %v4006
        %v4063 = vadd.f32 %v3772, %v4009
        %v4064 = vadd.f32 %v3773, %v4014
        %v4065 = vadd.f32 %v3774, %v4017
        %v4066 = vadd.f32 %v3775, %v4022
        %v4067 = vadd.f32 %v3776, %v4025
        %v4068 = vadd.f32 %v3777, %v4030
        %v4069 = vadd.f32 %v3778, %v4033
        %v4070 = vadd.f32 %v3779, %v4038
        %v4071 = vadd.f32 %v3780, %v4041
        %v4072 = vadd.f32 %v3781, %v4046
        %v4073 = vadd.f32 %v3782, %v4049
        %v4074 = vadd.f32 %v3783, %v4054
        %v4075 = vadd.f32 %v3784, %v4057
        %4076 = vst [vmem:[%s217] sm:$0xff] %v4060
        %4077 = vst [vmem:[%s217 + $0x8] sm:$0xff] %v4061
        %4078 = vst [vmem:[%s217 + $0x10] sm:$0xff] %v4062
        %4079 = vst [vmem:[%s217 + $0x18] sm:$0xff] %v4063
        %4080 = vst [vmem:[%s217 + $0x20] sm:$0xff] %v4064
        %4081 = vst [vmem:[%s217 + $0x28] sm:$0xff] %v4065
        %4082 = vst [vmem:[%s217 + $0x30] sm:$0xff] %v4066
        %4083 = vst [vmem:[%s217 + $0x38] sm:$0xff] %v4067
        %4084 = vst [vmem:[%s217 + $0x40] sm:$0xff] %v4068
        %4085 = vst [vmem:[%s217 + $0x48] sm:$0xff] %v4069
        %4086 = vst [vmem:[%s217 + $0x50] sm:$0xff] %v4070
        %4087 = vst [vmem:[%s217 + $0x58] sm:$0xff] %v4071
        %4088 = vst [vmem:[%s217 + $0x60] sm:$0xff] %v4072
        %4089 = vst [vmem:[%s217 + $0x68] sm:$0xff] %v4073
        %4090 = vst [vmem:[%s217 + $0x70] sm:$0xff] %v4074
        %4091 = vst [vmem:[%s217 + $0x78] sm:$0xff] %v4075
        %v4092 = vld [vmem:[%s217] sm:$0xff]
        %v4093 = vld [vmem:[%s217 + $0x8] sm:$0xff]
        %v4094 = vld [vmem:[%s217 + $0x10] sm:$0xff]
        %v4095 = vld [vmem:[%s217 + $0x18] sm:$0xff]
        %v4096 = vld [vmem:[%s217 + $0x20] sm:$0xff]
        %v4097 = vld [vmem:[%s217 + $0x28] sm:$0xff]
        %v4098 = vld [vmem:[%s217 + $0x30] sm:$0xff]
        %v4099 = vld [vmem:[%s217 + $0x38] sm:$0xff]
        %v4100 = vld [vmem:[%s217 + $0x40] sm:$0xff]
        %v4101 = vld [vmem:[%s217 + $0x48] sm:$0xff]
        %v4102 = vld [vmem:[%s217 + $0x50] sm:$0xff]
        %v4103 = vld [vmem:[%s217 + $0x58] sm:$0xff]
        %v4104 = vld [vmem:[%s217 + $0x60] sm:$0xff]
        %v4105 = vld [vmem:[%s217 + $0x68] sm:$0xff]
        %v4106 = vld [vmem:[%s217 + $0x70] sm:$0xff]
        %v4107 = vld [vmem:[%s217 + $0x78] sm:$0xff]
        %s4108 = scalar_lea.vmem %s2, 1408
        %v4109 = vld [vmem:[%s4108] sm:$0xff]
        %v4110 = vld [vmem:[%s4108 + $0x8] sm:$0xff]
        %v4111 = vld [vmem:[%s4108 + $0x10] sm:$0xff]
        %v4112 = vld [vmem:[%s4108 + $0x18] sm:$0xff]
        %v4113 = vld [vmem:[%s4108 + $0x20] sm:$0xff]
        %v4114 = vld [vmem:[%s4108 + $0x28] sm:$0xff]
        %v4115 = vld [vmem:[%s4108 + $0x30] sm:$0xff]
        %v4116 = vld [vmem:[%s4108 + $0x38] sm:$0xff]
        %v4117 = vld [vmem:[%s4108 + $0x40] sm:$0xff]
        %v4118 = vld [vmem:[%s4108 + $0x48] sm:$0xff]
        %v4119 = vld [vmem:[%s4108 + $0x50] sm:$0xff]
        %v4120 = vld [vmem:[%s4108 + $0x58] sm:$0xff]
        %v4121 = vld [vmem:[%s4108 + $0x60] sm:$0xff]
        %v4122 = vld [vmem:[%s4108 + $0x68] sm:$0xff]
        %v4123 = vld [vmem:[%s4108 + $0x70] sm:$0xff]
        %v4124 = vld [vmem:[%s4108 + $0x78] sm:$0xff]
        %4126 = vset.pattern.permute.xlu0 0
        %4127 = vperm.xlu0 %4126, %v4109
        %v4128 = vpop.permute.xlu0 %4127
        %4131 = vset.pattern.permute.xlu0 0
        %4132 = vperm.xlu0 %4131, %v4110
        %v4133 = vpop.permute.xlu0 %4132
        %4136 = vset.pattern.permute.xlu0 0
        %4137 = vperm.xlu0 %4136, %v4111
        %v4138 = vpop.permute.xlu0 %4137
        %4141 = vset.pattern.permute.xlu0 0
        %4142 = vperm.xlu0 %4141, %v4112
        %v4143 = vpop.permute.xlu0 %4142
        %4146 = vset.pattern.permute.xlu0 0
        %4147 = vperm.xlu0 %4146, %v4113
        %v4148 = vpop.permute.xlu0 %4147
        %4151 = vset.pattern.permute.xlu0 0
        %4152 = vperm.xlu0 %4151, %v4114
        %v4153 = vpop.permute.xlu0 %4152
        %4156 = vset.pattern.permute.xlu0 0
        %4157 = vperm.xlu0 %4156, %v4115
        %v4158 = vpop.permute.xlu0 %4157
        %4161 = vset.pattern.permute.xlu0 0
        %4162 = vperm.xlu0 %4161, %v4116
        %v4163 = vpop.permute.xlu0 %4162
        %4166 = vset.pattern.permute.xlu0 0
        %4167 = vperm.xlu0 %4166, %v4117
        %v4168 = vpop.permute.xlu0 %4167
        %4171 = vset.pattern.permute.xlu0 0
        %4172 = vperm.xlu0 %4171, %v4118
        %v4173 = vpop.permute.xlu0 %4172
        %4176 = vset.pattern.permute.xlu0 0
        %4177 = vperm.xlu0 %4176, %v4119
        %v4178 = vpop.permute.xlu0 %4177
        %4181 = vset.pattern.permute.xlu0 0
        %4182 = vperm.xlu0 %4181, %v4120
        %v4183 = vpop.permute.xlu0 %4182
        %4186 = vset.pattern.permute.xlu0 0
        %4187 = vperm.xlu0 %4186, %v4121
        %v4188 = vpop.permute.xlu0 %4187
        %4191 = vset.pattern.permute.xlu0 0
        %4192 = vperm.xlu0 %4191, %v4122
        %v4193 = vpop.permute.xlu0 %4192
        %4196 = vset.pattern.permute.xlu0 0
        %4197 = vperm.xlu0 %4196, %v4123
        %v4198 = vpop.permute.xlu0 %4197
        %4201 = vset.pattern.permute.xlu0 0
        %4202 = vperm.xlu0 %4201, %v4124
        %v4203 = vpop.permute.xlu0 %4202
        %v4205 = vmul.f32 %v1424, %v4128
        %v4206 = vmul.f32 %v1423, %v4133
        %v4207 = vmul.f32 %v1422, %v4138
        %v4208 = vmul.f32 %v1421, %v4143
        %v4209 = vmul.f32 %v1420, %v4148
        %v4210 = vmul.f32 %v1419, %v4153
        %v4211 = vmul.f32 %v1418, %v4158
        %v4212 = vmul.f32 %v1417, %v4163
        %v4213 = vmul.f32 %v1416, %v4168
        %v4214 = vmul.f32 %v1415, %v4173
        %v4215 = vmul.f32 %v1414, %v4178
        %v4216 = vmul.f32 %v1413, %v4183
        %v4217 = vmul.f32 %v1412, %v4188
        %v4218 = vmul.f32 %v1411, %v4193
        %v4219 = vmul.f32 %v1410, %v4198
        %v4220 = vmul.f32 %v1409, %v4203
        %v4221 = vpack.c.bf16 %v4206, %v4205
        %v4222 = vpack.c.bf16 %v4208, %v4207
        %v4223 = vpack.c.bf16 %v4210, %v4209
        %v4224 = vpack.c.bf16 %v4212, %v4211
        %v4225 = vpack.c.bf16 %v4214, %v4213
        %v4226 = vpack.c.bf16 %v4216, %v4215
        %v4227 = vpack.c.bf16 %v4218, %v4217
        %v4228 = vpack.c.bf16 %v4220, %v4219
        %s4229 = scalar_lea.vmem %s1, 352
        %v4230 = vld [vmem:[%s4229] sm:$0xf]
        %v4231 = vld [vmem:[%s4229 + $0x4] sm:$0xf]
        %v4232 = vld [vmem:[%s4229 + $0x8] sm:$0xf]
        %v4233 = vld [vmem:[%s4229 + $0xc] sm:$0xf]
        %v4234 = vld [vmem:[%s4229 + $0x10] sm:$0xf]
        %v4235 = vld [vmem:[%s4229 + $0x14] sm:$0xf]
        %v4236 = vld [vmem:[%s4229 + $0x18] sm:$0xf]
        %v4237 = vld [vmem:[%s4229 + $0x1c] sm:$0xf]
        %v4246 = vunpack.c.l.b16 %v4230
        %v4247 = vunpack.c.l.b16 %v4231
        %v4248 = vunpack.c.l.b16 %v4232
        %v4249 = vunpack.c.l.b16 %v4233
        %v4250 = vunpack.c.l.b16 %v4234
        %v4251 = vunpack.c.l.b16 %v4235
        %v4252 = vunpack.c.l.b16 %v4236
        %v4253 = vunpack.c.l.b16 %v4237
        %v4254 = vpack.c.b16 %v4247, %v4246
        %v4255 = vpack.c.b16 %v4249, %v4248
        %v4256 = vpack.c.b16 %v4251, %v4250
        %v4257 = vpack.c.b16 %v4253, %v4252
        %v4263 = vsel %vm526, %v4221, 0
        %v4266 = vsel %vm526, %v4222, 0
        %v4269 = vsel %vm526, %v4223, 0
        %v4272 = vsel %vm526, %v4224, 0
        %v4275 = vsel %vm526, %v4225, 0
        %v4278 = vsel %vm526, %v4226, 0
        %v4281 = vsel %vm526, %v4227, 0
        %v4284 = vsel %vm526, %v4228, 0
        %4286 = vmatprep.subr.bf16.mxu0 0
        %4287 = vmatpush1.bf16.msra.mxu0 0
        %4288 = vmatprep.subr.bf16.mxu0 0
        %4289 = vmatpush1.bf16.msra.mxu0 0
        %4290 = vmatprep.subr.bf16.mxu0 0
        %4291 = vmatpush1.bf16.msra.mxu0 0
        %4292 = vmatprep.subr.bf16.mxu0 0
        %4293 = vmatpush1.bf16.msra.mxu0 0
        %4294 = vmatprep.subr.bf16.mxu0 0
        %4295 = vmatpush1.bf16.msra.mxu0 %v4257
        %4296 = vmatprep.subr.bf16.mxu0 0
        %4297 = vmatpush1.bf16.msra.mxu0 %v4256
        %4298 = vmatprep.subr.bf16.mxu0 0
        %4299 = vmatpush1.bf16.msra.mxu0 %v4255
        %4300 = vmatprep.subr.bf16.mxu0 0
        %4301 = vmatpush1.bf16.msra.mxu0 %v4254
        %4302 = vmatprep.subr.bf16.mxu0 0
        %4303 = vmatpush2.bf16.msra.mxu0 0
        %4304 = vmatprep.subr.bf16.mxu0 0
        %4305 = vmatpush2.bf16.msra.mxu0 0
        %4306 = vmatprep.subr.bf16.mxu0 0
        %4307 = vmatpush2.bf16.msra.mxu0 0
        %4308 = vmatprep.subr.bf16.mxu0 0
        %4309 = vmatpush2.bf16.msra.mxu0 0
        %4310 = vmatprep.subr.bf16.mxu0 0
        %4311 = vmatpush2.bf16.msra.mxu0 0
        %4312 = vmatprep.subr.bf16.mxu0 0
        %4313 = vmatpush2.bf16.msra.mxu0 0
        %4314 = vmatprep.subr.bf16.mxu0 0
        %4315 = vmatpush2.bf16.msra.mxu0 0
        %4316 = vmatprep.subr.bf16.mxu0 0
        %4317 = vmatpush2.bf16.msra.mxu0 0
        %4318 = vmatprep.mubr.bf16.mxu0 0
        %4319 = vmatmul.mubr.bf16.gmra.mxu0 %v4263
        %v4320 = vpop.f32.mrf.mxu0
        %v4321 = vadd.f32 0.0, %v4320
        %v4322 = vpop.f32.mrf.mxu0
        %v4323 = vpop.f32.mrf.mxu0
        %v4324 = vadd.f32 0.0, %v4323
        %v4325 = vpop.f32.mrf.mxu0
        %4326 = vmatprep.mubr.bf16.mxu0 0
        %4327 = vmatmul.mubr.bf16.gmra.mxu0 %v4266
        %v4328 = vpop.f32.mrf.mxu0
        %v4329 = vadd.f32 0.0, %v4328
        %v4330 = vpop.f32.mrf.mxu0
        %v4331 = vpop.f32.mrf.mxu0
        %v4332 = vadd.f32 0.0, %v4331
        %v4333 = vpop.f32.mrf.mxu0
        %4334 = vmatprep.mubr.bf16.mxu0 0
        %4335 = vmatmul.mubr.bf16.gmra.mxu0 %v4269
        %v4336 = vpop.f32.mrf.mxu0
        %v4337 = vadd.f32 0.0, %v4336
        %v4338 = vpop.f32.mrf.mxu0
        %v4339 = vpop.f32.mrf.mxu0
        %v4340 = vadd.f32 0.0, %v4339
        %v4341 = vpop.f32.mrf.mxu0
        %4342 = vmatprep.mubr.bf16.mxu0 0
        %4343 = vmatmul.mubr.bf16.gmra.mxu0 %v4272
        %v4344 = vpop.f32.mrf.mxu0
        %v4345 = vadd.f32 0.0, %v4344
        %v4346 = vpop.f32.mrf.mxu0
        %v4347 = vpop.f32.mrf.mxu0
        %v4348 = vadd.f32 0.0, %v4347
        %v4349 = vpop.f32.mrf.mxu0
        %4350 = vmatprep.mubr.bf16.mxu0 0
        %4351 = vmatmul.mubr.bf16.gmra.mxu0 %v4275
        %v4352 = vpop.f32.mrf.mxu0
        %v4353 = vadd.f32 0.0, %v4352
        %v4354 = vpop.f32.mrf.mxu0
        %v4355 = vpop.f32.mrf.mxu0
        %v4356 = vadd.f32 0.0, %v4355
        %v4357 = vpop.f32.mrf.mxu0
        %4358 = vmatprep.mubr.bf16.mxu0 0
        %4359 = vmatmul.mubr.bf16.gmra.mxu0 %v4278
        %v4360 = vpop.f32.mrf.mxu0
        %v4361 = vadd.f32 0.0, %v4360
        %v4362 = vpop.f32.mrf.mxu0
        %v4363 = vpop.f32.mrf.mxu0
        %v4364 = vadd.f32 0.0, %v4363
        %v4365 = vpop.f32.mrf.mxu0
        %4366 = vmatprep.mubr.bf16.mxu0 0
        %4367 = vmatmul.mubr.bf16.gmra.mxu0 %v4281
        %v4368 = vpop.f32.mrf.mxu0
        %v4369 = vadd.f32 0.0, %v4368
        %v4370 = vpop.f32.mrf.mxu0
        %v4371 = vpop.f32.mrf.mxu0
        %v4372 = vadd.f32 0.0, %v4371
        %v4373 = vpop.f32.mrf.mxu0
        %4374 = vmatprep.mubr.bf16.mxu0 0
        %4375 = vmatmul.mubr.bf16.gmra.mxu0 %v4284
        %v4376 = vpop.f32.mrf.mxu0
        %v4377 = vadd.f32 0.0, %v4376
        %v4378 = vpop.f32.mrf.mxu0
        %v4379 = vpop.f32.mrf.mxu0
        %v4380 = vadd.f32 0.0, %v4379
        %v4381 = vpop.f32.mrf.mxu0
        %4382 = vdwg.mxu0
        %v4383 = vadd.f32 %v4092, %v4321
        %v4384 = vadd.f32 %v4093, %v4324
        %v4385 = vadd.f32 %v4094, %v4329
        %v4386 = vadd.f32 %v4095, %v4332
        %v4387 = vadd.f32 %v4096, %v4337
        %v4388 = vadd.f32 %v4097, %v4340
        %v4389 = vadd.f32 %v4098, %v4345
        %v4390 = vadd.f32 %v4099, %v4348
        %v4391 = vadd.f32 %v4100, %v4353
        %v4392 = vadd.f32 %v4101, %v4356
        %v4393 = vadd.f32 %v4102, %v4361
        %v4394 = vadd.f32 %v4103, %v4364
        %v4395 = vadd.f32 %v4104, %v4369
        %v4396 = vadd.f32 %v4105, %v4372
        %v4397 = vadd.f32 %v4106, %v4377
        %v4398 = vadd.f32 %v4107, %v4380
        %4399 = vst [vmem:[%s217] sm:$0xff] %v4383
        %4400 = vst [vmem:[%s217 + $0x8] sm:$0xff] %v4384
        %4401 = vst [vmem:[%s217 + $0x10] sm:$0xff] %v4385
        %4402 = vst [vmem:[%s217 + $0x18] sm:$0xff] %v4386
        %4403 = vst [vmem:[%s217 + $0x20] sm:$0xff] %v4387
        %4404 = vst [vmem:[%s217 + $0x28] sm:$0xff] %v4388
        %4405 = vst [vmem:[%s217 + $0x30] sm:$0xff] %v4389
        %4406 = vst [vmem:[%s217 + $0x38] sm:$0xff] %v4390
        %4407 = vst [vmem:[%s217 + $0x40] sm:$0xff] %v4391
        %4408 = vst [vmem:[%s217 + $0x48] sm:$0xff] %v4392
        %4409 = vst [vmem:[%s217 + $0x50] sm:$0xff] %v4393
        %4410 = vst [vmem:[%s217 + $0x58] sm:$0xff] %v4394
        %4411 = vst [vmem:[%s217 + $0x60] sm:$0xff] %v4395
        %4412 = vst [vmem:[%s217 + $0x68] sm:$0xff] %v4396
        %4413 = vst [vmem:[%s217 + $0x70] sm:$0xff] %v4397
        %4414 = vst [vmem:[%s217 + $0x78] sm:$0xff] %v4398
        %v4415 = vld [vmem:[%s217] sm:$0xff]
        %v4416 = vld [vmem:[%s217 + $0x8] sm:$0xff]
        %v4417 = vld [vmem:[%s217 + $0x10] sm:$0xff]
        %v4418 = vld [vmem:[%s217 + $0x18] sm:$0xff]
        %v4419 = vld [vmem:[%s217 + $0x20] sm:$0xff]
        %v4420 = vld [vmem:[%s217 + $0x28] sm:$0xff]
        %v4421 = vld [vmem:[%s217 + $0x30] sm:$0xff]
        %v4422 = vld [vmem:[%s217 + $0x38] sm:$0xff]
        %v4423 = vld [vmem:[%s217 + $0x40] sm:$0xff]
        %v4424 = vld [vmem:[%s217 + $0x48] sm:$0xff]
        %v4425 = vld [vmem:[%s217 + $0x50] sm:$0xff]
        %v4426 = vld [vmem:[%s217 + $0x58] sm:$0xff]
        %v4427 = vld [vmem:[%s217 + $0x60] sm:$0xff]
        %v4428 = vld [vmem:[%s217 + $0x68] sm:$0xff]
        %v4429 = vld [vmem:[%s217 + $0x70] sm:$0xff]
        %v4430 = vld [vmem:[%s217 + $0x78] sm:$0xff]
        %s4431 = scalar_lea.vmem %s2, 1536
        %v4432 = vld [vmem:[%s4431] sm:$0xff]
        %v4433 = vld [vmem:[%s4431 + $0x8] sm:$0xff]
        %v4434 = vld [vmem:[%s4431 + $0x10] sm:$0xff]
        %v4435 = vld [vmem:[%s4431 + $0x18] sm:$0xff]
        %v4436 = vld [vmem:[%s4431 + $0x20] sm:$0xff]
        %v4437 = vld [vmem:[%s4431 + $0x28] sm:$0xff]
        %v4438 = vld [vmem:[%s4431 + $0x30] sm:$0xff]
        %v4439 = vld [vmem:[%s4431 + $0x38] sm:$0xff]
        %v4440 = vld [vmem:[%s4431 + $0x40] sm:$0xff]
        %v4441 = vld [vmem:[%s4431 + $0x48] sm:$0xff]
        %v4442 = vld [vmem:[%s4431 + $0x50] sm:$0xff]
        %v4443 = vld [vmem:[%s4431 + $0x58] sm:$0xff]
        %v4444 = vld [vmem:[%s4431 + $0x60] sm:$0xff]
        %v4445 = vld [vmem:[%s4431 + $0x68] sm:$0xff]
        %v4446 = vld [vmem:[%s4431 + $0x70] sm:$0xff]
        %v4447 = vld [vmem:[%s4431 + $0x78] sm:$0xff]
        %4449 = vset.pattern.permute.xlu0 0
        %4450 = vperm.xlu0 %4449, %v4432
        %v4451 = vpop.permute.xlu0 %4450
        %4454 = vset.pattern.permute.xlu0 0
        %4455 = vperm.xlu0 %4454, %v4433
        %v4456 = vpop.permute.xlu0 %4455
        %4459 = vset.pattern.permute.xlu0 0
        %4460 = vperm.xlu0 %4459, %v4434
        %v4461 = vpop.permute.xlu0 %4460
        %4464 = vset.pattern.permute.xlu0 0
        %4465 = vperm.xlu0 %4464, %v4435
        %v4466 = vpop.permute.xlu0 %4465
        %4469 = vset.pattern.permute.xlu0 0
        %4470 = vperm.xlu0 %4469, %v4436
        %v4471 = vpop.permute.xlu0 %4470
        %4474 = vset.pattern.permute.xlu0 0
        %4475 = vperm.xlu0 %4474, %v4437
        %v4476 = vpop.permute.xlu0 %4475
        %4479 = vset.pattern.permute.xlu0 0
        %4480 = vperm.xlu0 %4479, %v4438
        %v4481 = vpop.permute.xlu0 %4480
        %4484 = vset.pattern.permute.xlu0 0
        %4485 = vperm.xlu0 %4484, %v4439
        %v4486 = vpop.permute.xlu0 %4485
        %4489 = vset.pattern.permute.xlu0 0
        %4490 = vperm.xlu0 %4489, %v4440
        %v4491 = vpop.permute.xlu0 %4490
        %4494 = vset.pattern.permute.xlu0 0
        %4495 = vperm.xlu0 %4494, %v4441
        %v4496 = vpop.permute.xlu0 %4495
        %4499 = vset.pattern.permute.xlu0 0
        %4500 = vperm.xlu0 %4499, %v4442
        %v4501 = vpop.permute.xlu0 %4500
        %4504 = vset.pattern.permute.xlu0 0
        %4505 = vperm.xlu0 %4504, %v4443
        %v4506 = vpop.permute.xlu0 %4505
        %4509 = vset.pattern.permute.xlu0 0
        %4510 = vperm.xlu0 %4509, %v4444
        %v4511 = vpop.permute.xlu0 %4510
        %4514 = vset.pattern.permute.xlu0 0
        %4515 = vperm.xlu0 %4514, %v4445
        %v4516 = vpop.permute.xlu0 %4515
        %4519 = vset.pattern.permute.xlu0 0
        %4520 = vperm.xlu0 %4519, %v4446
        %v4521 = vpop.permute.xlu0 %4520
        %4524 = vset.pattern.permute.xlu0 0
        %4525 = vperm.xlu0 %4524, %v4447
        %v4526 = vpop.permute.xlu0 %4525
        %v4528 = vmul.f32 %v1780, %v4451
        %v4529 = vmul.f32 %v1779, %v4456
        %v4530 = vmul.f32 %v1778, %v4461
        %v4531 = vmul.f32 %v1777, %v4466
        %v4532 = vmul.f32 %v1776, %v4471
        %v4533 = vmul.f32 %v1775, %v4476
        %v4534 = vmul.f32 %v1774, %v4481
        %v4535 = vmul.f32 %v1773, %v4486
        %v4536 = vmul.f32 %v1772, %v4491
        %v4537 = vmul.f32 %v1771, %v4496
        %v4538 = vmul.f32 %v1770, %v4501
        %v4539 = vmul.f32 %v1769, %v4506
        %v4540 = vmul.f32 %v1768, %v4511
        %v4541 = vmul.f32 %v1767, %v4516
        %v4542 = vmul.f32 %v1766, %v4521
        %v4543 = vmul.f32 %v1765, %v4526
        %v4544 = vpack.c.bf16 %v4529, %v4528
        %v4545 = vpack.c.bf16 %v4531, %v4530
        %v4546 = vpack.c.bf16 %v4533, %v4532
        %v4547 = vpack.c.bf16 %v4535, %v4534
        %v4548 = vpack.c.bf16 %v4537, %v4536
        %v4549 = vpack.c.bf16 %v4539, %v4538
        %v4550 = vpack.c.bf16 %v4541, %v4540
        %v4551 = vpack.c.bf16 %v4543, %v4542
        %s4552 = scalar_lea.vmem %s1, 384
        %v4553 = vld [vmem:[%s4552] sm:$0xf]
        %v4554 = vld [vmem:[%s4552 + $0x4] sm:$0xf]
        %v4555 = vld [vmem:[%s4552 + $0x8] sm:$0xf]
        %v4556 = vld [vmem:[%s4552 + $0xc] sm:$0xf]
        %v4557 = vld [vmem:[%s4552 + $0x10] sm:$0xf]
        %v4558 = vld [vmem:[%s4552 + $0x14] sm:$0xf]
        %v4559 = vld [vmem:[%s4552 + $0x18] sm:$0xf]
        %v4560 = vld [vmem:[%s4552 + $0x1c] sm:$0xf]
        %v4569 = vunpack.c.l.b16 %v4553
        %v4570 = vunpack.c.l.b16 %v4554
        %v4571 = vunpack.c.l.b16 %v4555
        %v4572 = vunpack.c.l.b16 %v4556
        %v4573 = vunpack.c.l.b16 %v4557
        %v4574 = vunpack.c.l.b16 %v4558
        %v4575 = vunpack.c.l.b16 %v4559
        %v4576 = vunpack.c.l.b16 %v4560
        %v4577 = vpack.c.b16 %v4570, %v4569
        %v4578 = vpack.c.b16 %v4572, %v4571
        %v4579 = vpack.c.b16 %v4574, %v4573
        %v4580 = vpack.c.b16 %v4576, %v4575
        %v4586 = vsel %vm526, %v4544, 0
        %v4589 = vsel %vm526, %v4545, 0
        %v4592 = vsel %vm526, %v4546, 0
        %v4595 = vsel %vm526, %v4547, 0
        %v4598 = vsel %vm526, %v4548, 0
        %v4601 = vsel %vm526, %v4549, 0
        %v4604 = vsel %vm526, %v4550, 0
        %v4607 = vsel %vm526, %v4551, 0
        %4609 = vmatprep.subr.bf16.mxu0 0
        %4610 = vmatpush1.bf16.msra.mxu0 0
        %4611 = vmatprep.subr.bf16.mxu0 0
        %4612 = vmatpush1.bf16.msra.mxu0 0
        %4613 = vmatprep.subr.bf16.mxu0 0
        %4614 = vmatpush1.bf16.msra.mxu0 0
        %4615 = vmatprep.subr.bf16.mxu0 0
        %4616 = vmatpush1.bf16.msra.mxu0 0
        %4617 = vmatprep.subr.bf16.mxu0 0
        %4618 = vmatpush1.bf16.msra.mxu0 %v4580
        %4619 = vmatprep.subr.bf16.mxu0 0
        %4620 = vmatpush1.bf16.msra.mxu0 %v4579
        %4621 = vmatprep.subr.bf16.mxu0 0
        %4622 = vmatpush1.bf16.msra.mxu0 %v4578
        %4623 = vmatprep.subr.bf16.mxu0 0
        %4624 = vmatpush1.bf16.msra.mxu0 %v4577
        %4625 = vmatprep.subr.bf16.mxu0 0
        %4626 = vmatpush2.bf16.msra.mxu0 0
        %4627 = vmatprep.subr.bf16.mxu0 0
        %4628 = vmatpush2.bf16.msra.mxu0 0
        %4629 = vmatprep.subr.bf16.mxu0 0
        %4630 = vmatpush2.bf16.msra.mxu0 0
        %4631 = vmatprep.subr.bf16.mxu0 0
        %4632 = vmatpush2.bf16.msra.mxu0 0
        %4633 = vmatprep.subr.bf16.mxu0 0
        %4634 = vmatpush2.bf16.msra.mxu0 0
        %4635 = vmatprep.subr.bf16.mxu0 0
        %4636 = vmatpush2.bf16.msra.mxu0 0
        %4637 = vmatprep.subr.bf16.mxu0 0
        %4638 = vmatpush2.bf16.msra.mxu0 0
        %4639 = vmatprep.subr.bf16.mxu0 0
        %4640 = vmatpush2.bf16.msra.mxu0 0
        %4641 = vmatprep.mubr.bf16.mxu0 0
        %4642 = vmatmul.mubr.bf16.gmra.mxu0 %v4586
        %v4643 = vpop.f32.mrf.mxu0
        %v4644 = vadd.f32 0.0, %v4643
        %v4645 = vpop.f32.mrf.mxu0
        %v4646 = vpop.f32.mrf.mxu0
        %v4647 = vadd.f32 0.0, %v4646
        %v4648 = vpop.f32.mrf.mxu0
        %4649 = vmatprep.mubr.bf16.mxu0 0
        %4650 = vmatmul.mubr.bf16.gmra.mxu0 %v4589
        %v4651 = vpop.f32.mrf.mxu0
        %v4652 = vadd.f32 0.0, %v4651
        %v4653 = vpop.f32.mrf.mxu0
        %v4654 = vpop.f32.mrf.mxu0
        %v4655 = vadd.f32 0.0, %v4654
        %v4656 = vpop.f32.mrf.mxu0
        %4657 = vmatprep.mubr.bf16.mxu0 0
        %4658 = vmatmul.mubr.bf16.gmra.mxu0 %v4592
        %v4659 = vpop.f32.mrf.mxu0
        %v4660 = vadd.f32 0.0, %v4659
        %v4661 = vpop.f32.mrf.mxu0
        %v4662 = vpop.f32.mrf.mxu0
        %v4663 = vadd.f32 0.0, %v4662
        %v4664 = vpop.f32.mrf.mxu0
        %4665 = vmatprep.mubr.bf16.mxu0 0
        %4666 = vmatmul.mubr.bf16.gmra.mxu0 %v4595
        %v4667 = vpop.f32.mrf.mxu0
        %v4668 = vadd.f32 0.0, %v4667
        %v4669 = vpop.f32.mrf.mxu0
        %v4670 = vpop.f32.mrf.mxu0
        %v4671 = vadd.f32 0.0, %v4670
        %v4672 = vpop.f32.mrf.mxu0
        %4673 = vmatprep.mubr.bf16.mxu0 0
        %4674 = vmatmul.mubr.bf16.gmra.mxu0 %v4598
        %v4675 = vpop.f32.mrf.mxu0
        %v4676 = vadd.f32 0.0, %v4675
        %v4677 = vpop.f32.mrf.mxu0
        %v4678 = vpop.f32.mrf.mxu0
        %v4679 = vadd.f32 0.0, %v4678
        %v4680 = vpop.f32.mrf.mxu0
        %4681 = vmatprep.mubr.bf16.mxu0 0
        %4682 = vmatmul.mubr.bf16.gmra.mxu0 %v4601
        %v4683 = vpop.f32.mrf.mxu0
        %v4684 = vadd.f32 0.0, %v4683
        %v4685 = vpop.f32.mrf.mxu0
        %v4686 = vpop.f32.mrf.mxu0
        %v4687 = vadd.f32 0.0, %v4686
        %v4688 = vpop.f32.mrf.mxu0
        %4689 = vmatprep.mubr.bf16.mxu0 0
        %4690 = vmatmul.mubr.bf16.gmra.mxu0 %v4604
        %v4691 = vpop.f32.mrf.mxu0
        %v4692 = vadd.f32 0.0, %v4691
        %v4693 = vpop.f32.mrf.mxu0
        %v4694 = vpop.f32.mrf.mxu0
        %v4695 = vadd.f32 0.0, %v4694
        %v4696 = vpop.f32.mrf.mxu0
        %4697 = vmatprep.mubr.bf16.mxu0 0
        %4698 = vmatmul.mubr.bf16.gmra.mxu0 %v4607
        %v4699 = vpop.f32.mrf.mxu0
        %v4700 = vadd.f32 0.0, %v4699
        %v4701 = vpop.f32.mrf.mxu0
        %v4702 = vpop.f32.mrf.mxu0
        %v4703 = vadd.f32 0.0, %v4702
        %v4704 = vpop.f32.mrf.mxu0
        %4705 = vdwg.mxu0
        %v4706 = vadd.f32 %v4415, %v4644
        %v4707 = vadd.f32 %v4416, %v4647
        %v4708 = vadd.f32 %v4417, %v4652
        %v4709 = vadd.f32 %v4418, %v4655
        %v4710 = vadd.f32 %v4419, %v4660
        %v4711 = vadd.f32 %v4420, %v4663
        %v4712 = vadd.f32 %v4421, %v4668
        %v4713 = vadd.f32 %v4422, %v4671
        %v4714 = vadd.f32 %v4423, %v4676
        %v4715 = vadd.f32 %v4424, %v4679
        %v4716 = vadd.f32 %v4425, %v4684
        %v4717 = vadd.f32 %v4426, %v4687
        %v4718 = vadd.f32 %v4427, %v4692
        %v4719 = vadd.f32 %v4428, %v4695
        %v4720 = vadd.f32 %v4429, %v4700
        %v4721 = vadd.f32 %v4430, %v4703
        %4722 = vst [vmem:[%s217] sm:$0xff] %v4706
        %4723 = vst [vmem:[%s217 + $0x8] sm:$0xff] %v4707
        %4724 = vst [vmem:[%s217 + $0x10] sm:$0xff] %v4708
        %4725 = vst [vmem:[%s217 + $0x18] sm:$0xff] %v4709
        %4726 = vst [vmem:[%s217 + $0x20] sm:$0xff] %v4710
        %4727 = vst [vmem:[%s217 + $0x28] sm:$0xff] %v4711
        %4728 = vst [vmem:[%s217 + $0x30] sm:$0xff] %v4712
        %4729 = vst [vmem:[%s217 + $0x38] sm:$0xff] %v4713
        %4730 = vst [vmem:[%s217 + $0x40] sm:$0xff] %v4714
        %4731 = vst [vmem:[%s217 + $0x48] sm:$0xff] %v4715
        %4732 = vst [vmem:[%s217 + $0x50] sm:$0xff] %v4716
        %4733 = vst [vmem:[%s217 + $0x58] sm:$0xff] %v4717
        %4734 = vst [vmem:[%s217 + $0x60] sm:$0xff] %v4718
        %4735 = vst [vmem:[%s217 + $0x68] sm:$0xff] %v4719
        %4736 = vst [vmem:[%s217 + $0x70] sm:$0xff] %v4720
        %4737 = vst [vmem:[%s217 + $0x78] sm:$0xff] %v4721
        %v4738 = vld [vmem:[%s217] sm:$0xff]
        %v4739 = vld [vmem:[%s217 + $0x8] sm:$0xff]
        %v4740 = vld [vmem:[%s217 + $0x10] sm:$0xff]
        %v4741 = vld [vmem:[%s217 + $0x18] sm:$0xff]
        %v4742 = vld [vmem:[%s217 + $0x20] sm:$0xff]
        %v4743 = vld [vmem:[%s217 + $0x28] sm:$0xff]
        %v4744 = vld [vmem:[%s217 + $0x30] sm:$0xff]
        %v4745 = vld [vmem:[%s217 + $0x38] sm:$0xff]
        %v4746 = vld [vmem:[%s217 + $0x40] sm:$0xff]
        %v4747 = vld [vmem:[%s217 + $0x48] sm:$0xff]
        %v4748 = vld [vmem:[%s217 + $0x50] sm:$0xff]
        %v4749 = vld [vmem:[%s217 + $0x58] sm:$0xff]
        %v4750 = vld [vmem:[%s217 + $0x60] sm:$0xff]
        %v4751 = vld [vmem:[%s217 + $0x68] sm:$0xff]
        %v4752 = vld [vmem:[%s217 + $0x70] sm:$0xff]
        %v4753 = vld [vmem:[%s217 + $0x78] sm:$0xff]
        %s4754 = scalar_lea.vmem %s2, 1664
        %v4755 = vld [vmem:[%s4754] sm:$0xff]
        %v4756 = vld [vmem:[%s4754 + $0x8] sm:$0xff]
        %v4757 = vld [vmem:[%s4754 + $0x10] sm:$0xff]
        %v4758 = vld [vmem:[%s4754 + $0x18] sm:$0xff]
        %v4759 = vld [vmem:[%s4754 + $0x20] sm:$0xff]
        %v4760 = vld [vmem:[%s4754 + $0x28] sm:$0xff]
        %v4761 = vld [vmem:[%s4754 + $0x30] sm:$0xff]
        %v4762 = vld [vmem:[%s4754 + $0x38] sm:$0xff]
        %v4763 = vld [vmem:[%s4754 + $0x40] sm:$0xff]
        %v4764 = vld [vmem:[%s4754 + $0x48] sm:$0xff]
        %v4765 = vld [vmem:[%s4754 + $0x50] sm:$0xff]
        %v4766 = vld [vmem:[%s4754 + $0x58] sm:$0xff]
        %v4767 = vld [vmem:[%s4754 + $0x60] sm:$0xff]
        %v4768 = vld [vmem:[%s4754 + $0x68] sm:$0xff]
        %v4769 = vld [vmem:[%s4754 + $0x70] sm:$0xff]
        %v4770 = vld [vmem:[%s4754 + $0x78] sm:$0xff]
        %4772 = vset.pattern.permute.xlu0 0
        %4773 = vperm.xlu0 %4772, %v4755
        %v4774 = vpop.permute.xlu0 %4773
        %4777 = vset.pattern.permute.xlu0 0
        %4778 = vperm.xlu0 %4777, %v4756
        %v4779 = vpop.permute.xlu0 %4778
        %4782 = vset.pattern.permute.xlu0 0
        %4783 = vperm.xlu0 %4782, %v4757
        %v4784 = vpop.permute.xlu0 %4783
        %4787 = vset.pattern.permute.xlu0 0
        %4788 = vperm.xlu0 %4787, %v4758
        %v4789 = vpop.permute.xlu0 %4788
        %4792 = vset.pattern.permute.xlu0 0
        %4793 = vperm.xlu0 %4792, %v4759
        %v4794 = vpop.permute.xlu0 %4793
        %4797 = vset.pattern.permute.xlu0 0
        %4798 = vperm.xlu0 %4797, %v4760
        %v4799 = vpop.permute.xlu0 %4798
        %4802 = vset.pattern.permute.xlu0 0
        %4803 = vperm.xlu0 %4802, %v4761
        %v4804 = vpop.permute.xlu0 %4803
        %4807 = vset.pattern.permute.xlu0 0
        %4808 = vperm.xlu0 %4807, %v4762
        %v4809 = vpop.permute.xlu0 %4808
        %4812 = vset.pattern.permute.xlu0 0
        %4813 = vperm.xlu0 %4812, %v4763
        %v4814 = vpop.permute.xlu0 %4813
        %4817 = vset.pattern.permute.xlu0 0
        %4818 = vperm.xlu0 %4817, %v4764
        %v4819 = vpop.permute.xlu0 %4818
        %4822 = vset.pattern.permute.xlu0 0
        %4823 = vperm.xlu0 %4822, %v4765
        %v4824 = vpop.permute.xlu0 %4823
        %4827 = vset.pattern.permute.xlu0 0
        %4828 = vperm.xlu0 %4827, %v4766
        %v4829 = vpop.permute.xlu0 %4828
        %4832 = vset.pattern.permute.xlu0 0
        %4833 = vperm.xlu0 %4832, %v4767
        %v4834 = vpop.permute.xlu0 %4833
        %4837 = vset.pattern.permute.xlu0 0
        %4838 = vperm.xlu0 %4837, %v4768
        %v4839 = vpop.permute.xlu0 %4838
        %4842 = vset.pattern.permute.xlu0 0
        %4843 = vperm.xlu0 %4842, %v4769
        %v4844 = vpop.permute.xlu0 %4843
        %4847 = vset.pattern.permute.xlu0 0
        %4848 = vperm.xlu0 %4847, %v4770
        %v4849 = vpop.permute.xlu0 %4848
        %v4851 = vmul.f32 %v2136, %v4774
        %v4852 = vmul.f32 %v2135, %v4779
        %v4853 = vmul.f32 %v2134, %v4784
        %v4854 = vmul.f32 %v2133, %v4789
        %v4855 = vmul.f32 %v2132, %v4794
        %v4856 = vmul.f32 %v2131, %v4799
        %v4857 = vmul.f32 %v2130, %v4804
        %v4858 = vmul.f32 %v2129, %v4809
        %v4859 = vmul.f32 %v2128, %v4814
        %v4860 = vmul.f32 %v2127, %v4819
        %v4861 = vmul.f32 %v2126, %v4824
        %v4862 = vmul.f32 %v2125, %v4829
        %v4863 = vmul.f32 %v2124, %v4834
        %v4864 = vmul.f32 %v2123, %v4839
        %v4865 = vmul.f32 %v2122, %v4844
        %v4866 = vmul.f32 %v2121, %v4849
        %v4867 = vpack.c.bf16 %v4852, %v4851
        %v4868 = vpack.c.bf16 %v4854, %v4853
        %v4869 = vpack.c.bf16 %v4856, %v4855
        %v4870 = vpack.c.bf16 %v4858, %v4857
        %v4871 = vpack.c.bf16 %v4860, %v4859
        %v4872 = vpack.c.bf16 %v4862, %v4861
        %v4873 = vpack.c.bf16 %v4864, %v4863
        %v4874 = vpack.c.bf16 %v4866, %v4865
        %s4875 = scalar_lea.vmem %s1, 416
        %v4876 = vld [vmem:[%s4875] sm:$0xf]
        %v4877 = vld [vmem:[%s4875 + $0x4] sm:$0xf]
        %v4878 = vld [vmem:[%s4875 + $0x8] sm:$0xf]
        %v4879 = vld [vmem:[%s4875 + $0xc] sm:$0xf]
        %v4880 = vld [vmem:[%s4875 + $0x10] sm:$0xf]
        %v4881 = vld [vmem:[%s4875 + $0x14] sm:$0xf]
        %v4882 = vld [vmem:[%s4875 + $0x18] sm:$0xf]
        %v4883 = vld [vmem:[%s4875 + $0x1c] sm:$0xf]
        %v4892 = vunpack.c.l.b16 %v4876
        %v4893 = vunpack.c.l.b16 %v4877
        %v4894 = vunpack.c.l.b16 %v4878
        %v4895 = vunpack.c.l.b16 %v4879
        %v4896 = vunpack.c.l.b16 %v4880
        %v4897 = vunpack.c.l.b16 %v4881
        %v4898 = vunpack.c.l.b16 %v4882
        %v4899 = vunpack.c.l.b16 %v4883
        %v4900 = vpack.c.b16 %v4893, %v4892
        %v4901 = vpack.c.b16 %v4895, %v4894
        %v4902 = vpack.c.b16 %v4897, %v4896
        %v4903 = vpack.c.b16 %v4899, %v4898
        %v4909 = vsel %vm526, %v4867, 0
        %v4912 = vsel %vm526, %v4868, 0
        %v4915 = vsel %vm526, %v4869, 0
        %v4918 = vsel %vm526, %v4870, 0
        %v4921 = vsel %vm526, %v4871, 0
        %v4924 = vsel %vm526, %v4872, 0
        %v4927 = vsel %vm526, %v4873, 0
        %v4930 = vsel %vm526, %v4874, 0
        %4932 = vmatprep.subr.bf16.mxu0 0
        %4933 = vmatpush1.bf16.msra.mxu0 0
        %4934 = vmatprep.subr.bf16.mxu0 0
        %4935 = vmatpush1.bf16.msra.mxu0 0
        %4936 = vmatprep.subr.bf16.mxu0 0
        %4937 = vmatpush1.bf16.msra.mxu0 0
        %4938 = vmatprep.subr.bf16.mxu0 0
        %4939 = vmatpush1.bf16.msra.mxu0 0
        %4940 = vmatprep.subr.bf16.mxu0 0
        %4941 = vmatpush1.bf16.msra.mxu0 %v4903
        %4942 = vmatprep.subr.bf16.mxu0 0
        %4943 = vmatpush1.bf16.msra.mxu0 %v4902
        %4944 = vmatprep.subr.bf16.mxu0 0
        %4945 = vmatpush1.bf16.msra.mxu0 %v4901
        %4946 = vmatprep.subr.bf16.mxu0 0
        %4947 = vmatpush1.bf16.msra.mxu0 %v4900
        %4948 = vmatprep.subr.bf16.mxu0 0
        %4949 = vmatpush2.bf16.msra.mxu0 0
        %4950 = vmatprep.subr.bf16.mxu0 0
        %4951 = vmatpush2.bf16.msra.mxu0 0
        %4952 = vmatprep.subr.bf16.mxu0 0
        %4953 = vmatpush2.bf16.msra.mxu0 0
        %4954 = vmatprep.subr.bf16.mxu0 0
        %4955 = vmatpush2.bf16.msra.mxu0 0
        %4956 = vmatprep.subr.bf16.mxu0 0
        %4957 = vmatpush2.bf16.msra.mxu0 0
        %4958 = vmatprep.subr.bf16.mxu0 0
        %4959 = vmatpush2.bf16.msra.mxu0 0
        %4960 = vmatprep.subr.bf16.mxu0 0
        %4961 = vmatpush2.bf16.msra.mxu0 0
        %4962 = vmatprep.subr.bf16.mxu0 0
        %4963 = vmatpush2.bf16.msra.mxu0 0
        %4964 = vmatprep.mubr.bf16.mxu0 0
        %4965 = vmatmul.mubr.bf16.gmra.mxu0 %v4909
        %v4966 = vpop.f32.mrf.mxu0
        %v4967 = vadd.f32 0.0, %v4966
        %v4968 = vpop.f32.mrf.mxu0
        %v4969 = vpop.f32.mrf.mxu0
        %v4970 = vadd.f32 0.0, %v4969
        %v4971 = vpop.f32.mrf.mxu0
        %4972 = vmatprep.mubr.bf16.mxu0 0
        %4973 = vmatmul.mubr.bf16.gmra.mxu0 %v4912
        %v4974 = vpop.f32.mrf.mxu0
        %v4975 = vadd.f32 0.0, %v4974
        %v4976 = vpop.f32.mrf.mxu0
        %v4977 = vpop.f32.mrf.mxu0
        %v4978 = vadd.f32 0.0, %v4977
        %v4979 = vpop.f32.mrf.mxu0
        %4980 = vmatprep.mubr.bf16.mxu0 0
        %4981 = vmatmul.mubr.bf16.gmra.mxu0 %v4915
        %v4982 = vpop.f32.mrf.mxu0
        %v4983 = vadd.f32 0.0, %v4982
        %v4984 = vpop.f32.mrf.mxu0
        %v4985 = vpop.f32.mrf.mxu0
        %v4986 = vadd.f32 0.0, %v4985
        %v4987 = vpop.f32.mrf.mxu0
        %4988 = vmatprep.mubr.bf16.mxu0 0
        %4989 = vmatmul.mubr.bf16.gmra.mxu0 %v4918
        %v4990 = vpop.f32.mrf.mxu0
        %v4991 = vadd.f32 0.0, %v4990
        %v4992 = vpop.f32.mrf.mxu0
        %v4993 = vpop.f32.mrf.mxu0
        %v4994 = vadd.f32 0.0, %v4993
        %v4995 = vpop.f32.mrf.mxu0
        %4996 = vmatprep.mubr.bf16.mxu0 0
        %4997 = vmatmul.mubr.bf16.gmra.mxu0 %v4921
        %v4998 = vpop.f32.mrf.mxu0
        %v4999 = vadd.f32 0.0, %v4998
        %v5000 = vpop.f32.mrf.mxu0
        %v5001 = vpop.f32.mrf.mxu0
        %v5002 = vadd.f32 0.0, %v5001
        %v5003 = vpop.f32.mrf.mxu0
        %5004 = vmatprep.mubr.bf16.mxu0 0
        %5005 = vmatmul.mubr.bf16.gmra.mxu0 %v4924
        %v5006 = vpop.f32.mrf.mxu0
        %v5007 = vadd.f32 0.0, %v5006
        %v5008 = vpop.f32.mrf.mxu0
        %v5009 = vpop.f32.mrf.mxu0
        %v5010 = vadd.f32 0.0, %v5009
        %v5011 = vpop.f32.mrf.mxu0
        %5012 = vmatprep.mubr.bf16.mxu0 0
        %5013 = vmatmul.mubr.bf16.gmra.mxu0 %v4927
        %v5014 = vpop.f32.mrf.mxu0
        %v5015 = vadd.f32 0.0, %v5014
        %v5016 = vpop.f32.mrf.mxu0
        %v5017 = vpop.f32.mrf.mxu0
        %v5018 = vadd.f32 0.0, %v5017
        %v5019 = vpop.f32.mrf.mxu0
        %5020 = vmatprep.mubr.bf16.mxu0 0
        %5021 = vmatmul.mubr.bf16.gmra.mxu0 %v4930
        %v5022 = vpop.f32.mrf.mxu0
        %v5023 = vadd.f32 0.0, %v5022
        %v5024 = vpop.f32.mrf.mxu0
        %v5025 = vpop.f32.mrf.mxu0
        %v5026 = vadd.f32 0.0, %v5025
        %v5027 = vpop.f32.mrf.mxu0
        %5028 = vdwg.mxu0
        %v5029 = vadd.f32 %v4738, %v4967
        %v5030 = vadd.f32 %v4739, %v4970
        %v5031 = vadd.f32 %v4740, %v4975
        %v5032 = vadd.f32 %v4741, %v4978
        %v5033 = vadd.f32 %v4742, %v4983
        %v5034 = vadd.f32 %v4743, %v4986
        %v5035 = vadd.f32 %v4744, %v4991
        %v5036 = vadd.f32 %v4745, %v4994
        %v5037 = vadd.f32 %v4746, %v4999
        %v5038 = vadd.f32 %v4747, %v5002
        %v5039 = vadd.f32 %v4748, %v5007
        %v5040 = vadd.f32 %v4749, %v5010
        %v5041 = vadd.f32 %v4750, %v5015
        %v5042 = vadd.f32 %v4751, %v5018
        %v5043 = vadd.f32 %v4752, %v5023
        %v5044 = vadd.f32 %v4753, %v5026
        %5045 = vst [vmem:[%s217] sm:$0xff] %v5029
        %5046 = vst [vmem:[%s217 + $0x8] sm:$0xff] %v5030
        %5047 = vst [vmem:[%s217 + $0x10] sm:$0xff] %v5031
        %5048 = vst [vmem:[%s217 + $0x18] sm:$0xff] %v5032
        %5049 = vst [vmem:[%s217 + $0x20] sm:$0xff] %v5033
        %5050 = vst [vmem:[%s217 + $0x28] sm:$0xff] %v5034
        %5051 = vst [vmem:[%s217 + $0x30] sm:$0xff] %v5035
        %5052 = vst [vmem:[%s217 + $0x38] sm:$0xff] %v5036
        %5053 = vst [vmem:[%s217 + $0x40] sm:$0xff] %v5037
        %5054 = vst [vmem:[%s217 + $0x48] sm:$0xff] %v5038
        %5055 = vst [vmem:[%s217 + $0x50] sm:$0xff] %v5039
        %5056 = vst [vmem:[%s217 + $0x58] sm:$0xff] %v5040
        %5057 = vst [vmem:[%s217 + $0x60] sm:$0xff] %v5041
        %5058 = vst [vmem:[%s217 + $0x68] sm:$0xff] %v5042
        %5059 = vst [vmem:[%s217 + $0x70] sm:$0xff] %v5043
        %5060 = vst [vmem:[%s217 + $0x78] sm:$0xff] %v5044
        %v5061 = vld [vmem:[%s217] sm:$0xff]
        %v5062 = vld [vmem:[%s217 + $0x8] sm:$0xff]
        %v5063 = vld [vmem:[%s217 + $0x10] sm:$0xff]
        %v5064 = vld [vmem:[%s217 + $0x18] sm:$0xff]
        %v5065 = vld [vmem:[%s217 + $0x20] sm:$0xff]
        %v5066 = vld [vmem:[%s217 + $0x28] sm:$0xff]
        %v5067 = vld [vmem:[%s217 + $0x30] sm:$0xff]
        %v5068 = vld [vmem:[%s217 + $0x38] sm:$0xff]
        %v5069 = vld [vmem:[%s217 + $0x40] sm:$0xff]
        %v5070 = vld [vmem:[%s217 + $0x48] sm:$0xff]
        %v5071 = vld [vmem:[%s217 + $0x50] sm:$0xff]
        %v5072 = vld [vmem:[%s217 + $0x58] sm:$0xff]
        %v5073 = vld [vmem:[%s217 + $0x60] sm:$0xff]
        %v5074 = vld [vmem:[%s217 + $0x68] sm:$0xff]
        %v5075 = vld [vmem:[%s217 + $0x70] sm:$0xff]
        %v5076 = vld [vmem:[%s217 + $0x78] sm:$0xff]
        %s5077 = scalar_lea.vmem %s2, 1792
        %v5078 = vld [vmem:[%s5077] sm:$0xff]
        %v5079 = vld [vmem:[%s5077 + $0x8] sm:$0xff]
        %v5080 = vld [vmem:[%s5077 + $0x10] sm:$0xff]
        %v5081 = vld [vmem:[%s5077 + $0x18] sm:$0xff]
        %v5082 = vld [vmem:[%s5077 + $0x20] sm:$0xff]
        %v5083 = vld [vmem:[%s5077 + $0x28] sm:$0xff]
        %v5084 = vld [vmem:[%s5077 + $0x30] sm:$0xff]
        %v5085 = vld [vmem:[%s5077 + $0x38] sm:$0xff]
        %v5086 = vld [vmem:[%s5077 + $0x40] sm:$0xff]
        %v5087 = vld [vmem:[%s5077 + $0x48] sm:$0xff]
        %v5088 = vld [vmem:[%s5077 + $0x50] sm:$0xff]
        %v5089 = vld [vmem:[%s5077 + $0x58] sm:$0xff]
        %v5090 = vld [vmem:[%s5077 + $0x60] sm:$0xff]
        %v5091 = vld [vmem:[%s5077 + $0x68] sm:$0xff]
        %v5092 = vld [vmem:[%s5077 + $0x70] sm:$0xff]
        %v5093 = vld [vmem:[%s5077 + $0x78] sm:$0xff]
        %5095 = vset.pattern.permute.xlu0 0
        %5096 = vperm.xlu0 %5095, %v5078
        %v5097 = vpop.permute.xlu0 %5096
        %5100 = vset.pattern.permute.xlu0 0
        %5101 = vperm.xlu0 %5100, %v5079
        %v5102 = vpop.permute.xlu0 %5101
        %5105 = vset.pattern.permute.xlu0 0
        %5106 = vperm.xlu0 %5105, %v5080
        %v5107 = vpop.permute.xlu0 %5106
        %5110 = vset.pattern.permute.xlu0 0
        %5111 = vperm.xlu0 %5110, %v5081
        %v5112 = vpop.permute.xlu0 %5111
        %5115 = vset.pattern.permute.xlu0 0
        %5116 = vperm.xlu0 %5115, %v5082
        %v5117 = vpop.permute.xlu0 %5116
        %5120 = vset.pattern.permute.xlu0 0
        %5121 = vperm.xlu0 %5120, %v5083
        %v5122 = vpop.permute.xlu0 %5121
        %5125 = vset.pattern.permute.xlu0 0
        %5126 = vperm.xlu0 %5125, %v5084
        %v5127 = vpop.permute.xlu0 %5126
        %5130 = vset.pattern.permute.xlu0 0
        %5131 = vperm.xlu0 %5130, %v5085
        %v5132 = vpop.permute.xlu0 %5131
        %5135 = vset.pattern.permute.xlu0 0
        %5136 = vperm.xlu0 %5135, %v5086
        %v5137 = vpop.permute.xlu0 %5136
        %5140 = vset.pattern.permute.xlu0 0
        %5141 = vperm.xlu0 %5140, %v5087
        %v5142 = vpop.permute.xlu0 %5141
        %5145 = vset.pattern.permute.xlu0 0
        %5146 = vperm.xlu0 %5145, %v5088
        %v5147 = vpop.permute.xlu0 %5146
        %5150 = vset.pattern.permute.xlu0 0
        %5151 = vperm.xlu0 %5150, %v5089
        %v5152 = vpop.permute.xlu0 %5151
        %5155 = vset.pattern.permute.xlu0 0
        %5156 = vperm.xlu0 %5155, %v5090
        %v5157 = vpop.permute.xlu0 %5156
        %5160 = vset.pattern.permute.xlu0 0
        %5161 = vperm.xlu0 %5160, %v5091
        %v5162 = vpop.permute.xlu0 %5161
        %5165 = vset.pattern.permute.xlu0 0
        %5166 = vperm.xlu0 %5165, %v5092
        %v5167 = vpop.permute.xlu0 %5166
        %5170 = vset.pattern.permute.xlu0 0
        %5171 = vperm.xlu0 %5170, %v5093
        %v5172 = vpop.permute.xlu0 %5171
        %v5174 = vmul.f32 %v2492, %v5097
        %v5175 = vmul.f32 %v2491, %v5102
        %v5176 = vmul.f32 %v2490, %v5107
        %v5177 = vmul.f32 %v2489, %v5112
        %v5178 = vmul.f32 %v2488, %v5117
        %v5179 = vmul.f32 %v2487, %v5122
        %v5180 = vmul.f32 %v2486, %v5127
        %v5181 = vmul.f32 %v2485, %v5132
        %v5182 = vmul.f32 %v2484, %v5137
        %v5183 = vmul.f32 %v2483, %v5142
        %v5184 = vmul.f32 %v2482, %v5147
        %v5185 = vmul.f32 %v2481, %v5152
        %v5186 = vmul.f32 %v2480, %v5157
        %v5187 = vmul.f32 %v2479, %v5162
        %v5188 = vmul.f32 %v2478, %v5167
        %v5189 = vmul.f32 %v2477, %v5172
        %v5190 = vpack.c.bf16 %v5175, %v5174
        %v5191 = vpack.c.bf16 %v5177, %v5176
        %v5192 = vpack.c.bf16 %v5179, %v5178
        %v5193 = vpack.c.bf16 %v5181, %v5180
        %v5194 = vpack.c.bf16 %v5183, %v5182
        %v5195 = vpack.c.bf16 %v5185, %v5184
        %v5196 = vpack.c.bf16 %v5187, %v5186
        %v5197 = vpack.c.bf16 %v5189, %v5188
        %s5198 = scalar_lea.vmem %s1, 448
        %v5199 = vld [vmem:[%s5198] sm:$0xf]
        %v5200 = vld [vmem:[%s5198 + $0x4] sm:$0xf]
        %v5201 = vld [vmem:[%s5198 + $0x8] sm:$0xf]
        %v5202 = vld [vmem:[%s5198 + $0xc] sm:$0xf]
        %v5203 = vld [vmem:[%s5198 + $0x10] sm:$0xf]
        %v5204 = vld [vmem:[%s5198 + $0x14] sm:$0xf]
        %v5205 = vld [vmem:[%s5198 + $0x18] sm:$0xf]
        %v5206 = vld [vmem:[%s5198 + $0x1c] sm:$0xf]
        %v5215 = vunpack.c.l.b16 %v5199
        %v5216 = vunpack.c.l.b16 %v5200
        %v5217 = vunpack.c.l.b16 %v5201
        %v5218 = vunpack.c.l.b16 %v5202
        %v5219 = vunpack.c.l.b16 %v5203
        %v5220 = vunpack.c.l.b16 %v5204
        %v5221 = vunpack.c.l.b16 %v5205
        %v5222 = vunpack.c.l.b16 %v5206
        %v5223 = vpack.c.b16 %v5216, %v5215
        %v5224 = vpack.c.b16 %v5218, %v5217
        %v5225 = vpack.c.b16 %v5220, %v5219
        %v5226 = vpack.c.b16 %v5222, %v5221
        %v5232 = vsel %vm526, %v5190, 0
        %v5235 = vsel %vm526, %v5191, 0
        %v5238 = vsel %vm526, %v5192, 0
        %v5241 = vsel %vm526, %v5193, 0
        %v5244 = vsel %vm526, %v5194, 0
        %v5247 = vsel %vm526, %v5195, 0
        %v5250 = vsel %vm526, %v5196, 0
        %v5253 = vsel %vm526, %v5197, 0
        %5255 = vmatprep.subr.bf16.mxu0 0
        %5256 = vmatpush1.bf16.msra.mxu0 0
        %5257 = vmatprep.subr.bf16.mxu0 0
        %5258 = vmatpush1.bf16.msra.mxu0 0
        %5259 = vmatprep.subr.bf16.mxu0 0
        %5260 = vmatpush1.bf16.msra.mxu0 0
        %5261 = vmatprep.subr.bf16.mxu0 0
        %5262 = vmatpush1.bf16.msra.mxu0 0
        %5263 = vmatprep.subr.bf16.mxu0 0
        %5264 = vmatpush1.bf16.msra.mxu0 %v5226
        %5265 = vmatprep.subr.bf16.mxu0 0
        %5266 = vmatpush1.bf16.msra.mxu0 %v5225
        %5267 = vmatprep.subr.bf16.mxu0 0
        %5268 = vmatpush1.bf16.msra.mxu0 %v5224
        %5269 = vmatprep.subr.bf16.mxu0 0
        %5270 = vmatpush1.bf16.msra.mxu0 %v5223
        %5271 = vmatprep.subr.bf16.mxu0 0
        %5272 = vmatpush2.bf16.msra.mxu0 0
        %5273 = vmatprep.subr.bf16.mxu0 0
        %5274 = vmatpush2.bf16.msra.mxu0 0
        %5275 = vmatprep.subr.bf16.mxu0 0
        %5276 = vmatpush2.bf16.msra.mxu0 0
        %5277 = vmatprep.subr.bf16.mxu0 0
        %5278 = vmatpush2.bf16.msra.mxu0 0
        %5279 = vmatprep.subr.bf16.mxu0 0
        %5280 = vmatpush2.bf16.msra.mxu0 0
        %5281 = vmatprep.subr.bf16.mxu0 0
        %5282 = vmatpush2.bf16.msra.mxu0 0
        %5283 = vmatprep.subr.bf16.mxu0 0
        %5284 = vmatpush2.bf16.msra.mxu0 0
        %5285 = vmatprep.subr.bf16.mxu0 0
        %5286 = vmatpush2.bf16.msra.mxu0 0
        %5287 = vmatprep.mubr.bf16.mxu0 0
        %5288 = vmatmul.mubr.bf16.gmra.mxu0 %v5232
        %v5289 = vpop.f32.mrf.mxu0
        %v5290 = vadd.f32 0.0, %v5289
        %v5291 = vpop.f32.mrf.mxu0
        %v5292 = vpop.f32.mrf.mxu0
        %v5293 = vadd.f32 0.0, %v5292
        %v5294 = vpop.f32.mrf.mxu0
        %5295 = vmatprep.mubr.bf16.mxu0 0
        %5296 = vmatmul.mubr.bf16.gmra.mxu0 %v5235
        %v5297 = vpop.f32.mrf.mxu0
        %v5298 = vadd.f32 0.0, %v5297
        %v5299 = vpop.f32.mrf.mxu0
        %v5300 = vpop.f32.mrf.mxu0
        %v5301 = vadd.f32 0.0, %v5300
        %v5302 = vpop.f32.mrf.mxu0
        %5303 = vmatprep.mubr.bf16.mxu0 0
        %5304 = vmatmul.mubr.bf16.gmra.mxu0 %v5238
        %v5305 = vpop.f32.mrf.mxu0
        %v5306 = vadd.f32 0.0, %v5305
        %v5307 = vpop.f32.mrf.mxu0
        %v5308 = vpop.f32.mrf.mxu0
        %v5309 = vadd.f32 0.0, %v5308
        %v5310 = vpop.f32.mrf.mxu0
        %5311 = vmatprep.mubr.bf16.mxu0 0
        %5312 = vmatmul.mubr.bf16.gmra.mxu0 %v5241
        %v5313 = vpop.f32.mrf.mxu0
        %v5314 = vadd.f32 0.0, %v5313
        %v5315 = vpop.f32.mrf.mxu0
        %v5316 = vpop.f32.mrf.mxu0
        %v5317 = vadd.f32 0.0, %v5316
        %v5318 = vpop.f32.mrf.mxu0
        %5319 = vmatprep.mubr.bf16.mxu0 0
        %5320 = vmatmul.mubr.bf16.gmra.mxu0 %v5244
        %v5321 = vpop.f32.mrf.mxu0
        %v5322 = vadd.f32 0.0, %v5321
        %v5323 = vpop.f32.mrf.mxu0
        %v5324 = vpop.f32.mrf.mxu0
        %v5325 = vadd.f32 0.0, %v5324
        %v5326 = vpop.f32.mrf.mxu0
        %5327 = vmatprep.mubr.bf16.mxu0 0
        %5328 = vmatmul.mubr.bf16.gmra.mxu0 %v5247
        %v5329 = vpop.f32.mrf.mxu0
        %v5330 = vadd.f32 0.0, %v5329
        %v5331 = vpop.f32.mrf.mxu0
        %v5332 = vpop.f32.mrf.mxu0
        %v5333 = vadd.f32 0.0, %v5332
        %v5334 = vpop.f32.mrf.mxu0
        %5335 = vmatprep.mubr.bf16.mxu0 0
        %5336 = vmatmul.mubr.bf16.gmra.mxu0 %v5250
        %v5337 = vpop.f32.mrf.mxu0
        %v5338 = vadd.f32 0.0, %v5337
        %v5339 = vpop.f32.mrf.mxu0
        %v5340 = vpop.f32.mrf.mxu0
        %v5341 = vadd.f32 0.0, %v5340
        %v5342 = vpop.f32.mrf.mxu0
        %5343 = vmatprep.mubr.bf16.mxu0 0
        %5344 = vmatmul.mubr.bf16.gmra.mxu0 %v5253
        %v5345 = vpop.f32.mrf.mxu0
        %v5346 = vadd.f32 0.0, %v5345
        %v5347 = vpop.f32.mrf.mxu0
        %v5348 = vpop.f32.mrf.mxu0
        %v5349 = vadd.f32 0.0, %v5348
        %v5350 = vpop.f32.mrf.mxu0
        %5351 = vdwg.mxu0
        %v5352 = vadd.f32 %v5061, %v5290
        %v5353 = vadd.f32 %v5062, %v5293
        %v5354 = vadd.f32 %v5063, %v5298
        %v5355 = vadd.f32 %v5064, %v5301
        %v5356 = vadd.f32 %v5065, %v5306
        %v5357 = vadd.f32 %v5066, %v5309
        %v5358 = vadd.f32 %v5067, %v5314
        %v5359 = vadd.f32 %v5068, %v5317
        %v5360 = vadd.f32 %v5069, %v5322
        %v5361 = vadd.f32 %v5070, %v5325
        %v5362 = vadd.f32 %v5071, %v5330
        %v5363 = vadd.f32 %v5072, %v5333
        %v5364 = vadd.f32 %v5073, %v5338
        %v5365 = vadd.f32 %v5074, %v5341
        %v5366 = vadd.f32 %v5075, %v5346
        %v5367 = vadd.f32 %v5076, %v5349
        %5368 = vst [vmem:[%s217] sm:$0xff] %v5352
        %5369 = vst [vmem:[%s217 + $0x8] sm:$0xff] %v5353
        %5370 = vst [vmem:[%s217 + $0x10] sm:$0xff] %v5354
        %5371 = vst [vmem:[%s217 + $0x18] sm:$0xff] %v5355
        %5372 = vst [vmem:[%s217 + $0x20] sm:$0xff] %v5356
        %5373 = vst [vmem:[%s217 + $0x28] sm:$0xff] %v5357
        %5374 = vst [vmem:[%s217 + $0x30] sm:$0xff] %v5358
        %5375 = vst [vmem:[%s217 + $0x38] sm:$0xff] %v5359
        %5376 = vst [vmem:[%s217 + $0x40] sm:$0xff] %v5360
        %5377 = vst [vmem:[%s217 + $0x48] sm:$0xff] %v5361
        %5378 = vst [vmem:[%s217 + $0x50] sm:$0xff] %v5362
        %5379 = vst [vmem:[%s217 + $0x58] sm:$0xff] %v5363
        %5380 = vst [vmem:[%s217 + $0x60] sm:$0xff] %v5364
        %5381 = vst [vmem:[%s217 + $0x68] sm:$0xff] %v5365
        %5382 = vst [vmem:[%s217 + $0x70] sm:$0xff] %v5366
        %5383 = vst [vmem:[%s217 + $0x78] sm:$0xff] %v5367
        %v5384 = vld [vmem:[%s217] sm:$0xff]
        %v5385 = vld [vmem:[%s217 + $0x8] sm:$0xff]
        %v5386 = vld [vmem:[%s217 + $0x10] sm:$0xff]
        %v5387 = vld [vmem:[%s217 + $0x18] sm:$0xff]
        %v5388 = vld [vmem:[%s217 + $0x20] sm:$0xff]
        %v5389 = vld [vmem:[%s217 + $0x28] sm:$0xff]
        %v5390 = vld [vmem:[%s217 + $0x30] sm:$0xff]
        %v5391 = vld [vmem:[%s217 + $0x38] sm:$0xff]
        %v5392 = vld [vmem:[%s217 + $0x40] sm:$0xff]
        %v5393 = vld [vmem:[%s217 + $0x48] sm:$0xff]
        %v5394 = vld [vmem:[%s217 + $0x50] sm:$0xff]
        %v5395 = vld [vmem:[%s217 + $0x58] sm:$0xff]
        %v5396 = vld [vmem:[%s217 + $0x60] sm:$0xff]
        %v5397 = vld [vmem:[%s217 + $0x68] sm:$0xff]
        %v5398 = vld [vmem:[%s217 + $0x70] sm:$0xff]
        %v5399 = vld [vmem:[%s217 + $0x78] sm:$0xff]
        %v5400 = vpack.c.bf16 %v324, %v323
        %v5401 = vpack.c.bf16 %v326, %v325
        %v5402 = vpack.c.bf16 %v328, %v327
        %v5403 = vpack.c.bf16 %v330, %v329
        %v5404 = vpack.c.bf16 %v332, %v331
        %v5405 = vpack.c.bf16 %v334, %v333
        %v5406 = vpack.c.bf16 %v336, %v335
        %v5407 = vpack.c.bf16 %v338, %v337
        %s5408 = scalar_lea.vmem %s1, 480
        %v5409 = vld [vmem:[%s5408] sm:$0xf]
        %v5410 = vld [vmem:[%s5408 + $0x4] sm:$0xf]
        %v5411 = vld [vmem:[%s5408 + $0x8] sm:$0xf]
        %v5412 = vld [vmem:[%s5408 + $0xc] sm:$0xf]
        %v5413 = vld [vmem:[%s5408 + $0x10] sm:$0xf]
        %v5414 = vld [vmem:[%s5408 + $0x14] sm:$0xf]
        %v5415 = vld [vmem:[%s5408 + $0x18] sm:$0xf]
        %v5416 = vld [vmem:[%s5408 + $0x1c] sm:$0xf]
        %v5425 = vunpack.c.l.b16 %v5409
        %v5426 = vunpack.c.l.b16 %v5410
        %v5427 = vunpack.c.l.b16 %v5411
        %v5428 = vunpack.c.l.b16 %v5412
        %v5429 = vunpack.c.l.b16 %v5413
        %v5430 = vunpack.c.l.b16 %v5414
        %v5431 = vunpack.c.l.b16 %v5415
        %v5432 = vunpack.c.l.b16 %v5416
        %v5433 = vpack.c.b16 %v5426, %v5425
        %v5434 = vpack.c.b16 %v5428, %v5427
        %v5435 = vpack.c.b16 %v5430, %v5429
        %v5436 = vpack.c.b16 %v5432, %v5431
        %v5442 = vsel %vm526, %v5400, 0
        %v5445 = vsel %vm526, %v5401, 0
        %v5448 = vsel %vm526, %v5402, 0
        %v5451 = vsel %vm526, %v5403, 0
        %v5454 = vsel %vm526, %v5404, 0
        %v5457 = vsel %vm526, %v5405, 0
        %v5460 = vsel %vm526, %v5406, 0
        %v5463 = vsel %vm526, %v5407, 0
        %5465 = vmatprep.subr.bf16.mxu0 0
        %5466 = vmatpush1.bf16.msra.mxu0 0
        %5467 = vmatprep.subr.bf16.mxu0 0
        %5468 = vmatpush1.bf16.msra.mxu0 0
        %5469 = vmatprep.subr.bf16.mxu0 0
        %5470 = vmatpush1.bf16.msra.mxu0 0
        %5471 = vmatprep.subr.bf16.mxu0 0
        %5472 = vmatpush1.bf16.msra.mxu0 0
        %5473 = vmatprep.subr.bf16.mxu0 0
        %5474 = vmatpush1.bf16.msra.mxu0 %v5436
        %5475 = vmatprep.subr.bf16.mxu0 0
        %5476 = vmatpush1.bf16.msra.mxu0 %v5435
        %5477 = vmatprep.subr.bf16.mxu0 0
        %5478 = vmatpush1.bf16.msra.mxu0 %v5434
        %5479 = vmatprep.subr.bf16.mxu0 0
        %5480 = vmatpush1.bf16.msra.mxu0 %v5433
        %5481 = vmatprep.subr.bf16.mxu0 0
        %5482 = vmatpush2.bf16.msra.mxu0 0
        %5483 = vmatprep.subr.bf16.mxu0 0
        %5484 = vmatpush2.bf16.msra.mxu0 0
        %5485 = vmatprep.subr.bf16.mxu0 0
        %5486 = vmatpush2.bf16.msra.mxu0 0
        %5487 = vmatprep.subr.bf16.mxu0 0
        %5488 = vmatpush2.bf16.msra.mxu0 0
        %5489 = vmatprep.subr.bf16.mxu0 0
        %5490 = vmatpush2.bf16.msra.mxu0 0
        %5491 = vmatprep.subr.bf16.mxu0 0
        %5492 = vmatpush2.bf16.msra.mxu0 0
        %5493 = vmatprep.subr.bf16.mxu0 0
        %5494 = vmatpush2.bf16.msra.mxu0 0
        %5495 = vmatprep.subr.bf16.mxu0 0
        %5496 = vmatpush2.bf16.msra.mxu0 0
        %5497 = vmatprep.mubr.bf16.mxu0 0
        %5498 = vmatmul.mubr.bf16.gmra.mxu0 %v5442
        %v5499 = vpop.f32.mrf.mxu0
        %v5500 = vadd.f32 0.0, %v5499
        %v5501 = vpop.f32.mrf.mxu0
        %v5502 = vpop.f32.mrf.mxu0
        %v5503 = vadd.f32 0.0, %v5502
        %v5504 = vpop.f32.mrf.mxu0
        %5505 = vmatprep.mubr.bf16.mxu0 0
        %5506 = vmatmul.mubr.bf16.gmra.mxu0 %v5445
        %v5507 = vpop.f32.mrf.mxu0
        %v5508 = vadd.f32 0.0, %v5507
        %v5509 = vpop.f32.mrf.mxu0
        %v5510 = vpop.f32.mrf.mxu0
        %v5511 = vadd.f32 0.0, %v5510
        %v5512 = vpop.f32.mrf.mxu0
        %5513 = vmatprep.mubr.bf16.mxu0 0
        %5514 = vmatmul.mubr.bf16.gmra.mxu0 %v5448
        %v5515 = vpop.f32.mrf.mxu0
        %v5516 = vadd.f32 0.0, %v5515
        %v5517 = vpop.f32.mrf.mxu0
        %v5518 = vpop.f32.mrf.mxu0
        %v5519 = vadd.f32 0.0, %v5518
        %v5520 = vpop.f32.mrf.mxu0
        %5521 = vmatprep.mubr.bf16.mxu0 0
        %5522 = vmatmul.mubr.bf16.gmra.mxu0 %v5451
        %v5523 = vpop.f32.mrf.mxu0
        %v5524 = vadd.f32 0.0, %v5523
        %v5525 = vpop.f32.mrf.mxu0
        %v5526 = vpop.f32.mrf.mxu0
        %v5527 = vadd.f32 0.0, %v5526
        %v5528 = vpop.f32.mrf.mxu0
        %5529 = vmatprep.mubr.bf16.mxu0 0
        %5530 = vmatmul.mubr.bf16.gmra.mxu0 %v5454
        %v5531 = vpop.f32.mrf.mxu0
        %v5532 = vadd.f32 0.0, %v5531
        %v5533 = vpop.f32.mrf.mxu0
        %v5534 = vpop.f32.mrf.mxu0
        %v5535 = vadd.f32 0.0, %v5534
        %v5536 = vpop.f32.mrf.mxu0
        %5537 = vmatprep.mubr.bf16.mxu0 0
        %5538 = vmatmul.mubr.bf16.gmra.mxu0 %v5457
        %v5539 = vpop.f32.mrf.mxu0
        %v5540 = vadd.f32 0.0, %v5539
        %v5541 = vpop.f32.mrf.mxu0
        %v5542 = vpop.f32.mrf.mxu0
        %v5543 = vadd.f32 0.0, %v5542
        %v5544 = vpop.f32.mrf.mxu0
        %5545 = vmatprep.mubr.bf16.mxu0 0
        %5546 = vmatmul.mubr.bf16.gmra.mxu0 %v5460
        %v5547 = vpop.f32.mrf.mxu0
        %v5548 = vadd.f32 0.0, %v5547
        %v5549 = vpop.f32.mrf.mxu0
        %v5550 = vpop.f32.mrf.mxu0
        %v5551 = vadd.f32 0.0, %v5550
        %v5552 = vpop.f32.mrf.mxu0
        %5553 = vmatprep.mubr.bf16.mxu0 0
        %5554 = vmatmul.mubr.bf16.gmra.mxu0 %v5463
        %v5555 = vpop.f32.mrf.mxu0
        %v5556 = vadd.f32 0.0, %v5555
        %v5557 = vpop.f32.mrf.mxu0
        %v5558 = vpop.f32.mrf.mxu0
        %v5559 = vadd.f32 0.0, %v5558
        %v5560 = vpop.f32.mrf.mxu0
        %5561 = vdwg.mxu0
        %v5562 = vadd.f32 %v5384, %v5500
        %v5563 = vadd.f32 %v5385, %v5503
        %v5564 = vadd.f32 %v5386, %v5508
        %v5565 = vadd.f32 %v5387, %v5511
        %v5566 = vadd.f32 %v5388, %v5516
        %v5567 = vadd.f32 %v5389, %v5519
        %v5568 = vadd.f32 %v5390, %v5524
        %v5569 = vadd.f32 %v5391, %v5527
        %v5570 = vadd.f32 %v5392, %v5532
        %v5571 = vadd.f32 %v5393, %v5535
        %v5572 = vadd.f32 %v5394, %v5540
        %v5573 = vadd.f32 %v5395, %v5543
        %v5574 = vadd.f32 %v5396, %v5548
        %v5575 = vadd.f32 %v5397, %v5551
        %v5576 = vadd.f32 %v5398, %v5556
        %v5577 = vadd.f32 %v5399, %v5559
        %5578 = vst [vmem:[%s217] sm:$0xff] %v5562
        %5579 = vst [vmem:[%s217 + $0x8] sm:$0xff] %v5563
        %5580 = vst [vmem:[%s217 + $0x10] sm:$0xff] %v5564
        %5581 = vst [vmem:[%s217 + $0x18] sm:$0xff] %v5565
        %5582 = vst [vmem:[%s217 + $0x20] sm:$0xff] %v5566
        %5583 = vst [vmem:[%s217 + $0x28] sm:$0xff] %v5567
        %5584 = vst [vmem:[%s217 + $0x30] sm:$0xff] %v5568
        %5585 = vst [vmem:[%s217 + $0x38] sm:$0xff] %v5569
        %5586 = vst [vmem:[%s217 + $0x40] sm:$0xff] %v5570
        %5587 = vst [vmem:[%s217 + $0x48] sm:$0xff] %v5571
        %5588 = vst [vmem:[%s217 + $0x50] sm:$0xff] %v5572
        %5589 = vst [vmem:[%s217 + $0x58] sm:$0xff] %v5573
        %5590 = vst [vmem:[%s217 + $0x60] sm:$0xff] %v5574
        %5591 = vst [vmem:[%s217 + $0x68] sm:$0xff] %v5575
        %5592 = vst [vmem:[%s217 + $0x70] sm:$0xff] %v5576
        %5593 = vst [vmem:[%s217 + $0x78] sm:$0xff] %v5577
        %v5594 = vld [vmem:[%s217] sm:$0xff]
        %v5595 = vld [vmem:[%s217 + $0x8] sm:$0xff]
        %v5596 = vld [vmem:[%s217 + $0x10] sm:$0xff]
        %v5597 = vld [vmem:[%s217 + $0x18] sm:$0xff]
        %v5598 = vld [vmem:[%s217 + $0x20] sm:$0xff]
        %v5599 = vld [vmem:[%s217 + $0x28] sm:$0xff]
        %v5600 = vld [vmem:[%s217 + $0x30] sm:$0xff]
        %v5601 = vld [vmem:[%s217 + $0x38] sm:$0xff]
        %v5602 = vld [vmem:[%s217 + $0x40] sm:$0xff]
        %v5603 = vld [vmem:[%s217 + $0x48] sm:$0xff]
        %v5604 = vld [vmem:[%s217 + $0x50] sm:$0xff]
        %v5605 = vld [vmem:[%s217 + $0x58] sm:$0xff]
        %v5606 = vld [vmem:[%s217 + $0x60] sm:$0xff]
        %v5607 = vld [vmem:[%s217 + $0x68] sm:$0xff]
        %v5608 = vld [vmem:[%s217 + $0x70] sm:$0xff]
        %v5609 = vld [vmem:[%s217 + $0x78] sm:$0xff]
        %s5610 = scalar_lea.vmem %s2, 2048
        %v5611 = vld [vmem:[%s5610] sm:$0xff]
        %v5612 = vld [vmem:[%s5610 + $0x8] sm:$0xff]
        %v5613 = vld [vmem:[%s5610 + $0x10] sm:$0xff]
        %v5614 = vld [vmem:[%s5610 + $0x18] sm:$0xff]
        %v5615 = vld [vmem:[%s5610 + $0x20] sm:$0xff]
        %v5616 = vld [vmem:[%s5610 + $0x28] sm:$0xff]
        %v5617 = vld [vmem:[%s5610 + $0x30] sm:$0xff]
        %v5618 = vld [vmem:[%s5610 + $0x38] sm:$0xff]
        %v5619 = vld [vmem:[%s5610 + $0x40] sm:$0xff]
        %v5620 = vld [vmem:[%s5610 + $0x48] sm:$0xff]
        %v5621 = vld [vmem:[%s5610 + $0x50] sm:$0xff]
        %v5622 = vld [vmem:[%s5610 + $0x58] sm:$0xff]
        %v5623 = vld [vmem:[%s5610 + $0x60] sm:$0xff]
        %v5624 = vld [vmem:[%s5610 + $0x68] sm:$0xff]
        %v5625 = vld [vmem:[%s5610 + $0x70] sm:$0xff]
        %v5626 = vld [vmem:[%s5610 + $0x78] sm:$0xff]
        %5628 = vset.pattern.permute.xlu0 0
        %5629 = vperm.xlu0 %5628, %v5611
        %v5630 = vpop.permute.xlu0 %5629
        %5633 = vset.pattern.permute.xlu0 0
        %5634 = vperm.xlu0 %5633, %v5612
        %v5635 = vpop.permute.xlu0 %5634
        %5638 = vset.pattern.permute.xlu0 0
        %5639 = vperm.xlu0 %5638, %v5613
        %v5640 = vpop.permute.xlu0 %5639
        %5643 = vset.pattern.permute.xlu0 0
        %5644 = vperm.xlu0 %5643, %v5614
        %v5645 = vpop.permute.xlu0 %5644
        %5648 = vset.pattern.permute.xlu0 0
        %5649 = vperm.xlu0 %5648, %v5615
        %v5650 = vpop.permute.xlu0 %5649
        %5653 = vset.pattern.permute.xlu0 0
        %5654 = vperm.xlu0 %5653, %v5616
        %v5655 = vpop.permute.xlu0 %5654
        %5658 = vset.pattern.permute.xlu0 0
        %5659 = vperm.xlu0 %5658, %v5617
        %v5660 = vpop.permute.xlu0 %5659
        %5663 = vset.pattern.permute.xlu0 0
        %5664 = vperm.xlu0 %5663, %v5618
        %v5665 = vpop.permute.xlu0 %5664
        %5668 = vset.pattern.permute.xlu0 0
        %5669 = vperm.xlu0 %5668, %v5619
        %v5670 = vpop.permute.xlu0 %5669
        %5673 = vset.pattern.permute.xlu0 0
        %5674 = vperm.xlu0 %5673, %v5620
        %v5675 = vpop.permute.xlu0 %5674
        %5678 = vset.pattern.permute.xlu0 0
        %5679 = vperm.xlu0 %5678, %v5621
        %v5680 = vpop.permute.xlu0 %5679
        %5683 = vset.pattern.permute.xlu0 0
        %5684 = vperm.xlu0 %5683, %v5622
        %v5685 = vpop.permute.xlu0 %5684
        %5688 = vset.pattern.permute.xlu0 0
        %5689 = vperm.xlu0 %5688, %v5623
        %v5690 = vpop.permute.xlu0 %5689
        %5693 = vset.pattern.permute.xlu0 0
        %5694 = vperm.xlu0 %5693, %v5624
        %v5695 = vpop.permute.xlu0 %5694
        %5698 = vset.pattern.permute.xlu0 0
        %5699 = vperm.xlu0 %5698, %v5625
        %v5700 = vpop.permute.xlu0 %5699
        %5703 = vset.pattern.permute.xlu0 0
        %5704 = vperm.xlu0 %5703, %v5626
        %v5705 = vpop.permute.xlu0 %5704
        %v5707 = vmul.f32 %v372, %v5630
        %v5708 = vmul.f32 %v371, %v5635
        %v5709 = vmul.f32 %v370, %v5640
        %v5710 = vmul.f32 %v369, %v5645
        %v5711 = vmul.f32 %v368, %v5650
        %v5712 = vmul.f32 %v367, %v5655
        %v5713 = vmul.f32 %v366, %v5660
        %v5714 = vmul.f32 %v365, %v5665
        %v5715 = vmul.f32 %v364, %v5670
        %v5716 = vmul.f32 %v363, %v5675
        %v5717 = vmul.f32 %v362, %v5680
        %v5718 = vmul.f32 %v361, %v5685
        %v5719 = vmul.f32 %v360, %v5690
        %v5720 = vmul.f32 %v359, %v5695
        %v5721 = vmul.f32 %v358, %v5700
        %v5722 = vmul.f32 %v373, %v5705
        %v5723 = vpack.c.bf16 %v5708, %v5707
        %v5724 = vpack.c.bf16 %v5710, %v5709
        %v5725 = vpack.c.bf16 %v5712, %v5711
        %v5726 = vpack.c.bf16 %v5714, %v5713
        %v5727 = vpack.c.bf16 %v5716, %v5715
        %v5728 = vpack.c.bf16 %v5718, %v5717
        %v5729 = vpack.c.bf16 %v5720, %v5719
        %v5730 = vpack.c.bf16 %v5722, %v5721
        %s5731 = scalar_lea.vmem %s1, 512
        %v5732 = vld [vmem:[%s5731] sm:$0xf]
        %v5733 = vld [vmem:[%s5731 + $0x4] sm:$0xf]
        %v5734 = vld [vmem:[%s5731 + $0x8] sm:$0xf]
        %v5735 = vld [vmem:[%s5731 + $0xc] sm:$0xf]
        %v5736 = vld [vmem:[%s5731 + $0x10] sm:$0xf]
        %v5737 = vld [vmem:[%s5731 + $0x14] sm:$0xf]
        %v5738 = vld [vmem:[%s5731 + $0x18] sm:$0xf]
        %v5739 = vld [vmem:[%s5731 + $0x1c] sm:$0xf]
        %v5748 = vunpack.c.l.b16 %v5732
        %v5749 = vunpack.c.l.b16 %v5733
        %v5750 = vunpack.c.l.b16 %v5734
        %v5751 = vunpack.c.l.b16 %v5735
        %v5752 = vunpack.c.l.b16 %v5736
        %v5753 = vunpack.c.l.b16 %v5737
        %v5754 = vunpack.c.l.b16 %v5738
        %v5755 = vunpack.c.l.b16 %v5739
        %v5756 = vpack.c.b16 %v5749, %v5748
        %v5757 = vpack.c.b16 %v5751, %v5750
        %v5758 = vpack.c.b16 %v5753, %v5752
        %v5759 = vpack.c.b16 %v5755, %v5754
        %v5765 = vsel %vm526, %v5723, 0
        %v5768 = vsel %vm526, %v5724, 0
        %v5771 = vsel %vm526, %v5725, 0
        %v5774 = vsel %vm526, %v5726, 0
        %v5777 = vsel %vm526, %v5727, 0
        %v5780 = vsel %vm526, %v5728, 0
        %v5783 = vsel %vm526, %v5729, 0
        %v5786 = vsel %vm526, %v5730, 0
        %5788 = vmatprep.subr.bf16.mxu0 0
        %5789 = vmatpush1.bf16.msra.mxu0 0
        %5790 = vmatprep.subr.bf16.mxu0 0
        %5791 = vmatpush1.bf16.msra.mxu0 0
        %5792 = vmatprep.subr.bf16.mxu0 0
        %5793 = vmatpush1.bf16.msra.mxu0 0
        %5794 = vmatprep.subr.bf16.mxu0 0
        %5795 = vmatpush1.bf16.msra.mxu0 0
        %5796 = vmatprep.subr.bf16.mxu0 0
        %5797 = vmatpush1.bf16.msra.mxu0 %v5759
        %5798 = vmatprep.subr.bf16.mxu0 0
        %5799 = vmatpush1.bf16.msra.mxu0 %v5758
        %5800 = vmatprep.subr.bf16.mxu0 0
        %5801 = vmatpush1.bf16.msra.mxu0 %v5757
        %5802 = vmatprep.subr.bf16.mxu0 0
        %5803 = vmatpush1.bf16.msra.mxu0 %v5756
        %5804 = vmatprep.subr.bf16.mxu0 0
        %5805 = vmatpush2.bf16.msra.mxu0 0
        %5806 = vmatprep.subr.bf16.mxu0 0
        %5807 = vmatpush2.bf16.msra.mxu0 0
        %5808 = vmatprep.subr.bf16.mxu0 0
        %5809 = vmatpush2.bf16.msra.mxu0 0
        %5810 = vmatprep.subr.bf16.mxu0 0
        %5811 = vmatpush2.bf16.msra.mxu0 0
        %5812 = vmatprep.subr.bf16.mxu0 0
        %5813 = vmatpush2.bf16.msra.mxu0 0
        %5814 = vmatprep.subr.bf16.mxu0 0
        %5815 = vmatpush2.bf16.msra.mxu0 0
        %5816 = vmatprep.subr.bf16.mxu0 0
        %5817 = vmatpush2.bf16.msra.mxu0 0
        %5818 = vmatprep.subr.bf16.mxu0 0
        %5819 = vmatpush2.bf16.msra.mxu0 0
        %5820 = vmatprep.mubr.bf16.mxu0 0
        %5821 = vmatmul.mubr.bf16.gmra.mxu0 %v5765
        %v5822 = vpop.f32.mrf.mxu0
        %v5823 = vadd.f32 0.0, %v5822
        %v5824 = vpop.f32.mrf.mxu0
        %v5825 = vpop.f32.mrf.mxu0
        %v5826 = vadd.f32 0.0, %v5825
        %v5827 = vpop.f32.mrf.mxu0
        %5828 = vmatprep.mubr.bf16.mxu0 0
        %5829 = vmatmul.mubr.bf16.gmra.mxu0 %v5768
        %v5830 = vpop.f32.mrf.mxu0
        %v5831 = vadd.f32 0.0, %v5830
        %v5832 = vpop.f32.mrf.mxu0
        %v5833 = vpop.f32.mrf.mxu0
        %v5834 = vadd.f32 0.0, %v5833
        %v5835 = vpop.f32.mrf.mxu0
        %5836 = vmatprep.mubr.bf16.mxu0 0
        %5837 = vmatmul.mubr.bf16.gmra.mxu0 %v5771
        %v5838 = vpop.f32.mrf.mxu0
        %v5839 = vadd.f32 0.0, %v5838
        %v5840 = vpop.f32.mrf.mxu0
        %v5841 = vpop.f32.mrf.mxu0
        %v5842 = vadd.f32 0.0, %v5841
        %v5843 = vpop.f32.mrf.mxu0
        %5844 = vmatprep.mubr.bf16.mxu0 0
        %5845 = vmatmul.mubr.bf16.gmra.mxu0 %v5774
        %v5846 = vpop.f32.mrf.mxu0
        %v5847 = vadd.f32 0.0, %v5846
        %v5848 = vpop.f32.mrf.mxu0
        %v5849 = vpop.f32.mrf.mxu0
        %v5850 = vadd.f32 0.0, %v5849
        %v5851 = vpop.f32.mrf.mxu0
        %5852 = vmatprep.mubr.bf16.mxu0 0
        %5853 = vmatmul.mubr.bf16.gmra.mxu0 %v5777
        %v5854 = vpop.f32.mrf.mxu0
        %v5855 = vadd.f32 0.0, %v5854
        %v5856 = vpop.f32.mrf.mxu0
        %v5857 = vpop.f32.mrf.mxu0
        %v5858 = vadd.f32 0.0, %v5857
        %v5859 = vpop.f32.mrf.mxu0
        %5860 = vmatprep.mubr.bf16.mxu0 0
        %5861 = vmatmul.mubr.bf16.gmra.mxu0 %v5780
        %v5862 = vpop.f32.mrf.mxu0
        %v5863 = vadd.f32 0.0, %v5862
        %v5864 = vpop.f32.mrf.mxu0
        %v5865 = vpop.f32.mrf.mxu0
        %v5866 = vadd.f32 0.0, %v5865
        %v5867 = vpop.f32.mrf.mxu0
        %5868 = vmatprep.mubr.bf16.mxu0 0
        %5869 = vmatmul.mubr.bf16.gmra.mxu0 %v5783
        %v5870 = vpop.f32.mrf.mxu0
        %v5871 = vadd.f32 0.0, %v5870
        %v5872 = vpop.f32.mrf.mxu0
        %v5873 = vpop.f32.mrf.mxu0
        %v5874 = vadd.f32 0.0, %v5873
        %v5875 = vpop.f32.mrf.mxu0
        %5876 = vmatprep.mubr.bf16.mxu0 0
        %5877 = vmatmul.mubr.bf16.gmra.mxu0 %v5786
        %v5878 = vpop.f32.mrf.mxu0
        %v5879 = vadd.f32 0.0, %v5878
        %v5880 = vpop.f32.mrf.mxu0
        %v5881 = vpop.f32.mrf.mxu0
        %v5882 = vadd.f32 0.0, %v5881
        %v5883 = vpop.f32.mrf.mxu0
        %5884 = vdwg.mxu0
        %v5885 = vadd.f32 %v5594, %v5823
        %v5886 = vadd.f32 %v5595, %v5826
        %v5887 = vadd.f32 %v5596, %v5831
        %v5888 = vadd.f32 %v5597, %v5834
        %v5889 = vadd.f32 %v5598, %v5839
        %v5890 = vadd.f32 %v5599, %v5842
        %v5891 = vadd.f32 %v5600, %v5847
        %v5892 = vadd.f32 %v5601, %v5850
        %v5893 = vadd.f32 %v5602, %v5855
        %v5894 = vadd.f32 %v5603, %v5858
        %v5895 = vadd.f32 %v5604, %v5863
        %v5896 = vadd.f32 %v5605, %v5866
        %v5897 = vadd.f32 %v5606, %v5871
        %v5898 = vadd.f32 %v5607, %v5874
        %v5899 = vadd.f32 %v5608, %v5879
        %v5900 = vadd.f32 %v5609, %v5882
        %5901 = vst [vmem:[%s217] sm:$0xff] %v5885
        %5902 = vst [vmem:[%s217 + $0x8] sm:$0xff] %v5886
        %5903 = vst [vmem:[%s217 + $0x10] sm:$0xff] %v5887
        %5904 = vst [vmem:[%s217 + $0x18] sm:$0xff] %v5888
        %5905 = vst [vmem:[%s217 + $0x20] sm:$0xff] %v5889
        %5906 = vst [vmem:[%s217 + $0x28] sm:$0xff] %v5890
        %5907 = vst [vmem:[%s217 + $0x30] sm:$0xff] %v5891
        %5908 = vst [vmem:[%s217 + $0x38] sm:$0xff] %v5892
        %5909 = vst [vmem:[%s217 + $0x40] sm:$0xff] %v5893
        %5910 = vst [vmem:[%s217 + $0x48] sm:$0xff] %v5894
        %5911 = vst [vmem:[%s217 + $0x50] sm:$0xff] %v5895
        %5912 = vst [vmem:[%s217 + $0x58] sm:$0xff] %v5896
        %5913 = vst [vmem:[%s217 + $0x60] sm:$0xff] %v5897
        %5914 = vst [vmem:[%s217 + $0x68] sm:$0xff] %v5898
        %5915 = vst [vmem:[%s217 + $0x70] sm:$0xff] %v5899
        %5916 = vst [vmem:[%s217 + $0x78] sm:$0xff] %v5900
        %v5917 = vld [vmem:[%s217] sm:$0xff]
        %v5918 = vld [vmem:[%s217 + $0x8] sm:$0xff]
        %v5919 = vld [vmem:[%s217 + $0x10] sm:$0xff]
        %v5920 = vld [vmem:[%s217 + $0x18] sm:$0xff]
        %v5921 = vld [vmem:[%s217 + $0x20] sm:$0xff]
        %v5922 = vld [vmem:[%s217 + $0x28] sm:$0xff]
        %v5923 = vld [vmem:[%s217 + $0x30] sm:$0xff]
        %v5924 = vld [vmem:[%s217 + $0x38] sm:$0xff]
        %v5925 = vld [vmem:[%s217 + $0x40] sm:$0xff]
        %v5926 = vld [vmem:[%s217 + $0x48] sm:$0xff]
        %v5927 = vld [vmem:[%s217 + $0x50] sm:$0xff]
        %v5928 = vld [vmem:[%s217 + $0x58] sm:$0xff]
        %v5929 = vld [vmem:[%s217 + $0x60] sm:$0xff]
        %v5930 = vld [vmem:[%s217 + $0x68] sm:$0xff]
        %v5931 = vld [vmem:[%s217 + $0x70] sm:$0xff]
        %v5932 = vld [vmem:[%s217 + $0x78] sm:$0xff]
        %s5933 = scalar_lea.vmem %s2, 2176
        %v5934 = vld [vmem:[%s5933] sm:$0xff]
        %v5935 = vld [vmem:[%s5933 + $0x8] sm:$0xff]
        %v5936 = vld [vmem:[%s5933 + $0x10] sm:$0xff]
        %v5937 = vld [vmem:[%s5933 + $0x18] sm:$0xff]
        %v5938 = vld [vmem:[%s5933 + $0x20] sm:$0xff]
        %v5939 = vld [vmem:[%s5933 + $0x28] sm:$0xff]
        %v5940 = vld [vmem:[%s5933 + $0x30] sm:$0xff]
        %v5941 = vld [vmem:[%s5933 + $0x38] sm:$0xff]
        %v5942 = vld [vmem:[%s5933 + $0x40] sm:$0xff]
        %v5943 = vld [vmem:[%s5933 + $0x48] sm:$0xff]
        %v5944 = vld [vmem:[%s5933 + $0x50] sm:$0xff]
        %v5945 = vld [vmem:[%s5933 + $0x58] sm:$0xff]
        %v5946 = vld [vmem:[%s5933 + $0x60] sm:$0xff]
        %v5947 = vld [vmem:[%s5933 + $0x68] sm:$0xff]
        %v5948 = vld [vmem:[%s5933 + $0x70] sm:$0xff]
        %v5949 = vld [vmem:[%s5933 + $0x78] sm:$0xff]
        %5951 = vset.pattern.permute.xlu0 0
        %5952 = vperm.xlu0 %5951, %v5934
        %v5953 = vpop.permute.xlu0 %5952
        %5956 = vset.pattern.permute.xlu0 0
        %5957 = vperm.xlu0 %5956, %v5935
        %v5958 = vpop.permute.xlu0 %5957
        %5961 = vset.pattern.permute.xlu0 0
        %5962 = vperm.xlu0 %5961, %v5936
        %v5963 = vpop.permute.xlu0 %5962
        %5966 = vset.pattern.permute.xlu0 0
        %5967 = vperm.xlu0 %5966, %v5937
        %v5968 = vpop.permute.xlu0 %5967
        %5971 = vset.pattern.permute.xlu0 0
        %5972 = vperm.xlu0 %5971, %v5938
        %v5973 = vpop.permute.xlu0 %5972
        %5976 = vset.pattern.permute.xlu0 0
        %5977 = vperm.xlu0 %5976, %v5939
        %v5978 = vpop.permute.xlu0 %5977
        %5981 = vset.pattern.permute.xlu0 0
        %5982 = vperm.xlu0 %5981, %v5940
        %v5983 = vpop.permute.xlu0 %5982
        %5986 = vset.pattern.permute.xlu0 0
        %5987 = vperm.xlu0 %5986, %v5941
        %v5988 = vpop.permute.xlu0 %5987
        %5991 = vset.pattern.permute.xlu0 0
        %5992 = vperm.xlu0 %5991, %v5942
        %v5993 = vpop.permute.xlu0 %5992
        %5996 = vset.pattern.permute.xlu0 0
        %5997 = vperm.xlu0 %5996, %v5943
        %v5998 = vpop.permute.xlu0 %5997
        %6001 = vset.pattern.permute.xlu0 0
        %6002 = vperm.xlu0 %6001, %v5944
        %v6003 = vpop.permute.xlu0 %6002
        %6006 = vset.pattern.permute.xlu0 0
        %6007 = vperm.xlu0 %6006, %v5945
        %v6008 = vpop.permute.xlu0 %6007
        %6011 = vset.pattern.permute.xlu0 0
        %6012 = vperm.xlu0 %6011, %v5946
        %v6013 = vpop.permute.xlu0 %6012
        %6016 = vset.pattern.permute.xlu0 0
        %6017 = vperm.xlu0 %6016, %v5947
        %v6018 = vpop.permute.xlu0 %6017
        %6021 = vset.pattern.permute.xlu0 0
        %6022 = vperm.xlu0 %6021, %v5948
        %v6023 = vpop.permute.xlu0 %6022
        %6026 = vset.pattern.permute.xlu0 0
        %6027 = vperm.xlu0 %6026, %v5949
        %v6028 = vpop.permute.xlu0 %6027
        %v6030 = vmul.f32 %v711, %v5953
        %v6031 = vmul.f32 %v710, %v5958
        %v6032 = vmul.f32 %v709, %v5963
        %v6033 = vmul.f32 %v708, %v5968
        %v6034 = vmul.f32 %v707, %v5973
        %v6035 = vmul.f32 %v706, %v5978
        %v6036 = vmul.f32 %v705, %v5983
        %v6037 = vmul.f32 %v704, %v5988
        %v6038 = vmul.f32 %v703, %v5993
        %v6039 = vmul.f32 %v702, %v5998
        %v6040 = vmul.f32 %v701, %v6003
        %v6041 = vmul.f32 %v700, %v6008
        %v6042 = vmul.f32 %v699, %v6013
        %v6043 = vmul.f32 %v698, %v6018
        %v6044 = vmul.f32 %v697, %v6023
        %v6045 = vmul.f32 %v712, %v6028
        %v6046 = vpack.c.bf16 %v6031, %v6030
        %v6047 = vpack.c.bf16 %v6033, %v6032
        %v6048 = vpack.c.bf16 %v6035, %v6034
        %v6049 = vpack.c.bf16 %v6037, %v6036
        %v6050 = vpack.c.bf16 %v6039, %v6038
        %v6051 = vpack.c.bf16 %v6041, %v6040
        %v6052 = vpack.c.bf16 %v6043, %v6042
        %v6053 = vpack.c.bf16 %v6045, %v6044
        %s6054 = scalar_lea.vmem %s1, 544
        %v6055 = vld [vmem:[%s6054] sm:$0xf]
        %v6056 = vld [vmem:[%s6054 + $0x4] sm:$0xf]
        %v6057 = vld [vmem:[%s6054 + $0x8] sm:$0xf]
        %v6058 = vld [vmem:[%s6054 + $0xc] sm:$0xf]
        %v6059 = vld [vmem:[%s6054 + $0x10] sm:$0xf]
        %v6060 = vld [vmem:[%s6054 + $0x14] sm:$0xf]
        %v6061 = vld [vmem:[%s6054 + $0x18] sm:$0xf]
        %v6062 = vld [vmem:[%s6054 + $0x1c] sm:$0xf]
        %v6071 = vunpack.c.l.b16 %v6055
        %v6072 = vunpack.c.l.b16 %v6056
        %v6073 = vunpack.c.l.b16 %v6057
        %v6074 = vunpack.c.l.b16 %v6058
        %v6075 = vunpack.c.l.b16 %v6059
        %v6076 = vunpack.c.l.b16 %v6060
        %v6077 = vunpack.c.l.b16 %v6061
        %v6078 = vunpack.c.l.b16 %v6062
        %v6079 = vpack.c.b16 %v6072, %v6071
        %v6080 = vpack.c.b16 %v6074, %v6073
        %v6081 = vpack.c.b16 %v6076, %v6075
        %v6082 = vpack.c.b16 %v6078, %v6077
        %v6088 = vsel %vm526, %v6046, 0
        %v6091 = vsel %vm526, %v6047, 0
        %v6094 = vsel %vm526, %v6048, 0
        %v6097 = vsel %vm526, %v6049, 0
        %v6100 = vsel %vm526, %v6050, 0
        %v6103 = vsel %vm526, %v6051, 0
        %v6106 = vsel %vm526, %v6052, 0
        %v6109 = vsel %vm526, %v6053, 0
        %6111 = vmatprep.subr.bf16.mxu0 0
        %6112 = vmatpush1.bf16.msra.mxu0 0
        %6113 = vmatprep.subr.bf16.mxu0 0
        %6114 = vmatpush1.bf16.msra.mxu0 0
        %6115 = vmatprep.subr.bf16.mxu0 0
        %6116 = vmatpush1.bf16.msra.mxu0 0
        %6117 = vmatprep.subr.bf16.mxu0 0
        %6118 = vmatpush1.bf16.msra.mxu0 0
        %6119 = vmatprep.subr.bf16.mxu0 0
        %6120 = vmatpush1.bf16.msra.mxu0 %v6082
        %6121 = vmatprep.subr.bf16.mxu0 0
        %6122 = vmatpush1.bf16.msra.mxu0 %v6081
        %6123 = vmatprep.subr.bf16.mxu0 0
        %6124 = vmatpush1.bf16.msra.mxu0 %v6080
        %6125 = vmatprep.subr.bf16.mxu0 0
        %6126 = vmatpush1.bf16.msra.mxu0 %v6079
        %6127 = vmatprep.subr.bf16.mxu0 0
        %6128 = vmatpush2.bf16.msra.mxu0 0
        %6129 = vmatprep.subr.bf16.mxu0 0
        %6130 = vmatpush2.bf16.msra.mxu0 0
        %6131 = vmatprep.subr.bf16.mxu0 0
        %6132 = vmatpush2.bf16.msra.mxu0 0
        %6133 = vmatprep.subr.bf16.mxu0 0
        %6134 = vmatpush2.bf16.msra.mxu0 0
        %6135 = vmatprep.subr.bf16.mxu0 0
        %6136 = vmatpush2.bf16.msra.mxu0 0
        %6137 = vmatprep.subr.bf16.mxu0 0
        %6138 = vmatpush2.bf16.msra.mxu0 0
        %6139 = vmatprep.subr.bf16.mxu0 0
        %6140 = vmatpush2.bf16.msra.mxu0 0
        %6141 = vmatprep.subr.bf16.mxu0 0
        %6142 = vmatpush2.bf16.msra.mxu0 0
        %6143 = vmatprep.mubr.bf16.mxu0 0
        %6144 = vmatmul.mubr.bf16.gmra.mxu0 %v6088
        %v6145 = vpop.f32.mrf.mxu0
        %v6146 = vadd.f32 0.0, %v6145
        %v6147 = vpop.f32.mrf.mxu0
        %v6148 = vpop.f32.mrf.mxu0
        %v6149 = vadd.f32 0.0, %v6148
        %v6150 = vpop.f32.mrf.mxu0
        %6151 = vmatprep.mubr.bf16.mxu0 0
        %6152 = vmatmul.mubr.bf16.gmra.mxu0 %v6091
        %v6153 = vpop.f32.mrf.mxu0
        %v6154 = vadd.f32 0.0, %v6153
        %v6155 = vpop.f32.mrf.mxu0
        %v6156 = vpop.f32.mrf.mxu0
        %v6157 = vadd.f32 0.0, %v6156
        %v6158 = vpop.f32.mrf.mxu0
        %6159 = vmatprep.mubr.bf16.mxu0 0
        %6160 = vmatmul.mubr.bf16.gmra.mxu0 %v6094
        %v6161 = vpop.f32.mrf.mxu0
        %v6162 = vadd.f32 0.0, %v6161
        %v6163 = vpop.f32.mrf.mxu0
        %v6164 = vpop.f32.mrf.mxu0
        %v6165 = vadd.f32 0.0, %v6164
        %v6166 = vpop.f32.mrf.mxu0
        %6167 = vmatprep.mubr.bf16.mxu0 0
        %6168 = vmatmul.mubr.bf16.gmra.mxu0 %v6097
        %v6169 = vpop.f32.mrf.mxu0
        %v6170 = vadd.f32 0.0, %v6169
        %v6171 = vpop.f32.mrf.mxu0
        %v6172 = vpop.f32.mrf.mxu0
        %v6173 = vadd.f32 0.0, %v6172
        %v6174 = vpop.f32.mrf.mxu0
        %6175 = vmatprep.mubr.bf16.mxu0 0
        %6176 = vmatmul.mubr.bf16.gmra.mxu0 %v6100
        %v6177 = vpop.f32.mrf.mxu0
        %v6178 = vadd.f32 0.0, %v6177
        %v6179 = vpop.f32.mrf.mxu0
        %v6180 = vpop.f32.mrf.mxu0
        %v6181 = vadd.f32 0.0, %v6180
        %v6182 = vpop.f32.mrf.mxu0
        %6183 = vmatprep.mubr.bf16.mxu0 0
        %6184 = vmatmul.mubr.bf16.gmra.mxu0 %v6103
        %v6185 = vpop.f32.mrf.mxu0
        %v6186 = vadd.f32 0.0, %v6185
        %v6187 = vpop.f32.mrf.mxu0
        %v6188 = vpop.f32.mrf.mxu0
        %v6189 = vadd.f32 0.0, %v6188
        %v6190 = vpop.f32.mrf.mxu0
        %6191 = vmatprep.mubr.bf16.mxu0 0
        %6192 = vmatmul.mubr.bf16.gmra.mxu0 %v6106
        %v6193 = vpop.f32.mrf.mxu0
        %v6194 = vadd.f32 0.0, %v6193
        %v6195 = vpop.f32.mrf.mxu0
        %v6196 = vpop.f32.mrf.mxu0
        %v6197 = vadd.f32 0.0, %v6196
        %v6198 = vpop.f32.mrf.mxu0
        %6199 = vmatprep.mubr.bf16.mxu0 0
        %6200 = vmatmul.mubr.bf16.gmra.mxu0 %v6109
        %v6201 = vpop.f32.mrf.mxu0
        %v6202 = vadd.f32 0.0, %v6201
        %v6203 = vpop.f32.mrf.mxu0
        %v6204 = vpop.f32.mrf.mxu0
        %v6205 = vadd.f32 0.0, %v6204
        %v6206 = vpop.f32.mrf.mxu0
        %6207 = vdwg.mxu0
        %v6208 = vadd.f32 %v5917, %v6146
        %v6209 = vadd.f32 %v5918, %v6149
        %v6210 = vadd.f32 %v5919, %v6154
        %v6211 = vadd.f32 %v5920, %v6157
        %v6212 = vadd.f32 %v5921, %v6162
        %v6213 = vadd.f32 %v5922, %v6165
        %v6214 = vadd.f32 %v5923, %v6170
        %v6215 = vadd.f32 %v5924, %v6173
        %v6216 = vadd.f32 %v5925, %v6178
        %v6217 = vadd.f32 %v5926, %v6181
        %v6218 = vadd.f32 %v5927, %v6186
        %v6219 = vadd.f32 %v5928, %v6189
        %v6220 = vadd.f32 %v5929, %v6194
        %v6221 = vadd.f32 %v5930, %v6197
        %v6222 = vadd.f32 %v5931, %v6202
        %v6223 = vadd.f32 %v5932, %v6205
        %6224 = vst [vmem:[%s217] sm:$0xff] %v6208
        %6225 = vst [vmem:[%s217 + $0x8] sm:$0xff] %v6209
        %6226 = vst [vmem:[%s217 + $0x10] sm:$0xff] %v6210
        %6227 = vst [vmem:[%s217 + $0x18] sm:$0xff] %v6211
        %6228 = vst [vmem:[%s217 + $0x20] sm:$0xff] %v6212
        %6229 = vst [vmem:[%s217 + $0x28] sm:$0xff] %v6213
        %6230 = vst [vmem:[%s217 + $0x30] sm:$0xff] %v6214
        %6231 = vst [vmem:[%s217 + $0x38] sm:$0xff] %v6215
        %6232 = vst [vmem:[%s217 + $0x40] sm:$0xff] %v6216
        %6233 = vst [vmem:[%s217 + $0x48] sm:$0xff] %v6217
        %6234 = vst [vmem:[%s217 + $0x50] sm:$0xff] %v6218
        %6235 = vst [vmem:[%s217 + $0x58] sm:$0xff] %v6219
        %6236 = vst [vmem:[%s217 + $0x60] sm:$0xff] %v6220
        %6237 = vst [vmem:[%s217 + $0x68] sm:$0xff] %v6221
        %6238 = vst [vmem:[%s217 + $0x70] sm:$0xff] %v6222
        %6239 = vst [vmem:[%s217 + $0x78] sm:$0xff] %v6223
        %v6240 = vld [vmem:[%s217] sm:$0xff]
        %v6241 = vld [vmem:[%s217 + $0x8] sm:$0xff]
        %v6242 = vld [vmem:[%s217 + $0x10] sm:$0xff]
        %v6243 = vld [vmem:[%s217 + $0x18] sm:$0xff]
        %v6244 = vld [vmem:[%s217 + $0x20] sm:$0xff]
        %v6245 = vld [vmem:[%s217 + $0x28] sm:$0xff]
        %v6246 = vld [vmem:[%s217 + $0x30] sm:$0xff]
        %v6247 = vld [vmem:[%s217 + $0x38] sm:$0xff]
        %v6248 = vld [vmem:[%s217 + $0x40] sm:$0xff]
        %v6249 = vld [vmem:[%s217 + $0x48] sm:$0xff]
        %v6250 = vld [vmem:[%s217 + $0x50] sm:$0xff]
        %v6251 = vld [vmem:[%s217 + $0x58] sm:$0xff]
        %v6252 = vld [vmem:[%s217 + $0x60] sm:$0xff]
        %v6253 = vld [vmem:[%s217 + $0x68] sm:$0xff]
        %v6254 = vld [vmem:[%s217 + $0x70] sm:$0xff]
        %v6255 = vld [vmem:[%s217 + $0x78] sm:$0xff]
        %s6256 = scalar_lea.vmem %s2, 2304
        %v6257 = vld [vmem:[%s6256] sm:$0xff]
        %v6258 = vld [vmem:[%s6256 + $0x8] sm:$0xff]
        %v6259 = vld [vmem:[%s6256 + $0x10] sm:$0xff]
        %v6260 = vld [vmem:[%s6256 + $0x18] sm:$0xff]
        %v6261 = vld [vmem:[%s6256 + $0x20] sm:$0xff]
        %v6262 = vld [vmem:[%s6256 + $0x28] sm:$0xff]
        %v6263 = vld [vmem:[%s6256 + $0x30] sm:$0xff]
        %v6264 = vld [vmem:[%s6256 + $0x38] sm:$0xff]
        %v6265 = vld [vmem:[%s6256 + $0x40] sm:$0xff]
        %v6266 = vld [vmem:[%s6256 + $0x48] sm:$0xff]
        %v6267 = vld [vmem:[%s6256 + $0x50] sm:$0xff]
        %v6268 = vld [vmem:[%s6256 + $0x58] sm:$0xff]
        %v6269 = vld [vmem:[%s6256 + $0x60] sm:$0xff]
        %v6270 = vld [vmem:[%s6256 + $0x68] sm:$0xff]
        %v6271 = vld [vmem:[%s6256 + $0x70] sm:$0xff]
        %v6272 = vld [vmem:[%s6256 + $0x78] sm:$0xff]
        %6274 = vset.pattern.permute.xlu0 0
        %6275 = vperm.xlu0 %6274, %v6257
        %v6276 = vpop.permute.xlu0 %6275
        %6279 = vset.pattern.permute.xlu0 0
        %6280 = vperm.xlu0 %6279, %v6258
        %v6281 = vpop.permute.xlu0 %6280
        %6284 = vset.pattern.permute.xlu0 0
        %6285 = vperm.xlu0 %6284, %v6259
        %v6286 = vpop.permute.xlu0 %6285
        %6289 = vset.pattern.permute.xlu0 0
        %6290 = vperm.xlu0 %6289, %v6260
        %v6291 = vpop.permute.xlu0 %6290
        %6294 = vset.pattern.permute.xlu0 0
        %6295 = vperm.xlu0 %6294, %v6261
        %v6296 = vpop.permute.xlu0 %6295
        %6299 = vset.pattern.permute.xlu0 0
        %6300 = vperm.xlu0 %6299, %v6262
        %v6301 = vpop.permute.xlu0 %6300
        %6304 = vset.pattern.permute.xlu0 0
        %6305 = vperm.xlu0 %6304, %v6263
        %v6306 = vpop.permute.xlu0 %6305
        %6309 = vset.pattern.permute.xlu0 0
        %6310 = vperm.xlu0 %6309, %v6264
        %v6311 = vpop.permute.xlu0 %6310
        %6314 = vset.pattern.permute.xlu0 0
        %6315 = vperm.xlu0 %6314, %v6265
        %v6316 = vpop.permute.xlu0 %6315
        %6319 = vset.pattern.permute.xlu0 0
        %6320 = vperm.xlu0 %6319, %v6266
        %v6321 = vpop.permute.xlu0 %6320
        %6324 = vset.pattern.permute.xlu0 0
        %6325 = vperm.xlu0 %6324, %v6267
        %v6326 = vpop.permute.xlu0 %6325
        %6329 = vset.pattern.permute.xlu0 0
        %6330 = vperm.xlu0 %6329, %v6268
        %v6331 = vpop.permute.xlu0 %6330
        %6334 = vset.pattern.permute.xlu0 0
        %6335 = vperm.xlu0 %6334, %v6269
        %v6336 = vpop.permute.xlu0 %6335
        %6339 = vset.pattern.permute.xlu0 0
        %6340 = vperm.xlu0 %6339, %v6270
        %v6341 = vpop.permute.xlu0 %6340
        %6344 = vset.pattern.permute.xlu0 0
        %6345 = vperm.xlu0 %6344, %v6271
        %v6346 = vpop.permute.xlu0 %6345
        %6349 = vset.pattern.permute.xlu0 0
        %6350 = vperm.xlu0 %6349, %v6272
        %v6351 = vpop.permute.xlu0 %6350
        %v6353 = vmul.f32 %v1067, %v6276
        %v6354 = vmul.f32 %v1066, %v6281
        %v6355 = vmul.f32 %v1065, %v6286
        %v6356 = vmul.f32 %v1064, %v6291
        %v6357 = vmul.f32 %v1063, %v6296
        %v6358 = vmul.f32 %v1062, %v6301
        %v6359 = vmul.f32 %v1061, %v6306
        %v6360 = vmul.f32 %v1060, %v6311
        %v6361 = vmul.f32 %v1059, %v6316
        %v6362 = vmul.f32 %v1058, %v6321
        %v6363 = vmul.f32 %v1057, %v6326
        %v6364 = vmul.f32 %v1056, %v6331
        %v6365 = vmul.f32 %v1055, %v6336
        %v6366 = vmul.f32 %v1054, %v6341
        %v6367 = vmul.f32 %v1053, %v6346
        %v6368 = vmul.f32 %v1068, %v6351
        %v6369 = vpack.c.bf16 %v6354, %v6353
        %v6370 = vpack.c.bf16 %v6356, %v6355
        %v6371 = vpack.c.bf16 %v6358, %v6357
        %v6372 = vpack.c.bf16 %v6360, %v6359
        %v6373 = vpack.c.bf16 %v6362, %v6361
        %v6374 = vpack.c.bf16 %v6364, %v6363
        %v6375 = vpack.c.bf16 %v6366, %v6365
        %v6376 = vpack.c.bf16 %v6368, %v6367
        %s6377 = scalar_lea.vmem %s1, 576
        %v6378 = vld [vmem:[%s6377] sm:$0xf]
        %v6379 = vld [vmem:[%s6377 + $0x4] sm:$0xf]
        %v6380 = vld [vmem:[%s6377 + $0x8] sm:$0xf]
        %v6381 = vld [vmem:[%s6377 + $0xc] sm:$0xf]
        %v6382 = vld [vmem:[%s6377 + $0x10] sm:$0xf]
        %v6383 = vld [vmem:[%s6377 + $0x14] sm:$0xf]
        %v6384 = vld [vmem:[%s6377 + $0x18] sm:$0xf]
        %v6385 = vld [vmem:[%s6377 + $0x1c] sm:$0xf]
        %v6394 = vunpack.c.l.b16 %v6378
        %v6395 = vunpack.c.l.b16 %v6379
        %v6396 = vunpack.c.l.b16 %v6380
        %v6397 = vunpack.c.l.b16 %v6381
        %v6398 = vunpack.c.l.b16 %v6382
        %v6399 = vunpack.c.l.b16 %v6383
        %v6400 = vunpack.c.l.b16 %v6384
        %v6401 = vunpack.c.l.b16 %v6385
        %v6402 = vpack.c.b16 %v6395, %v6394
        %v6403 = vpack.c.b16 %v6397, %v6396
        %v6404 = vpack.c.b16 %v6399, %v6398
        %v6405 = vpack.c.b16 %v6401, %v6400
        %v6411 = vsel %vm526, %v6369, 0
        %v6414 = vsel %vm526, %v6370, 0
        %v6417 = vsel %vm526, %v6371, 0
        %v6420 = vsel %vm526, %v6372, 0
        %v6423 = vsel %vm526, %v6373, 0
        %v6426 = vsel %vm526, %v6374, 0
        %v6429 = vsel %vm526, %v6375, 0
        %v6432 = vsel %vm526, %v6376, 0
        %6434 = vmatprep.subr.bf16.mxu0 0
        %6435 = vmatpush1.bf16.msra.mxu0 0
        %6436 = vmatprep.subr.bf16.mxu0 0
        %6437 = vmatpush1.bf16.msra.mxu0 0
        %6438 = vmatprep.subr.bf16.mxu0 0
        %6439 = vmatpush1.bf16.msra.mxu0 0
        %6440 = vmatprep.subr.bf16.mxu0 0
        %6441 = vmatpush1.bf16.msra.mxu0 0
        %6442 = vmatprep.subr.bf16.mxu0 0
        %6443 = vmatpush1.bf16.msra.mxu0 %v6405
        %6444 = vmatprep.subr.bf16.mxu0 0
        %6445 = vmatpush1.bf16.msra.mxu0 %v6404
        %6446 = vmatprep.subr.bf16.mxu0 0
        %6447 = vmatpush1.bf16.msra.mxu0 %v6403
        %6448 = vmatprep.subr.bf16.mxu0 0
        %6449 = vmatpush1.bf16.msra.mxu0 %v6402
        %6450 = vmatprep.subr.bf16.mxu0 0
        %6451 = vmatpush2.bf16.msra.mxu0 0
        %6452 = vmatprep.subr.bf16.mxu0 0
        %6453 = vmatpush2.bf16.msra.mxu0 0
        %6454 = vmatprep.subr.bf16.mxu0 0
        %6455 = vmatpush2.bf16.msra.mxu0 0
        %6456 = vmatprep.subr.bf16.mxu0 0
        %6457 = vmatpush2.bf16.msra.mxu0 0
        %6458 = vmatprep.subr.bf16.mxu0 0
        %6459 = vmatpush2.bf16.msra.mxu0 0
        %6460 = vmatprep.subr.bf16.mxu0 0
        %6461 = vmatpush2.bf16.msra.mxu0 0
        %6462 = vmatprep.subr.bf16.mxu0 0
        %6463 = vmatpush2.bf16.msra.mxu0 0
        %6464 = vmatprep.subr.bf16.mxu0 0
        %6465 = vmatpush2.bf16.msra.mxu0 0
        %6466 = vmatprep.mubr.bf16.mxu0 0
        %6467 = vmatmul.mubr.bf16.gmra.mxu0 %v6411
        %v6468 = vpop.f32.mrf.mxu0
        %v6469 = vadd.f32 0.0, %v6468
        %v6470 = vpop.f32.mrf.mxu0
        %v6471 = vpop.f32.mrf.mxu0
        %v6472 = vadd.f32 0.0, %v6471
        %v6473 = vpop.f32.mrf.mxu0
        %6474 = vmatprep.mubr.bf16.mxu0 0
        %6475 = vmatmul.mubr.bf16.gmra.mxu0 %v6414
        %v6476 = vpop.f32.mrf.mxu0
        %v6477 = vadd.f32 0.0, %v6476
        %v6478 = vpop.f32.mrf.mxu0
        %v6479 = vpop.f32.mrf.mxu0
        %v6480 = vadd.f32 0.0, %v6479
        %v6481 = vpop.f32.mrf.mxu0
        %6482 = vmatprep.mubr.bf16.mxu0 0
        %6483 = vmatmul.mubr.bf16.gmra.mxu0 %v6417
        %v6484 = vpop.f32.mrf.mxu0
        %v6485 = vadd.f32 0.0, %v6484
        %v6486 = vpop.f32.mrf.mxu0
        %v6487 = vpop.f32.mrf.mxu0
        %v6488 = vadd.f32 0.0, %v6487
        %v6489 = vpop.f32.mrf.mxu0
        %6490 = vmatprep.mubr.bf16.mxu0 0
        %6491 = vmatmul.mubr.bf16.gmra.mxu0 %v6420
        %v6492 = vpop.f32.mrf.mxu0
        %v6493 = vadd.f32 0.0, %v6492
        %v6494 = vpop.f32.mrf.mxu0
        %v6495 = vpop.f32.mrf.mxu0
        %v6496 = vadd.f32 0.0, %v6495
        %v6497 = vpop.f32.mrf.mxu0
        %6498 = vmatprep.mubr.bf16.mxu0 0
        %6499 = vmatmul.mubr.bf16.gmra.mxu0 %v6423
        %v6500 = vpop.f32.mrf.mxu0
        %v6501 = vadd.f32 0.0, %v6500
        %v6502 = vpop.f32.mrf.mxu0
        %v6503 = vpop.f32.mrf.mxu0
        %v6504 = vadd.f32 0.0, %v6503
        %v6505 = vpop.f32.mrf.mxu0
        %6506 = vmatprep.mubr.bf16.mxu0 0
        %6507 = vmatmul.mubr.bf16.gmra.mxu0 %v6426
        %v6508 = vpop.f32.mrf.mxu0
        %v6509 = vadd.f32 0.0, %v6508
        %v6510 = vpop.f32.mrf.mxu0
        %v6511 = vpop.f32.mrf.mxu0
        %v6512 = vadd.f32 0.0, %v6511
        %v6513 = vpop.f32.mrf.mxu0
        %6514 = vmatprep.mubr.bf16.mxu0 0
        %6515 = vmatmul.mubr.bf16.gmra.mxu0 %v6429
        %v6516 = vpop.f32.mrf.mxu0
        %v6517 = vadd.f32 0.0, %v6516
        %v6518 = vpop.f32.mrf.mxu0
        %v6519 = vpop.f32.mrf.mxu0
        %v6520 = vadd.f32 0.0, %v6519
        %v6521 = vpop.f32.mrf.mxu0
        %6522 = vmatprep.mubr.bf16.mxu0 0
        %6523 = vmatmul.mubr.bf16.gmra.mxu0 %v6432
        %v6524 = vpop.f32.mrf.mxu0
        %v6525 = vadd.f32 0.0, %v6524
        %v6526 = vpop.f32.mrf.mxu0
        %v6527 = vpop.f32.mrf.mxu0
        %v6528 = vadd.f32 0.0, %v6527
        %v6529 = vpop.f32.mrf.mxu0
        %6530 = vdwg.mxu0
        %v6531 = vadd.f32 %v6240, %v6469
        %v6532 = vadd.f32 %v6241, %v6472
        %v6533 = vadd.f32 %v6242, %v6477
        %v6534 = vadd.f32 %v6243, %v6480
        %v6535 = vadd.f32 %v6244, %v6485
        %v6536 = vadd.f32 %v6245, %v6488
        %v6537 = vadd.f32 %v6246, %v6493
        %v6538 = vadd.f32 %v6247, %v6496
        %v6539 = vadd.f32 %v6248, %v6501
        %v6540 = vadd.f32 %v6249, %v6504
        %v6541 = vadd.f32 %v6250, %v6509
        %v6542 = vadd.f32 %v6251, %v6512
        %v6543 = vadd.f32 %v6252, %v6517
        %v6544 = vadd.f32 %v6253, %v6520
        %v6545 = vadd.f32 %v6254, %v6525
        %v6546 = vadd.f32 %v6255, %v6528
        %6547 = vst [vmem:[%s217] sm:$0xff] %v6531
        %6548 = vst [vmem:[%s217 + $0x8] sm:$0xff] %v6532
        %6549 = vst [vmem:[%s217 + $0x10] sm:$0xff] %v6533
        %6550 = vst [vmem:[%s217 + $0x18] sm:$0xff] %v6534
        %6551 = vst [vmem:[%s217 + $0x20] sm:$0xff] %v6535
        %6552 = vst [vmem:[%s217 + $0x28] sm:$0xff] %v6536
        %6553 = vst [vmem:[%s217 + $0x30] sm:$0xff] %v6537
        %6554 = vst [vmem:[%s217 + $0x38] sm:$0xff] %v6538
        %6555 = vst [vmem:[%s217 + $0x40] sm:$0xff] %v6539
        %6556 = vst [vmem:[%s217 + $0x48] sm:$0xff] %v6540
        %6557 = vst [vmem:[%s217 + $0x50] sm:$0xff] %v6541
        %6558 = vst [vmem:[%s217 + $0x58] sm:$0xff] %v6542
        %6559 = vst [vmem:[%s217 + $0x60] sm:$0xff] %v6543
        %6560 = vst [vmem:[%s217 + $0x68] sm:$0xff] %v6544
        %6561 = vst [vmem:[%s217 + $0x70] sm:$0xff] %v6545
        %6562 = vst [vmem:[%s217 + $0x78] sm:$0xff] %v6546
        %v6563 = vld [vmem:[%s217] sm:$0xff]
        %v6564 = vld [vmem:[%s217 + $0x8] sm:$0xff]
        %v6565 = vld [vmem:[%s217 + $0x10] sm:$0xff]
        %v6566 = vld [vmem:[%s217 + $0x18] sm:$0xff]
        %v6567 = vld [vmem:[%s217 + $0x20] sm:$0xff]
        %v6568 = vld [vmem:[%s217 + $0x28] sm:$0xff]
        %v6569 = vld [vmem:[%s217 + $0x30] sm:$0xff]
        %v6570 = vld [vmem:[%s217 + $0x38] sm:$0xff]
        %v6571 = vld [vmem:[%s217 + $0x40] sm:$0xff]
        %v6572 = vld [vmem:[%s217 + $0x48] sm:$0xff]
        %v6573 = vld [vmem:[%s217 + $0x50] sm:$0xff]
        %v6574 = vld [vmem:[%s217 + $0x58] sm:$0xff]
        %v6575 = vld [vmem:[%s217 + $0x60] sm:$0xff]
        %v6576 = vld [vmem:[%s217 + $0x68] sm:$0xff]
        %v6577 = vld [vmem:[%s217 + $0x70] sm:$0xff]
        %v6578 = vld [vmem:[%s217 + $0x78] sm:$0xff]
        %s6579 = scalar_lea.vmem %s2, 2432
        %v6580 = vld [vmem:[%s6579] sm:$0xff]
        %v6581 = vld [vmem:[%s6579 + $0x8] sm:$0xff]
        %v6582 = vld [vmem:[%s6579 + $0x10] sm:$0xff]
        %v6583 = vld [vmem:[%s6579 + $0x18] sm:$0xff]
        %v6584 = vld [vmem:[%s6579 + $0x20] sm:$0xff]
        %v6585 = vld [vmem:[%s6579 + $0x28] sm:$0xff]
        %v6586 = vld [vmem:[%s6579 + $0x30] sm:$0xff]
        %v6587 = vld [vmem:[%s6579 + $0x38] sm:$0xff]
        %v6588 = vld [vmem:[%s6579 + $0x40] sm:$0xff]
        %v6589 = vld [vmem:[%s6579 + $0x48] sm:$0xff]
        %v6590 = vld [vmem:[%s6579 + $0x50] sm:$0xff]
        %v6591 = vld [vmem:[%s6579 + $0x58] sm:$0xff]
        %v6592 = vld [vmem:[%s6579 + $0x60] sm:$0xff]
        %v6593 = vld [vmem:[%s6579 + $0x68] sm:$0xff]
        %v6594 = vld [vmem:[%s6579 + $0x70] sm:$0xff]
        %v6595 = vld [vmem:[%s6579 + $0x78] sm:$0xff]
        %6597 = vset.pattern.permute.xlu0 0
        %6598 = vperm.xlu0 %6597, %v6580
        %v6599 = vpop.permute.xlu0 %6598
        %6602 = vset.pattern.permute.xlu0 0
        %6603 = vperm.xlu0 %6602, %v6581
        %v6604 = vpop.permute.xlu0 %6603
        %6607 = vset.pattern.permute.xlu0 0
        %6608 = vperm.xlu0 %6607, %v6582
        %v6609 = vpop.permute.xlu0 %6608
        %6612 = vset.pattern.permute.xlu0 0
        %6613 = vperm.xlu0 %6612, %v6583
        %v6614 = vpop.permute.xlu0 %6613
        %6617 = vset.pattern.permute.xlu0 0
        %6618 = vperm.xlu0 %6617, %v6584
        %v6619 = vpop.permute.xlu0 %6618
        %6622 = vset.pattern.permute.xlu0 0
        %6623 = vperm.xlu0 %6622, %v6585
        %v6624 = vpop.permute.xlu0 %6623
        %6627 = vset.pattern.permute.xlu0 0
        %6628 = vperm.xlu0 %6627, %v6586
        %v6629 = vpop.permute.xlu0 %6628
        %6632 = vset.pattern.permute.xlu0 0
        %6633 = vperm.xlu0 %6632, %v6587
        %v6634 = vpop.permute.xlu0 %6633
        %6637 = vset.pattern.permute.xlu0 0
        %6638 = vperm.xlu0 %6637, %v6588
        %v6639 = vpop.permute.xlu0 %6638
        %6642 = vset.pattern.permute.xlu0 0
        %6643 = vperm.xlu0 %6642, %v6589
        %v6644 = vpop.permute.xlu0 %6643
        %6647 = vset.pattern.permute.xlu0 0
        %6648 = vperm.xlu0 %6647, %v6590
        %v6649 = vpop.permute.xlu0 %6648
        %6652 = vset.pattern.permute.xlu0 0
        %6653 = vperm.xlu0 %6652, %v6591
        %v6654 = vpop.permute.xlu0 %6653
        %6657 = vset.pattern.permute.xlu0 0
        %6658 = vperm.xlu0 %6657, %v6592
        %v6659 = vpop.permute.xlu0 %6658
        %6662 = vset.pattern.permute.xlu0 0
        %6663 = vperm.xlu0 %6662, %v6593
        %v6664 = vpop.permute.xlu0 %6663
        %6667 = vset.pattern.permute.xlu0 0
        %6668 = vperm.xlu0 %6667, %v6594
        %v6669 = vpop.permute.xlu0 %6668
        %6672 = vset.pattern.permute.xlu0 0
        %6673 = vperm.xlu0 %6672, %v6595
        %v6674 = vpop.permute.xlu0 %6673
        %v6676 = vmul.f32 %v1423, %v6599
        %v6677 = vmul.f32 %v1422, %v6604
        %v6678 = vmul.f32 %v1421, %v6609
        %v6679 = vmul.f32 %v1420, %v6614
        %v6680 = vmul.f32 %v1419, %v6619
        %v6681 = vmul.f32 %v1418, %v6624
        %v6682 = vmul.f32 %v1417, %v6629
        %v6683 = vmul.f32 %v1416, %v6634
        %v6684 = vmul.f32 %v1415, %v6639
        %v6685 = vmul.f32 %v1414, %v6644
        %v6686 = vmul.f32 %v1413, %v6649
        %v6687 = vmul.f32 %v1412, %v6654
        %v6688 = vmul.f32 %v1411, %v6659
        %v6689 = vmul.f32 %v1410, %v6664
        %v6690 = vmul.f32 %v1409, %v6669
        %v6691 = vmul.f32 %v1424, %v6674
        %v6692 = vpack.c.bf16 %v6677, %v6676
        %v6693 = vpack.c.bf16 %v6679, %v6678
        %v6694 = vpack.c.bf16 %v6681, %v6680
        %v6695 = vpack.c.bf16 %v6683, %v6682
        %v6696 = vpack.c.bf16 %v6685, %v6684
        %v6697 = vpack.c.bf16 %v6687, %v6686
        %v6698 = vpack.c.bf16 %v6689, %v6688
        %v6699 = vpack.c.bf16 %v6691, %v6690
        %s6700 = scalar_lea.vmem %s1, 608
        %v6701 = vld [vmem:[%s6700] sm:$0xf]
        %v6702 = vld [vmem:[%s6700 + $0x4] sm:$0xf]
        %v6703 = vld [vmem:[%s6700 + $0x8] sm:$0xf]
        %v6704 = vld [vmem:[%s6700 + $0xc] sm:$0xf]
        %v6705 = vld [vmem:[%s6700 + $0x10] sm:$0xf]
        %v6706 = vld [vmem:[%s6700 + $0x14] sm:$0xf]
        %v6707 = vld [vmem:[%s6700 + $0x18] sm:$0xf]
        %v6708 = vld [vmem:[%s6700 + $0x1c] sm:$0xf]
        %v6717 = vunpack.c.l.b16 %v6701
        %v6718 = vunpack.c.l.b16 %v6702
        %v6719 = vunpack.c.l.b16 %v6703
        %v6720 = vunpack.c.l.b16 %v6704
        %v6721 = vunpack.c.l.b16 %v6705
        %v6722 = vunpack.c.l.b16 %v6706
        %v6723 = vunpack.c.l.b16 %v6707
        %v6724 = vunpack.c.l.b16 %v6708
        %v6725 = vpack.c.b16 %v6718, %v6717
        %v6726 = vpack.c.b16 %v6720, %v6719
        %v6727 = vpack.c.b16 %v6722, %v6721
        %v6728 = vpack.c.b16 %v6724, %v6723
        %v6734 = vsel %vm526, %v6692, 0
        %v6737 = vsel %vm526, %v6693, 0
        %v6740 = vsel %vm526, %v6694, 0
        %v6743 = vsel %vm526, %v6695, 0
        %v6746 = vsel %vm526, %v6696, 0
        %v6749 = vsel %vm526, %v6697, 0
        %v6752 = vsel %vm526, %v6698, 0
        %v6755 = vsel %vm526, %v6699, 0
        %6757 = vmatprep.subr.bf16.mxu0 0
        %6758 = vmatpush1.bf16.msra.mxu0 0
        %6759 = vmatprep.subr.bf16.mxu0 0
        %6760 = vmatpush1.bf16.msra.mxu0 0
        %6761 = vmatprep.subr.bf16.mxu0 0
        %6762 = vmatpush1.bf16.msra.mxu0 0
        %6763 = vmatprep.subr.bf16.mxu0 0
        %6764 = vmatpush1.bf16.msra.mxu0 0
        %6765 = vmatprep.subr.bf16.mxu0 0
        %6766 = vmatpush1.bf16.msra.mxu0 %v6728
        %6767 = vmatprep.subr.bf16.mxu0 0
        %6768 = vmatpush1.bf16.msra.mxu0 %v6727
        %6769 = vmatprep.subr.bf16.mxu0 0
        %6770 = vmatpush1.bf16.msra.mxu0 %v6726
        %6771 = vmatprep.subr.bf16.mxu0 0
        %6772 = vmatpush1.bf16.msra.mxu0 %v6725
        %6773 = vmatprep.subr.bf16.mxu0 0
        %6774 = vmatpush2.bf16.msra.mxu0 0
        %6775 = vmatprep.subr.bf16.mxu0 0
        %6776 = vmatpush2.bf16.msra.mxu0 0
        %6777 = vmatprep.subr.bf16.mxu0 0
        %6778 = vmatpush2.bf16.msra.mxu0 0
        %6779 = vmatprep.subr.bf16.mxu0 0
        %6780 = vmatpush2.bf16.msra.mxu0 0
        %6781 = vmatprep.subr.bf16.mxu0 0
        %6782 = vmatpush2.bf16.msra.mxu0 0
        %6783 = vmatprep.subr.bf16.mxu0 0
        %6784 = vmatpush2.bf16.msra.mxu0 0
        %6785 = vmatprep.subr.bf16.mxu0 0
        %6786 = vmatpush2.bf16.msra.mxu0 0
        %6787 = vmatprep.subr.bf16.mxu0 0
        %6788 = vmatpush2.bf16.msra.mxu0 0
        %6789 = vmatprep.mubr.bf16.mxu0 0
        %6790 = vmatmul.mubr.bf16.gmra.mxu0 %v6734
        %v6791 = vpop.f32.mrf.mxu0
        %v6792 = vadd.f32 0.0, %v6791
        %v6793 = vpop.f32.mrf.mxu0
        %v6794 = vpop.f32.mrf.mxu0
        %v6795 = vadd.f32 0.0, %v6794
        %v6796 = vpop.f32.mrf.mxu0
        %6797 = vmatprep.mubr.bf16.mxu0 0
        %6798 = vmatmul.mubr.bf16.gmra.mxu0 %v6737
        %v6799 = vpop.f32.mrf.mxu0
        %v6800 = vadd.f32 0.0, %v6799
        %v6801 = vpop.f32.mrf.mxu0
        %v6802 = vpop.f32.mrf.mxu0
        %v6803 = vadd.f32 0.0, %v6802
        %v6804 = vpop.f32.mrf.mxu0
        %6805 = vmatprep.mubr.bf16.mxu0 0
        %6806 = vmatmul.mubr.bf16.gmra.mxu0 %v6740
        %v6807 = vpop.f32.mrf.mxu0
        %v6808 = vadd.f32 0.0, %v6807
        %v6809 = vpop.f32.mrf.mxu0
        %v6810 = vpop.f32.mrf.mxu0
        %v6811 = vadd.f32 0.0, %v6810
        %v6812 = vpop.f32.mrf.mxu0
        %6813 = vmatprep.mubr.bf16.mxu0 0
        %6814 = vmatmul.mubr.bf16.gmra.mxu0 %v6743
        %v6815 = vpop.f32.mrf.mxu0
        %v6816 = vadd.f32 0.0, %v6815
        %v6817 = vpop.f32.mrf.mxu0
        %v6818 = vpop.f32.mrf.mxu0
        %v6819 = vadd.f32 0.0, %v6818
        %v6820 = vpop.f32.mrf.mxu0
        %6821 = vmatprep.mubr.bf16.mxu0 0
        %6822 = vmatmul.mubr.bf16.gmra.mxu0 %v6746
        %v6823 = vpop.f32.mrf.mxu0
        %v6824 = vadd.f32 0.0, %v6823
        %v6825 = vpop.f32.mrf.mxu0
        %v6826 = vpop.f32.mrf.mxu0
        %v6827 = vadd.f32 0.0, %v6826
        %v6828 = vpop.f32.mrf.mxu0
        %6829 = vmatprep.mubr.bf16.mxu0 0
        %6830 = vmatmul.mubr.bf16.gmra.mxu0 %v6749
        %v6831 = vpop.f32.mrf.mxu0
        %v6832 = vadd.f32 0.0, %v6831
        %v6833 = vpop.f32.mrf.mxu0
        %v6834 = vpop.f32.mrf.mxu0
        %v6835 = vadd.f32 0.0, %v6834
        %v6836 = vpop.f32.mrf.mxu0
        %6837 = vmatprep.mubr.bf16.mxu0 0
        %6838 = vmatmul.mubr.bf16.gmra.mxu0 %v6752
        %v6839 = vpop.f32.mrf.mxu0
        %v6840 = vadd.f32 0.0, %v6839
        %v6841 = vpop.f32.mrf.mxu0
        %v6842 = vpop.f32.mrf.mxu0
        %v6843 = vadd.f32 0.0, %v6842
        %v6844 = vpop.f32.mrf.mxu0
        %6845 = vmatprep.mubr.bf16.mxu0 0
        %6846 = vmatmul.mubr.bf16.gmra.mxu0 %v6755
        %v6847 = vpop.f32.mrf.mxu0
        %v6848 = vadd.f32 0.0, %v6847
        %v6849 = vpop.f32.mrf.mxu0
        %v6850 = vpop.f32.mrf.mxu0
        %v6851 = vadd.f32 0.0, %v6850
        %v6852 = vpop.f32.mrf.mxu0
        %6853 = vdwg.mxu0
        %v6854 = vadd.f32 %v6563, %v6792
        %v6855 = vadd.f32 %v6564, %v6795
        %v6856 = vadd.f32 %v6565, %v6800
        %v6857 = vadd.f32 %v6566, %v6803
        %v6858 = vadd.f32 %v6567, %v6808
        %v6859 = vadd.f32 %v6568, %v6811
        %v6860 = vadd.f32 %v6569, %v6816
        %v6861 = vadd.f32 %v6570, %v6819
        %v6862 = vadd.f32 %v6571, %v6824
        %v6863 = vadd.f32 %v6572, %v6827
        %v6864 = vadd.f32 %v6573, %v6832
        %v6865 = vadd.f32 %v6574, %v6835
        %v6866 = vadd.f32 %v6575, %v6840
        %v6867 = vadd.f32 %v6576, %v6843
        %v6868 = vadd.f32 %v6577, %v6848
        %v6869 = vadd.f32 %v6578, %v6851
        %6870 = vst [vmem:[%s217] sm:$0xff] %v6854
        %6871 = vst [vmem:[%s217 + $0x8] sm:$0xff] %v6855
        %6872 = vst [vmem:[%s217 + $0x10] sm:$0xff] %v6856
        %6873 = vst [vmem:[%s217 + $0x18] sm:$0xff] %v6857
        %6874 = vst [vmem:[%s217 + $0x20] sm:$0xff] %v6858
        %6875 = vst [vmem:[%s217 + $0x28] sm:$0xff] %v6859
        %6876 = vst [vmem:[%s217 + $0x30] sm:$0xff] %v6860
        %6877 = vst [vmem:[%s217 + $0x38] sm:$0xff] %v6861
        %6878 = vst [vmem:[%s217 + $0x40] sm:$0xff] %v6862
        %6879 = vst [vmem:[%s217 + $0x48] sm:$0xff] %v6863
        %6880 = vst [vmem:[%s217 + $0x50] sm:$0xff] %v6864
        %6881 = vst [vmem:[%s217 + $0x58] sm:$0xff] %v6865
        %6882 = vst [vmem:[%s217 + $0x60] sm:$0xff] %v6866
        %6883 = vst [vmem:[%s217 + $0x68] sm:$0xff] %v6867
        %6884 = vst [vmem:[%s217 + $0x70] sm:$0xff] %v6868
        %6885 = vst [vmem:[%s217 + $0x78] sm:$0xff] %v6869
        %v6886 = vld [vmem:[%s217] sm:$0xff]
        %v6887 = vld [vmem:[%s217 + $0x8] sm:$0xff]
        %v6888 = vld [vmem:[%s217 + $0x10] sm:$0xff]
        %v6889 = vld [vmem:[%s217 + $0x18] sm:$0xff]
        %v6890 = vld [vmem:[%s217 + $0x20] sm:$0xff]
        %v6891 = vld [vmem:[%s217 + $0x28] sm:$0xff]
        %v6892 = vld [vmem:[%s217 + $0x30] sm:$0xff]
        %v6893 = vld [vmem:[%s217 + $0x38] sm:$0xff]
        %v6894 = vld [vmem:[%s217 + $0x40] sm:$0xff]
        %v6895 = vld [vmem:[%s217 + $0x48] sm:$0xff]
        %v6896 = vld [vmem:[%s217 + $0x50] sm:$0xff]
        %v6897 = vld [vmem:[%s217 + $0x58] sm:$0xff]
        %v6898 = vld [vmem:[%s217 + $0x60] sm:$0xff]
        %v6899 = vld [vmem:[%s217 + $0x68] sm:$0xff]
        %v6900 = vld [vmem:[%s217 + $0x70] sm:$0xff]
        %v6901 = vld [vmem:[%s217 + $0x78] sm:$0xff]
        %s6902 = scalar_lea.vmem %s2, 2560
        %v6903 = vld [vmem:[%s6902] sm:$0xff]
        %v6904 = vld [vmem:[%s6902 + $0x8] sm:$0xff]
        %v6905 = vld [vmem:[%s6902 + $0x10] sm:$0xff]
        %v6906 = vld [vmem:[%s6902 + $0x18] sm:$0xff]
        %v6907 = vld [vmem:[%s6902 + $0x20] sm:$0xff]
        %v6908 = vld [vmem:[%s6902 + $0x28] sm:$0xff]
        %v6909 = vld [vmem:[%s6902 + $0x30] sm:$0xff]
        %v6910 = vld [vmem:[%s6902 + $0x38] sm:$0xff]
        %v6911 = vld [vmem:[%s6902 + $0x40] sm:$0xff]
        %v6912 = vld [vmem:[%s6902 + $0x48] sm:$0xff]
        %v6913 = vld [vmem:[%s6902 + $0x50] sm:$0xff]
        %v6914 = vld [vmem:[%s6902 + $0x58] sm:$0xff]
        %v6915 = vld [vmem:[%s6902 + $0x60] sm:$0xff]
        %v6916 = vld [vmem:[%s6902 + $0x68] sm:$0xff]
        %v6917 = vld [vmem:[%s6902 + $0x70] sm:$0xff]
        %v6918 = vld [vmem:[%s6902 + $0x78] sm:$0xff]
        %6920 = vset.pattern.permute.xlu0 0
        %6921 = vperm.xlu0 %6920, %v6903
        %v6922 = vpop.permute.xlu0 %6921
        %6925 = vset.pattern.permute.xlu0 0
        %6926 = vperm.xlu0 %6925, %v6904
        %v6927 = vpop.permute.xlu0 %6926
        %6930 = vset.pattern.permute.xlu0 0
        %6931 = vperm.xlu0 %6930, %v6905
        %v6932 = vpop.permute.xlu0 %6931
        %6935 = vset.pattern.permute.xlu0 0
        %6936 = vperm.xlu0 %6935, %v6906
        %v6937 = vpop.permute.xlu0 %6936
        %6940 = vset.pattern.permute.xlu0 0
        %6941 = vperm.xlu0 %6940, %v6907
        %v6942 = vpop.permute.xlu0 %6941
        %6945 = vset.pattern.permute.xlu0 0
        %6946 = vperm.xlu0 %6945, %v6908
        %v6947 = vpop.permute.xlu0 %6946
        %6950 = vset.pattern.permute.xlu0 0
        %6951 = vperm.xlu0 %6950, %v6909
        %v6952 = vpop.permute.xlu0 %6951
        %6955 = vset.pattern.permute.xlu0 0
        %6956 = vperm.xlu0 %6955, %v6910
        %v6957 = vpop.permute.xlu0 %6956
        %6960 = vset.pattern.permute.xlu0 0
        %6961 = vperm.xlu0 %6960, %v6911
        %v6962 = vpop.permute.xlu0 %6961
        %6965 = vset.pattern.permute.xlu0 0
        %6966 = vperm.xlu0 %6965, %v6912
        %v6967 = vpop.permute.xlu0 %6966
        %6970 = vset.pattern.permute.xlu0 0
        %6971 = vperm.xlu0 %6970, %v6913
        %v6972 = vpop.permute.xlu0 %6971
        %6975 = vset.pattern.permute.xlu0 0
        %6976 = vperm.xlu0 %6975, %v6914
        %v6977 = vpop.permute.xlu0 %6976
        %6980 = vset.pattern.permute.xlu0 0
        %6981 = vperm.xlu0 %6980, %v6915
        %v6982 = vpop.permute.xlu0 %6981
        %6985 = vset.pattern.permute.xlu0 0
        %6986 = vperm.xlu0 %6985, %v6916
        %v6987 = vpop.permute.xlu0 %6986
        %6990 = vset.pattern.permute.xlu0 0
        %6991 = vperm.xlu0 %6990, %v6917
        %v6992 = vpop.permute.xlu0 %6991
        %6995 = vset.pattern.permute.xlu0 0
        %6996 = vperm.xlu0 %6995, %v6918
        %v6997 = vpop.permute.xlu0 %6996
        %v6999 = vmul.f32 %v1779, %v6922
        %v7000 = vmul.f32 %v1778, %v6927
        %v7001 = vmul.f32 %v1777, %v6932
        %v7002 = vmul.f32 %v1776, %v6937
        %v7003 = vmul.f32 %v1775, %v6942
        %v7004 = vmul.f32 %v1774, %v6947
        %v7005 = vmul.f32 %v1773, %v6952
        %v7006 = vmul.f32 %v1772, %v6957
        %v7007 = vmul.f32 %v1771, %v6962
        %v7008 = vmul.f32 %v1770, %v6967
        %v7009 = vmul.f32 %v1769, %v6972
        %v7010 = vmul.f32 %v1768, %v6977
        %v7011 = vmul.f32 %v1767, %v6982
        %v7012 = vmul.f32 %v1766, %v6987
        %v7013 = vmul.f32 %v1765, %v6992
        %v7014 = vmul.f32 %v1780, %v6997
        %v7015 = vpack.c.bf16 %v7000, %v6999
        %v7016 = vpack.c.bf16 %v7002, %v7001
        %v7017 = vpack.c.bf16 %v7004, %v7003
        %v7018 = vpack.c.bf16 %v7006, %v7005
        %v7019 = vpack.c.bf16 %v7008, %v7007
        %v7020 = vpack.c.bf16 %v7010, %v7009
        %v7021 = vpack.c.bf16 %v7012, %v7011
        %v7022 = vpack.c.bf16 %v7014, %v7013
        %s7023 = scalar_lea.vmem %s1, 640
        %v7024 = vld [vmem:[%s7023] sm:$0xf]
        %v7025 = vld [vmem:[%s7023 + $0x4] sm:$0xf]
        %v7026 = vld [vmem:[%s7023 + $0x8] sm:$0xf]
        %v7027 = vld [vmem:[%s7023 + $0xc] sm:$0xf]
        %v7028 = vld [vmem:[%s7023 + $0x10] sm:$0xf]
        %v7029 = vld [vmem:[%s7023 + $0x14] sm:$0xf]
        %v7030 = vld [vmem:[%s7023 + $0x18] sm:$0xf]
        %v7031 = vld [vmem:[%s7023 + $0x1c] sm:$0xf]
        %v7040 = vunpack.c.l.b16 %v7024
        %v7041 = vunpack.c.l.b16 %v7025
        %v7042 = vunpack.c.l.b16 %v7026
        %v7043 = vunpack.c.l.b16 %v7027
        %v7044 = vunpack.c.l.b16 %v7028
        %v7045 = vunpack.c.l.b16 %v7029
        %v7046 = vunpack.c.l.b16 %v7030
        %v7047 = vunpack.c.l.b16 %v7031
        %v7048 = vpack.c.b16 %v7041, %v7040
        %v7049 = vpack.c.b16 %v7043, %v7042
        %v7050 = vpack.c.b16 %v7045, %v7044
        %v7051 = vpack.c.b16 %v7047, %v7046
        %v7057 = vsel %vm526, %v7015, 0
        %v7060 = vsel %vm526, %v7016, 0
        %v7063 = vsel %vm526, %v7017, 0
        %v7066 = vsel %vm526, %v7018, 0
        %v7069 = vsel %vm526, %v7019, 0
        %v7072 = vsel %vm526, %v7020, 0
        %v7075 = vsel %vm526, %v7021, 0
        %v7078 = vsel %vm526, %v7022, 0
        %7080 = vmatprep.subr.bf16.mxu0 0
        %7081 = vmatpush1.bf16.msra.mxu0 0
        %7082 = vmatprep.subr.bf16.mxu0 0
        %7083 = vmatpush1.bf16.msra.mxu0 0
        %7084 = vmatprep.subr.bf16.mxu0 0
        %7085 = vmatpush1.bf16.msra.mxu0 0
        %7086 = vmatprep.subr.bf16.mxu0 0
        %7087 = vmatpush1.bf16.msra.mxu0 0
        %7088 = vmatprep.subr.bf16.mxu0 0
        %7089 = vmatpush1.bf16.msra.mxu0 %v7051
        %7090 = vmatprep.subr.bf16.mxu0 0
        %7091 = vmatpush1.bf16.msra.mxu0 %v7050
        %7092 = vmatprep.subr.bf16.mxu0 0
        %7093 = vmatpush1.bf16.msra.mxu0 %v7049
        %7094 = vmatprep.subr.bf16.mxu0 0
        %7095 = vmatpush1.bf16.msra.mxu0 %v7048
        %7096 = vmatprep.subr.bf16.mxu0 0
        %7097 = vmatpush2.bf16.msra.mxu0 0
        %7098 = vmatprep.subr.bf16.mxu0 0
        %7099 = vmatpush2.bf16.msra.mxu0 0
        %7100 = vmatprep.subr.bf16.mxu0 0
        %7101 = vmatpush2.bf16.msra.mxu0 0
        %7102 = vmatprep.subr.bf16.mxu0 0
        %7103 = vmatpush2.bf16.msra.mxu0 0
        %7104 = vmatprep.subr.bf16.mxu0 0
        %7105 = vmatpush2.bf16.msra.mxu0 0
        %7106 = vmatprep.subr.bf16.mxu0 0
        %7107 = vmatpush2.bf16.msra.mxu0 0
        %7108 = vmatprep.subr.bf16.mxu0 0
        %7109 = vmatpush2.bf16.msra.mxu0 0
        %7110 = vmatprep.subr.bf16.mxu0 0
        %7111 = vmatpush2.bf16.msra.mxu0 0
        %7112 = vmatprep.mubr.bf16.mxu0 0
        %7113 = vmatmul.mubr.bf16.gmra.mxu0 %v7057
        %v7114 = vpop.f32.mrf.mxu0
        %v7115 = vadd.f32 0.0, %v7114
        %v7116 = vpop.f32.mrf.mxu0
        %v7117 = vpop.f32.mrf.mxu0
        %v7118 = vadd.f32 0.0, %v7117
        %v7119 = vpop.f32.mrf.mxu0
        %7120 = vmatprep.mubr.bf16.mxu0 0
        %7121 = vmatmul.mubr.bf16.gmra.mxu0 %v7060
        %v7122 = vpop.f32.mrf.mxu0
        %v7123 = vadd.f32 0.0, %v7122
        %v7124 = vpop.f32.mrf.mxu0
        %v7125 = vpop.f32.mrf.mxu0
        %v7126 = vadd.f32 0.0, %v7125
        %v7127 = vpop.f32.mrf.mxu0
        %7128 = vmatprep.mubr.bf16.mxu0 0
        %7129 = vmatmul.mubr.bf16.gmra.mxu0 %v7063
        %v7130 = vpop.f32.mrf.mxu0
        %v7131 = vadd.f32 0.0, %v7130
        %v7132 = vpop.f32.mrf.mxu0
        %v7133 = vpop.f32.mrf.mxu0
        %v7134 = vadd.f32 0.0, %v7133
        %v7135 = vpop.f32.mrf.mxu0
        %7136 = vmatprep.mubr.bf16.mxu0 0
        %7137 = vmatmul.mubr.bf16.gmra.mxu0 %v7066
        %v7138 = vpop.f32.mrf.mxu0
        %v7139 = vadd.f32 0.0, %v7138
        %v7140 = vpop.f32.mrf.mxu0
        %v7141 = vpop.f32.mrf.mxu0
        %v7142 = vadd.f32 0.0, %v7141
        %v7143 = vpop.f32.mrf.mxu0
        %7144 = vmatprep.mubr.bf16.mxu0 0
        %7145 = vmatmul.mubr.bf16.gmra.mxu0 %v7069
        %v7146 = vpop.f32.mrf.mxu0
        %v7147 = vadd.f32 0.0, %v7146
        %v7148 = vpop.f32.mrf.mxu0
        %v7149 = vpop.f32.mrf.mxu0
        %v7150 = vadd.f32 0.0, %v7149
        %v7151 = vpop.f32.mrf.mxu0
        %7152 = vmatprep.mubr.bf16.mxu0 0
        %7153 = vmatmul.mubr.bf16.gmra.mxu0 %v7072
        %v7154 = vpop.f32.mrf.mxu0
        %v7155 = vadd.f32 0.0, %v7154
        %v7156 = vpop.f32.mrf.mxu0
        %v7157 = vpop.f32.mrf.mxu0
        %v7158 = vadd.f32 0.0, %v7157
        %v7159 = vpop.f32.mrf.mxu0
        %7160 = vmatprep.mubr.bf16.mxu0 0
        %7161 = vmatmul.mubr.bf16.gmra.mxu0 %v7075
        %v7162 = vpop.f32.mrf.mxu0
        %v7163 = vadd.f32 0.0, %v7162
        %v7164 = vpop.f32.mrf.mxu0
        %v7165 = vpop.f32.mrf.mxu0
        %v7166 = vadd.f32 0.0, %v7165
        %v7167 = vpop.f32.mrf.mxu0
        %7168 = vmatprep.mubr.bf16.mxu0 0
        %7169 = vmatmul.mubr.bf16.gmra.mxu0 %v7078
        %v7170 = vpop.f32.mrf.mxu0
        %v7171 = vadd.f32 0.0, %v7170
        %v7172 = vpop.f32.mrf.mxu0
        %v7173 = vpop.f32.mrf.mxu0
        %v7174 = vadd.f32 0.0, %v7173
        %v7175 = vpop.f32.mrf.mxu0
        %7176 = vdwg.mxu0
        %v7177 = vadd.f32 %v6886, %v7115
        %v7178 = vadd.f32 %v6887, %v7118
        %v7179 = vadd.f32 %v6888, %v7123
        %v7180 = vadd.f32 %v6889, %v7126
        %v7181 = vadd.f32 %v6890, %v7131
        %v7182 = vadd.f32 %v6891, %v7134
        %v7183 = vadd.f32 %v6892, %v7139
        %v7184 = vadd.f32 %v6893, %v7142
        %v7185 = vadd.f32 %v6894, %v7147
        %v7186 = vadd.f32 %v6895, %v7150
        %v7187 = vadd.f32 %v6896, %v7155
        %v7188 = vadd.f32 %v6897, %v7158
        %v7189 = vadd.f32 %v6898, %v7163
        %v7190 = vadd.f32 %v6899, %v7166
        %v7191 = vadd.f32 %v6900, %v7171
        %v7192 = vadd.f32 %v6901, %v7174
        %7193 = vst [vmem:[%s217] sm:$0xff] %v7177
        %7194 = vst [vmem:[%s217 + $0x8] sm:$0xff] %v7178
        %7195 = vst [vmem:[%s217 + $0x10] sm:$0xff] %v7179
        %7196 = vst [vmem:[%s217 + $0x18] sm:$0xff] %v7180
        %7197 = vst [vmem:[%s217 + $0x20] sm:$0xff] %v7181
        %7198 = vst [vmem:[%s217 + $0x28] sm:$0xff] %v7182
        %7199 = vst [vmem:[%s217 + $0x30] sm:$0xff] %v7183
        %7200 = vst [vmem:[%s217 + $0x38] sm:$0xff] %v7184
        %7201 = vst [vmem:[%s217 + $0x40] sm:$0xff] %v7185
        %7202 = vst [vmem:[%s217 + $0x48] sm:$0xff] %v7186
        %7203 = vst [vmem:[%s217 + $0x50] sm:$0xff] %v7187
        %7204 = vst [vmem:[%s217 + $0x58] sm:$0xff] %v7188
        %7205 = vst [vmem:[%s217 + $0x60] sm:$0xff] %v7189
        %7206 = vst [vmem:[%s217 + $0x68] sm:$0xff] %v7190
        %7207 = vst [vmem:[%s217 + $0x70] sm:$0xff] %v7191
        %7208 = vst [vmem:[%s217 + $0x78] sm:$0xff] %v7192
        %v7209 = vld [vmem:[%s217] sm:$0xff]
        %v7210 = vld [vmem:[%s217 + $0x8] sm:$0xff]
        %v7211 = vld [vmem:[%s217 + $0x10] sm:$0xff]
        %v7212 = vld [vmem:[%s217 + $0x18] sm:$0xff]
        %v7213 = vld [vmem:[%s217 + $0x20] sm:$0xff]
        %v7214 = vld [vmem:[%s217 + $0x28] sm:$0xff]
        %v7215 = vld [vmem:[%s217 + $0x30] sm:$0xff]
        %v7216 = vld [vmem:[%s217 + $0x38] sm:$0xff]
        %v7217 = vld [vmem:[%s217 + $0x40] sm:$0xff]
        %v7218 = vld [vmem:[%s217 + $0x48] sm:$0xff]
        %v7219 = vld [vmem:[%s217 + $0x50] sm:$0xff]
        %v7220 = vld [vmem:[%s217 + $0x58] sm:$0xff]
        %v7221 = vld [vmem:[%s217 + $0x60] sm:$0xff]
        %v7222 = vld [vmem:[%s217 + $0x68] sm:$0xff]
        %v7223 = vld [vmem:[%s217 + $0x70] sm:$0xff]
        %v7224 = vld [vmem:[%s217 + $0x78] sm:$0xff]
        %s7225 = scalar_lea.vmem %s2, 2688
        %v7226 = vld [vmem:[%s7225] sm:$0xff]
        %v7227 = vld [vmem:[%s7225 + $0x8] sm:$0xff]
        %v7228 = vld [vmem:[%s7225 + $0x10] sm:$0xff]
        %v7229 = vld [vmem:[%s7225 + $0x18] sm:$0xff]
        %v7230 = vld [vmem:[%s7225 + $0x20] sm:$0xff]
        %v7231 = vld [vmem:[%s7225 + $0x28] sm:$0xff]
        %v7232 = vld [vmem:[%s7225 + $0x30] sm:$0xff]
        %v7233 = vld [vmem:[%s7225 + $0x38] sm:$0xff]
        %v7234 = vld [vmem:[%s7225 + $0x40] sm:$0xff]
        %v7235 = vld [vmem:[%s7225 + $0x48] sm:$0xff]
        %v7236 = vld [vmem:[%s7225 + $0x50] sm:$0xff]
        %v7237 = vld [vmem:[%s7225 + $0x58] sm:$0xff]
        %v7238 = vld [vmem:[%s7225 + $0x60] sm:$0xff]
        %v7239 = vld [vmem:[%s7225 + $0x68] sm:$0xff]
        %v7240 = vld [vmem:[%s7225 + $0x70] sm:$0xff]
        %v7241 = vld [vmem:[%s7225 + $0x78] sm:$0xff]
        %7243 = vset.pattern.permute.xlu0 0
        %7244 = vperm.xlu0 %7243, %v7226
        %v7245 = vpop.permute.xlu0 %7244
        %7248 = vset.pattern.permute.xlu0 0
        %7249 = vperm.xlu0 %7248, %v7227
        %v7250 = vpop.permute.xlu0 %7249
        %7253 = vset.pattern.permute.xlu0 0
        %7254 = vperm.xlu0 %7253, %v7228
        %v7255 = vpop.permute.xlu0 %7254
        %7258 = vset.pattern.permute.xlu0 0
        %7259 = vperm.xlu0 %7258, %v7229
        %v7260 = vpop.permute.xlu0 %7259
        %7263 = vset.pattern.permute.xlu0 0
        %7264 = vperm.xlu0 %7263, %v7230
        %v7265 = vpop.permute.xlu0 %7264
        %7268 = vset.pattern.permute.xlu0 0
        %7269 = vperm.xlu0 %7268, %v7231
        %v7270 = vpop.permute.xlu0 %7269
        %7273 = vset.pattern.permute.xlu0 0
        %7274 = vperm.xlu0 %7273, %v7232
        %v7275 = vpop.permute.xlu0 %7274
        %7278 = vset.pattern.permute.xlu0 0
        %7279 = vperm.xlu0 %7278, %v7233
        %v7280 = vpop.permute.xlu0 %7279
        %7283 = vset.pattern.permute.xlu0 0
        %7284 = vperm.xlu0 %7283, %v7234
        %v7285 = vpop.permute.xlu0 %7284
        %7288 = vset.pattern.permute.xlu0 0
        %7289 = vperm.xlu0 %7288, %v7235
        %v7290 = vpop.permute.xlu0 %7289
        %7293 = vset.pattern.permute.xlu0 0
        %7294 = vperm.xlu0 %7293, %v7236
        %v7295 = vpop.permute.xlu0 %7294
        %7298 = vset.pattern.permute.xlu0 0
        %7299 = vperm.xlu0 %7298, %v7237
        %v7300 = vpop.permute.xlu0 %7299
        %7303 = vset.pattern.permute.xlu0 0
        %7304 = vperm.xlu0 %7303, %v7238
        %v7305 = vpop.permute.xlu0 %7304
        %7308 = vset.pattern.permute.xlu0 0
        %7309 = vperm.xlu0 %7308, %v7239
        %v7310 = vpop.permute.xlu0 %7309
        %7313 = vset.pattern.permute.xlu0 0
        %7314 = vperm.xlu0 %7313, %v7240
        %v7315 = vpop.permute.xlu0 %7314
        %7318 = vset.pattern.permute.xlu0 0
        %7319 = vperm.xlu0 %7318, %v7241
        %v7320 = vpop.permute.xlu0 %7319
        %v7322 = vmul.f32 %v2135, %v7245
        %v7323 = vmul.f32 %v2134, %v7250
        %v7324 = vmul.f32 %v2133, %v7255
        %v7325 = vmul.f32 %v2132, %v7260
        %v7326 = vmul.f32 %v2131, %v7265
        %v7327 = vmul.f32 %v2130, %v7270
        %v7328 = vmul.f32 %v2129, %v7275
        %v7329 = vmul.f32 %v2128, %v7280
        %v7330 = vmul.f32 %v2127, %v7285
        %v7331 = vmul.f32 %v2126, %v7290
        %v7332 = vmul.f32 %v2125, %v7295
        %v7333 = vmul.f32 %v2124, %v7300
        %v7334 = vmul.f32 %v2123, %v7305
        %v7335 = vmul.f32 %v2122, %v7310
        %v7336 = vmul.f32 %v2121, %v7315
        %v7337 = vmul.f32 %v2136, %v7320
        %v7338 = vpack.c.bf16 %v7323, %v7322
        %v7339 = vpack.c.bf16 %v7325, %v7324
        %v7340 = vpack.c.bf16 %v7327, %v7326
        %v7341 = vpack.c.bf16 %v7329, %v7328
        %v7342 = vpack.c.bf16 %v7331, %v7330
        %v7343 = vpack.c.bf16 %v7333, %v7332
        %v7344 = vpack.c.bf16 %v7335, %v7334
        %v7345 = vpack.c.bf16 %v7337, %v7336
        %s7346 = scalar_lea.vmem %s1, 672
        %v7347 = vld [vmem:[%s7346] sm:$0xf]
        %v7348 = vld [vmem:[%s7346 + $0x4] sm:$0xf]
        %v7349 = vld [vmem:[%s7346 + $0x8] sm:$0xf]
        %v7350 = vld [vmem:[%s7346 + $0xc] sm:$0xf]
        %v7351 = vld [vmem:[%s7346 + $0x10] sm:$0xf]
        %v7352 = vld [vmem:[%s7346 + $0x14] sm:$0xf]
        %v7353 = vld [vmem:[%s7346 + $0x18] sm:$0xf]
        %v7354 = vld [vmem:[%s7346 + $0x1c] sm:$0xf]
        %v7363 = vunpack.c.l.b16 %v7347
        %v7364 = vunpack.c.l.b16 %v7348
        %v7365 = vunpack.c.l.b16 %v7349
        %v7366 = vunpack.c.l.b16 %v7350
        %v7367 = vunpack.c.l.b16 %v7351
        %v7368 = vunpack.c.l.b16 %v7352
        %v7369 = vunpack.c.l.b16 %v7353
        %v7370 = vunpack.c.l.b16 %v7354
        %v7371 = vpack.c.b16 %v7364, %v7363
        %v7372 = vpack.c.b16 %v7366, %v7365
        %v7373 = vpack.c.b16 %v7368, %v7367
        %v7374 = vpack.c.b16 %v7370, %v7369
        %v7380 = vsel %vm526, %v7338, 0
        %v7383 = vsel %vm526, %v7339, 0
        %v7386 = vsel %vm526, %v7340, 0
        %v7389 = vsel %vm526, %v7341, 0
        %v7392 = vsel %vm526, %v7342, 0
        %v7395 = vsel %vm526, %v7343, 0
        %v7398 = vsel %vm526, %v7344, 0
        %v7401 = vsel %vm526, %v7345, 0
        %7403 = vmatprep.subr.bf16.mxu0 0
        %7404 = vmatpush1.bf16.msra.mxu0 0
        %7405 = vmatprep.subr.bf16.mxu0 0
        %7406 = vmatpush1.bf16.msra.mxu0 0
        %7407 = vmatprep.subr.bf16.mxu0 0
        %7408 = vmatpush1.bf16.msra.mxu0 0
        %7409 = vmatprep.subr.bf16.mxu0 0
        %7410 = vmatpush1.bf16.msra.mxu0 0
        %7411 = vmatprep.subr.bf16.mxu0 0
        %7412 = vmatpush1.bf16.msra.mxu0 %v7374
        %7413 = vmatprep.subr.bf16.mxu0 0
        %7414 = vmatpush1.bf16.msra.mxu0 %v7373
        %7415 = vmatprep.subr.bf16.mxu0 0
        %7416 = vmatpush1.bf16.msra.mxu0 %v7372
        %7417 = vmatprep.subr.bf16.mxu0 0
        %7418 = vmatpush1.bf16.msra.mxu0 %v7371
        %7419 = vmatprep.subr.bf16.mxu0 0
        %7420 = vmatpush2.bf16.msra.mxu0 0
        %7421 = vmatprep.subr.bf16.mxu0 0
        %7422 = vmatpush2.bf16.msra.mxu0 0
        %7423 = vmatprep.subr.bf16.mxu0 0
        %7424 = vmatpush2.bf16.msra.mxu0 0
        %7425 = vmatprep.subr.bf16.mxu0 0
        %7426 = vmatpush2.bf16.msra.mxu0 0
        %7427 = vmatprep.subr.bf16.mxu0 0
        %7428 = vmatpush2.bf16.msra.mxu0 0
        %7429 = vmatprep.subr.bf16.mxu0 0
        %7430 = vmatpush2.bf16.msra.mxu0 0
        %7431 = vmatprep.subr.bf16.mxu0 0
        %7432 = vmatpush2.bf16.msra.mxu0 0
        %7433 = vmatprep.subr.bf16.mxu0 0
        %7434 = vmatpush2.bf16.msra.mxu0 0
        %7435 = vmatprep.mubr.bf16.mxu0 0
        %7436 = vmatmul.mubr.bf16.gmra.mxu0 %v7380
        %v7437 = vpop.f32.mrf.mxu0
        %v7438 = vadd.f32 0.0, %v7437
        %v7439 = vpop.f32.mrf.mxu0
        %v7440 = vpop.f32.mrf.mxu0
        %v7441 = vadd.f32 0.0, %v7440
        %v7442 = vpop.f32.mrf.mxu0
        %7443 = vmatprep.mubr.bf16.mxu0 0
        %7444 = vmatmul.mubr.bf16.gmra.mxu0 %v7383
        %v7445 = vpop.f32.mrf.mxu0
        %v7446 = vadd.f32 0.0, %v7445
        %v7447 = vpop.f32.mrf.mxu0
        %v7448 = vpop.f32.mrf.mxu0
        %v7449 = vadd.f32 0.0, %v7448
        %v7450 = vpop.f32.mrf.mxu0
        %7451 = vmatprep.mubr.bf16.mxu0 0
        %7452 = vmatmul.mubr.bf16.gmra.mxu0 %v7386
        %v7453 = vpop.f32.mrf.mxu0
        %v7454 = vadd.f32 0.0, %v7453
        %v7455 = vpop.f32.mrf.mxu0
        %v7456 = vpop.f32.mrf.mxu0
        %v7457 = vadd.f32 0.0, %v7456
        %v7458 = vpop.f32.mrf.mxu0
        %7459 = vmatprep.mubr.bf16.mxu0 0
        %7460 = vmatmul.mubr.bf16.gmra.mxu0 %v7389
        %v7461 = vpop.f32.mrf.mxu0
        %v7462 = vadd.f32 0.0, %v7461
        %v7463 = vpop.f32.mrf.mxu0
        %v7464 = vpop.f32.mrf.mxu0
        %v7465 = vadd.f32 0.0, %v7464
        %v7466 = vpop.f32.mrf.mxu0
        %7467 = vmatprep.mubr.bf16.mxu0 0
        %7468 = vmatmul.mubr.bf16.gmra.mxu0 %v7392
        %v7469 = vpop.f32.mrf.mxu0
        %v7470 = vadd.f32 0.0, %v7469
        %v7471 = vpop.f32.mrf.mxu0
        %v7472 = vpop.f32.mrf.mxu0
        %v7473 = vadd.f32 0.0, %v7472
        %v7474 = vpop.f32.mrf.mxu0
        %7475 = vmatprep.mubr.bf16.mxu0 0
        %7476 = vmatmul.mubr.bf16.gmra.mxu0 %v7395
        %v7477 = vpop.f32.mrf.mxu0
        %v7478 = vadd.f32 0.0, %v7477
        %v7479 = vpop.f32.mrf.mxu0
        %v7480 = vpop.f32.mrf.mxu0
        %v7481 = vadd.f32 0.0, %v7480
        %v7482 = vpop.f32.mrf.mxu0
        %7483 = vmatprep.mubr.bf16.mxu0 0
        %7484 = vmatmul.mubr.bf16.gmra.mxu0 %v7398
        %v7485 = vpop.f32.mrf.mxu0
        %v7486 = vadd.f32 0.0, %v7485
        %v7487 = vpop.f32.mrf.mxu0
        %v7488 = vpop.f32.mrf.mxu0
        %v7489 = vadd.f32 0.0, %v7488
        %v7490 = vpop.f32.mrf.mxu0
        %7491 = vmatprep.mubr.bf16.mxu0 0
        %7492 = vmatmul.mubr.bf16.gmra.mxu0 %v7401
        %v7493 = vpop.f32.mrf.mxu0
        %v7494 = vadd.f32 0.0, %v7493
        %v7495 = vpop.f32.mrf.mxu0
        %v7496 = vpop.f32.mrf.mxu0
        %v7497 = vadd.f32 0.0, %v7496
        %v7498 = vpop.f32.mrf.mxu0
        %7499 = vdwg.mxu0
        %v7500 = vadd.f32 %v7209, %v7438
        %v7501 = vadd.f32 %v7210, %v7441
        %v7502 = vadd.f32 %v7211, %v7446
        %v7503 = vadd.f32 %v7212, %v7449
        %v7504 = vadd.f32 %v7213, %v7454
        %v7505 = vadd.f32 %v7214, %v7457
        %v7506 = vadd.f32 %v7215, %v7462
        %v7507 = vadd.f32 %v7216, %v7465
        %v7508 = vadd.f32 %v7217, %v7470
        %v7509 = vadd.f32 %v7218, %v7473
        %v7510 = vadd.f32 %v7219, %v7478
        %v7511 = vadd.f32 %v7220, %v7481
        %v7512 = vadd.f32 %v7221, %v7486
        %v7513 = vadd.f32 %v7222, %v7489
        %v7514 = vadd.f32 %v7223, %v7494
        %v7515 = vadd.f32 %v7224, %v7497
        %7516 = vst [vmem:[%s217] sm:$0xff] %v7500
        %7517 = vst [vmem:[%s217 + $0x8] sm:$0xff] %v7501
        %7518 = vst [vmem:[%s217 + $0x10] sm:$0xff] %v7502
        %7519 = vst [vmem:[%s217 + $0x18] sm:$0xff] %v7503
        %7520 = vst [vmem:[%s217 + $0x20] sm:$0xff] %v7504
        %7521 = vst [vmem:[%s217 + $0x28] sm:$0xff] %v7505
        %7522 = vst [vmem:[%s217 + $0x30] sm:$0xff] %v7506
        %7523 = vst [vmem:[%s217 + $0x38] sm:$0xff] %v7507
        %7524 = vst [vmem:[%s217 + $0x40] sm:$0xff] %v7508
        %7525 = vst [vmem:[%s217 + $0x48] sm:$0xff] %v7509
        %7526 = vst [vmem:[%s217 + $0x50] sm:$0xff] %v7510
        %7527 = vst [vmem:[%s217 + $0x58] sm:$0xff] %v7511
        %7528 = vst [vmem:[%s217 + $0x60] sm:$0xff] %v7512
        %7529 = vst [vmem:[%s217 + $0x68] sm:$0xff] %v7513
        %7530 = vst [vmem:[%s217 + $0x70] sm:$0xff] %v7514
        %7531 = vst [vmem:[%s217 + $0x78] sm:$0xff] %v7515
        %v7532 = vld [vmem:[%s217] sm:$0xff]
        %v7533 = vld [vmem:[%s217 + $0x8] sm:$0xff]
        %v7534 = vld [vmem:[%s217 + $0x10] sm:$0xff]
        %v7535 = vld [vmem:[%s217 + $0x18] sm:$0xff]
        %v7536 = vld [vmem:[%s217 + $0x20] sm:$0xff]
        %v7537 = vld [vmem:[%s217 + $0x28] sm:$0xff]
        %v7538 = vld [vmem:[%s217 + $0x30] sm:$0xff]
        %v7539 = vld [vmem:[%s217 + $0x38] sm:$0xff]
        %v7540 = vld [vmem:[%s217 + $0x40] sm:$0xff]
        %v7541 = vld [vmem:[%s217 + $0x48] sm:$0xff]
        %v7542 = vld [vmem:[%s217 + $0x50] sm:$0xff]
        %v7543 = vld [vmem:[%s217 + $0x58] sm:$0xff]
        %v7544 = vld [vmem:[%s217 + $0x60] sm:$0xff]
        %v7545 = vld [vmem:[%s217 + $0x68] sm:$0xff]
        %v7546 = vld [vmem:[%s217 + $0x70] sm:$0xff]
        %v7547 = vld [vmem:[%s217 + $0x78] sm:$0xff]
        %s7548 = scalar_lea.vmem %s2, 2816
        %v7549 = vld [vmem:[%s7548] sm:$0xff]
        %v7550 = vld [vmem:[%s7548 + $0x8] sm:$0xff]
        %v7551 = vld [vmem:[%s7548 + $0x10] sm:$0xff]
        %v7552 = vld [vmem:[%s7548 + $0x18] sm:$0xff]
        %v7553 = vld [vmem:[%s7548 + $0x20] sm:$0xff]
        %v7554 = vld [vmem:[%s7548 + $0x28] sm:$0xff]
        %v7555 = vld [vmem:[%s7548 + $0x30] sm:$0xff]
        %v7556 = vld [vmem:[%s7548 + $0x38] sm:$0xff]
        %v7557 = vld [vmem:[%s7548 + $0x40] sm:$0xff]
        %v7558 = vld [vmem:[%s7548 + $0x48] sm:$0xff]
        %v7559 = vld [vmem:[%s7548 + $0x50] sm:$0xff]
        %v7560 = vld [vmem:[%s7548 + $0x58] sm:$0xff]
        %v7561 = vld [vmem:[%s7548 + $0x60] sm:$0xff]
        %v7562 = vld [vmem:[%s7548 + $0x68] sm:$0xff]
        %v7563 = vld [vmem:[%s7548 + $0x70] sm:$0xff]
        %v7564 = vld [vmem:[%s7548 + $0x78] sm:$0xff]
        %7566 = vset.pattern.permute.xlu0 0
        %7567 = vperm.xlu0 %7566, %v7549
        %v7568 = vpop.permute.xlu0 %7567
        %7571 = vset.pattern.permute.xlu0 0
        %7572 = vperm.xlu0 %7571, %v7550
        %v7573 = vpop.permute.xlu0 %7572
        %7576 = vset.pattern.permute.xlu0 0
        %7577 = vperm.xlu0 %7576, %v7551
        %v7578 = vpop.permute.xlu0 %7577
        %7581 = vset.pattern.permute.xlu0 0
        %7582 = vperm.xlu0 %7581, %v7552
        %v7583 = vpop.permute.xlu0 %7582
        %7586 = vset.pattern.permute.xlu0 0
        %7587 = vperm.xlu0 %7586, %v7553
        %v7588 = vpop.permute.xlu0 %7587
        %7591 = vset.pattern.permute.xlu0 0
        %7592 = vperm.xlu0 %7591, %v7554
        %v7593 = vpop.permute.xlu0 %7592
        %7596 = vset.pattern.permute.xlu0 0
        %7597 = vperm.xlu0 %7596, %v7555
        %v7598 = vpop.permute.xlu0 %7597
        %7601 = vset.pattern.permute.xlu0 0
        %7602 = vperm.xlu0 %7601, %v7556
        %v7603 = vpop.permute.xlu0 %7602
        %7606 = vset.pattern.permute.xlu0 0
        %7607 = vperm.xlu0 %7606, %v7557
        %v7608 = vpop.permute.xlu0 %7607
        %7611 = vset.pattern.permute.xlu0 0
        %7612 = vperm.xlu0 %7611, %v7558
        %v7613 = vpop.permute.xlu0 %7612
        %7616 = vset.pattern.permute.xlu0 0
        %7617 = vperm.xlu0 %7616, %v7559
        %v7618 = vpop.permute.xlu0 %7617
        %7621 = vset.pattern.permute.xlu0 0
        %7622 = vperm.xlu0 %7621, %v7560
        %v7623 = vpop.permute.xlu0 %7622
        %7626 = vset.pattern.permute.xlu0 0
        %7627 = vperm.xlu0 %7626, %v7561
        %v7628 = vpop.permute.xlu0 %7627
        %7631 = vset.pattern.permute.xlu0 0
        %7632 = vperm.xlu0 %7631, %v7562
        %v7633 = vpop.permute.xlu0 %7632
        %7636 = vset.pattern.permute.xlu0 0
        %7637 = vperm.xlu0 %7636, %v7563
        %v7638 = vpop.permute.xlu0 %7637
        %7641 = vset.pattern.permute.xlu0 0
        %7642 = vperm.xlu0 %7641, %v7564
        %v7643 = vpop.permute.xlu0 %7642
        %v7645 = vmul.f32 %v2491, %v7568
        %v7646 = vmul.f32 %v2490, %v7573
        %v7647 = vmul.f32 %v2489, %v7578
        %v7648 = vmul.f32 %v2488, %v7583
        %v7649 = vmul.f32 %v2487, %v7588
        %v7650 = vmul.f32 %v2486, %v7593
        %v7651 = vmul.f32 %v2485, %v7598
        %v7652 = vmul.f32 %v2484, %v7603
        %v7653 = vmul.f32 %v2483, %v7608
        %v7654 = vmul.f32 %v2482, %v7613
        %v7655 = vmul.f32 %v2481, %v7618
        %v7656 = vmul.f32 %v2480, %v7623
        %v7657 = vmul.f32 %v2479, %v7628
        %v7658 = vmul.f32 %v2478, %v7633
        %v7659 = vmul.f32 %v2477, %v7638
        %v7660 = vmul.f32 %v2492, %v7643
        %v7661 = vpack.c.bf16 %v7646, %v7645
        %v7662 = vpack.c.bf16 %v7648, %v7647
        %v7663 = vpack.c.bf16 %v7650, %v7649
        %v7664 = vpack.c.bf16 %v7652, %v7651
        %v7665 = vpack.c.bf16 %v7654, %v7653
        %v7666 = vpack.c.bf16 %v7656, %v7655
        %v7667 = vpack.c.bf16 %v7658, %v7657
        %v7668 = vpack.c.bf16 %v7660, %v7659
        %s7669 = scalar_lea.vmem %s1, 704
        %v7670 = vld [vmem:[%s7669] sm:$0xf]
        %v7671 = vld [vmem:[%s7669 + $0x4] sm:$0xf]
        %v7672 = vld [vmem:[%s7669 + $0x8] sm:$0xf]
        %v7673 = vld [vmem:[%s7669 + $0xc] sm:$0xf]
        %v7674 = vld [vmem:[%s7669 + $0x10] sm:$0xf]
        %v7675 = vld [vmem:[%s7669 + $0x14] sm:$0xf]
        %v7676 = vld [vmem:[%s7669 + $0x18] sm:$0xf]
        %v7677 = vld [vmem:[%s7669 + $0x1c] sm:$0xf]
        %v7686 = vunpack.c.l.b16 %v7670
        %v7687 = vunpack.c.l.b16 %v7671
        %v7688 = vunpack.c.l.b16 %v7672
        %v7689 = vunpack.c.l.b16 %v7673
        %v7690 = vunpack.c.l.b16 %v7674
        %v7691 = vunpack.c.l.b16 %v7675
        %v7692 = vunpack.c.l.b16 %v7676
        %v7693 = vunpack.c.l.b16 %v7677
        %v7694 = vpack.c.b16 %v7687, %v7686
        %v7695 = vpack.c.b16 %v7689, %v7688
        %v7696 = vpack.c.b16 %v7691, %v7690
        %v7697 = vpack.c.b16 %v7693, %v7692
        %v7703 = vsel %vm526, %v7661, 0
        %v7706 = vsel %vm526, %v7662, 0
        %v7709 = vsel %vm526, %v7663, 0
        %v7712 = vsel %vm526, %v7664, 0
        %v7715 = vsel %vm526, %v7665, 0
        %v7718 = vsel %vm526, %v7666, 0
        %v7721 = vsel %vm526, %v7667, 0
        %v7724 = vsel %vm526, %v7668, 0
        %7726 = vmatprep.subr.bf16.mxu0 0
        %7727 = vmatpush1.bf16.msra.mxu0 0
        %7728 = vmatprep.subr.bf16.mxu0 0
        %7729 = vmatpush1.bf16.msra.mxu0 0
        %7730 = vmatprep.subr.bf16.mxu0 0
        %7731 = vmatpush1.bf16.msra.mxu0 0
        %7732 = vmatprep.subr.bf16.mxu0 0
        %7733 = vmatpush1.bf16.msra.mxu0 0
        %7734 = vmatprep.subr.bf16.mxu0 0
        %7735 = vmatpush1.bf16.msra.mxu0 %v7697
        %7736 = vmatprep.subr.bf16.mxu0 0
        %7737 = vmatpush1.bf16.msra.mxu0 %v7696
        %7738 = vmatprep.subr.bf16.mxu0 0
        %7739 = vmatpush1.bf16.msra.mxu0 %v7695
        %7740 = vmatprep.subr.bf16.mxu0 0
        %7741 = vmatpush1.bf16.msra.mxu0 %v7694
        %7742 = vmatprep.subr.bf16.mxu0 0
        %7743 = vmatpush2.bf16.msra.mxu0 0
        %7744 = vmatprep.subr.bf16.mxu0 0
        %7745 = vmatpush2.bf16.msra.mxu0 0
        %7746 = vmatprep.subr.bf16.mxu0 0
        %7747 = vmatpush2.bf16.msra.mxu0 0
        %7748 = vmatprep.subr.bf16.mxu0 0
        %7749 = vmatpush2.bf16.msra.mxu0 0
        %7750 = vmatprep.subr.bf16.mxu0 0
        %7751 = vmatpush2.bf16.msra.mxu0 0
        %7752 = vmatprep.subr.bf16.mxu0 0
        %7753 = vmatpush2.bf16.msra.mxu0 0
        %7754 = vmatprep.subr.bf16.mxu0 0
        %7755 = vmatpush2.bf16.msra.mxu0 0
        %7756 = vmatprep.subr.bf16.mxu0 0
        %7757 = vmatpush2.bf16.msra.mxu0 0
        %7758 = vmatprep.mubr.bf16.mxu0 0
        %7759 = vmatmul.mubr.bf16.gmra.mxu0 %v7703
        %v7760 = vpop.f32.mrf.mxu0
        %v7761 = vadd.f32 0.0, %v7760
        %v7762 = vpop.f32.mrf.mxu0
        %v7763 = vpop.f32.mrf.mxu0
        %v7764 = vadd.f32 0.0, %v7763
        %v7765 = vpop.f32.mrf.mxu0
        %7766 = vmatprep.mubr.bf16.mxu0 0
        %7767 = vmatmul.mubr.bf16.gmra.mxu0 %v7706
        %v7768 = vpop.f32.mrf.mxu0
        %v7769 = vadd.f32 0.0, %v7768
        %v7770 = vpop.f32.mrf.mxu0
        %v7771 = vpop.f32.mrf.mxu0
        %v7772 = vadd.f32 0.0, %v7771
        %v7773 = vpop.f32.mrf.mxu0
        %7774 = vmatprep.mubr.bf16.mxu0 0
        %7775 = vmatmul.mubr.bf16.gmra.mxu0 %v7709
        %v7776 = vpop.f32.mrf.mxu0
        %v7777 = vadd.f32 0.0, %v7776
        %v7778 = vpop.f32.mrf.mxu0
        %v7779 = vpop.f32.mrf.mxu0
        %v7780 = vadd.f32 0.0, %v7779
        %v7781 = vpop.f32.mrf.mxu0
        %7782 = vmatprep.mubr.bf16.mxu0 0
        %7783 = vmatmul.mubr.bf16.gmra.mxu0 %v7712
        %v7784 = vpop.f32.mrf.mxu0
        %v7785 = vadd.f32 0.0, %v7784
        %v7786 = vpop.f32.mrf.mxu0
        %v7787 = vpop.f32.mrf.mxu0
        %v7788 = vadd.f32 0.0, %v7787
        %v7789 = vpop.f32.mrf.mxu0
        %7790 = vmatprep.mubr.bf16.mxu0 0
        %7791 = vmatmul.mubr.bf16.gmra.mxu0 %v7715
        %v7792 = vpop.f32.mrf.mxu0
        %v7793 = vadd.f32 0.0, %v7792
        %v7794 = vpop.f32.mrf.mxu0
        %v7795 = vpop.f32.mrf.mxu0
        %v7796 = vadd.f32 0.0, %v7795
        %v7797 = vpop.f32.mrf.mxu0
        %7798 = vmatprep.mubr.bf16.mxu0 0
        %7799 = vmatmul.mubr.bf16.gmra.mxu0 %v7718
        %v7800 = vpop.f32.mrf.mxu0
        %v7801 = vadd.f32 0.0, %v7800
        %v7802 = vpop.f32.mrf.mxu0
        %v7803 = vpop.f32.mrf.mxu0
        %v7804 = vadd.f32 0.0, %v7803
        %v7805 = vpop.f32.mrf.mxu0
        %7806 = vmatprep.mubr.bf16.mxu0 0
        %7807 = vmatmul.mubr.bf16.gmra.mxu0 %v7721
        %v7808 = vpop.f32.mrf.mxu0
        %v7809 = vadd.f32 0.0, %v7808
        %v7810 = vpop.f32.mrf.mxu0
        %v7811 = vpop.f32.mrf.mxu0
        %v7812 = vadd.f32 0.0, %v7811
        %v7813 = vpop.f32.mrf.mxu0
        %7814 = vmatprep.mubr.bf16.mxu0 0
        %7815 = vmatmul.mubr.bf16.gmra.mxu0 %v7724
        %v7816 = vpop.f32.mrf.mxu0
        %v7817 = vadd.f32 0.0, %v7816
        %v7818 = vpop.f32.mrf.mxu0
        %v7819 = vpop.f32.mrf.mxu0
        %v7820 = vadd.f32 0.0, %v7819
        %v7821 = vpop.f32.mrf.mxu0
        %7822 = vdwg.mxu0
        %v7823 = vadd.f32 %v7532, %v7761
        %v7824 = vadd.f32 %v7533, %v7764
        %v7825 = vadd.f32 %v7534, %v7769
        %v7826 = vadd.f32 %v7535, %v7772
        %v7827 = vadd.f32 %v7536, %v7777
        %v7828 = vadd.f32 %v7537, %v7780
        %v7829 = vadd.f32 %v7538, %v7785
        %v7830 = vadd.f32 %v7539, %v7788
        %v7831 = vadd.f32 %v7540, %v7793
        %v7832 = vadd.f32 %v7541, %v7796
        %v7833 = vadd.f32 %v7542, %v7801
        %v7834 = vadd.f32 %v7543, %v7804
        %v7835 = vadd.f32 %v7544, %v7809
        %v7836 = vadd.f32 %v7545, %v7812
        %v7837 = vadd.f32 %v7546, %v7817
        %v7838 = vadd.f32 %v7547, %v7820
        %7839 = vst [vmem:[%s217] sm:$0xff] %v7823
        %7840 = vst [vmem:[%s217 + $0x8] sm:$0xff] %v7824
        %7841 = vst [vmem:[%s217 + $0x10] sm:$0xff] %v7825
        %7842 = vst [vmem:[%s217 + $0x18] sm:$0xff] %v7826
        %7843 = vst [vmem:[%s217 + $0x20] sm:$0xff] %v7827
        %7844 = vst [vmem:[%s217 + $0x28] sm:$0xff] %v7828
        %7845 = vst [vmem:[%s217 + $0x30] sm:$0xff] %v7829
        %7846 = vst [vmem:[%s217 + $0x38] sm:$0xff] %v7830
        %7847 = vst [vmem:[%s217 + $0x40] sm:$0xff] %v7831
        %7848 = vst [vmem:[%s217 + $0x48] sm:$0xff] %v7832
        %7849 = vst [vmem:[%s217 + $0x50] sm:$0xff] %v7833
        %7850 = vst [vmem:[%s217 + $0x58] sm:$0xff] %v7834
        %7851 = vst [vmem:[%s217 + $0x60] sm:$0xff] %v7835
        %7852 = vst [vmem:[%s217 + $0x68] sm:$0xff] %v7836
        %7853 = vst [vmem:[%s217 + $0x70] sm:$0xff] %v7837
        %7854 = vst [vmem:[%s217 + $0x78] sm:$0xff] %v7838
        %v7855 = vld [vmem:[%s217] sm:$0xff]
        %v7856 = vld [vmem:[%s217 + $0x8] sm:$0xff]
        %v7857 = vld [vmem:[%s217 + $0x10] sm:$0xff]
        %v7858 = vld [vmem:[%s217 + $0x18] sm:$0xff]
        %v7859 = vld [vmem:[%s217 + $0x20] sm:$0xff]
        %v7860 = vld [vmem:[%s217 + $0x28] sm:$0xff]
        %v7861 = vld [vmem:[%s217 + $0x30] sm:$0xff]
        %v7862 = vld [vmem:[%s217 + $0x38] sm:$0xff]
        %v7863 = vld [vmem:[%s217 + $0x40] sm:$0xff]
        %v7864 = vld [vmem:[%s217 + $0x48] sm:$0xff]
        %v7865 = vld [vmem:[%s217 + $0x50] sm:$0xff]
        %v7866 = vld [vmem:[%s217 + $0x58] sm:$0xff]
        %v7867 = vld [vmem:[%s217 + $0x60] sm:$0xff]
        %v7868 = vld [vmem:[%s217 + $0x68] sm:$0xff]
        %v7869 = vld [vmem:[%s217 + $0x70] sm:$0xff]
        %v7870 = vld [vmem:[%s217 + $0x78] sm:$0xff]
        %s7871 = scalar_lea.vmem %s2, 2944
        %v7872 = vld [vmem:[%s7871] sm:$0xff]
        %v7873 = vld [vmem:[%s7871 + $0x8] sm:$0xff]
        %v7874 = vld [vmem:[%s7871 + $0x10] sm:$0xff]
        %v7875 = vld [vmem:[%s7871 + $0x18] sm:$0xff]
        %v7876 = vld [vmem:[%s7871 + $0x20] sm:$0xff]
        %v7877 = vld [vmem:[%s7871 + $0x28] sm:$0xff]
        %v7878 = vld [vmem:[%s7871 + $0x30] sm:$0xff]
        %v7879 = vld [vmem:[%s7871 + $0x38] sm:$0xff]
        %v7880 = vld [vmem:[%s7871 + $0x40] sm:$0xff]
        %v7881 = vld [vmem:[%s7871 + $0x48] sm:$0xff]
        %v7882 = vld [vmem:[%s7871 + $0x50] sm:$0xff]
        %v7883 = vld [vmem:[%s7871 + $0x58] sm:$0xff]
        %v7884 = vld [vmem:[%s7871 + $0x60] sm:$0xff]
        %v7885 = vld [vmem:[%s7871 + $0x68] sm:$0xff]
        %v7886 = vld [vmem:[%s7871 + $0x70] sm:$0xff]
        %v7887 = vld [vmem:[%s7871 + $0x78] sm:$0xff]
        %7889 = vset.pattern.permute.xlu0 0
        %7890 = vperm.xlu0 %7889, %v7872
        %v7891 = vpop.permute.xlu0 %7890
        %7894 = vset.pattern.permute.xlu0 0
        %7895 = vperm.xlu0 %7894, %v7873
        %v7896 = vpop.permute.xlu0 %7895
        %7899 = vset.pattern.permute.xlu0 0
        %7900 = vperm.xlu0 %7899, %v7874
        %v7901 = vpop.permute.xlu0 %7900
        %7904 = vset.pattern.permute.xlu0 0
        %7905 = vperm.xlu0 %7904, %v7875
        %v7906 = vpop.permute.xlu0 %7905
        %7909 = vset.pattern.permute.xlu0 0
        %7910 = vperm.xlu0 %7909, %v7876
        %v7911 = vpop.permute.xlu0 %7910
        %7914 = vset.pattern.permute.xlu0 0
        %7915 = vperm.xlu0 %7914, %v7877
        %v7916 = vpop.permute.xlu0 %7915
        %7919 = vset.pattern.permute.xlu0 0
        %7920 = vperm.xlu0 %7919, %v7878
        %v7921 = vpop.permute.xlu0 %7920
        %7924 = vset.pattern.permute.xlu0 0
        %7925 = vperm.xlu0 %7924, %v7879
        %v7926 = vpop.permute.xlu0 %7925
        %7929 = vset.pattern.permute.xlu0 0
        %7930 = vperm.xlu0 %7929, %v7880
        %v7931 = vpop.permute.xlu0 %7930
        %7934 = vset.pattern.permute.xlu0 0
        %7935 = vperm.xlu0 %7934, %v7881
        %v7936 = vpop.permute.xlu0 %7935
        %7939 = vset.pattern.permute.xlu0 0
        %7940 = vperm.xlu0 %7939, %v7882
        %v7941 = vpop.permute.xlu0 %7940
        %7944 = vset.pattern.permute.xlu0 0
        %7945 = vperm.xlu0 %7944, %v7883
        %v7946 = vpop.permute.xlu0 %7945
        %7949 = vset.pattern.permute.xlu0 0
        %7950 = vperm.xlu0 %7949, %v7884
        %v7951 = vpop.permute.xlu0 %7950
        %7954 = vset.pattern.permute.xlu0 0
        %7955 = vperm.xlu0 %7954, %v7885
        %v7956 = vpop.permute.xlu0 %7955
        %7959 = vset.pattern.permute.xlu0 0
        %7960 = vperm.xlu0 %7959, %v7886
        %v7961 = vpop.permute.xlu0 %7960
        %7964 = vset.pattern.permute.xlu0 0
        %7965 = vperm.xlu0 %7964, %v7887
        %v7966 = vpop.permute.xlu0 %7965
        %v7968 = vmul.f32 %v324, %v7891
        %v7969 = vmul.f32 %v325, %v7896
        %v7970 = vmul.f32 %v326, %v7901
        %v7971 = vmul.f32 %v327, %v7906
        %v7972 = vmul.f32 %v328, %v7911
        %v7973 = vmul.f32 %v329, %v7916
        %v7974 = vmul.f32 %v330, %v7921
        %v7975 = vmul.f32 %v331, %v7926
        %v7976 = vmul.f32 %v332, %v7931
        %v7977 = vmul.f32 %v333, %v7936
        %v7978 = vmul.f32 %v334, %v7941
        %v7979 = vmul.f32 %v335, %v7946
        %v7980 = vmul.f32 %v336, %v7951
        %v7981 = vmul.f32 %v337, %v7956
        %v7982 = vmul.f32 %v338, %v7961
        %v7983 = vmul.f32 %v323, %v7966
        %v7984 = vpack.c.bf16 %v7969, %v7968
        %v7985 = vpack.c.bf16 %v7971, %v7970
        %v7986 = vpack.c.bf16 %v7973, %v7972
        %v7987 = vpack.c.bf16 %v7975, %v7974
        %v7988 = vpack.c.bf16 %v7977, %v7976
        %v7989 = vpack.c.bf16 %v7979, %v7978
        %v7990 = vpack.c.bf16 %v7981, %v7980
        %v7991 = vpack.c.bf16 %v7983, %v7982
        %s7992 = scalar_lea.vmem %s1, 736
        %v7993 = vld [vmem:[%s7992] sm:$0xf]
        %v7994 = vld [vmem:[%s7992 + $0x4] sm:$0xf]
        %v7995 = vld [vmem:[%s7992 + $0x8] sm:$0xf]
        %v7996 = vld [vmem:[%s7992 + $0xc] sm:$0xf]
        %v7997 = vld [vmem:[%s7992 + $0x10] sm:$0xf]
        %v7998 = vld [vmem:[%s7992 + $0x14] sm:$0xf]
        %v7999 = vld [vmem:[%s7992 + $0x18] sm:$0xf]
        %v8000 = vld [vmem:[%s7992 + $0x1c] sm:$0xf]
        %v8009 = vunpack.c.l.b16 %v7993
        %v8010 = vunpack.c.l.b16 %v7994
        %v8011 = vunpack.c.l.b16 %v7995
        %v8012 = vunpack.c.l.b16 %v7996
        %v8013 = vunpack.c.l.b16 %v7997
        %v8014 = vunpack.c.l.b16 %v7998
        %v8015 = vunpack.c.l.b16 %v7999
        %v8016 = vunpack.c.l.b16 %v8000
        %v8017 = vpack.c.b16 %v8010, %v8009
        %v8018 = vpack.c.b16 %v8012, %v8011
        %v8019 = vpack.c.b16 %v8014, %v8013
        %v8020 = vpack.c.b16 %v8016, %v8015
        %v8026 = vsel %vm526, %v7984, 0
        %v8029 = vsel %vm526, %v7985, 0
        %v8032 = vsel %vm526, %v7986, 0
        %v8035 = vsel %vm526, %v7987, 0
        %v8038 = vsel %vm526, %v7988, 0
        %v8041 = vsel %vm526, %v7989, 0
        %v8044 = vsel %vm526, %v7990, 0
        %v8047 = vsel %vm526, %v7991, 0
        %8049 = vmatprep.subr.bf16.mxu0 0
        %8050 = vmatpush1.bf16.msra.mxu0 0
        %8051 = vmatprep.subr.bf16.mxu0 0
        %8052 = vmatpush1.bf16.msra.mxu0 0
        %8053 = vmatprep.subr.bf16.mxu0 0
        %8054 = vmatpush1.bf16.msra.mxu0 0
        %8055 = vmatprep.subr.bf16.mxu0 0
        %8056 = vmatpush1.bf16.msra.mxu0 0
        %8057 = vmatprep.subr.bf16.mxu0 0
        %8058 = vmatpush1.bf16.msra.mxu0 %v8020
        %8059 = vmatprep.subr.bf16.mxu0 0
        %8060 = vmatpush1.bf16.msra.mxu0 %v8019
        %8061 = vmatprep.subr.bf16.mxu0 0
        %8062 = vmatpush1.bf16.msra.mxu0 %v8018
        %8063 = vmatprep.subr.bf16.mxu0 0
        %8064 = vmatpush1.bf16.msra.mxu0 %v8017
        %8065 = vmatprep.subr.bf16.mxu0 0
        %8066 = vmatpush2.bf16.msra.mxu0 0
        %8067 = vmatprep.subr.bf16.mxu0 0
        %8068 = vmatpush2.bf16.msra.mxu0 0
        %8069 = vmatprep.subr.bf16.mxu0 0
        %8070 = vmatpush2.bf16.msra.mxu0 0
        %8071 = vmatprep.subr.bf16.mxu0 0
        %8072 = vmatpush2.bf16.msra.mxu0 0
        %8073 = vmatprep.subr.bf16.mxu0 0
        %8074 = vmatpush2.bf16.msra.mxu0 0
        %8075 = vmatprep.subr.bf16.mxu0 0
        %8076 = vmatpush2.bf16.msra.mxu0 0
        %8077 = vmatprep.subr.bf16.mxu0 0
        %8078 = vmatpush2.bf16.msra.mxu0 0
        %8079 = vmatprep.subr.bf16.mxu0 0
        %8080 = vmatpush2.bf16.msra.mxu0 0
        %8081 = vmatprep.mubr.bf16.mxu0 0
        %8082 = vmatmul.mubr.bf16.gmra.mxu0 %v8026
        %v8083 = vpop.f32.mrf.mxu0
        %v8084 = vadd.f32 0.0, %v8083
        %v8085 = vpop.f32.mrf.mxu0
        %v8086 = vpop.f32.mrf.mxu0
        %v8087 = vadd.f32 0.0, %v8086
        %v8088 = vpop.f32.mrf.mxu0
        %8089 = vmatprep.mubr.bf16.mxu0 0
        %8090 = vmatmul.mubr.bf16.gmra.mxu0 %v8029
        %v8091 = vpop.f32.mrf.mxu0
        %v8092 = vadd.f32 0.0, %v8091
        %v8093 = vpop.f32.mrf.mxu0
        %v8094 = vpop.f32.mrf.mxu0
        %v8095 = vadd.f32 0.0, %v8094
        %v8096 = vpop.f32.mrf.mxu0
        %8097 = vmatprep.mubr.bf16.mxu0 0
        %8098 = vmatmul.mubr.bf16.gmra.mxu0 %v8032
        %v8099 = vpop.f32.mrf.mxu0
        %v8100 = vadd.f32 0.0, %v8099
        %v8101 = vpop.f32.mrf.mxu0
        %v8102 = vpop.f32.mrf.mxu0
        %v8103 = vadd.f32 0.0, %v8102
        %v8104 = vpop.f32.mrf.mxu0
        %8105 = vmatprep.mubr.bf16.mxu0 0
        %8106 = vmatmul.mubr.bf16.gmra.mxu0 %v8035
        %v8107 = vpop.f32.mrf.mxu0
        %v8108 = vadd.f32 0.0, %v8107
        %v8109 = vpop.f32.mrf.mxu0
        %v8110 = vpop.f32.mrf.mxu0
        %v8111 = vadd.f32 0.0, %v8110
        %v8112 = vpop.f32.mrf.mxu0
        %8113 = vmatprep.mubr.bf16.mxu0 0
        %8114 = vmatmul.mubr.bf16.gmra.mxu0 %v8038
        %v8115 = vpop.f32.mrf.mxu0
        %v8116 = vadd.f32 0.0, %v8115
        %v8117 = vpop.f32.mrf.mxu0
        %v8118 = vpop.f32.mrf.mxu0
        %v8119 = vadd.f32 0.0, %v8118
        %v8120 = vpop.f32.mrf.mxu0
        %8121 = vmatprep.mubr.bf16.mxu0 0
        %8122 = vmatmul.mubr.bf16.gmra.mxu0 %v8041
        %v8123 = vpop.f32.mrf.mxu0
        %v8124 = vadd.f32 0.0, %v8123
        %v8125 = vpop.f32.mrf.mxu0
        %v8126 = vpop.f32.mrf.mxu0
        %v8127 = vadd.f32 0.0, %v8126
        %v8128 = vpop.f32.mrf.mxu0
        %8129 = vmatprep.mubr.bf16.mxu0 0
        %8130 = vmatmul.mubr.bf16.gmra.mxu0 %v8044
        %v8131 = vpop.f32.mrf.mxu0
        %v8132 = vadd.f32 0.0, %v8131
        %v8133 = vpop.f32.mrf.mxu0
        %v8134 = vpop.f32.mrf.mxu0
        %v8135 = vadd.f32 0.0, %v8134
        %v8136 = vpop.f32.mrf.mxu0
        %8137 = vmatprep.mubr.bf16.mxu0 0
        %8138 = vmatmul.mubr.bf16.gmra.mxu0 %v8047
        %v8139 = vpop.f32.mrf.mxu0
        %v8140 = vadd.f32 0.0, %v8139
        %v8141 = vpop.f32.mrf.mxu0
        %v8142 = vpop.f32.mrf.mxu0
        %v8143 = vadd.f32 0.0, %v8142
        %v8144 = vpop.f32.mrf.mxu0
        %8145 = vdwg.mxu0
        %v8146 = vadd.f32 %v7855, %v8084
        %v8147 = vadd.f32 %v7856, %v8087
        %v8148 = vadd.f32 %v7857, %v8092
        %v8149 = vadd.f32 %v7858, %v8095
        %v8150 = vadd.f32 %v7859, %v8100
        %v8151 = vadd.f32 %v7860, %v8103
        %v8152 = vadd.f32 %v7861, %v8108
        %v8153 = vadd.f32 %v7862, %v8111
        %v8154 = vadd.f32 %v7863, %v8116
        %v8155 = vadd.f32 %v7864, %v8119
        %v8156 = vadd.f32 %v7865, %v8124
        %v8157 = vadd.f32 %v7866, %v8127
        %v8158 = vadd.f32 %v7867, %v8132
        %v8159 = vadd.f32 %v7868, %v8135
        %v8160 = vadd.f32 %v7869, %v8140
        %v8161 = vadd.f32 %v7870, %v8143
        %8162 = vst [vmem:[%s217] sm:$0xff] %v8146
        %8163 = vst [vmem:[%s217 + $0x8] sm:$0xff] %v8147
        %8164 = vst [vmem:[%s217 + $0x10] sm:$0xff] %v8148
        %8165 = vst [vmem:[%s217 + $0x18] sm:$0xff] %v8149
        %8166 = vst [vmem:[%s217 + $0x20] sm:$0xff] %v8150
        %8167 = vst [vmem:[%s217 + $0x28] sm:$0xff] %v8151
        %8168 = vst [vmem:[%s217 + $0x30] sm:$0xff] %v8152
        %8169 = vst [vmem:[%s217 + $0x38] sm:$0xff] %v8153
        %8170 = vst [vmem:[%s217 + $0x40] sm:$0xff] %v8154
        %8171 = vst [vmem:[%s217 + $0x48] sm:$0xff] %v8155
        %8172 = vst [vmem:[%s217 + $0x50] sm:$0xff] %v8156
        %8173 = vst [vmem:[%s217 + $0x58] sm:$0xff] %v8157
        %8174 = vst [vmem:[%s217 + $0x60] sm:$0xff] %v8158
        %8175 = vst [vmem:[%s217 + $0x68] sm:$0xff] %v8159
        %8176 = vst [vmem:[%s217 + $0x70] sm:$0xff] %v8160
        %8177 = vst [vmem:[%s217 + $0x78] sm:$0xff] %v8161
        %v8178 = vld [vmem:[%s217] sm:$0xff]
        %v8179 = vld [vmem:[%s217 + $0x8] sm:$0xff]
        %v8180 = vld [vmem:[%s217 + $0x10] sm:$0xff]
        %v8181 = vld [vmem:[%s217 + $0x18] sm:$0xff]
        %v8182 = vld [vmem:[%s217 + $0x20] sm:$0xff]
        %v8183 = vld [vmem:[%s217 + $0x28] sm:$0xff]
        %v8184 = vld [vmem:[%s217 + $0x30] sm:$0xff]
        %v8185 = vld [vmem:[%s217 + $0x38] sm:$0xff]
        %v8186 = vld [vmem:[%s217 + $0x40] sm:$0xff]
        %v8187 = vld [vmem:[%s217 + $0x48] sm:$0xff]
        %v8188 = vld [vmem:[%s217 + $0x50] sm:$0xff]
        %v8189 = vld [vmem:[%s217 + $0x58] sm:$0xff]
        %v8190 = vld [vmem:[%s217 + $0x60] sm:$0xff]
        %v8191 = vld [vmem:[%s217 + $0x68] sm:$0xff]
        %v8192 = vld [vmem:[%s217 + $0x70] sm:$0xff]
        %v8193 = vld [vmem:[%s217 + $0x78] sm:$0xff]
        %s8194 = scalar_lea.vmem %s2, 3072
        %v8195 = vld [vmem:[%s8194] sm:$0xff]
        %v8196 = vld [vmem:[%s8194 + $0x8] sm:$0xff]
        %v8197 = vld [vmem:[%s8194 + $0x10] sm:$0xff]
        %v8198 = vld [vmem:[%s8194 + $0x18] sm:$0xff]
        %v8199 = vld [vmem:[%s8194 + $0x20] sm:$0xff]
        %v8200 = vld [vmem:[%s8194 + $0x28] sm:$0xff]
        %v8201 = vld [vmem:[%s8194 + $0x30] sm:$0xff]
        %v8202 = vld [vmem:[%s8194 + $0x38] sm:$0xff]
        %v8203 = vld [vmem:[%s8194 + $0x40] sm:$0xff]
        %v8204 = vld [vmem:[%s8194 + $0x48] sm:$0xff]
        %v8205 = vld [vmem:[%s8194 + $0x50] sm:$0xff]
        %v8206 = vld [vmem:[%s8194 + $0x58] sm:$0xff]
        %v8207 = vld [vmem:[%s8194 + $0x60] sm:$0xff]
        %v8208 = vld [vmem:[%s8194 + $0x68] sm:$0xff]
        %v8209 = vld [vmem:[%s8194 + $0x70] sm:$0xff]
        %v8210 = vld [vmem:[%s8194 + $0x78] sm:$0xff]
        %8212 = vset.pattern.permute.xlu0 0
        %8213 = vperm.xlu0 %8212, %v8195
        %v8214 = vpop.permute.xlu0 %8213
        %8217 = vset.pattern.permute.xlu0 0
        %8218 = vperm.xlu0 %8217, %v8196
        %v8219 = vpop.permute.xlu0 %8218
        %8222 = vset.pattern.permute.xlu0 0
        %8223 = vperm.xlu0 %8222, %v8197
        %v8224 = vpop.permute.xlu0 %8223
        %8227 = vset.pattern.permute.xlu0 0
        %8228 = vperm.xlu0 %8227, %v8198
        %v8229 = vpop.permute.xlu0 %8228
        %8232 = vset.pattern.permute.xlu0 0
        %8233 = vperm.xlu0 %8232, %v8199
        %v8234 = vpop.permute.xlu0 %8233
        %8237 = vset.pattern.permute.xlu0 0
        %8238 = vperm.xlu0 %8237, %v8200
        %v8239 = vpop.permute.xlu0 %8238
        %8242 = vset.pattern.permute.xlu0 0
        %8243 = vperm.xlu0 %8242, %v8201
        %v8244 = vpop.permute.xlu0 %8243
        %8247 = vset.pattern.permute.xlu0 0
        %8248 = vperm.xlu0 %8247, %v8202
        %v8249 = vpop.permute.xlu0 %8248
        %8252 = vset.pattern.permute.xlu0 0
        %8253 = vperm.xlu0 %8252, %v8203
        %v8254 = vpop.permute.xlu0 %8253
        %8257 = vset.pattern.permute.xlu0 0
        %8258 = vperm.xlu0 %8257, %v8204
        %v8259 = vpop.permute.xlu0 %8258
        %8262 = vset.pattern.permute.xlu0 0
        %8263 = vperm.xlu0 %8262, %v8205
        %v8264 = vpop.permute.xlu0 %8263
        %8267 = vset.pattern.permute.xlu0 0
        %8268 = vperm.xlu0 %8267, %v8206
        %v8269 = vpop.permute.xlu0 %8268
        %8272 = vset.pattern.permute.xlu0 0
        %8273 = vperm.xlu0 %8272, %v8207
        %v8274 = vpop.permute.xlu0 %8273
        %8277 = vset.pattern.permute.xlu0 0
        %8278 = vperm.xlu0 %8277, %v8208
        %v8279 = vpop.permute.xlu0 %8278
        %8282 = vset.pattern.permute.xlu0 0
        %8283 = vperm.xlu0 %8282, %v8209
        %v8284 = vpop.permute.xlu0 %8283
        %8287 = vset.pattern.permute.xlu0 0
        %8288 = vperm.xlu0 %8287, %v8210
        %v8289 = vpop.permute.xlu0 %8288
        %v8291 = vmul.f32 %v371, %v8214
        %v8292 = vmul.f32 %v370, %v8219
        %v8293 = vmul.f32 %v369, %v8224
        %v8294 = vmul.f32 %v368, %v8229
        %v8295 = vmul.f32 %v367, %v8234
        %v8296 = vmul.f32 %v366, %v8239
        %v8297 = vmul.f32 %v365, %v8244
        %v8298 = vmul.f32 %v364, %v8249
        %v8299 = vmul.f32 %v363, %v8254
        %v8300 = vmul.f32 %v362, %v8259
        %v8301 = vmul.f32 %v361, %v8264
        %v8302 = vmul.f32 %v360, %v8269
        %v8303 = vmul.f32 %v359, %v8274
        %v8304 = vmul.f32 %v358, %v8279
        %v8305 = vmul.f32 %v373, %v8284
        %v8306 = vmul.f32 %v372, %v8289
        %v8307 = vpack.c.bf16 %v8292, %v8291
        %v8308 = vpack.c.bf16 %v8294, %v8293
        %v8309 = vpack.c.bf16 %v8296, %v8295
        %v8310 = vpack.c.bf16 %v8298, %v8297
        %v8311 = vpack.c.bf16 %v8300, %v8299
        %v8312 = vpack.c.bf16 %v8302, %v8301
        %v8313 = vpack.c.bf16 %v8304, %v8303
        %v8314 = vpack.c.bf16 %v8306, %v8305
        %s8315 = scalar_lea.vmem %s1, 768
        %v8316 = vld [vmem:[%s8315] sm:$0xf]
        %v8317 = vld [vmem:[%s8315 + $0x4] sm:$0xf]
        %v8318 = vld [vmem:[%s8315 + $0x8] sm:$0xf]
        %v8319 = vld [vmem:[%s8315 + $0xc] sm:$0xf]
        %v8320 = vld [vmem:[%s8315 + $0x10] sm:$0xf]
        %v8321 = vld [vmem:[%s8315 + $0x14] sm:$0xf]
        %v8322 = vld [vmem:[%s8315 + $0x18] sm:$0xf]
        %v8323 = vld [vmem:[%s8315 + $0x1c] sm:$0xf]
        %v8332 = vunpack.c.l.b16 %v8316
        %v8333 = vunpack.c.l.b16 %v8317
        %v8334 = vunpack.c.l.b16 %v8318
        %v8335 = vunpack.c.l.b16 %v8319
        %v8336 = vunpack.c.l.b16 %v8320
        %v8337 = vunpack.c.l.b16 %v8321
        %v8338 = vunpack.c.l.b16 %v8322
        %v8339 = vunpack.c.l.b16 %v8323
        %v8340 = vpack.c.b16 %v8333, %v8332
        %v8341 = vpack.c.b16 %v8335, %v8334
        %v8342 = vpack.c.b16 %v8337, %v8336
        %v8343 = vpack.c.b16 %v8339, %v8338
        %v8349 = vsel %vm526, %v8307, 0
        %v8352 = vsel %vm526, %v8308, 0
        %v8355 = vsel %vm526, %v8309, 0
        %v8358 = vsel %vm526, %v8310, 0
        %v8361 = vsel %vm526, %v8311, 0
        %v8364 = vsel %vm526, %v8312, 0
        %v8367 = vsel %vm526, %v8313, 0
        %v8370 = vsel %vm526, %v8314, 0
        %8372 = vmatprep.subr.bf16.mxu0 0
        %8373 = vmatpush1.bf16.msra.mxu0 0
        %8374 = vmatprep.subr.bf16.mxu0 0
        %8375 = vmatpush1.bf16.msra.mxu0 0
        %8376 = vmatprep.subr.bf16.mxu0 0
        %8377 = vmatpush1.bf16.msra.mxu0 0
        %8378 = vmatprep.subr.bf16.mxu0 0
        %8379 = vmatpush1.bf16.msra.mxu0 0
        %8380 = vmatprep.subr.bf16.mxu0 0
        %8381 = vmatpush1.bf16.msra.mxu0 %v8343
        %8382 = vmatprep.subr.bf16.mxu0 0
        %8383 = vmatpush1.bf16.msra.mxu0 %v8342
        %8384 = vmatprep.subr.bf16.mxu0 0
        %8385 = vmatpush1.bf16.msra.mxu0 %v8341
        %8386 = vmatprep.subr.bf16.mxu0 0
        %8387 = vmatpush1.bf16.msra.mxu0 %v8340
        %8388 = vmatprep.subr.bf16.mxu0 0
        %8389 = vmatpush2.bf16.msra.mxu0 0
        %8390 = vmatprep.subr.bf16.mxu0 0
        %8391 = vmatpush2.bf16.msra.mxu0 0
        %8392 = vmatprep.subr.bf16.mxu0 0
        %8393 = vmatpush2.bf16.msra.mxu0 0
        %8394 = vmatprep.subr.bf16.mxu0 0
        %8395 = vmatpush2.bf16.msra.mxu0 0
        %8396 = vmatprep.subr.bf16.mxu0 0
        %8397 = vmatpush2.bf16.msra.mxu0 0
        %8398 = vmatprep.subr.bf16.mxu0 0
        %8399 = vmatpush2.bf16.msra.mxu0 0
        %8400 = vmatprep.subr.bf16.mxu0 0
        %8401 = vmatpush2.bf16.msra.mxu0 0
        %8402 = vmatprep.subr.bf16.mxu0 0
        %8403 = vmatpush2.bf16.msra.mxu0 0
        %8404 = vmatprep.mubr.bf16.mxu0 0
        %8405 = vmatmul.mubr.bf16.gmra.mxu0 %v8349
        %v8406 = vpop.f32.mrf.mxu0
        %v8407 = vadd.f32 0.0, %v8406
        %v8408 = vpop.f32.mrf.mxu0
        %v8409 = vpop.f32.mrf.mxu0
        %v8410 = vadd.f32 0.0, %v8409
        %v8411 = vpop.f32.mrf.mxu0
        %8412 = vmatprep.mubr.bf16.mxu0 0
        %8413 = vmatmul.mubr.bf16.gmra.mxu0 %v8352
        %v8414 = vpop.f32.mrf.mxu0
        %v8415 = vadd.f32 0.0, %v8414
        %v8416 = vpop.f32.mrf.mxu0
        %v8417 = vpop.f32.mrf.mxu0
        %v8418 = vadd.f32 0.0, %v8417
        %v8419 = vpop.f32.mrf.mxu0
        %8420 = vmatprep.mubr.bf16.mxu0 0
        %8421 = vmatmul.mubr.bf16.gmra.mxu0 %v8355
        %v8422 = vpop.f32.mrf.mxu0
        %v8423 = vadd.f32 0.0, %v8422
        %v8424 = vpop.f32.mrf.mxu0
        %v8425 = vpop.f32.mrf.mxu0
        %v8426 = vadd.f32 0.0, %v8425
        %v8427 = vpop.f32.mrf.mxu0
        %8428 = vmatprep.mubr.bf16.mxu0 0
        %8429 = vmatmul.mubr.bf16.gmra.mxu0 %v8358
        %v8430 = vpop.f32.mrf.mxu0
        %v8431 = vadd.f32 0.0, %v8430
        %v8432 = vpop.f32.mrf.mxu0
        %v8433 = vpop.f32.mrf.mxu0
        %v8434 = vadd.f32 0.0, %v8433
        %v8435 = vpop.f32.mrf.mxu0
        %8436 = vmatprep.mubr.bf16.mxu0 0
        %8437 = vmatmul.mubr.bf16.gmra.mxu0 %v8361
        %v8438 = vpop.f32.mrf.mxu0
        %v8439 = vadd.f32 0.0, %v8438
        %v8440 = vpop.f32.mrf.mxu0
        %v8441 = vpop.f32.mrf.mxu0
        %v8442 = vadd.f32 0.0, %v8441
        %v8443 = vpop.f32.mrf.mxu0
        %8444 = vmatprep.mubr.bf16.mxu0 0
        %8445 = vmatmul.mubr.bf16.gmra.mxu0 %v8364
        %v8446 = vpop.f32.mrf.mxu0
        %v8447 = vadd.f32 0.0, %v8446
        %v8448 = vpop.f32.mrf.mxu0
        %v8449 = vpop.f32.mrf.mxu0
        %v8450 = vadd.f32 0.0, %v8449
        %v8451 = vpop.f32.mrf.mxu0
        %8452 = vmatprep.mubr.bf16.mxu0 0
        %8453 = vmatmul.mubr.bf16.gmra.mxu0 %v8367
        %v8454 = vpop.f32.mrf.mxu0
        %v8455 = vadd.f32 0.0, %v8454
        %v8456 = vpop.f32.mrf.mxu0
        %v8457 = vpop.f32.mrf.mxu0
        %v8458 = vadd.f32 0.0, %v8457
        %v8459 = vpop.f32.mrf.mxu0
        %8460 = vmatprep.mubr.bf16.mxu0 0
        %8461 = vmatmul.mubr.bf16.gmra.mxu0 %v8370
        %v8462 = vpop.f32.mrf.mxu0
        %v8463 = vadd.f32 0.0, %v8462
        %v8464 = vpop.f32.mrf.mxu0
        %v8465 = vpop.f32.mrf.mxu0
        %v8466 = vadd.f32 0.0, %v8465
        %v8467 = vpop.f32.mrf.mxu0
        %8468 = vdwg.mxu0
        %v8469 = vadd.f32 %v8178, %v8407
        %v8470 = vadd.f32 %v8179, %v8410
        %v8471 = vadd.f32 %v8180, %v8415
        %v8472 = vadd.f32 %v8181, %v8418
        %v8473 = vadd.f32 %v8182, %v8423
        %v8474 = vadd.f32 %v8183, %v8426
        %v8475 = vadd.f32 %v8184, %v8431
        %v8476 = vadd.f32 %v8185, %v8434
        %v8477 = vadd.f32 %v8186, %v8439
        %v8478 = vadd.f32 %v8187, %v8442
        %v8479 = vadd.f32 %v8188, %v8447
        %v8480 = vadd.f32 %v8189, %v8450
        %v8481 = vadd.f32 %v8190, %v8455
        %v8482 = vadd.f32 %v8191, %v8458
        %v8483 = vadd.f32 %v8192, %v8463
        %v8484 = vadd.f32 %v8193, %v8466
        %8485 = vst [vmem:[%s217] sm:$0xff] %v8469
        %8486 = vst [vmem:[%s217 + $0x8] sm:$0xff] %v8470
        %8487 = vst [vmem:[%s217 + $0x10] sm:$0xff] %v8471
        %8488 = vst [vmem:[%s217 + $0x18] sm:$0xff] %v8472
        %8489 = vst [vmem:[%s217 + $0x20] sm:$0xff] %v8473
        %8490 = vst [vmem:[%s217 + $0x28] sm:$0xff] %v8474
        %8491 = vst [vmem:[%s217 + $0x30] sm:$0xff] %v8475
        %8492 = vst [vmem:[%s217 + $0x38] sm:$0xff] %v8476
        %8493 = vst [vmem:[%s217 + $0x40] sm:$0xff] %v8477
        %8494 = vst [vmem:[%s217 + $0x48] sm:$0xff] %v8478
        %8495 = vst [vmem:[%s217 + $0x50] sm:$0xff] %v8479
        %8496 = vst [vmem:[%s217 + $0x58] sm:$0xff] %v8480
        %8497 = vst [vmem:[%s217 + $0x60] sm:$0xff] %v8481
        %8498 = vst [vmem:[%s217 + $0x68] sm:$0xff] %v8482
        %8499 = vst [vmem:[%s217 + $0x70] sm:$0xff] %v8483
        %8500 = vst [vmem:[%s217 + $0x78] sm:$0xff] %v8484
        %v8501 = vld [vmem:[%s217] sm:$0xff]
        %v8502 = vld [vmem:[%s217 + $0x8] sm:$0xff]
        %v8503 = vld [vmem:[%s217 + $0x10] sm:$0xff]
        %v8504 = vld [vmem:[%s217 + $0x18] sm:$0xff]
        %v8505 = vld [vmem:[%s217 + $0x20] sm:$0xff]
        %v8506 = vld [vmem:[%s217 + $0x28] sm:$0xff]
        %v8507 = vld [vmem:[%s217 + $0x30] sm:$0xff]
        %v8508 = vld [vmem:[%s217 + $0x38] sm:$0xff]
        %v8509 = vld [vmem:[%s217 + $0x40] sm:$0xff]
        %v8510 = vld [vmem:[%s217 + $0x48] sm:$0xff]
        %v8511 = vld [vmem:[%s217 + $0x50] sm:$0xff]
        %v8512 = vld [vmem:[%s217 + $0x58] sm:$0xff]
        %v8513 = vld [vmem:[%s217 + $0x60] sm:$0xff]
        %v8514 = vld [vmem:[%s217 + $0x68] sm:$0xff]
        %v8515 = vld [vmem:[%s217 + $0x70] sm:$0xff]
        %v8516 = vld [vmem:[%s217 + $0x78] sm:$0xff]
        %s8517 = scalar_lea.vmem %s2, 3200
        %v8518 = vld [vmem:[%s8517] sm:$0xff]
        %v8519 = vld [vmem:[%s8517 + $0x8] sm:$0xff]
        %v8520 = vld [vmem:[%s8517 + $0x10] sm:$0xff]
        %v8521 = vld [vmem:[%s8517 + $0x18] sm:$0xff]
        %v8522 = vld [vmem:[%s8517 + $0x20] sm:$0xff]
        %v8523 = vld [vmem:[%s8517 + $0x28] sm:$0xff]
        %v8524 = vld [vmem:[%s8517 + $0x30] sm:$0xff]
        %v8525 = vld [vmem:[%s8517 + $0x38] sm:$0xff]
        %v8526 = vld [vmem:[%s8517 + $0x40] sm:$0xff]
        %v8527 = vld [vmem:[%s8517 + $0x48] sm:$0xff]
        %v8528 = vld [vmem:[%s8517 + $0x50] sm:$0xff]
        %v8529 = vld [vmem:[%s8517 + $0x58] sm:$0xff]
        %v8530 = vld [vmem:[%s8517 + $0x60] sm:$0xff]
        %v8531 = vld [vmem:[%s8517 + $0x68] sm:$0xff]
        %v8532 = vld [vmem:[%s8517 + $0x70] sm:$0xff]
        %v8533 = vld [vmem:[%s8517 + $0x78] sm:$0xff]
        %8535 = vset.pattern.permute.xlu0 0
        %8536 = vperm.xlu0 %8535, %v8518
        %v8537 = vpop.permute.xlu0 %8536
        %8540 = vset.pattern.permute.xlu0 0
        %8541 = vperm.xlu0 %8540, %v8519
        %v8542 = vpop.permute.xlu0 %8541
        %8545 = vset.pattern.permute.xlu0 0
        %8546 = vperm.xlu0 %8545, %v8520
        %v8547 = vpop.permute.xlu0 %8546
        %8550 = vset.pattern.permute.xlu0 0
        %8551 = vperm.xlu0 %8550, %v8521
        %v8552 = vpop.permute.xlu0 %8551
        %8555 = vset.pattern.permute.xlu0 0
        %8556 = vperm.xlu0 %8555, %v8522
        %v8557 = vpop.permute.xlu0 %8556
        %8560 = vset.pattern.permute.xlu0 0
        %8561 = vperm.xlu0 %8560, %v8523
        %v8562 = vpop.permute.xlu0 %8561
        %8565 = vset.pattern.permute.xlu0 0
        %8566 = vperm.xlu0 %8565, %v8524
        %v8567 = vpop.permute.xlu0 %8566
        %8570 = vset.pattern.permute.xlu0 0
        %8571 = vperm.xlu0 %8570, %v8525
        %v8572 = vpop.permute.xlu0 %8571
        %8575 = vset.pattern.permute.xlu0 0
        %8576 = vperm.xlu0 %8575, %v8526
        %v8577 = vpop.permute.xlu0 %8576
        %8580 = vset.pattern.permute.xlu0 0
        %8581 = vperm.xlu0 %8580, %v8527
        %v8582 = vpop.permute.xlu0 %8581
        %8585 = vset.pattern.permute.xlu0 0
        %8586 = vperm.xlu0 %8585, %v8528
        %v8587 = vpop.permute.xlu0 %8586
        %8590 = vset.pattern.permute.xlu0 0
        %8591 = vperm.xlu0 %8590, %v8529
        %v8592 = vpop.permute.xlu0 %8591
        %8595 = vset.pattern.permute.xlu0 0
        %8596 = vperm.xlu0 %8595, %v8530
        %v8597 = vpop.permute.xlu0 %8596
        %8600 = vset.pattern.permute.xlu0 0
        %8601 = vperm.xlu0 %8600, %v8531
        %v8602 = vpop.permute.xlu0 %8601
        %8605 = vset.pattern.permute.xlu0 0
        %8606 = vperm.xlu0 %8605, %v8532
        %v8607 = vpop.permute.xlu0 %8606
        %8610 = vset.pattern.permute.xlu0 0
        %8611 = vperm.xlu0 %8610, %v8533
        %v8612 = vpop.permute.xlu0 %8611
        %v8614 = vmul.f32 %v710, %v8537
        %v8615 = vmul.f32 %v709, %v8542
        %v8616 = vmul.f32 %v708, %v8547
        %v8617 = vmul.f32 %v707, %v8552
        %v8618 = vmul.f32 %v706, %v8557
        %v8619 = vmul.f32 %v705, %v8562
        %v8620 = vmul.f32 %v704, %v8567
        %v8621 = vmul.f32 %v703, %v8572
        %v8622 = vmul.f32 %v702, %v8577
        %v8623 = vmul.f32 %v701, %v8582
        %v8624 = vmul.f32 %v700, %v8587
        %v8625 = vmul.f32 %v699, %v8592
        %v8626 = vmul.f32 %v698, %v8597
        %v8627 = vmul.f32 %v697, %v8602
        %v8628 = vmul.f32 %v712, %v8607
        %v8629 = vmul.f32 %v711, %v8612
        %v8630 = vpack.c.bf16 %v8615, %v8614
        %v8631 = vpack.c.bf16 %v8617, %v8616
        %v8632 = vpack.c.bf16 %v8619, %v8618
        %v8633 = vpack.c.bf16 %v8621, %v8620
        %v8634 = vpack.c.bf16 %v8623, %v8622
        %v8635 = vpack.c.bf16 %v8625, %v8624
        %v8636 = vpack.c.bf16 %v8627, %v8626
        %v8637 = vpack.c.bf16 %v8629, %v8628
        %s8638 = scalar_lea.vmem %s1, 800
        %v8639 = vld [vmem:[%s8638] sm:$0xf]
        %v8640 = vld [vmem:[%s8638 + $0x4] sm:$0xf]
        %v8641 = vld [vmem:[%s8638 + $0x8] sm:$0xf]
        %v8642 = vld [vmem:[%s8638 + $0xc] sm:$0xf]
        %v8643 = vld [vmem:[%s8638 + $0x10] sm:$0xf]
        %v8644 = vld [vmem:[%s8638 + $0x14] sm:$0xf]
        %v8645 = vld [vmem:[%s8638 + $0x18] sm:$0xf]
        %v8646 = vld [vmem:[%s8638 + $0x1c] sm:$0xf]
        %v8655 = vunpack.c.l.b16 %v8639
        %v8656 = vunpack.c.l.b16 %v8640
        %v8657 = vunpack.c.l.b16 %v8641
        %v8658 = vunpack.c.l.b16 %v8642
        %v8659 = vunpack.c.l.b16 %v8643
        %v8660 = vunpack.c.l.b16 %v8644
        %v8661 = vunpack.c.l.b16 %v8645
        %v8662 = vunpack.c.l.b16 %v8646
        %v8663 = vpack.c.b16 %v8656, %v8655
        %v8664 = vpack.c.b16 %v8658, %v8657
        %v8665 = vpack.c.b16 %v8660, %v8659
        %v8666 = vpack.c.b16 %v8662, %v8661
        %v8672 = vsel %vm526, %v8630, 0
        %v8675 = vsel %vm526, %v8631, 0
        %v8678 = vsel %vm526, %v8632, 0
        %v8681 = vsel %vm526, %v8633, 0
        %v8684 = vsel %vm526, %v8634, 0
        %v8687 = vsel %vm526, %v8635, 0
        %v8690 = vsel %vm526, %v8636, 0
        %v8693 = vsel %vm526, %v8637, 0
        %8695 = vmatprep.subr.bf16.mxu0 0
        %8696 = vmatpush1.bf16.msra.mxu0 0
        %8697 = vmatprep.subr.bf16.mxu0 0
        %8698 = vmatpush1.bf16.msra.mxu0 0
        %8699 = vmatprep.subr.bf16.mxu0 0
        %8700 = vmatpush1.bf16.msra.mxu0 0
        %8701 = vmatprep.subr.bf16.mxu0 0
        %8702 = vmatpush1.bf16.msra.mxu0 0
        %8703 = vmatprep.subr.bf16.mxu0 0
        %8704 = vmatpush1.bf16.msra.mxu0 %v8666
        %8705 = vmatprep.subr.bf16.mxu0 0
        %8706 = vmatpush1.bf16.msra.mxu0 %v8665
        %8707 = vmatprep.subr.bf16.mxu0 0
        %8708 = vmatpush1.bf16.msra.mxu0 %v8664
        %8709 = vmatprep.subr.bf16.mxu0 0
        %8710 = vmatpush1.bf16.msra.mxu0 %v8663
        %8711 = vmatprep.subr.bf16.mxu0 0
        %8712 = vmatpush2.bf16.msra.mxu0 0
        %8713 = vmatprep.subr.bf16.mxu0 0
        %8714 = vmatpush2.bf16.msra.mxu0 0
        %8715 = vmatprep.subr.bf16.mxu0 0
        %8716 = vmatpush2.bf16.msra.mxu0 0
        %8717 = vmatprep.subr.bf16.mxu0 0
        %8718 = vmatpush2.bf16.msra.mxu0 0
        %8719 = vmatprep.subr.bf16.mxu0 0
        %8720 = vmatpush2.bf16.msra.mxu0 0
        %8721 = vmatprep.subr.bf16.mxu0 0
        %8722 = vmatpush2.bf16.msra.mxu0 0
        %8723 = vmatprep.subr.bf16.mxu0 0
        %8724 = vmatpush2.bf16.msra.mxu0 0
        %8725 = vmatprep.subr.bf16.mxu0 0
        %8726 = vmatpush2.bf16.msra.mxu0 0
        %8727 = vmatprep.mubr.bf16.mxu0 0
        %8728 = vmatmul.mubr.bf16.gmra.mxu0 %v8672
        %v8729 = vpop.f32.mrf.mxu0
        %v8730 = vadd.f32 0.0, %v8729
        %v8731 = vpop.f32.mrf.mxu0
        %v8732 = vpop.f32.mrf.mxu0
        %v8733 = vadd.f32 0.0, %v8732
        %v8734 = vpop.f32.mrf.mxu0
        %8735 = vmatprep.mubr.bf16.mxu0 0
        %8736 = vmatmul.mubr.bf16.gmra.mxu0 %v8675
        %v8737 = vpop.f32.mrf.mxu0
        %v8738 = vadd.f32 0.0, %v8737
        %v8739 = vpop.f32.mrf.mxu0
        %v8740 = vpop.f32.mrf.mxu0
        %v8741 = vadd.f32 0.0, %v8740
        %v8742 = vpop.f32.mrf.mxu0
        %8743 = vmatprep.mubr.bf16.mxu0 0
        %8744 = vmatmul.mubr.bf16.gmra.mxu0 %v8678
        %v8745 = vpop.f32.mrf.mxu0
        %v8746 = vadd.f32 0.0, %v8745
        %v8747 = vpop.f32.mrf.mxu0
        %v8748 = vpop.f32.mrf.mxu0
        %v8749 = vadd.f32 0.0, %v8748
        %v8750 = vpop.f32.mrf.mxu0
        %8751 = vmatprep.mubr.bf16.mxu0 0
        %8752 = vmatmul.mubr.bf16.gmra.mxu0 %v8681
        %v8753 = vpop.f32.mrf.mxu0
        %v8754 = vadd.f32 0.0, %v8753
        %v8755 = vpop.f32.mrf.mxu0
        %v8756 = vpop.f32.mrf.mxu0
        %v8757 = vadd.f32 0.0, %v8756
        %v8758 = vpop.f32.mrf.mxu0
        %8759 = vmatprep.mubr.bf16.mxu0 0
        %8760 = vmatmul.mubr.bf16.gmra.mxu0 %v8684
        %v8761 = vpop.f32.mrf.mxu0
        %v8762 = vadd.f32 0.0, %v8761
        %v8763 = vpop.f32.mrf.mxu0
        %v8764 = vpop.f32.mrf.mxu0
        %v8765 = vadd.f32 0.0, %v8764
        %v8766 = vpop.f32.mrf.mxu0
        %8767 = vmatprep.mubr.bf16.mxu0 0
        %8768 = vmatmul.mubr.bf16.gmra.mxu0 %v8687
        %v8769 = vpop.f32.mrf.mxu0
        %v8770 = vadd.f32 0.0, %v8769
        %v8771 = vpop.f32.mrf.mxu0
        %v8772 = vpop.f32.mrf.mxu0
        %v8773 = vadd.f32 0.0, %v8772
        %v8774 = vpop.f32.mrf.mxu0
        %8775 = vmatprep.mubr.bf16.mxu0 0
        %8776 = vmatmul.mubr.bf16.gmra.mxu0 %v8690
        %v8777 = vpop.f32.mrf.mxu0
        %v8778 = vadd.f32 0.0, %v8777
        %v8779 = vpop.f32.mrf.mxu0
        %v8780 = vpop.f32.mrf.mxu0
        %v8781 = vadd.f32 0.0, %v8780
        %v8782 = vpop.f32.mrf.mxu0
        %8783 = vmatprep.mubr.bf16.mxu0 0
        %8784 = vmatmul.mubr.bf16.gmra.mxu0 %v8693
        %v8785 = vpop.f32.mrf.mxu0
        %v8786 = vadd.f32 0.0, %v8785
        %v8787 = vpop.f32.mrf.mxu0
        %v8788 = vpop.f32.mrf.mxu0
        %v8789 = vadd.f32 0.0, %v8788
        %v8790 = vpop.f32.mrf.mxu0
        %8791 = vdwg.mxu0
        %v8792 = vadd.f32 %v8501, %v8730
        %v8793 = vadd.f32 %v8502, %v8733
        %v8794 = vadd.f32 %v8503, %v8738
        %v8795 = vadd.f32 %v8504, %v8741
        %v8796 = vadd.f32 %v8505, %v8746
        %v8797 = vadd.f32 %v8506, %v8749
        %v8798 = vadd.f32 %v8507, %v8754
        %v8799 = vadd.f32 %v8508, %v8757
        %v8800 = vadd.f32 %v8509, %v8762
        %v8801 = vadd.f32 %v8510, %v8765
        %v8802 = vadd.f32 %v8511, %v8770
        %v8803 = vadd.f32 %v8512, %v8773
        %v8804 = vadd.f32 %v8513, %v8778
        %v8805 = vadd.f32 %v8514, %v8781
        %v8806 = vadd.f32 %v8515, %v8786
        %v8807 = vadd.f32 %v8516, %v8789
        %8808 = vst [vmem:[%s217] sm:$0xff] %v8792
        %8809 = vst [vmem:[%s217 + $0x8] sm:$0xff] %v8793
        %8810 = vst [vmem:[%s217 + $0x10] sm:$0xff] %v8794
        %8811 = vst [vmem:[%s217 + $0x18] sm:$0xff] %v8795
        %8812 = vst [vmem:[%s217 + $0x20] sm:$0xff] %v8796
        %8813 = vst [vmem:[%s217 + $0x28] sm:$0xff] %v8797
        %8814 = vst [vmem:[%s217 + $0x30] sm:$0xff] %v8798
        %8815 = vst [vmem:[%s217 + $0x38] sm:$0xff] %v8799
        %8816 = vst [vmem:[%s217 + $0x40] sm:$0xff] %v8800
        %8817 = vst [vmem:[%s217 + $0x48] sm:$0xff] %v8801
        %8818 = vst [vmem:[%s217 + $0x50] sm:$0xff] %v8802
        %8819 = vst [vmem:[%s217 + $0x58] sm:$0xff] %v8803
        %8820 = vst [vmem:[%s217 + $0x60] sm:$0xff] %v8804
        %8821 = vst [vmem:[%s217 + $0x68] sm:$0xff] %v8805
        %8822 = vst [vmem:[%s217 + $0x70] sm:$0xff] %v8806
        %8823 = vst [vmem:[%s217 + $0x78] sm:$0xff] %v8807
        %v8824 = vld [vmem:[%s217] sm:$0xff]
        %v8825 = vld [vmem:[%s217 + $0x8] sm:$0xff]
        %v8826 = vld [vmem:[%s217 + $0x10] sm:$0xff]
        %v8827 = vld [vmem:[%s217 + $0x18] sm:$0xff]
        %v8828 = vld [vmem:[%s217 + $0x20] sm:$0xff]
        %v8829 = vld [vmem:[%s217 + $0x28] sm:$0xff]
        %v8830 = vld [vmem:[%s217 + $0x30] sm:$0xff]
        %v8831 = vld [vmem:[%s217 + $0x38] sm:$0xff]
        %v8832 = vld [vmem:[%s217 + $0x40] sm:$0xff]
        %v8833 = vld [vmem:[%s217 + $0x48] sm:$0xff]
        %v8834 = vld [vmem:[%s217 + $0x50] sm:$0xff]
        %v8835 = vld [vmem:[%s217 + $0x58] sm:$0xff]
        %v8836 = vld [vmem:[%s217 + $0x60] sm:$0xff]
        %v8837 = vld [vmem:[%s217 + $0x68] sm:$0xff]
        %v8838 = vld [vmem:[%s217 + $0x70] sm:$0xff]
        %v8839 = vld [vmem:[%s217 + $0x78] sm:$0xff]
        %s8840 = scalar_lea.vmem %s2, 3328
        %v8841 = vld [vmem:[%s8840] sm:$0xff]
        %v8842 = vld [vmem:[%s8840 + $0x8] sm:$0xff]
        %v8843 = vld [vmem:[%s8840 + $0x10] sm:$0xff]
        %v8844 = vld [vmem:[%s8840 + $0x18] sm:$0xff]
        %v8845 = vld [vmem:[%s8840 + $0x20] sm:$0xff]
        %v8846 = vld [vmem:[%s8840 + $0x28] sm:$0xff]
        %v8847 = vld [vmem:[%s8840 + $0x30] sm:$0xff]
        %v8848 = vld [vmem:[%s8840 + $0x38] sm:$0xff]
        %v8849 = vld [vmem:[%s8840 + $0x40] sm:$0xff]
        %v8850 = vld [vmem:[%s8840 + $0x48] sm:$0xff]
        %v8851 = vld [vmem:[%s8840 + $0x50] sm:$0xff]
        %v8852 = vld [vmem:[%s8840 + $0x58] sm:$0xff]
        %v8853 = vld [vmem:[%s8840 + $0x60] sm:$0xff]
        %v8854 = vld [vmem:[%s8840 + $0x68] sm:$0xff]
        %v8855 = vld [vmem:[%s8840 + $0x70] sm:$0xff]
        %v8856 = vld [vmem:[%s8840 + $0x78] sm:$0xff]
        %8858 = vset.pattern.permute.xlu0 0
        %8859 = vperm.xlu0 %8858, %v8841
        %v8860 = vpop.permute.xlu0 %8859
        %8863 = vset.pattern.permute.xlu0 0
        %8864 = vperm.xlu0 %8863, %v8842
        %v8865 = vpop.permute.xlu0 %8864
        %8868 = vset.pattern.permute.xlu0 0
        %8869 = vperm.xlu0 %8868, %v8843
        %v8870 = vpop.permute.xlu0 %8869
        %8873 = vset.pattern.permute.xlu0 0
        %8874 = vperm.xlu0 %8873, %v8844
        %v8875 = vpop.permute.xlu0 %8874
        %8878 = vset.pattern.permute.xlu0 0
        %8879 = vperm.xlu0 %8878, %v8845
        %v8880 = vpop.permute.xlu0 %8879
        %8883 = vset.pattern.permute.xlu0 0
        %8884 = vperm.xlu0 %8883, %v8846
        %v8885 = vpop.permute.xlu0 %8884
        %8888 = vset.pattern.permute.xlu0 0
        %8889 = vperm.xlu0 %8888, %v8847
        %v8890 = vpop.permute.xlu0 %8889
        %8893 = vset.pattern.permute.xlu0 0
        %8894 = vperm.xlu0 %8893, %v8848
        %v8895 = vpop.permute.xlu0 %8894
        %8898 = vset.pattern.permute.xlu0 0
        %8899 = vperm.xlu0 %8898, %v8849
        %v8900 = vpop.permute.xlu0 %8899
        %8903 = vset.pattern.permute.xlu0 0
        %8904 = vperm.xlu0 %8903, %v8850
        %v8905 = vpop.permute.xlu0 %8904
        %8908 = vset.pattern.permute.xlu0 0
        %8909 = vperm.xlu0 %8908, %v8851
        %v8910 = vpop.permute.xlu0 %8909
        %8913 = vset.pattern.permute.xlu0 0
        %8914 = vperm.xlu0 %8913, %v8852
        %v8915 = vpop.permute.xlu0 %8914
        %8918 = vset.pattern.permute.xlu0 0
        %8919 = vperm.xlu0 %8918, %v8853
        %v8920 = vpop.permute.xlu0 %8919
        %8923 = vset.pattern.permute.xlu0 0
        %8924 = vperm.xlu0 %8923, %v8854
        %v8925 = vpop.permute.xlu0 %8924
        %8928 = vset.pattern.permute.xlu0 0
        %8929 = vperm.xlu0 %8928, %v8855
        %v8930 = vpop.permute.xlu0 %8929
        %8933 = vset.pattern.permute.xlu0 0
        %8934 = vperm.xlu0 %8933, %v8856
        %v8935 = vpop.permute.xlu0 %8934
        %v8937 = vmul.f32 %v1066, %v8860
        %v8938 = vmul.f32 %v1065, %v8865
        %v8939 = vmul.f32 %v1064, %v8870
        %v8940 = vmul.f32 %v1063, %v8875
        %v8941 = vmul.f32 %v1062, %v8880
        %v8942 = vmul.f32 %v1061, %v8885
        %v8943 = vmul.f32 %v1060, %v8890
        %v8944 = vmul.f32 %v1059, %v8895
        %v8945 = vmul.f32 %v1058, %v8900
        %v8946 = vmul.f32 %v1057, %v8905
        %v8947 = vmul.f32 %v1056, %v8910
        %v8948 = vmul.f32 %v1055, %v8915
        %v8949 = vmul.f32 %v1054, %v8920
        %v8950 = vmul.f32 %v1053, %v8925
        %v8951 = vmul.f32 %v1068, %v8930
        %v8952 = vmul.f32 %v1067, %v8935
        %v8953 = vpack.c.bf16 %v8938, %v8937
        %v8954 = vpack.c.bf16 %v8940, %v8939
        %v8955 = vpack.c.bf16 %v8942, %v8941
        %v8956 = vpack.c.bf16 %v8944, %v8943
        %v8957 = vpack.c.bf16 %v8946, %v8945
        %v8958 = vpack.c.bf16 %v8948, %v8947
        %v8959 = vpack.c.bf16 %v8950, %v8949
        %v8960 = vpack.c.bf16 %v8952, %v8951
        %s8961 = scalar_lea.vmem %s1, 832
        %v8962 = vld [vmem:[%s8961] sm:$0xf]
        %v8963 = vld [vmem:[%s8961 + $0x4] sm:$0xf]
        %v8964 = vld [vmem:[%s8961 + $0x8] sm:$0xf]
        %v8965 = vld [vmem:[%s8961 + $0xc] sm:$0xf]
        %v8966 = vld [vmem:[%s8961 + $0x10] sm:$0xf]
        %v8967 = vld [vmem:[%s8961 + $0x14] sm:$0xf]
        %v8968 = vld [vmem:[%s8961 + $0x18] sm:$0xf]
        %v8969 = vld [vmem:[%s8961 + $0x1c] sm:$0xf]
        %v8978 = vunpack.c.l.b16 %v8962
        %v8979 = vunpack.c.l.b16 %v8963
        %v8980 = vunpack.c.l.b16 %v8964
        %v8981 = vunpack.c.l.b16 %v8965
        %v8982 = vunpack.c.l.b16 %v8966
        %v8983 = vunpack.c.l.b16 %v8967
        %v8984 = vunpack.c.l.b16 %v8968
        %v8985 = vunpack.c.l.b16 %v8969
        %v8986 = vpack.c.b16 %v8979, %v8978
        %v8987 = vpack.c.b16 %v8981, %v8980
        %v8988 = vpack.c.b16 %v8983, %v8982
        %v8989 = vpack.c.b16 %v8985, %v8984
        %v8995 = vsel %vm526, %v8953, 0
        %v8998 = vsel %vm526, %v8954, 0
        %v9001 = vsel %vm526, %v8955, 0
        %v9004 = vsel %vm526, %v8956, 0
        %v9007 = vsel %vm526, %v8957, 0
        %v9010 = vsel %vm526, %v8958, 0
        %v9013 = vsel %vm526, %v8959, 0
        %v9016 = vsel %vm526, %v8960, 0
        %9018 = vmatprep.subr.bf16.mxu0 0
        %9019 = vmatpush1.bf16.msra.mxu0 0
        %9020 = vmatprep.subr.bf16.mxu0 0
        %9021 = vmatpush1.bf16.msra.mxu0 0
        %9022 = vmatprep.subr.bf16.mxu0 0
        %9023 = vmatpush1.bf16.msra.mxu0 0
        %9024 = vmatprep.subr.bf16.mxu0 0
        %9025 = vmatpush1.bf16.msra.mxu0 0
        %9026 = vmatprep.subr.bf16.mxu0 0
        %9027 = vmatpush1.bf16.msra.mxu0 %v8989
        %9028 = vmatprep.subr.bf16.mxu0 0
        %9029 = vmatpush1.bf16.msra.mxu0 %v8988
        %9030 = vmatprep.subr.bf16.mxu0 0
        %9031 = vmatpush1.bf16.msra.mxu0 %v8987
        %9032 = vmatprep.subr.bf16.mxu0 0
        %9033 = vmatpush1.bf16.msra.mxu0 %v8986
        %9034 = vmatprep.subr.bf16.mxu0 0
        %9035 = vmatpush2.bf16.msra.mxu0 0
        %9036 = vmatprep.subr.bf16.mxu0 0
        %9037 = vmatpush2.bf16.msra.mxu0 0
        %9038 = vmatprep.subr.bf16.mxu0 0
        %9039 = vmatpush2.bf16.msra.mxu0 0
        %9040 = vmatprep.subr.bf16.mxu0 0
        %9041 = vmatpush2.bf16.msra.mxu0 0
        %9042 = vmatprep.subr.bf16.mxu0 0
        %9043 = vmatpush2.bf16.msra.mxu0 0
        %9044 = vmatprep.subr.bf16.mxu0 0
        %9045 = vmatpush2.bf16.msra.mxu0 0
        %9046 = vmatprep.subr.bf16.mxu0 0
        %9047 = vmatpush2.bf16.msra.mxu0 0
        %9048 = vmatprep.subr.bf16.mxu0 0
        %9049 = vmatpush2.bf16.msra.mxu0 0
        %9050 = vmatprep.mubr.bf16.mxu0 0
        %9051 = vmatmul.mubr.bf16.gmra.mxu0 %v8995
        %v9052 = vpop.f32.mrf.mxu0
        %v9053 = vadd.f32 0.0, %v9052
        %v9054 = vpop.f32.mrf.mxu0
        %v9055 = vpop.f32.mrf.mxu0
        %v9056 = vadd.f32 0.0, %v9055
        %v9057 = vpop.f32.mrf.mxu0
        %9058 = vmatprep.mubr.bf16.mxu0 0
        %9059 = vmatmul.mubr.bf16.gmra.mxu0 %v8998
        %v9060 = vpop.f32.mrf.mxu0
        %v9061 = vadd.f32 0.0, %v9060
        %v9062 = vpop.f32.mrf.mxu0
        %v9063 = vpop.f32.mrf.mxu0
        %v9064 = vadd.f32 0.0, %v9063
        %v9065 = vpop.f32.mrf.mxu0
        %9066 = vmatprep.mubr.bf16.mxu0 0
        %9067 = vmatmul.mubr.bf16.gmra.mxu0 %v9001
        %v9068 = vpop.f32.mrf.mxu0
        %v9069 = vadd.f32 0.0, %v9068
        %v9070 = vpop.f32.mrf.mxu0
        %v9071 = vpop.f32.mrf.mxu0
        %v9072 = vadd.f32 0.0, %v9071
        %v9073 = vpop.f32.mrf.mxu0
        %9074 = vmatprep.mubr.bf16.mxu0 0
        %9075 = vmatmul.mubr.bf16.gmra.mxu0 %v9004
        %v9076 = vpop.f32.mrf.mxu0
        %v9077 = vadd.f32 0.0, %v9076
        %v9078 = vpop.f32.mrf.mxu0
        %v9079 = vpop.f32.mrf.mxu0
        %v9080 = vadd.f32 0.0, %v9079
        %v9081 = vpop.f32.mrf.mxu0
        %9082 = vmatprep.mubr.bf16.mxu0 0
        %9083 = vmatmul.mubr.bf16.gmra.mxu0 %v9007
        %v9084 = vpop.f32.mrf.mxu0
        %v9085 = vadd.f32 0.0, %v9084
        %v9086 = vpop.f32.mrf.mxu0
        %v9087 = vpop.f32.mrf.mxu0
        %v9088 = vadd.f32 0.0, %v9087
        %v9089 = vpop.f32.mrf.mxu0
        %9090 = vmatprep.mubr.bf16.mxu0 0
        %9091 = vmatmul.mubr.bf16.gmra.mxu0 %v9010
        %v9092 = vpop.f32.mrf.mxu0
        %v9093 = vadd.f32 0.0, %v9092
        %v9094 = vpop.f32.mrf.mxu0
        %v9095 = vpop.f32.mrf.mxu0
        %v9096 = vadd.f32 0.0, %v9095
        %v9097 = vpop.f32.mrf.mxu0
        %9098 = vmatprep.mubr.bf16.mxu0 0
        %9099 = vmatmul.mubr.bf16.gmra.mxu0 %v9013
        %v9100 = vpop.f32.mrf.mxu0
        %v9101 = vadd.f32 0.0, %v9100
        %v9102 = vpop.f32.mrf.mxu0
        %v9103 = vpop.f32.mrf.mxu0
        %v9104 = vadd.f32 0.0, %v9103
        %v9105 = vpop.f32.mrf.mxu0
        %9106 = vmatprep.mubr.bf16.mxu0 0
        %9107 = vmatmul.mubr.bf16.gmra.mxu0 %v9016
        %v9108 = vpop.f32.mrf.mxu0
        %v9109 = vadd.f32 0.0, %v9108
        %v9110 = vpop.f32.mrf.mxu0
        %v9111 = vpop.f32.mrf.mxu0
        %v9112 = vadd.f32 0.0, %v9111
        %v9113 = vpop.f32.mrf.mxu0
        %9114 = vdwg.mxu0
        %v9115 = vadd.f32 %v8824, %v9053
        %v9116 = vadd.f32 %v8825, %v9056
        %v9117 = vadd.f32 %v8826, %v9061
        %v9118 = vadd.f32 %v8827, %v9064
        %v9119 = vadd.f32 %v8828, %v9069
        %v9120 = vadd.f32 %v8829, %v9072
        %v9121 = vadd.f32 %v8830, %v9077
        %v9122 = vadd.f32 %v8831, %v9080
        %v9123 = vadd.f32 %v8832, %v9085
        %v9124 = vadd.f32 %v8833, %v9088
        %v9125 = vadd.f32 %v8834, %v9093
        %v9126 = vadd.f32 %v8835, %v9096
        %v9127 = vadd.f32 %v8836, %v9101
        %v9128 = vadd.f32 %v8837, %v9104
        %v9129 = vadd.f32 %v8838, %v9109
        %v9130 = vadd.f32 %v8839, %v9112
        %9131 = vst [vmem:[%s217] sm:$0xff] %v9115
        %9132 = vst [vmem:[%s217 + $0x8] sm:$0xff] %v9116
        %9133 = vst [vmem:[%s217 + $0x10] sm:$0xff] %v9117
        %9134 = vst [vmem:[%s217 + $0x18] sm:$0xff] %v9118
        %9135 = vst [vmem:[%s217 + $0x20] sm:$0xff] %v9119
        %9136 = vst [vmem:[%s217 + $0x28] sm:$0xff] %v9120
        %9137 = vst [vmem:[%s217 + $0x30] sm:$0xff] %v9121
        %9138 = vst [vmem:[%s217 + $0x38] sm:$0xff] %v9122
        %9139 = vst [vmem:[%s217 + $0x40] sm:$0xff] %v9123
        %9140 = vst [vmem:[%s217 + $0x48] sm:$0xff] %v9124
        %9141 = vst [vmem:[%s217 + $0x50] sm:$0xff] %v9125
        %9142 = vst [vmem:[%s217 + $0x58] sm:$0xff] %v9126
        %9143 = vst [vmem:[%s217 + $0x60] sm:$0xff] %v9127
        %9144 = vst [vmem:[%s217 + $0x68] sm:$0xff] %v9128
        %9145 = vst [vmem:[%s217 + $0x70] sm:$0xff] %v9129
        %9146 = vst [vmem:[%s217 + $0x78] sm:$0xff] %v9130
        %v9147 = vld [vmem:[%s217] sm:$0xff]
        %v9148 = vld [vmem:[%s217 + $0x8] sm:$0xff]
        %v9149 = vld [vmem:[%s217 + $0x10] sm:$0xff]
        %v9150 = vld [vmem:[%s217 + $0x18] sm:$0xff]
        %v9151 = vld [vmem:[%s217 + $0x20] sm:$0xff]
        %v9152 = vld [vmem:[%s217 + $0x28] sm:$0xff]
        %v9153 = vld [vmem:[%s217 + $0x30] sm:$0xff]
        %v9154 = vld [vmem:[%s217 + $0x38] sm:$0xff]
        %v9155 = vld [vmem:[%s217 + $0x40] sm:$0xff]
        %v9156 = vld [vmem:[%s217 + $0x48] sm:$0xff]
        %v9157 = vld [vmem:[%s217 + $0x50] sm:$0xff]
        %v9158 = vld [vmem:[%s217 + $0x58] sm:$0xff]
        %v9159 = vld [vmem:[%s217 + $0x60] sm:$0xff]
        %v9160 = vld [vmem:[%s217 + $0x68] sm:$0xff]
        %v9161 = vld [vmem:[%s217 + $0x70] sm:$0xff]
        %v9162 = vld [vmem:[%s217 + $0x78] sm:$0xff]
        %s9163 = scalar_lea.vmem %s2, 3456
        %v9164 = vld [vmem:[%s9163] sm:$0xff]
        %v9165 = vld [vmem:[%s9163 + $0x8] sm:$0xff]
        %v9166 = vld [vmem:[%s9163 + $0x10] sm:$0xff]
        %v9167 = vld [vmem:[%s9163 + $0x18] sm:$0xff]
        %v9168 = vld [vmem:[%s9163 + $0x20] sm:$0xff]
        %v9169 = vld [vmem:[%s9163 + $0x28] sm:$0xff]
        %v9170 = vld [vmem:[%s9163 + $0x30] sm:$0xff]
        %v9171 = vld [vmem:[%s9163 + $0x38] sm:$0xff]
        %v9172 = vld [vmem:[%s9163 + $0x40] sm:$0xff]
        %v9173 = vld [vmem:[%s9163 + $0x48] sm:$0xff]
        %v9174 = vld [vmem:[%s9163 + $0x50] sm:$0xff]
        %v9175 = vld [vmem:[%s9163 + $0x58] sm:$0xff]
        %v9176 = vld [vmem:[%s9163 + $0x60] sm:$0xff]
        %v9177 = vld [vmem:[%s9163 + $0x68] sm:$0xff]
        %v9178 = vld [vmem:[%s9163 + $0x70] sm:$0xff]
        %v9179 = vld [vmem:[%s9163 + $0x78] sm:$0xff]
        %9181 = vset.pattern.permute.xlu0 0
        %9182 = vperm.xlu0 %9181, %v9164
        %v9183 = vpop.permute.xlu0 %9182
        %9186 = vset.pattern.permute.xlu0 0
        %9187 = vperm.xlu0 %9186, %v9165
        %v9188 = vpop.permute.xlu0 %9187
        %9191 = vset.pattern.permute.xlu0 0
        %9192 = vperm.xlu0 %9191, %v9166
        %v9193 = vpop.permute.xlu0 %9192
        %9196 = vset.pattern.permute.xlu0 0
        %9197 = vperm.xlu0 %9196, %v9167
        %v9198 = vpop.permute.xlu0 %9197
        %9201 = vset.pattern.permute.xlu0 0
        %9202 = vperm.xlu0 %9201, %v9168
        %v9203 = vpop.permute.xlu0 %9202
        %9206 = vset.pattern.permute.xlu0 0
        %9207 = vperm.xlu0 %9206, %v9169
        %v9208 = vpop.permute.xlu0 %9207
        %9211 = vset.pattern.permute.xlu0 0
        %9212 = vperm.xlu0 %9211, %v9170
        %v9213 = vpop.permute.xlu0 %9212
        %9216 = vset.pattern.permute.xlu0 0
        %9217 = vperm.xlu0 %9216, %v9171
        %v9218 = vpop.permute.xlu0 %9217
        %9221 = vset.pattern.permute.xlu0 0
        %9222 = vperm.xlu0 %9221, %v9172
        %v9223 = vpop.permute.xlu0 %9222
        %9226 = vset.pattern.permute.xlu0 0
        %9227 = vperm.xlu0 %9226, %v9173
        %v9228 = vpop.permute.xlu0 %9227
        %9231 = vset.pattern.permute.xlu0 0
        %9232 = vperm.xlu0 %9231, %v9174
        %v9233 = vpop.permute.xlu0 %9232
        %9236 = vset.pattern.permute.xlu0 0
        %9237 = vperm.xlu0 %9236, %v9175
        %v9238 = vpop.permute.xlu0 %9237
        %9241 = vset.pattern.permute.xlu0 0
        %9242 = vperm.xlu0 %9241, %v9176
        %v9243 = vpop.permute.xlu0 %9242
        %9246 = vset.pattern.permute.xlu0 0
        %9247 = vperm.xlu0 %9246, %v9177
        %v9248 = vpop.permute.xlu0 %9247
        %9251 = vset.pattern.permute.xlu0 0
        %9252 = vperm.xlu0 %9251, %v9178
        %v9253 = vpop.permute.xlu0 %9252
        %9256 = vset.pattern.permute.xlu0 0
        %9257 = vperm.xlu0 %9256, %v9179
        %v9258 = vpop.permute.xlu0 %9257
        %v9260 = vmul.f32 %v1422, %v9183
        %v9261 = vmul.f32 %v1421, %v9188
        %v9262 = vmul.f32 %v1420, %v9193
        %v9263 = vmul.f32 %v1419, %v9198
        %v9264 = vmul.f32 %v1418, %v9203
        %v9265 = vmul.f32 %v1417, %v9208
        %v9266 = vmul.f32 %v1416, %v9213
        %v9267 = vmul.f32 %v1415, %v9218
        %v9268 = vmul.f32 %v1414, %v9223
        %v9269 = vmul.f32 %v1413, %v9228
        %v9270 = vmul.f32 %v1412, %v9233
        %v9271 = vmul.f32 %v1411, %v9238
        %v9272 = vmul.f32 %v1410, %v9243
        %v9273 = vmul.f32 %v1409, %v9248
        %v9274 = vmul.f32 %v1424, %v9253
        %v9275 = vmul.f32 %v1423, %v9258
        %v9276 = vpack.c.bf16 %v9261, %v9260
        %v9277 = vpack.c.bf16 %v9263, %v9262
        %v9278 = vpack.c.bf16 %v9265, %v9264
        %v9279 = vpack.c.bf16 %v9267, %v9266
        %v9280 = vpack.c.bf16 %v9269, %v9268
        %v9281 = vpack.c.bf16 %v9271, %v9270
        %v9282 = vpack.c.bf16 %v9273, %v9272
        %v9283 = vpack.c.bf16 %v9275, %v9274
        %s9284 = scalar_lea.vmem %s1, 864
        %v9285 = vld [vmem:[%s9284] sm:$0xf]
        %v9286 = vld [vmem:[%s9284 + $0x4] sm:$0xf]
        %v9287 = vld [vmem:[%s9284 + $0x8] sm:$0xf]
        %v9288 = vld [vmem:[%s9284 + $0xc] sm:$0xf]
        %v9289 = vld [vmem:[%s9284 + $0x10] sm:$0xf]
        %v9290 = vld [vmem:[%s9284 + $0x14] sm:$0xf]
        %v9291 = vld [vmem:[%s9284 + $0x18] sm:$0xf]
        %v9292 = vld [vmem:[%s9284 + $0x1c] sm:$0xf]
        %v9301 = vunpack.c.l.b16 %v9285
        %v9302 = vunpack.c.l.b16 %v9286
        %v9303 = vunpack.c.l.b16 %v9287
        %v9304 = vunpack.c.l.b16 %v9288
        %v9305 = vunpack.c.l.b16 %v9289
        %v9306 = vunpack.c.l.b16 %v9290
        %v9307 = vunpack.c.l.b16 %v9291
        %v9308 = vunpack.c.l.b16 %v9292
        %v9309 = vpack.c.b16 %v9302, %v9301
        %v9310 = vpack.c.b16 %v9304, %v9303
        %v9311 = vpack.c.b16 %v9306, %v9305
        %v9312 = vpack.c.b16 %v9308, %v9307
        %v9318 = vsel %vm526, %v9276, 0
        %v9321 = vsel %vm526, %v9277, 0
        %v9324 = vsel %vm526, %v9278, 0
        %v9327 = vsel %vm526, %v9279, 0
        %v9330 = vsel %vm526, %v9280, 0
        %v9333 = vsel %vm526, %v9281, 0
        %v9336 = vsel %vm526, %v9282, 0
        %v9339 = vsel %vm526, %v9283, 0
        %9341 = vmatprep.subr.bf16.mxu0 0
        %9342 = vmatpush1.bf16.msra.mxu0 0
        %9343 = vmatprep.subr.bf16.mxu0 0
        %9344 = vmatpush1.bf16.msra.mxu0 0
        %9345 = vmatprep.subr.bf16.mxu0 0
        %9346 = vmatpush1.bf16.msra.mxu0 0
        %9347 = vmatprep.subr.bf16.mxu0 0
        %9348 = vmatpush1.bf16.msra.mxu0 0
        %9349 = vmatprep.subr.bf16.mxu0 0
        %9350 = vmatpush1.bf16.msra.mxu0 %v9312
        %9351 = vmatprep.subr.bf16.mxu0 0
        %9352 = vmatpush1.bf16.msra.mxu0 %v9311
        %9353 = vmatprep.subr.bf16.mxu0 0
        %9354 = vmatpush1.bf16.msra.mxu0 %v9310
        %9355 = vmatprep.subr.bf16.mxu0 0
        %9356 = vmatpush1.bf16.msra.mxu0 %v9309
        %9357 = vmatprep.subr.bf16.mxu0 0
        %9358 = vmatpush2.bf16.msra.mxu0 0
        %9359 = vmatprep.subr.bf16.mxu0 0
        %9360 = vmatpush2.bf16.msra.mxu0 0
        %9361 = vmatprep.subr.bf16.mxu0 0
        %9362 = vmatpush2.bf16.msra.mxu0 0
        %9363 = vmatprep.subr.bf16.mxu0 0
        %9364 = vmatpush2.bf16.msra.mxu0 0
        %9365 = vmatprep.subr.bf16.mxu0 0
        %9366 = vmatpush2.bf16.msra.mxu0 0
        %9367 = vmatprep.subr.bf16.mxu0 0
        %9368 = vmatpush2.bf16.msra.mxu0 0
        %9369 = vmatprep.subr.bf16.mxu0 0
        %9370 = vmatpush2.bf16.msra.mxu0 0
        %9371 = vmatprep.subr.bf16.mxu0 0
        %9372 = vmatpush2.bf16.msra.mxu0 0
        %9373 = vmatprep.mubr.bf16.mxu0 0
        %9374 = vmatmul.mubr.bf16.gmra.mxu0 %v9318
        %v9375 = vpop.f32.mrf.mxu0
        %v9376 = vadd.f32 0.0, %v9375
        %v9377 = vpop.f32.mrf.mxu0
        %v9378 = vpop.f32.mrf.mxu0
        %v9379 = vadd.f32 0.0, %v9378
        %v9380 = vpop.f32.mrf.mxu0
        %9381 = vmatprep.mubr.bf16.mxu0 0
        %9382 = vmatmul.mubr.bf16.gmra.mxu0 %v9321
        %v9383 = vpop.f32.mrf.mxu0
        %v9384 = vadd.f32 0.0, %v9383
        %v9385 = vpop.f32.mrf.mxu0
        %v9386 = vpop.f32.mrf.mxu0
        %v9387 = vadd.f32 0.0, %v9386
        %v9388 = vpop.f32.mrf.mxu0
        %9389 = vmatprep.mubr.bf16.mxu0 0
        %9390 = vmatmul.mubr.bf16.gmra.mxu0 %v9324
        %v9391 = vpop.f32.mrf.mxu0
        %v9392 = vadd.f32 0.0, %v9391
        %v9393 = vpop.f32.mrf.mxu0
        %v9394 = vpop.f32.mrf.mxu0
        %v9395 = vadd.f32 0.0, %v9394
        %v9396 = vpop.f32.mrf.mxu0
        %9397 = vmatprep.mubr.bf16.mxu0 0
        %9398 = vmatmul.mubr.bf16.gmra.mxu0 %v9327
        %v9399 = vpop.f32.mrf.mxu0
        %v9400 = vadd.f32 0.0, %v9399
        %v9401 = vpop.f32.mrf.mxu0
        %v9402 = vpop.f32.mrf.mxu0
        %v9403 = vadd.f32 0.0, %v9402
        %v9404 = vpop.f32.mrf.mxu0
        %9405 = vmatprep.mubr.bf16.mxu0 0
        %9406 = vmatmul.mubr.bf16.gmra.mxu0 %v9330
        %v9407 = vpop.f32.mrf.mxu0
        %v9408 = vadd.f32 0.0, %v9407
        %v9409 = vpop.f32.mrf.mxu0
        %v9410 = vpop.f32.mrf.mxu0
        %v9411 = vadd.f32 0.0, %v9410
        %v9412 = vpop.f32.mrf.mxu0
        %9413 = vmatprep.mubr.bf16.mxu0 0
        %9414 = vmatmul.mubr.bf16.gmra.mxu0 %v9333
        %v9415 = vpop.f32.mrf.mxu0
        %v9416 = vadd.f32 0.0, %v9415
        %v9417 = vpop.f32.mrf.mxu0
        %v9418 = vpop.f32.mrf.mxu0
        %v9419 = vadd.f32 0.0, %v9418
        %v9420 = vpop.f32.mrf.mxu0
        %9421 = vmatprep.mubr.bf16.mxu0 0
        %9422 = vmatmul.mubr.bf16.gmra.mxu0 %v9336
        %v9423 = vpop.f32.mrf.mxu0
        %v9424 = vadd.f32 0.0, %v9423
        %v9425 = vpop.f32.mrf.mxu0
        %v9426 = vpop.f32.mrf.mxu0
        %v9427 = vadd.f32 0.0, %v9426
        %v9428 = vpop.f32.mrf.mxu0
        %9429 = vmatprep.mubr.bf16.mxu0 0
        %9430 = vmatmul.mubr.bf16.gmra.mxu0 %v9339
        %v9431 = vpop.f32.mrf.mxu0
        %v9432 = vadd.f32 0.0, %v9431
        %v9433 = vpop.f32.mrf.mxu0
        %v9434 = vpop.f32.mrf.mxu0
        %v9435 = vadd.f32 0.0, %v9434
        %v9436 = vpop.f32.mrf.mxu0
        %9437 = vdwg.mxu0
        %v9438 = vadd.f32 %v9147, %v9376
        %v9439 = vadd.f32 %v9148, %v9379
        %v9440 = vadd.f32 %v9149, %v9384
        %v9441 = vadd.f32 %v9150, %v9387
        %v9442 = vadd.f32 %v9151, %v9392
        %v9443 = vadd.f32 %v9152, %v9395
        %v9444 = vadd.f32 %v9153, %v9400
        %v9445 = vadd.f32 %v9154, %v9403
        %v9446 = vadd.f32 %v9155, %v9408
        %v9447 = vadd.f32 %v9156, %v9411
        %v9448 = vadd.f32 %v9157, %v9416
        %v9449 = vadd.f32 %v9158, %v9419
        %v9450 = vadd.f32 %v9159, %v9424
        %v9451 = vadd.f32 %v9160, %v9427
        %v9452 = vadd.f32 %v9161, %v9432
        %v9453 = vadd.f32 %v9162, %v9435
        %9454 = vst [vmem:[%s217] sm:$0xff] %v9438
        %9455 = vst [vmem:[%s217 + $0x8] sm:$0xff] %v9439
        %9456 = vst [vmem:[%s217 + $0x10] sm:$0xff] %v9440
        %9457 = vst [vmem:[%s217 + $0x18] sm:$0xff] %v9441
        %9458 = vst [vmem:[%s217 + $0x20] sm:$0xff] %v9442
        %9459 = vst [vmem:[%s217 + $0x28] sm:$0xff] %v9443
        %9460 = vst [vmem:[%s217 + $0x30] sm:$0xff] %v9444
        %9461 = vst [vmem:[%s217 + $0x38] sm:$0xff] %v9445
        %9462 = vst [vmem:[%s217 + $0x40] sm:$0xff] %v9446
        %9463 = vst [vmem:[%s217 + $0x48] sm:$0xff] %v9447
        %9464 = vst [vmem:[%s217 + $0x50] sm:$0xff] %v9448
        %9465 = vst [vmem:[%s217 + $0x58] sm:$0xff] %v9449
        %9466 = vst [vmem:[%s217 + $0x60] sm:$0xff] %v9450
        %9467 = vst [vmem:[%s217 + $0x68] sm:$0xff] %v9451
        %9468 = vst [vmem:[%s217 + $0x70] sm:$0xff] %v9452
        %9469 = vst [vmem:[%s217 + $0x78] sm:$0xff] %v9453
        %v9470 = vld [vmem:[%s217] sm:$0xff]
        %v9471 = vld [vmem:[%s217 + $0x8] sm:$0xff]
        %v9472 = vld [vmem:[%s217 + $0x10] sm:$0xff]
        %v9473 = vld [vmem:[%s217 + $0x18] sm:$0xff]
        %v9474 = vld [vmem:[%s217 + $0x20] sm:$0xff]
        %v9475 = vld [vmem:[%s217 + $0x28] sm:$0xff]
        %v9476 = vld [vmem:[%s217 + $0x30] sm:$0xff]
        %v9477 = vld [vmem:[%s217 + $0x38] sm:$0xff]
        %v9478 = vld [vmem:[%s217 + $0x40] sm:$0xff]
        %v9479 = vld [vmem:[%s217 + $0x48] sm:$0xff]
        %v9480 = vld [vmem:[%s217 + $0x50] sm:$0xff]
        %v9481 = vld [vmem:[%s217 + $0x58] sm:$0xff]
        %v9482 = vld [vmem:[%s217 + $0x60] sm:$0xff]
        %v9483 = vld [vmem:[%s217 + $0x68] sm:$0xff]
        %v9484 = vld [vmem:[%s217 + $0x70] sm:$0xff]
        %v9485 = vld [vmem:[%s217 + $0x78] sm:$0xff]
        %s9486 = scalar_lea.vmem %s2, 3584
        %v9487 = vld [vmem:[%s9486] sm:$0xff]
        %v9488 = vld [vmem:[%s9486 + $0x8] sm:$0xff]
        %v9489 = vld [vmem:[%s9486 + $0x10] sm:$0xff]
        %v9490 = vld [vmem:[%s9486 + $0x18] sm:$0xff]
        %v9491 = vld [vmem:[%s9486 + $0x20] sm:$0xff]
        %v9492 = vld [vmem:[%s9486 + $0x28] sm:$0xff]
        %v9493 = vld [vmem:[%s9486 + $0x30] sm:$0xff]
        %v9494 = vld [vmem:[%s9486 + $0x38] sm:$0xff]
        %v9495 = vld [vmem:[%s9486 + $0x40] sm:$0xff]
        %v9496 = vld [vmem:[%s9486 + $0x48] sm:$0xff]
        %v9497 = vld [vmem:[%s9486 + $0x50] sm:$0xff]
        %v9498 = vld [vmem:[%s9486 + $0x58] sm:$0xff]
        %v9499 = vld [vmem:[%s9486 + $0x60] sm:$0xff]
        %v9500 = vld [vmem:[%s9486 + $0x68] sm:$0xff]
        %v9501 = vld [vmem:[%s9486 + $0x70] sm:$0xff]
        %v9502 = vld [vmem:[%s9486 + $0x78] sm:$0xff]
        %9504 = vset.pattern.permute.xlu0 0
        %9505 = vperm.xlu0 %9504, %v9487
        %v9506 = vpop.permute.xlu0 %9505
        %9509 = vset.pattern.permute.xlu0 0
        %9510 = vperm.xlu0 %9509, %v9488
        %v9511 = vpop.permute.xlu0 %9510
        %9514 = vset.pattern.permute.xlu0 0
        %9515 = vperm.xlu0 %9514, %v9489
        %v9516 = vpop.permute.xlu0 %9515
        %9519 = vset.pattern.permute.xlu0 0
        %9520 = vperm.xlu0 %9519, %v9490
        %v9521 = vpop.permute.xlu0 %9520
        %9524 = vset.pattern.permute.xlu0 0
        %9525 = vperm.xlu0 %9524, %v9491
        %v9526 = vpop.permute.xlu0 %9525
        %9529 = vset.pattern.permute.xlu0 0
        %9530 = vperm.xlu0 %9529, %v9492
        %v9531 = vpop.permute.xlu0 %9530
        %9534 = vset.pattern.permute.xlu0 0
        %9535 = vperm.xlu0 %9534, %v9493
        %v9536 = vpop.permute.xlu0 %9535
        %9539 = vset.pattern.permute.xlu0 0
        %9540 = vperm.xlu0 %9539, %v9494
        %v9541 = vpop.permute.xlu0 %9540
        %9544 = vset.pattern.permute.xlu0 0
        %9545 = vperm.xlu0 %9544, %v9495
        %v9546 = vpop.permute.xlu0 %9545
        %9549 = vset.pattern.permute.xlu0 0
        %9550 = vperm.xlu0 %9549, %v9496
        %v9551 = vpop.permute.xlu0 %9550
        %9554 = vset.pattern.permute.xlu0 0
        %9555 = vperm.xlu0 %9554, %v9497
        %v9556 = vpop.permute.xlu0 %9555
        %9559 = vset.pattern.permute.xlu0 0
        %9560 = vperm.xlu0 %9559, %v9498
        %v9561 = vpop.permute.xlu0 %9560
        %9564 = vset.pattern.permute.xlu0 0
        %9565 = vperm.xlu0 %9564, %v9499
        %v9566 = vpop.permute.xlu0 %9565
        %9569 = vset.pattern.permute.xlu0 0
        %9570 = vperm.xlu0 %9569, %v9500
        %v9571 = vpop.permute.xlu0 %9570
        %9574 = vset.pattern.permute.xlu0 0
        %9575 = vperm.xlu0 %9574, %v9501
        %v9576 = vpop.permute.xlu0 %9575
        %9579 = vset.pattern.permute.xlu0 0
        %9580 = vperm.xlu0 %9579, %v9502
        %v9581 = vpop.permute.xlu0 %9580
        %v9583 = vmul.f32 %v1778, %v9506
        %v9584 = vmul.f32 %v1777, %v9511
        %v9585 = vmul.f32 %v1776, %v9516
        %v9586 = vmul.f32 %v1775, %v9521
        %v9587 = vmul.f32 %v1774, %v9526
        %v9588 = vmul.f32 %v1773, %v9531
        %v9589 = vmul.f32 %v1772, %v9536
        %v9590 = vmul.f32 %v1771, %v9541
        %v9591 = vmul.f32 %v1770, %v9546
        %v9592 = vmul.f32 %v1769, %v9551
        %v9593 = vmul.f32 %v1768, %v9556
        %v9594 = vmul.f32 %v1767, %v9561
        %v9595 = vmul.f32 %v1766, %v9566
        %v9596 = vmul.f32 %v1765, %v9571
        %v9597 = vmul.f32 %v1780, %v9576
        %v9598 = vmul.f32 %v1779, %v9581
        %v9599 = vpack.c.bf16 %v9584, %v9583
        %v9600 = vpack.c.bf16 %v9586, %v9585
        %v9601 = vpack.c.bf16 %v9588, %v9587
        %v9602 = vpack.c.bf16 %v9590, %v9589
        %v9603 = vpack.c.bf16 %v9592, %v9591
        %v9604 = vpack.c.bf16 %v9594, %v9593
        %v9605 = vpack.c.bf16 %v9596, %v9595
        %v9606 = vpack.c.bf16 %v9598, %v9597
        %s9607 = scalar_lea.vmem %s1, 896
        %v9608 = vld [vmem:[%s9607] sm:$0xf]
        %v9609 = vld [vmem:[%s9607 + $0x4] sm:$0xf]
        %v9610 = vld [vmem:[%s9607 + $0x8] sm:$0xf]
        %v9611 = vld [vmem:[%s9607 + $0xc] sm:$0xf]
        %v9612 = vld [vmem:[%s9607 + $0x10] sm:$0xf]
        %v9613 = vld [vmem:[%s9607 + $0x14] sm:$0xf]
        %v9614 = vld [vmem:[%s9607 + $0x18] sm:$0xf]
        %v9615 = vld [vmem:[%s9607 + $0x1c] sm:$0xf]
        %v9624 = vunpack.c.l.b16 %v9608
        %v9625 = vunpack.c.l.b16 %v9609
        %v9626 = vunpack.c.l.b16 %v9610
        %v9627 = vunpack.c.l.b16 %v9611
        %v9628 = vunpack.c.l.b16 %v9612
        %v9629 = vunpack.c.l.b16 %v9613
        %v9630 = vunpack.c.l.b16 %v9614
        %v9631 = vunpack.c.l.b16 %v9615
        %v9632 = vpack.c.b16 %v9625, %v9624
        %v9633 = vpack.c.b16 %v9627, %v9626
        %v9634 = vpack.c.b16 %v9629, %v9628
        %v9635 = vpack.c.b16 %v9631, %v9630
        %v9641 = vsel %vm526, %v9599, 0
        %v9644 = vsel %vm526, %v9600, 0
        %v9647 = vsel %vm526, %v9601, 0
        %v9650 = vsel %vm526, %v9602, 0
        %v9653 = vsel %vm526, %v9603, 0
        %v9656 = vsel %vm526, %v9604, 0
        %v9659 = vsel %vm526, %v9605, 0
        %v9662 = vsel %vm526, %v9606, 0
        %9664 = vmatprep.subr.bf16.mxu0 0
        %9665 = vmatpush1.bf16.msra.mxu0 0
        %9666 = vmatprep.subr.bf16.mxu0 0
        %9667 = vmatpush1.bf16.msra.mxu0 0
        %9668 = vmatprep.subr.bf16.mxu0 0
        %9669 = vmatpush1.bf16.msra.mxu0 0
        %9670 = vmatprep.subr.bf16.mxu0 0
        %9671 = vmatpush1.bf16.msra.mxu0 0
        %9672 = vmatprep.subr.bf16.mxu0 0
        %9673 = vmatpush1.bf16.msra.mxu0 %v9635
        %9674 = vmatprep.subr.bf16.mxu0 0
        %9675 = vmatpush1.bf16.msra.mxu0 %v9634
        %9676 = vmatprep.subr.bf16.mxu0 0
        %9677 = vmatpush1.bf16.msra.mxu0 %v9633
        %9678 = vmatprep.subr.bf16.mxu0 0
        %9679 = vmatpush1.bf16.msra.mxu0 %v9632
        %9680 = vmatprep.subr.bf16.mxu0 0
        %9681 = vmatpush2.bf16.msra.mxu0 0
        %9682 = vmatprep.subr.bf16.mxu0 0
        %9683 = vmatpush2.bf16.msra.mxu0 0
        %9684 = vmatprep.subr.bf16.mxu0 0
        %9685 = vmatpush2.bf16.msra.mxu0 0
        %9686 = vmatprep.subr.bf16.mxu0 0
        %9687 = vmatpush2.bf16.msra.mxu0 0
        %9688 = vmatprep.subr.bf16.mxu0 0
        %9689 = vmatpush2.bf16.msra.mxu0 0
        %9690 = vmatprep.subr.bf16.mxu0 0
        %9691 = vmatpush2.bf16.msra.mxu0 0
        %9692 = vmatprep.subr.bf16.mxu0 0
        %9693 = vmatpush2.bf16.msra.mxu0 0
        %9694 = vmatprep.subr.bf16.mxu0 0
        %9695 = vmatpush2.bf16.msra.mxu0 0
        %9696 = vmatprep.mubr.bf16.mxu0 0
        %9697 = vmatmul.mubr.bf16.gmra.mxu0 %v9641
        %v9698 = vpop.f32.mrf.mxu0
        %v9699 = vadd.f32 0.0, %v9698
        %v9700 = vpop.f32.mrf.mxu0
        %v9701 = vpop.f32.mrf.mxu0
        %v9702 = vadd.f32 0.0, %v9701
        %v9703 = vpop.f32.mrf.mxu0
        %9704 = vmatprep.mubr.bf16.mxu0 0
        %9705 = vmatmul.mubr.bf16.gmra.mxu0 %v9644
        %v9706 = vpop.f32.mrf.mxu0
        %v9707 = vadd.f32 0.0, %v9706
        %v9708 = vpop.f32.mrf.mxu0
        %v9709 = vpop.f32.mrf.mxu0
        %v9710 = vadd.f32 0.0, %v9709
        %v9711 = vpop.f32.mrf.mxu0
        %9712 = vmatprep.mubr.bf16.mxu0 0
        %9713 = vmatmul.mubr.bf16.gmra.mxu0 %v9647
        %v9714 = vpop.f32.mrf.mxu0
        %v9715 = vadd.f32 0.0, %v9714
        %v9716 = vpop.f32.mrf.mxu0
        %v9717 = vpop.f32.mrf.mxu0
        %v9718 = vadd.f32 0.0, %v9717
        %v9719 = vpop.f32.mrf.mxu0
        %9720 = vmatprep.mubr.bf16.mxu0 0
        %9721 = vmatmul.mubr.bf16.gmra.mxu0 %v9650
        %v9722 = vpop.f32.mrf.mxu0
        %v9723 = vadd.f32 0.0, %v9722
        %v9724 = vpop.f32.mrf.mxu0
        %v9725 = vpop.f32.mrf.mxu0
        %v9726 = vadd.f32 0.0, %v9725
        %v9727 = vpop.f32.mrf.mxu0
        %9728 = vmatprep.mubr.bf16.mxu0 0
        %9729 = vmatmul.mubr.bf16.gmra.mxu0 %v9653
        %v9730 = vpop.f32.mrf.mxu0
        %v9731 = vadd.f32 0.0, %v9730
        %v9732 = vpop.f32.mrf.mxu0
        %v9733 = vpop.f32.mrf.mxu0
        %v9734 = vadd.f32 0.0, %v9733
        %v9735 = vpop.f32.mrf.mxu0
        %9736 = vmatprep.mubr.bf16.mxu0 0
        %9737 = vmatmul.mubr.bf16.gmra.mxu0 %v9656
        %v9738 = vpop.f32.mrf.mxu0
        %v9739 = vadd.f32 0.0, %v9738
        %v9740 = vpop.f32.mrf.mxu0
        %v9741 = vpop.f32.mrf.mxu0
        %v9742 = vadd.f32 0.0, %v9741
        %v9743 = vpop.f32.mrf.mxu0
        %9744 = vmatprep.mubr.bf16.mxu0 0
        %9745 = vmatmul.mubr.bf16.gmra.mxu0 %v9659
        %v9746 = vpop.f32.mrf.mxu0
        %v9747 = vadd.f32 0.0, %v9746
        %v9748 = vpop.f32.mrf.mxu0
        %v9749 = vpop.f32.mrf.mxu0
        %v9750 = vadd.f32 0.0, %v9749
        %v9751 = vpop.f32.mrf.mxu0
        %9752 = vmatprep.mubr.bf16.mxu0 0
        %9753 = vmatmul.mubr.bf16.gmra.mxu0 %v9662
        %v9754 = vpop.f32.mrf.mxu0
        %v9755 = vadd.f32 0.0, %v9754
        %v9756 = vpop.f32.mrf.mxu0
        %v9757 = vpop.f32.mrf.mxu0
        %v9758 = vadd.f32 0.0, %v9757
        %v9759 = vpop.f32.mrf.mxu0
        %9760 = vdwg.mxu0
        %v9761 = vadd.f32 %v9470, %v9699
        %v9762 = vadd.f32 %v9471, %v9702
        %v9763 = vadd.f32 %v9472, %v9707
        %v9764 = vadd.f32 %v9473, %v9710
        %v9765 = vadd.f32 %v9474, %v9715
        %v9766 = vadd.f32 %v9475, %v9718
        %v9767 = vadd.f32 %v9476, %v9723
        %v9768 = vadd.f32 %v9477, %v9726
        %v9769 = vadd.f32 %v9478, %v9731
        %v9770 = vadd.f32 %v9479, %v9734
        %v9771 = vadd.f32 %v9480, %v9739
        %v9772 = vadd.f32 %v9481, %v9742
        %v9773 = vadd.f32 %v9482, %v9747
        %v9774 = vadd.f32 %v9483, %v9750
        %v9775 = vadd.f32 %v9484, %v9755
        %v9776 = vadd.f32 %v9485, %v9758
        %9777 = vst [vmem:[%s217] sm:$0xff] %v9761
        %9778 = vst [vmem:[%s217 + $0x8] sm:$0xff] %v9762
        %9779 = vst [vmem:[%s217 + $0x10] sm:$0xff] %v9763
        %9780 = vst [vmem:[%s217 + $0x18] sm:$0xff] %v9764
        %9781 = vst [vmem:[%s217 + $0x20] sm:$0xff] %v9765
        %9782 = vst [vmem:[%s217 + $0x28] sm:$0xff] %v9766
        %9783 = vst [vmem:[%s217 + $0x30] sm:$0xff] %v9767
        %9784 = vst [vmem:[%s217 + $0x38] sm:$0xff] %v9768
        %9785 = vst [vmem:[%s217 + $0x40] sm:$0xff] %v9769
        %9786 = vst [vmem:[%s217 + $0x48] sm:$0xff] %v9770
        %9787 = vst [vmem:[%s217 + $0x50] sm:$0xff] %v9771
        %9788 = vst [vmem:[%s217 + $0x58] sm:$0xff] %v9772
        %9789 = vst [vmem:[%s217 + $0x60] sm:$0xff] %v9773
        %9790 = vst [vmem:[%s217 + $0x68] sm:$0xff] %v9774
        %9791 = vst [vmem:[%s217 + $0x70] sm:$0xff] %v9775
        %9792 = vst [vmem:[%s217 + $0x78] sm:$0xff] %v9776
        %v9793 = vld [vmem:[%s217] sm:$0xff]
        %v9794 = vld [vmem:[%s217 + $0x8] sm:$0xff]
        %v9795 = vld [vmem:[%s217 + $0x10] sm:$0xff]
        %v9796 = vld [vmem:[%s217 + $0x18] sm:$0xff]
        %v9797 = vld [vmem:[%s217 + $0x20] sm:$0xff]
        %v9798 = vld [vmem:[%s217 + $0x28] sm:$0xff]
        %v9799 = vld [vmem:[%s217 + $0x30] sm:$0xff]
        %v9800 = vld [vmem:[%s217 + $0x38] sm:$0xff]
        %v9801 = vld [vmem:[%s217 + $0x40] sm:$0xff]
        %v9802 = vld [vmem:[%s217 + $0x48] sm:$0xff]
        %v9803 = vld [vmem:[%s217 + $0x50] sm:$0xff]
        %v9804 = vld [vmem:[%s217 + $0x58] sm:$0xff]
        %v9805 = vld [vmem:[%s217 + $0x60] sm:$0xff]
        %v9806 = vld [vmem:[%s217 + $0x68] sm:$0xff]
        %v9807 = vld [vmem:[%s217 + $0x70] sm:$0xff]
        %v9808 = vld [vmem:[%s217 + $0x78] sm:$0xff]
        %s9809 = scalar_lea.vmem %s2, 3712
        %v9810 = vld [vmem:[%s9809] sm:$0xff]
        %v9811 = vld [vmem:[%s9809 + $0x8] sm:$0xff]
        %v9812 = vld [vmem:[%s9809 + $0x10] sm:$0xff]
        %v9813 = vld [vmem:[%s9809 + $0x18] sm:$0xff]
        %v9814 = vld [vmem:[%s9809 + $0x20] sm:$0xff]
        %v9815 = vld [vmem:[%s9809 + $0x28] sm:$0xff]
        %v9816 = vld [vmem:[%s9809 + $0x30] sm:$0xff]
        %v9817 = vld [vmem:[%s9809 + $0x38] sm:$0xff]
        %v9818 = vld [vmem:[%s9809 + $0x40] sm:$0xff]
        %v9819 = vld [vmem:[%s9809 + $0x48] sm:$0xff]
        %v9820 = vld [vmem:[%s9809 + $0x50] sm:$0xff]
        %v9821 = vld [vmem:[%s9809 + $0x58] sm:$0xff]
        %v9822 = vld [vmem:[%s9809 + $0x60] sm:$0xff]
        %v9823 = vld [vmem:[%s9809 + $0x68] sm:$0xff]
        %v9824 = vld [vmem:[%s9809 + $0x70] sm:$0xff]
        %v9825 = vld [vmem:[%s9809 + $0x78] sm:$0xff]
        %9827 = vset.pattern.permute.xlu0 0
        %9828 = vperm.xlu0 %9827, %v9810
        %v9829 = vpop.permute.xlu0 %9828
        %9832 = vset.pattern.permute.xlu0 0
        %9833 = vperm.xlu0 %9832, %v9811
        %v9834 = vpop.permute.xlu0 %9833
        %9837 = vset.pattern.permute.xlu0 0
        %9838 = vperm.xlu0 %9837, %v9812
        %v9839 = vpop.permute.xlu0 %9838
        %9842 = vset.pattern.permute.xlu0 0
        %9843 = vperm.xlu0 %9842, %v9813
        %v9844 = vpop.permute.xlu0 %9843
        %9847 = vset.pattern.permute.xlu0 0
        %9848 = vperm.xlu0 %9847, %v9814
        %v9849 = vpop.permute.xlu0 %9848
        %9852 = vset.pattern.permute.xlu0 0
        %9853 = vperm.xlu0 %9852, %v9815
        %v9854 = vpop.permute.xlu0 %9853
        %9857 = vset.pattern.permute.xlu0 0
        %9858 = vperm.xlu0 %9857, %v9816
        %v9859 = vpop.permute.xlu0 %9858
        %9862 = vset.pattern.permute.xlu0 0
        %9863 = vperm.xlu0 %9862, %v9817
        %v9864 = vpop.permute.xlu0 %9863
        %9867 = vset.pattern.permute.xlu0 0
        %9868 = vperm.xlu0 %9867, %v9818
        %v9869 = vpop.permute.xlu0 %9868
        %9872 = vset.pattern.permute.xlu0 0
        %9873 = vperm.xlu0 %9872, %v9819
        %v9874 = vpop.permute.xlu0 %9873
        %9877 = vset.pattern.permute.xlu0 0
        %9878 = vperm.xlu0 %9877, %v9820
        %v9879 = vpop.permute.xlu0 %9878
        %9882 = vset.pattern.permute.xlu0 0
        %9883 = vperm.xlu0 %9882, %v9821
        %v9884 = vpop.permute.xlu0 %9883
        %9887 = vset.pattern.permute.xlu0 0
        %9888 = vperm.xlu0 %9887, %v9822
        %v9889 = vpop.permute.xlu0 %9888
        %9892 = vset.pattern.permute.xlu0 0
        %9893 = vperm.xlu0 %9892, %v9823
        %v9894 = vpop.permute.xlu0 %9893
        %9897 = vset.pattern.permute.xlu0 0
        %9898 = vperm.xlu0 %9897, %v9824
        %v9899 = vpop.permute.xlu0 %9898
        %9902 = vset.pattern.permute.xlu0 0
        %9903 = vperm.xlu0 %9902, %v9825
        %v9904 = vpop.permute.xlu0 %9903
        %v9906 = vmul.f32 %v2134, %v9829
        %v9907 = vmul.f32 %v2133, %v9834
        %v9908 = vmul.f32 %v2132, %v9839
        %v9909 = vmul.f32 %v2131, %v9844
        %v9910 = vmul.f32 %v2130, %v9849
        %v9911 = vmul.f32 %v2129, %v9854
        %v9912 = vmul.f32 %v2128, %v9859
        %v9913 = vmul.f32 %v2127, %v9864
        %v9914 = vmul.f32 %v2126, %v9869
        %v9915 = vmul.f32 %v2125, %v9874
        %v9916 = vmul.f32 %v2124, %v9879
        %v9917 = vmul.f32 %v2123, %v9884
        %v9918 = vmul.f32 %v2122, %v9889
        %v9919 = vmul.f32 %v2121, %v9894
        %v9920 = vmul.f32 %v2136, %v9899
        %v9921 = vmul.f32 %v2135, %v9904
        %v9922 = vpack.c.bf16 %v9907, %v9906
        %v9923 = vpack.c.bf16 %v9909, %v9908
        %v9924 = vpack.c.bf16 %v9911, %v9910
        %v9925 = vpack.c.bf16 %v9913, %v9912
        %v9926 = vpack.c.bf16 %v9915, %v9914
        %v9927 = vpack.c.bf16 %v9917, %v9916
        %v9928 = vpack.c.bf16 %v9919, %v9918
        %v9929 = vpack.c.bf16 %v9921, %v9920
        %s9930 = scalar_lea.vmem %s1, 928
        %v9931 = vld [vmem:[%s9930] sm:$0xf]
        %v9932 = vld [vmem:[%s9930 + $0x4] sm:$0xf]
        %v9933 = vld [vmem:[%s9930 + $0x8] sm:$0xf]
        %v9934 = vld [vmem:[%s9930 + $0xc] sm:$0xf]
        %v9935 = vld [vmem:[%s9930 + $0x10] sm:$0xf]
        %v9936 = vld [vmem:[%s9930 + $0x14] sm:$0xf]
        %v9937 = vld [vmem:[%s9930 + $0x18] sm:$0xf]
        %v9938 = vld [vmem:[%s9930 + $0x1c] sm:$0xf]
        %v9947 = vunpack.c.l.b16 %v9931
        %v9948 = vunpack.c.l.b16 %v9932
        %v9949 = vunpack.c.l.b16 %v9933
        %v9950 = vunpack.c.l.b16 %v9934
        %v9951 = vunpack.c.l.b16 %v9935
        %v9952 = vunpack.c.l.b16 %v9936
        %v9953 = vunpack.c.l.b16 %v9937
        %v9954 = vunpack.c.l.b16 %v9938
        %v9955 = vpack.c.b16 %v9948, %v9947
        %v9956 = vpack.c.b16 %v9950, %v9949
        %v9957 = vpack.c.b16 %v9952, %v9951
        %v9958 = vpack.c.b16 %v9954, %v9953
        %v9964 = vsel %vm526, %v9922, 0
        %v9967 = vsel %vm526, %v9923, 0
        %v9970 = vsel %vm526, %v9924, 0
        %v9973 = vsel %vm526, %v9925, 0
        %v9976 = vsel %vm526, %v9926, 0
        %v9979 = vsel %vm526, %v9927, 0
        %v9982 = vsel %vm526, %v9928, 0
        %v9985 = vsel %vm526, %v9929, 0
        %9987 = vmatprep.subr.bf16.mxu0 0
        %9988 = vmatpush1.bf16.msra.mxu0 0
        %9989 = vmatprep.subr.bf16.mxu0 0
        %9990 = vmatpush1.bf16.msra.mxu0 0
        %9991 = vmatprep.subr.bf16.mxu0 0
        %9992 = vmatpush1.bf16.msra.mxu0 0
        %9993 = vmatprep.subr.bf16.mxu0 0
        %9994 = vmatpush1.bf16.msra.mxu0 0
        %9995 = vmatprep.subr.bf16.mxu0 0
        %9996 = vmatpush1.bf16.msra.mxu0 %v9958
        %9997 = vmatprep.subr.bf16.mxu0 0
        %9998 = vmatpush1.bf16.msra.mxu0 %v9957
        %9999 = vmatprep.subr.bf16.mxu0 0
        %10000 = vmatpush1.bf16.msra.mxu0 %v9956
        %10001 = vmatprep.subr.bf16.mxu0 0
        %10002 = vmatpush1.bf16.msra.mxu0 %v9955
        %10003 = vmatprep.subr.bf16.mxu0 0
        %10004 = vmatpush2.bf16.msra.mxu0 0
        %10005 = vmatprep.subr.bf16.mxu0 0
        %10006 = vmatpush2.bf16.msra.mxu0 0
        %10007 = vmatprep.subr.bf16.mxu0 0
        %10008 = vmatpush2.bf16.msra.mxu0 0
        %10009 = vmatprep.subr.bf16.mxu0 0
        %10010 = vmatpush2.bf16.msra.mxu0 0
        %10011 = vmatprep.subr.bf16.mxu0 0
        %10012 = vmatpush2.bf16.msra.mxu0 0
        %10013 = vmatprep.subr.bf16.mxu0 0
        %10014 = vmatpush2.bf16.msra.mxu0 0
        %10015 = vmatprep.subr.bf16.mxu0 0
        %10016 = vmatpush2.bf16.msra.mxu0 0
        %10017 = vmatprep.subr.bf16.mxu0 0
        %10018 = vmatpush2.bf16.msra.mxu0 0
        %10019 = vmatprep.mubr.bf16.mxu0 0
        %10020 = vmatmul.mubr.bf16.gmra.mxu0 %v9964
        %v10021 = vpop.f32.mrf.mxu0
        %v10022 = vadd.f32 0.0, %v10021
        %v10023 = vpop.f32.mrf.mxu0
        %v10024 = vpop.f32.mrf.mxu0
        %v10025 = vadd.f32 0.0, %v10024
        %v10026 = vpop.f32.mrf.mxu0
        %10027 = vmatprep.mubr.bf16.mxu0 0
        %10028 = vmatmul.mubr.bf16.gmra.mxu0 %v9967
        %v10029 = vpop.f32.mrf.mxu0
        %v10030 = vadd.f32 0.0, %v10029
        %v10031 = vpop.f32.mrf.mxu0
        %v10032 = vpop.f32.mrf.mxu0
        %v10033 = vadd.f32 0.0, %v10032
        %v10034 = vpop.f32.mrf.mxu0
        %10035 = vmatprep.mubr.bf16.mxu0 0
        %10036 = vmatmul.mubr.bf16.gmra.mxu0 %v9970
        %v10037 = vpop.f32.mrf.mxu0
        %v10038 = vadd.f32 0.0, %v10037
        %v10039 = vpop.f32.mrf.mxu0
        %v10040 = vpop.f32.mrf.mxu0
        %v10041 = vadd.f32 0.0, %v10040
        %v10042 = vpop.f32.mrf.mxu0
        %10043 = vmatprep.mubr.bf16.mxu0 0
        %10044 = vmatmul.mubr.bf16.gmra.mxu0 %v9973
        %v10045 = vpop.f32.mrf.mxu0
        %v10046 = vadd.f32 0.0, %v10045
        %v10047 = vpop.f32.mrf.mxu0
        %v10048 = vpop.f32.mrf.mxu0
        %v10049 = vadd.f32 0.0, %v10048
        %v10050 = vpop.f32.mrf.mxu0
        %10051 = vmatprep.mubr.bf16.mxu0 0
        %10052 = vmatmul.mubr.bf16.gmra.mxu0 %v9976
        %v10053 = vpop.f32.mrf.mxu0
        %v10054 = vadd.f32 0.0, %v10053
        %v10055 = vpop.f32.mrf.mxu0
        %v10056 = vpop.f32.mrf.mxu0
        %v10057 = vadd.f32 0.0, %v10056
        %v10058 = vpop.f32.mrf.mxu0
        %10059 = vmatprep.mubr.bf16.mxu0 0
        %10060 = vmatmul.mubr.bf16.gmra.mxu0 %v9979
        %v10061 = vpop.f32.mrf.mxu0
        %v10062 = vadd.f32 0.0, %v10061
        %v10063 = vpop.f32.mrf.mxu0
        %v10064 = vpop.f32.mrf.mxu0
        %v10065 = vadd.f32 0.0, %v10064
        %v10066 = vpop.f32.mrf.mxu0
        %10067 = vmatprep.mubr.bf16.mxu0 0
        %10068 = vmatmul.mubr.bf16.gmra.mxu0 %v9982
        %v10069 = vpop.f32.mrf.mxu0
        %v10070 = vadd.f32 0.0, %v10069
        %v10071 = vpop.f32.mrf.mxu0
        %v10072 = vpop.f32.mrf.mxu0
        %v10073 = vadd.f32 0.0, %v10072
        %v10074 = vpop.f32.mrf.mxu0
        %10075 = vmatprep.mubr.bf16.mxu0 0
        %10076 = vmatmul.mubr.bf16.gmra.mxu0 %v9985
        %v10077 = vpop.f32.mrf.mxu0
        %v10078 = vadd.f32 0.0, %v10077
        %v10079 = vpop.f32.mrf.mxu0
        %v10080 = vpop.f32.mrf.mxu0
        %v10081 = vadd.f32 0.0, %v10080
        %v10082 = vpop.f32.mrf.mxu0
        %10083 = vdwg.mxu0
        %v10084 = vadd.f32 %v9793, %v10022
        %v10085 = vadd.f32 %v9794, %v10025
        %v10086 = vadd.f32 %v9795, %v10030
        %v10087 = vadd.f32 %v9796, %v10033
        %v10088 = vadd.f32 %v9797, %v10038
        %v10089 = vadd.f32 %v9798, %v10041
        %v10090 = vadd.f32 %v9799, %v10046
        %v10091 = vadd.f32 %v9800, %v10049
        %v10092 = vadd.f32 %v9801, %v10054
        %v10093 = vadd.f32 %v9802, %v10057
        %v10094 = vadd.f32 %v9803, %v10062
        %v10095 = vadd.f32 %v9804, %v10065
        %v10096 = vadd.f32 %v9805, %v10070
        %v10097 = vadd.f32 %v9806, %v10073
        %v10098 = vadd.f32 %v9807, %v10078
        %v10099 = vadd.f32 %v9808, %v10081
        %10100 = vst [vmem:[%s217] sm:$0xff] %v10084
        %10101 = vst [vmem:[%s217 + $0x8] sm:$0xff] %v10085
        %10102 = vst [vmem:[%s217 + $0x10] sm:$0xff] %v10086
        %10103 = vst [vmem:[%s217 + $0x18] sm:$0xff] %v10087
        %10104 = vst [vmem:[%s217 + $0x20] sm:$0xff] %v10088
        %10105 = vst [vmem:[%s217 + $0x28] sm:$0xff] %v10089
        %10106 = vst [vmem:[%s217 + $0x30] sm:$0xff] %v10090
        %10107 = vst [vmem:[%s217 + $0x38] sm:$0xff] %v10091
        %10108 = vst [vmem:[%s217 + $0x40] sm:$0xff] %v10092
        %10109 = vst [vmem:[%s217 + $0x48] sm:$0xff] %v10093
        %10110 = vst [vmem:[%s217 + $0x50] sm:$0xff] %v10094
        %10111 = vst [vmem:[%s217 + $0x58] sm:$0xff] %v10095
        %10112 = vst [vmem:[%s217 + $0x60] sm:$0xff] %v10096
        %10113 = vst [vmem:[%s217 + $0x68] sm:$0xff] %v10097
        %10114 = vst [vmem:[%s217 + $0x70] sm:$0xff] %v10098
        %10115 = vst [vmem:[%s217 + $0x78] sm:$0xff] %v10099
        %v10116 = vld [vmem:[%s217] sm:$0xff]
        %v10117 = vld [vmem:[%s217 + $0x8] sm:$0xff]
        %v10118 = vld [vmem:[%s217 + $0x10] sm:$0xff]
        %v10119 = vld [vmem:[%s217 + $0x18] sm:$0xff]
        %v10120 = vld [vmem:[%s217 + $0x20] sm:$0xff]
        %v10121 = vld [vmem:[%s217 + $0x28] sm:$0xff]
        %v10122 = vld [vmem:[%s217 + $0x30] sm:$0xff]
        %v10123 = vld [vmem:[%s217 + $0x38] sm:$0xff]
        %v10124 = vld [vmem:[%s217 + $0x40] sm:$0xff]
        %v10125 = vld [vmem:[%s217 + $0x48] sm:$0xff]
        %v10126 = vld [vmem:[%s217 + $0x50] sm:$0xff]
        %v10127 = vld [vmem:[%s217 + $0x58] sm:$0xff]
        %v10128 = vld [vmem:[%s217 + $0x60] sm:$0xff]
        %v10129 = vld [vmem:[%s217 + $0x68] sm:$0xff]
        %v10130 = vld [vmem:[%s217 + $0x70] sm:$0xff]
        %v10131 = vld [vmem:[%s217 + $0x78] sm:$0xff]
        %s10132 = scalar_lea.vmem %s2, 3840
        %v10133 = vld [vmem:[%s10132] sm:$0xff]
        %v10134 = vld [vmem:[%s10132 + $0x8] sm:$0xff]
        %v10135 = vld [vmem:[%s10132 + $0x10] sm:$0xff]
        %v10136 = vld [vmem:[%s10132 + $0x18] sm:$0xff]
        %v10137 = vld [vmem:[%s10132 + $0x20] sm:$0xff]
        %v10138 = vld [vmem:[%s10132 + $0x28] sm:$0xff]
        %v10139 = vld [vmem:[%s10132 + $0x30] sm:$0xff]
        %v10140 = vld [vmem:[%s10132 + $0x38] sm:$0xff]
        %v10141 = vld [vmem:[%s10132 + $0x40] sm:$0xff]
        %v10142 = vld [vmem:[%s10132 + $0x48] sm:$0xff]
        %v10143 = vld [vmem:[%s10132 + $0x50] sm:$0xff]
        %v10144 = vld [vmem:[%s10132 + $0x58] sm:$0xff]
        %v10145 = vld [vmem:[%s10132 + $0x60] sm:$0xff]
        %v10146 = vld [vmem:[%s10132 + $0x68] sm:$0xff]
        %v10147 = vld [vmem:[%s10132 + $0x70] sm:$0xff]
        %v10148 = vld [vmem:[%s10132 + $0x78] sm:$0xff]
        %10150 = vset.pattern.permute.xlu0 0
        %10151 = vperm.xlu0 %10150, %v10133
        %v10152 = vpop.permute.xlu0 %10151
        %10155 = vset.pattern.permute.xlu0 0
        %10156 = vperm.xlu0 %10155, %v10134
        %v10157 = vpop.permute.xlu0 %10156
        %10160 = vset.pattern.permute.xlu0 0
        %10161 = vperm.xlu0 %10160, %v10135
        %v10162 = vpop.permute.xlu0 %10161
        %10165 = vset.pattern.permute.xlu0 0
        %10166 = vperm.xlu0 %10165, %v10136
        %v10167 = vpop.permute.xlu0 %10166
        %10170 = vset.pattern.permute.xlu0 0
        %10171 = vperm.xlu0 %10170, %v10137
        %v10172 = vpop.permute.xlu0 %10171
        %10175 = vset.pattern.permute.xlu0 0
        %10176 = vperm.xlu0 %10175, %v10138
        %v10177 = vpop.permute.xlu0 %10176
        %10180 = vset.pattern.permute.xlu0 0
        %10181 = vperm.xlu0 %10180, %v10139
        %v10182 = vpop.permute.xlu0 %10181
        %10185 = vset.pattern.permute.xlu0 0
        %10186 = vperm.xlu0 %10185, %v10140
        %v10187 = vpop.permute.xlu0 %10186
        %10190 = vset.pattern.permute.xlu0 0
        %10191 = vperm.xlu0 %10190, %v10141
        %v10192 = vpop.permute.xlu0 %10191
        %10195 = vset.pattern.permute.xlu0 0
        %10196 = vperm.xlu0 %10195, %v10142
        %v10197 = vpop.permute.xlu0 %10196
        %10200 = vset.pattern.permute.xlu0 0
        %10201 = vperm.xlu0 %10200, %v10143
        %v10202 = vpop.permute.xlu0 %10201
        %10205 = vset.pattern.permute.xlu0 0
        %10206 = vperm.xlu0 %10205, %v10144
        %v10207 = vpop.permute.xlu0 %10206
        %10210 = vset.pattern.permute.xlu0 0
        %10211 = vperm.xlu0 %10210, %v10145
        %v10212 = vpop.permute.xlu0 %10211
        %10215 = vset.pattern.permute.xlu0 0
        %10216 = vperm.xlu0 %10215, %v10146
        %v10217 = vpop.permute.xlu0 %10216
        %10220 = vset.pattern.permute.xlu0 0
        %10221 = vperm.xlu0 %10220, %v10147
        %v10222 = vpop.permute.xlu0 %10221
        %10225 = vset.pattern.permute.xlu0 0
        %10226 = vperm.xlu0 %10225, %v10148
        %v10227 = vpop.permute.xlu0 %10226
        %v10229 = vmul.f32 %v2490, %v10152
        %v10230 = vmul.f32 %v2489, %v10157
        %v10231 = vmul.f32 %v2488, %v10162
        %v10232 = vmul.f32 %v2487, %v10167
        %v10233 = vmul.f32 %v2486, %v10172
        %v10234 = vmul.f32 %v2485, %v10177
        %v10235 = vmul.f32 %v2484, %v10182
        %v10236 = vmul.f32 %v2483, %v10187
        %v10237 = vmul.f32 %v2482, %v10192
        %v10238 = vmul.f32 %v2481, %v10197
        %v10239 = vmul.f32 %v2480, %v10202
        %v10240 = vmul.f32 %v2479, %v10207
        %v10241 = vmul.f32 %v2478, %v10212
        %v10242 = vmul.f32 %v2477, %v10217
        %v10243 = vmul.f32 %v2492, %v10222
        %v10244 = vmul.f32 %v2491, %v10227
        %v10245 = vpack.c.bf16 %v10230, %v10229
        %v10246 = vpack.c.bf16 %v10232, %v10231
        %v10247 = vpack.c.bf16 %v10234, %v10233
        %v10248 = vpack.c.bf16 %v10236, %v10235
        %v10249 = vpack.c.bf16 %v10238, %v10237
        %v10250 = vpack.c.bf16 %v10240, %v10239
        %v10251 = vpack.c.bf16 %v10242, %v10241
        %v10252 = vpack.c.bf16 %v10244, %v10243
        %s10253 = scalar_lea.vmem %s1, 960
        %v10254 = vld [vmem:[%s10253] sm:$0xf]
        %v10255 = vld [vmem:[%s10253 + $0x4] sm:$0xf]
        %v10256 = vld [vmem:[%s10253 + $0x8] sm:$0xf]
        %v10257 = vld [vmem:[%s10253 + $0xc] sm:$0xf]
        %v10258 = vld [vmem:[%s10253 + $0x10] sm:$0xf]
        %v10259 = vld [vmem:[%s10253 + $0x14] sm:$0xf]
        %v10260 = vld [vmem:[%s10253 + $0x18] sm:$0xf]
        %v10261 = vld [vmem:[%s10253 + $0x1c] sm:$0xf]
        %v10270 = vunpack.c.l.b16 %v10254
        %v10271 = vunpack.c.l.b16 %v10255
        %v10272 = vunpack.c.l.b16 %v10256
        %v10273 = vunpack.c.l.b16 %v10257
        %v10274 = vunpack.c.l.b16 %v10258
        %v10275 = vunpack.c.l.b16 %v10259
        %v10276 = vunpack.c.l.b16 %v10260
        %v10277 = vunpack.c.l.b16 %v10261
        %v10278 = vpack.c.b16 %v10271, %v10270
        %v10279 = vpack.c.b16 %v10273, %v10272
        %v10280 = vpack.c.b16 %v10275, %v10274
        %v10281 = vpack.c.b16 %v10277, %v10276
        %v10287 = vsel %vm526, %v10245, 0
        %v10290 = vsel %vm526, %v10246, 0
        %v10293 = vsel %vm526, %v10247, 0
        %v10296 = vsel %vm526, %v10248, 0
        %v10299 = vsel %vm526, %v10249, 0
        %v10302 = vsel %vm526, %v10250, 0
        %v10305 = vsel %vm526, %v10251, 0
        %v10308 = vsel %vm526, %v10252, 0
        %10310 = vmatprep.subr.bf16.mxu0 0
        %10311 = vmatpush1.bf16.msra.mxu0 0
        %10312 = vmatprep.subr.bf16.mxu0 0
        %10313 = vmatpush1.bf16.msra.mxu0 0
        %10314 = vmatprep.subr.bf16.mxu0 0
        %10315 = vmatpush1.bf16.msra.mxu0 0
        %10316 = vmatprep.subr.bf16.mxu0 0
        %10317 = vmatpush1.bf16.msra.mxu0 0
        %10318 = vmatprep.subr.bf16.mxu0 0
        %10319 = vmatpush1.bf16.msra.mxu0 %v10281
        %10320 = vmatprep.subr.bf16.mxu0 0
        %10321 = vmatpush1.bf16.msra.mxu0 %v10280
        %10322 = vmatprep.subr.bf16.mxu0 0
        %10323 = vmatpush1.bf16.msra.mxu0 %v10279
        %10324 = vmatprep.subr.bf16.mxu0 0
        %10325 = vmatpush1.bf16.msra.mxu0 %v10278
        %10326 = vmatprep.subr.bf16.mxu0 0
        %10327 = vmatpush2.bf16.msra.mxu0 0
        %10328 = vmatprep.subr.bf16.mxu0 0
        %10329 = vmatpush2.bf16.msra.mxu0 0
        %10330 = vmatprep.subr.bf16.mxu0 0
        %10331 = vmatpush2.bf16.msra.mxu0 0
        %10332 = vmatprep.subr.bf16.mxu0 0
        %10333 = vmatpush2.bf16.msra.mxu0 0
        %10334 = vmatprep.subr.bf16.mxu0 0
        %10335 = vmatpush2.bf16.msra.mxu0 0
        %10336 = vmatprep.subr.bf16.mxu0 0
        %10337 = vmatpush2.bf16.msra.mxu0 0
        %10338 = vmatprep.subr.bf16.mxu0 0
        %10339 = vmatpush2.bf16.msra.mxu0 0
        %10340 = vmatprep.subr.bf16.mxu0 0
        %10341 = vmatpush2.bf16.msra.mxu0 0
        %10342 = vmatprep.mubr.bf16.mxu0 0
        %10343 = vmatmul.mubr.bf16.gmra.mxu0 %v10287
        %v10344 = vpop.f32.mrf.mxu0
        %v10345 = vadd.f32 0.0, %v10344
        %v10346 = vpop.f32.mrf.mxu0
        %v10347 = vpop.f32.mrf.mxu0
        %v10348 = vadd.f32 0.0, %v10347
        %v10349 = vpop.f32.mrf.mxu0
        %10350 = vmatprep.mubr.bf16.mxu0 0
        %10351 = vmatmul.mubr.bf16.gmra.mxu0 %v10290
        %v10352 = vpop.f32.mrf.mxu0
        %v10353 = vadd.f32 0.0, %v10352
        %v10354 = vpop.f32.mrf.mxu0
        %v10355 = vpop.f32.mrf.mxu0
        %v10356 = vadd.f32 0.0, %v10355
        %v10357 = vpop.f32.mrf.mxu0
        %10358 = vmatprep.mubr.bf16.mxu0 0
        %10359 = vmatmul.mubr.bf16.gmra.mxu0 %v10293
        %v10360 = vpop.f32.mrf.mxu0
        %v10361 = vadd.f32 0.0, %v10360
        %v10362 = vpop.f32.mrf.mxu0
        %v10363 = vpop.f32.mrf.mxu0
        %v10364 = vadd.f32 0.0, %v10363
        %v10365 = vpop.f32.mrf.mxu0
        %10366 = vmatprep.mubr.bf16.mxu0 0
        %10367 = vmatmul.mubr.bf16.gmra.mxu0 %v10296
        %v10368 = vpop.f32.mrf.mxu0
        %v10369 = vadd.f32 0.0, %v10368
        %v10370 = vpop.f32.mrf.mxu0
        %v10371 = vpop.f32.mrf.mxu0
        %v10372 = vadd.f32 0.0, %v10371
        %v10373 = vpop.f32.mrf.mxu0
        %10374 = vmatprep.mubr.bf16.mxu0 0
        %10375 = vmatmul.mubr.bf16.gmra.mxu0 %v10299
        %v10376 = vpop.f32.mrf.mxu0
        %v10377 = vadd.f32 0.0, %v10376
        %v10378 = vpop.f32.mrf.mxu0
        %v10379 = vpop.f32.mrf.mxu0
        %v10380 = vadd.f32 0.0, %v10379
        %v10381 = vpop.f32.mrf.mxu0
        %10382 = vmatprep.mubr.bf16.mxu0 0
        %10383 = vmatmul.mubr.bf16.gmra.mxu0 %v10302
        %v10384 = vpop.f32.mrf.mxu0
        %v10385 = vadd.f32 0.0, %v10384
        %v10386 = vpop.f32.mrf.mxu0
        %v10387 = vpop.f32.mrf.mxu0
        %v10388 = vadd.f32 0.0, %v10387
        %v10389 = vpop.f32.mrf.mxu0
        %10390 = vmatprep.mubr.bf16.mxu0 0
        %10391 = vmatmul.mubr.bf16.gmra.mxu0 %v10305
        %v10392 = vpop.f32.mrf.mxu0
        %v10393 = vadd.f32 0.0, %v10392
        %v10394 = vpop.f32.mrf.mxu0
        %v10395 = vpop.f32.mrf.mxu0
        %v10396 = vadd.f32 0.0, %v10395
        %v10397 = vpop.f32.mrf.mxu0
        %10398 = vmatprep.mubr.bf16.mxu0 0
        %10399 = vmatmul.mubr.bf16.gmra.mxu0 %v10308
        %v10400 = vpop.f32.mrf.mxu0
        %v10401 = vadd.f32 0.0, %v10400
        %v10402 = vpop.f32.mrf.mxu0
        %v10403 = vpop.f32.mrf.mxu0
        %v10404 = vadd.f32 0.0, %v10403
        %v10405 = vpop.f32.mrf.mxu0
        %10406 = vdwg.mxu0
        %v10407 = vadd.f32 %v10116, %v10345
        %v10408 = vadd.f32 %v10117, %v10348
        %v10409 = vadd.f32 %v10118, %v10353
        %v10410 = vadd.f32 %v10119, %v10356
        %v10411 = vadd.f32 %v10120, %v10361
        %v10412 = vadd.f32 %v10121, %v10364
        %v10413 = vadd.f32 %v10122, %v10369
        %v10414 = vadd.f32 %v10123, %v10372
        %v10415 = vadd.f32 %v10124, %v10377
        %v10416 = vadd.f32 %v10125, %v10380
        %v10417 = vadd.f32 %v10126, %v10385
        %v10418 = vadd.f32 %v10127, %v10388
        %v10419 = vadd.f32 %v10128, %v10393
        %v10420 = vadd.f32 %v10129, %v10396
        %v10421 = vadd.f32 %v10130, %v10401
        %v10422 = vadd.f32 %v10131, %v10404
        %10423 = vst [vmem:[%s217] sm:$0xff] %v10407
        %10424 = vst [vmem:[%s217 + $0x8] sm:$0xff] %v10408
        %10425 = vst [vmem:[%s217 + $0x10] sm:$0xff] %v10409
        %10426 = vst [vmem:[%s217 + $0x18] sm:$0xff] %v10410
        %10427 = vst [vmem:[%s217 + $0x20] sm:$0xff] %v10411
        %10428 = vst [vmem:[%s217 + $0x28] sm:$0xff] %v10412
        %10429 = vst [vmem:[%s217 + $0x30] sm:$0xff] %v10413
        %10430 = vst [vmem:[%s217 + $0x38] sm:$0xff] %v10414
        %10431 = vst [vmem:[%s217 + $0x40] sm:$0xff] %v10415
        %10432 = vst [vmem:[%s217 + $0x48] sm:$0xff] %v10416
        %10433 = vst [vmem:[%s217 + $0x50] sm:$0xff] %v10417
        %10434 = vst [vmem:[%s217 + $0x58] sm:$0xff] %v10418
        %10435 = vst [vmem:[%s217 + $0x60] sm:$0xff] %v10419
        %10436 = vst [vmem:[%s217 + $0x68] sm:$0xff] %v10420
        %10437 = vst [vmem:[%s217 + $0x70] sm:$0xff] %v10421
        %10438 = vst [vmem:[%s217 + $0x78] sm:$0xff] %v10422
        %v10439 = vld [vmem:[%s217] sm:$0xff]
        %v10440 = vld [vmem:[%s217 + $0x8] sm:$0xff]
        %v10441 = vld [vmem:[%s217 + $0x10] sm:$0xff]
        %v10442 = vld [vmem:[%s217 + $0x18] sm:$0xff]
        %v10443 = vld [vmem:[%s217 + $0x20] sm:$0xff]
        %v10444 = vld [vmem:[%s217 + $0x28] sm:$0xff]
        %v10445 = vld [vmem:[%s217 + $0x30] sm:$0xff]
        %v10446 = vld [vmem:[%s217 + $0x38] sm:$0xff]
        %v10447 = vld [vmem:[%s217 + $0x40] sm:$0xff]
        %v10448 = vld [vmem:[%s217 + $0x48] sm:$0xff]
        %v10449 = vld [vmem:[%s217 + $0x50] sm:$0xff]
        %v10450 = vld [vmem:[%s217 + $0x58] sm:$0xff]
        %v10451 = vld [vmem:[%s217 + $0x60] sm:$0xff]
        %v10452 = vld [vmem:[%s217 + $0x68] sm:$0xff]
        %v10453 = vld [vmem:[%s217 + $0x70] sm:$0xff]
        %v10454 = vld [vmem:[%s217 + $0x78] sm:$0xff]
        %v10455 = vld [vmem:[%s3] sm:$0x1]
        %v10457 = vlaneseq
        %v10458 = vshrl.u32 %v10457, 7
        %v10459 = vsub.s32 0, %v10458
        %v10460 = vrot.slane %v10455, %v10459
        %v10462 = vmul.f32 %v10439, %v10460
        %v10463 = vmul.f32 %v10440, %v10460
        %v10464 = vmul.f32 %v10441, %v10460
        %v10465 = vmul.f32 %v10442, %v10460
        %v10466 = vmul.f32 %v10443, %v10460
        %v10467 = vmul.f32 %v10444, %v10460
        %v10468 = vmul.f32 %v10445, %v10460
        %v10469 = vmul.f32 %v10446, %v10460
        %v10470 = vmul.f32 %v10447, %v10460
        %v10471 = vmul.f32 %v10448, %v10460
        %v10472 = vmul.f32 %v10449, %v10460
        %v10473 = vmul.f32 %v10450, %v10460
        %v10474 = vmul.f32 %v10451, %v10460
        %v10475 = vmul.f32 %v10452, %v10460
        %v10476 = vmul.f32 %v10453, %v10460
        %v10477 = vmul.f32 %v10454, %v10460
        %v10478 = vld [vmem:[%s4] sm:$0x1]
        %v10480 = vlaneseq
        %v10481 = vshrl.u32 %v10480, 7
        %v10482 = vsub.s32 0, %v10481
        %v10483 = vrot.slane %v10478, %v10482
        %v10485 = vadd.f32 %v10462, %v10483
        %v10486 = vadd.f32 %v10463, %v10483
        %v10487 = vadd.f32 %v10464, %v10483
        %v10488 = vadd.f32 %v10465, %v10483
        %v10489 = vadd.f32 %v10466, %v10483
        %v10490 = vadd.f32 %v10467, %v10483
        %v10491 = vadd.f32 %v10468, %v10483
        %v10492 = vadd.f32 %v10469, %v10483
        %v10493 = vadd.f32 %v10470, %v10483
        %v10494 = vadd.f32 %v10471, %v10483
        %v10495 = vadd.f32 %v10472, %v10483
        %v10496 = vadd.f32 %v10473, %v10483
        %v10497 = vadd.f32 %v10474, %v10483
        %v10498 = vadd.f32 %v10475, %v10483
        %v10499 = vadd.f32 %v10476, %v10483
        %v10500 = vadd.f32 %v10477, %v10483
        %v10501 = vmax.f32 %v10485, 0.0
        %v10502 = vmax.f32 %v10486, 0.0
        %v10503 = vmax.f32 %v10487, 0.0
        %v10504 = vmax.f32 %v10488, 0.0
        %v10505 = vmax.f32 %v10489, 0.0
        %v10506 = vmax.f32 %v10490, 0.0
        %v10507 = vmax.f32 %v10491, 0.0
        %v10508 = vmax.f32 %v10492, 0.0
        %v10509 = vmax.f32 %v10493, 0.0
        %v10510 = vmax.f32 %v10494, 0.0
        %v10511 = vmax.f32 %v10495, 0.0
        %v10512 = vmax.f32 %v10496, 0.0
        %v10513 = vmax.f32 %v10497, 0.0
        %v10514 = vmax.f32 %v10498, 0.0
        %v10515 = vmax.f32 %v10499, 0.0
        %v10516 = vmax.f32 %v10500, 0.0
        %10517 = vst [vmem:[%s217] sm:$0xff] %v10501
        %10518 = vst [vmem:[%s217 + $0x8] sm:$0xff] %v10502
        %10519 = vst [vmem:[%s217 + $0x10] sm:$0xff] %v10503
        %10520 = vst [vmem:[%s217 + $0x18] sm:$0xff] %v10504
        %10521 = vst [vmem:[%s217 + $0x20] sm:$0xff] %v10505
        %10522 = vst [vmem:[%s217 + $0x28] sm:$0xff] %v10506
        %10523 = vst [vmem:[%s217 + $0x30] sm:$0xff] %v10507
        %10524 = vst [vmem:[%s217 + $0x38] sm:$0xff] %v10508
        %10525 = vst [vmem:[%s217 + $0x40] sm:$0xff] %v10509
        %10526 = vst [vmem:[%s217 + $0x48] sm:$0xff] %v10510
        %10527 = vst [vmem:[%s217 + $0x50] sm:$0xff] %v10511
        %10528 = vst [vmem:[%s217 + $0x58] sm:$0xff] %v10512
        %10529 = vst [vmem:[%s217 + $0x60] sm:$0xff] %v10513
        %10530 = vst [vmem:[%s217 + $0x68] sm:$0xff] %v10514
        %10531 = vst [vmem:[%s217 + $0x70] sm:$0xff] %v10515
        %10532 = vst [vmem:[%s217 + $0x78] sm:$0xff] %v10516
        %s10533 = sand.u32 %s137, 1
        %s10534 = scalar_lea.sflag [#allocation3], %s10533
        %s10535 = sand.u32 %s137, 1
        %s10536 = smul.addr %s10535, 128
        %s10537 = scalar_lea.vmem [#allocation2], %s10536
        // Predicated region
        $region41: #{tpu_custom_call.1} parent=39 // pred_check
          %p10538 = pneg %p147
        $region42: #{tpu_custom_call.1} parent=39 // pred_check_branch
          %10540 = sbr.rel (%p10538) target = $region44
        $region43: #{tpu_custom_call.1} parent=39 // pred_region
          %s10542 = ssub.s32 2048, 2048
          %10543 = vsyncadd %s10534, %s10542
          %s10544 = smul.addr %s19, 16
          %s10545 = smul.addr %s10544, 128
          %s10546 = scalar_lea.hbm %s5, %s10545
          %s10547 = sshll.u32 %s10537, 4
          %s10548 = int_to_ptr.vmem [resolvable:$true] %s10547
          %10553 = dma.vmem_to_hbm [thread:$0]  %s10548, 2048, %s10546, %s10534, 128, 128, 8
        $region44: #{tpu_custom_call.1} parent=39 // pred_fallthru
          _
      $region40: #{tpu_custom_call.1} parent=5 // pred_fallthru
        _
      %p10554 = scmp.le.s32.totalorder 2, %s14
      // Predicated region
      $region45: #{tpu_custom_call.1} parent=5 // pred_check
        %p10555 = pneg %p10554
      $region46: #{tpu_custom_call.1} parent=5 // pred_check_branch
        %10557 = sbr.rel (%p10555) target = $region48
      $region47: #{tpu_custom_call.1} parent=5 // pred_region
        %s10558 = ssub.s32 %s14, 2
        // Predicated region
        $region49: #{tpu_custom_call.1} parent=47 // pred_check
          %p10559 = pneg %p153
        $region50: #{tpu_custom_call.1} parent=47 // pred_check_branch
          %10561 = sbr.rel (%p10559) target = $region52
        $region51: #{tpu_custom_call.1} parent=47 // pred_region
          %s10562 = sand.u32 %s138, 1
          %s10563 = scalar_lea.sflag [#allocation3], %s10562
          %s10564 = sand.u32 %s138, 1
          %s10565 = smul.addr %s10564, 128
          %s10566 = scalar_lea.vmem [#allocation2], %s10565
          %10567 = dma.done %s10563, 2048
        $region52: #{tpu_custom_call.1} parent=47 // pred_fallthru
          _
      $region48: #{tpu_custom_call.1} parent=5 // pred_fallthru
        _
    $region6: #{tpu_custom_call.1} parent=1 // loop_footer
      %s18 = sadd.s32 1, %s14
    $region7: #{tpu_custom_call.1} parent=1 // loop_footer_branch
      %13 = sbr.rel target = $region3
    $region8: #{tpu_custom_call.1} parent=1 // loop_exit
      _
    %10568 = vsyncpa [#allocation3], 1
    %s10569 = scalar_lea.sflag [#allocation3], 1
    %10570 = vsyncpa %s10569, 1

</llo_original>
